<compile_context>
chip_gen: v5e
topology: v5e:2x2
jax: 0.10.0
libtpu: 0.0.40
codegen_flags: <defaults>
</compile_context>

<pallas_src>
import numpy as np
import jax
import jax.numpy as jnp
from jax.experimental import pallas as pl
from jax.experimental.pallas import tpu as pltpu

ATOM_FEATURE_DIMS = [119, 4, 12, 12, 10, 6, 6, 2, 2]
NUM_FEATURES = len(ATOM_FEATURE_DIMS)
K_TOTAL = sum(ATOM_FEATURE_DIMS)                          # 173
K_PAD = 256                                               # 2 x 128 lanes
# Compile-time per-feature row offsets into the packed table.
OFFSETS = tuple(int(o) for o in np.cumsum([0] + ATOM_FEATURE_DIMS[:-1]))


def atom_encoder_kernel(x_ref, table_ref, out_ref):
    # x_ref:     (tile_n, F) int32 raw feature indices
    # table_ref: (K_PAD, emb_dim) f32 packed embedding rows (zero-padded)
    # out_ref:   (tile_n, emb_dim) f32
    idx = x_ref[...]                                             # (tn, F) i32
    tn = idx.shape[0]
    # One lane-dense iota, reused across all 9 features.
    iota2d = jax.lax.broadcasted_iota(jnp.int32, (tn, K_PAD), 1)  # (tn, K)
    multi_hot = jnp.zeros((tn, K_PAD), jnp.float32)
    for f in range(NUM_FEATURES):                                # static unroll
        packed_idx = idx[:, f:f + 1] + OFFSETS[f]                # (tn, 1)
        multi_hot = multi_hot + (packed_idx == iota2d).astype(jnp.float32)
    # gather + sum == multi_hot @ packed_table  (MXU)
    out_ref[...] = jnp.dot(multi_hot, table_ref[...],
                           preferred_element_type=jnp.float32)


def atom_encoder_pallas(x, packed_table, *, tile_n=512):
    """x: [N, 9] int raw feature indices; packed_table: [K_PAD, emb_dim] f32."""
    n, f = x.shape
    assert f == NUM_FEATURES
    assert packed_table.shape[0] == K_PAD
    emb_dim = packed_table.shape[1]
    assert emb_dim % 128 == 0, (
        "pad emb_dim to a multiple of 128 (lane-dense output stores); "
        "slice the extra columns off outside the kernel")
    assert tile_n % 8 == 0

    x = x.astype(jnp.int32)
    # Pad the atom axis up to a multiple of tile_n (padded rows index row 0
    # of each table; their garbage output is sliced off below).
    n_pad = ((n + tile_n - 1) // tile_n) * tile_n
    if n_pad != n:
        x = jnp.pad(x, ((0, n_pad - n), (0, 0)))

    grid = (n_pad // tile_n,)
    out = pl.pallas_call(
        atom_encoder_kernel,
        out_shape=jax.ShapeDtypeStruct((n_pad, emb_dim), jnp.float32),
        grid_spec=pltpu.PrefetchScalarGridSpec(
            num_scalar_prefetch=0,
            grid=grid,
            in_specs=[
                pl.BlockSpec((tile_n, NUM_FEATURES), lambda i: (i, 0)),
                # Table index_map is constant across the grid; at 256x128 f32
                # the default double buffer costs only ~256 KB, so we keep it.
                pl.BlockSpec((K_PAD, emb_dim), lambda i: (0, 0)),
            ],
            out_specs=pl.BlockSpec((tile_n, emb_dim), lambda i: (i, 0)),
        ),
        compiler_params=pltpu.CompilerParams(
            dimension_semantics=("parallel",)),
    )(x, packed_table)
    return out[:n]


def init_packed_table(key, emb_dim):
    """Xavier-uniform init of each per-feature embedding, packed row-wise."""
    tables = []
    for i, dim in enumerate(ATOM_FEATURE_DIMS):
        k = jax.random.fold_in(key, i)
        bound = float(np.sqrt(6.0 / (dim + emb_dim)))
        tables.append(jax.random.uniform(k, (dim, emb_dim), jnp.float32,
                                         minval=-bound, maxval=bound))
    packed = jnp.concatenate(tables, axis=0)                    # (173, emb_dim)
    packed = jnp.pad(packed, ((0, K_PAD - K_TOTAL), (0, 0)))    # (256, emb_dim)
    return packed


def atom_encoder_reference(x, packed_table):
    offsets = jnp.array(OFFSETS, dtype=jnp.int32)
    idx = x.astype(jnp.int32) + offsets[None, :]                # (N, 9)
    emb = jnp.take(packed_table, idx, axis=0)                   # (N, 9, emb_dim)
    return jnp.sum(emb, axis=1)


if __name__ == "__main__":
    key = jax.random.PRNGKey(0)
    emb_dim = 128
    num_atoms = 1024        # 2 grid steps at tile_n=512 (exercises pipelining)

    k_tab, k_x = jax.random.split(key)
    packed_table = init_packed_table(k_tab, emb_dim)

    # Deterministic integer atom features, each column within its vocab range.
    cols = []
    for i, dim in enumerate(ATOM_FEATURE_DIMS):
        cols.append(jax.random.randint(jax.random.fold_in(k_x, i),
                                       (num_atoms, 1), 0, dim, dtype=jnp.int32))
    x = jnp.concatenate(cols, axis=1)                           # (N, 9) int32

    out = atom_encoder_pallas(x, packed_table, tile_n=512)
    out = jax.block_until_ready(out)

    ref = jax.block_until_ready(atom_encoder_reference(x, packed_table))
    np.testing.assert_allclose(np.asarray(out), np.asarray(ref),
                               rtol=1e-5, atol=1e-5)
    print("KERNEL_OK")
</pallas_src>

<mosaic_0001>
module attributes {stable_mosaic.version = 11 : i64} {
  func.func @atom_encoder_kernel(%arg0: i32, %arg1: memref<512x9xi32, #tpu.memory_space<vmem>>, %arg2: memref<256x128xf32, #tpu.memory_space<vmem>>, %arg3: memref<512x128xf32, #tpu.memory_space<vmem>>) attributes {dimension_semantics = [#tpu.dimension_semantics<parallel>], iteration_bounds = array<i64: 2>, scalar_prefetch = 0 : i64, scratch_operands = 0 : i64, tpu.core_type = #tpu.core_type<tc>, window_params = [{transform_indices = @transform_0, window_bounds = array<i64: 512, 9>}, {pipeline_mode = #tpu.pipeline_mode<synchronous>, transform_indices = @transform_1, window_bounds = array<i64: 256, 128>}, {transform_indices = @transform_2, window_bounds = array<i64: 512, 128>}]} {
    %c0 = arith.constant 0 : index
    %c0_0 = arith.constant 0 : index
    %0 = vector.load %arg1[%c0, %c0_0] : memref<512x9xi32, #tpu.memory_space<vmem>>, vector<512x9xi32>
    %1 = tpu.iota {dimensions = array<i32: 1>} : vector<512x256xi32>
    %cst = arith.constant 0.000000e+00 : f32
    %2 = vector.broadcast %cst : f32 to vector<512x256xf32>
    %3 = vector.extract_strided_slice %0 {offsets = [0, 0], sizes = [512, 1], strides = [1, 1]} : vector<512x9xi32> to vector<512x1xi32>
    %c0_i32 = arith.constant 0 : i32
    %4 = vector.broadcast %c0_i32 : i32 to vector<512x1xi32>
    %5 = arith.addi %3, %4 : vector<512x1xi32>
    %6 = vector.broadcast %5 : vector<512x1xi32> to vector<512x256xi32>
    %7 = arith.cmpi eq, %6, %1 : vector<512x256xi32>
    %8 = arith.extui %7 : vector<512x256xi1> to vector<512x256xi32>
    %9 = arith.sitofp %8 : vector<512x256xi32> to vector<512x256xf32>
    %10 = arith.addf %2, %9 : vector<512x256xf32>
    %11 = vector.extract_strided_slice %0 {offsets = [0, 1], sizes = [512, 1], strides = [1, 1]} : vector<512x9xi32> to vector<512x1xi32>
    %c119_i32 = arith.constant 119 : i32
    %12 = vector.broadcast %c119_i32 : i32 to vector<512x1xi32>
    %13 = arith.addi %11, %12 : vector<512x1xi32>
    %14 = vector.broadcast %13 : vector<512x1xi32> to vector<512x256xi32>
    %15 = arith.cmpi eq, %14, %1 : vector<512x256xi32>
    %16 = arith.extui %15 : vector<512x256xi1> to vector<512x256xi32>
    %17 = arith.sitofp %16 : vector<512x256xi32> to vector<512x256xf32>
    %18 = arith.addf %10, %17 : vector<512x256xf32>
    %19 = vector.extract_strided_slice %0 {offsets = [0, 2], sizes = [512, 1], strides = [1, 1]} : vector<512x9xi32> to vector<512x1xi32>
    %c123_i32 = arith.constant 123 : i32
    %20 = vector.broadcast %c123_i32 : i32 to vector<512x1xi32>
    %21 = arith.addi %19, %20 : vector<512x1xi32>
    %22 = vector.broadcast %21 : vector<512x1xi32> to vector<512x256xi32>
    %23 = arith.cmpi eq, %22, %1 : vector<512x256xi32>
    %24 = arith.extui %23 : vector<512x256xi1> to vector<512x256xi32>
    %25 = arith.sitofp %24 : vector<512x256xi32> to vector<512x256xf32>
    %26 = arith.addf %18, %25 : vector<512x256xf32>
    %27 = vector.extract_strided_slice %0 {offsets = [0, 3], sizes = [512, 1], strides = [1, 1]} : vector<512x9xi32> to vector<512x1xi32>
    %c135_i32 = arith.constant 135 : i32
    %28 = vector.broadcast %c135_i32 : i32 to vector<512x1xi32>
    %29 = arith.addi %27, %28 : vector<512x1xi32>
    %30 = vector.broadcast %29 : vector<512x1xi32> to vector<512x256xi32>
    %31 = arith.cmpi eq, %30, %1 : vector<512x256xi32>
    %32 = arith.extui %31 : vector<512x256xi1> to vector<512x256xi32>
    %33 = arith.sitofp %32 : vector<512x256xi32> to vector<512x256xf32>
    %34 = arith.addf %26, %33 : vector<512x256xf32>
    %35 = vector.extract_strided_slice %0 {offsets = [0, 4], sizes = [512, 1], strides = [1, 1]} : vector<512x9xi32> to vector<512x1xi32>
    %c147_i32 = arith.constant 147 : i32
    %36 = vector.broadcast %c147_i32 : i32 to vector<512x1xi32>
    %37 = arith.addi %35, %36 : vector<512x1xi32>
    %38 = vector.broadcast %37 : vector<512x1xi32> to vector<512x256xi32>
    %39 = arith.cmpi eq, %38, %1 : vector<512x256xi32>
    %40 = arith.extui %39 : vector<512x256xi1> to vector<512x256xi32>
    %41 = arith.sitofp %40 : vector<512x256xi32> to vector<512x256xf32>
    %42 = arith.addf %34, %41 : vector<512x256xf32>
    %43 = vector.extract_strided_slice %0 {offsets = [0, 5], sizes = [512, 1], strides = [1, 1]} : vector<512x9xi32> to vector<512x1xi32>
    %c157_i32 = arith.constant 157 : i32
    %44 = vector.broadcast %c157_i32 : i32 to vector<512x1xi32>
    %45 = arith.addi %43, %44 : vector<512x1xi32>
    %46 = vector.broadcast %45 : vector<512x1xi32> to vector<512x256xi32>
    %47 = arith.cmpi eq, %46, %1 : vector<512x256xi32>
    %48 = arith.extui %47 : vector<512x256xi1> to vector<512x256xi32>
    %49 = arith.sitofp %48 : vector<512x256xi32> to vector<512x256xf32>
    %50 = arith.addf %42, %49 : vector<512x256xf32>
    %51 = vector.extract_strided_slice %0 {offsets = [0, 6], sizes = [512, 1], strides = [1, 1]} : vector<512x9xi32> to vector<512x1xi32>
    %c163_i32 = arith.constant 163 : i32
    %52 = vector.broadcast %c163_i32 : i32 to vector<512x1xi32>
    %53 = arith.addi %51, %52 : vector<512x1xi32>
    %54 = vector.broadcast %53 : vector<512x1xi32> to vector<512x256xi32>
    %55 = arith.cmpi eq, %54, %1 : vector<512x256xi32>
    %56 = arith.extui %55 : vector<512x256xi1> to vector<512x256xi32>
    %57 = arith.sitofp %56 : vector<512x256xi32> to vector<512x256xf32>
    %58 = arith.addf %50, %57 : vector<512x256xf32>
    %59 = vector.extract_strided_slice %0 {offsets = [0, 7], sizes = [512, 1], strides = [1, 1]} : vector<512x9xi32> to vector<512x1xi32>
    %c169_i32 = arith.constant 169 : i32
    %60 = vector.broadcast %c169_i32 : i32 to vector<512x1xi32>
    %61 = arith.addi %59, %60 : vector<512x1xi32>
    %62 = vector.broadcast %61 : vector<512x1xi32> to vector<512x256xi32>
    %63 = arith.cmpi eq, %62, %1 : vector<512x256xi32>
    %64 = arith.extui %63 : vector<512x256xi1> to vector<512x256xi32>
    %65 = arith.sitofp %64 : vector<512x256xi32> to vector<512x256xf32>
    %66 = arith.addf %58, %65 : vector<512x256xf32>
    %67 = vector.extract_strided_slice %0 {offsets = [0, 8], sizes = [512, 1], strides = [1, 1]} : vector<512x9xi32> to vector<512x1xi32>
    %c171_i32 = arith.constant 171 : i32
    %68 = vector.broadcast %c171_i32 : i32 to vector<512x1xi32>
    %69 = arith.addi %67, %68 : vector<512x1xi32>
    %70 = vector.broadcast %69 : vector<512x1xi32> to vector<512x256xi32>
    %71 = arith.cmpi eq, %70, %1 : vector<512x256xi32>
    %72 = arith.extui %71 : vector<512x256xi1> to vector<512x256xi32>
    %73 = arith.sitofp %72 : vector<512x256xi32> to vector<512x256xf32>
    %74 = arith.addf %66, %73 : vector<512x256xf32>
    %c0_1 = arith.constant 0 : index
    %c0_2 = arith.constant 0 : index
    %75 = vector.load %arg2[%c0_1, %c0_2] : memref<256x128xf32, #tpu.memory_space<vmem>>, vector<256x128xf32>
    %cst_3 = arith.constant dense<0.000000e+00> : vector<512x128xf32>
    %76 = tpu.matmul %74, %75, %cst_3 {dimension_numbers = #tpu.dot_dimension_numbers<[1], [0], [0], [1], [0, 0, 1, 1], [], []>} : vector<512x256xf32>, vector<256x128xf32>, vector<512x128xf32> -> vector<512x128xf32>
    %c0_4 = arith.constant 0 : index
    %c0_5 = arith.constant 0 : index
    %77 = vector.load %arg3[%c0_4, %c0_5] : memref<512x128xf32, #tpu.memory_space<vmem>>, vector<512x128xf32>
    tpu.vector_store %arg3[%c0_4, %c0_5], %76 {strides = array<i32>} : memref<512x128xf32, #tpu.memory_space<vmem>>, vector<512x128xf32>,
    return
  }
  func.func @transform_0(%arg0: i32) -> (i32, i32) {
    %c0_i32 = arith.constant 0 : i32
    %c0_i32_0 = arith.constant 0 : i32
    return %arg0, %c0_i32 : i32, i32
  }
  func.func @transform_1(%arg0: i32) -> (i32, i32) {
    %c0_i32 = arith.constant 0 : i32
    %c0_i32_0 = arith.constant 0 : i32
    %c0_i32_1 = arith.constant 0 : i32
    return %c0_i32, %c0_i32_0 : i32, i32
  }
  func.func @transform_2(%arg0: i32) -> (i32, i32) {
    %c0_i32 = arith.constant 0 : i32
    %c0_i32_0 = arith.constant 0 : i32
    return %arg0, %c0_i32 : i32, i32
  }
}

</mosaic_0001>

<llo_original>
// kernel: tpu_custom_call.1
$region0: #{tpu_custom_call.1}
  #allocation0 [shape = 'u32[]', space=smem, size = 0x4, offset = 0x4, fixed_abs, tag = 'smem constant byte address 0x4 - core index']
  #allocation1 [shape = 'u32[72,128]{1,0:T(1,128)}', space=vmem, size = 0x9000, scoped, tag = 'internal scratch']
  %s0 = inlined_call_operand.vmem [shape: s32[1024,9], index: 0, kind: input, shape index: {}]
  %s1 = inlined_call_operand.vmem [shape: f32[256,128], index: 1, kind: input, shape index: {}]
  %s2 = inlined_call_operand.hbm [shape: f32[1024,128], index: 2, kind: output, shape index: {}]
  %s3 = sld [smem:[#allocation0]]
  $region41: #{tpu_custom_call.1} parent=0
    _
  %s5 = ssub.s32 1, %s3
  %s6 = scalar_select 0, %s5, %s3
  $region1: #{tpu_custom_call.1} parent=0
    #allocation2 [shape = 'u8[524288]{0}', space=vmem, size = 0x80000, scoped, tag = 'output window, operand 0']
    #allocation3 [shape = 's32[2]{0}', space=sflag, size = 0x8, scoped, tag = 'scoped memory for tpu_custom_call.1']
    %7 = vsyncpa [#allocation3], 0
    %s8 = scalar_lea.sflag [#allocation3], 1
    %9 = vsyncpa %s8, 0
    loop: start=0, step=1, limit=4
    $region2: #{tpu_custom_call.1} parent=1 // loop_pre_header
      _
    $region3: #{tpu_custom_call.1} parent=1 // loop_header
      %s11 = sphi 0, %s15
      %p12 = scmp.ge.s32.totalorder %s11, 4
      %s21 = sphi 0, %s23
      %s24 = sphi 0, %s21
      %s25 = sphi 0, %s24
      %s41 = sphi 0, %s25
      %s45 = sphi 0, %s45
      %s47 = sphi 0, %s45
      %s48 = sphi 0, %s47
      %s62 = sphi 0, %s48
      %s68 = sphi 0, %s70
      %s71 = sphi 0, %s68
      %s72 = sphi 0, %s71
      %s88 = sphi 0, %s72
    $region4: #{tpu_custom_call.1} parent=1 // loop_header_branch
      %14 = sbr.rel (%p12) target = $region8
    $region5: #{tpu_custom_call.1} parent=1 // loop_body
      %s16 = ssub.s32 %s11, 1
      %s17 = ssub.s32 %s11, 2
      %s18 = sadd.s32 %s11, 1
      %s19 = ssub.s32 %s11, %s18
      %p20 = scmp.eq.s32.totalorder %s19, 0
      %s22 = sadd.s32 %s21, 1
      %s23 = scalar_select %p20, %s21, %s22
      %p26 = pneg %p20
      %p27 = scmp.eq.s32.totalorder %s11, 1
      %p28 = por %p26, %p27
      %p29 = scmp.ne.s32.totalorder %s21, %s24
      %p30 = scmp.eq.s32.totalorder %s11, 0
      %p31 = por %p29, %p30
      %p32 = scmp.ne.s32.totalorder %s21, %s24
      %p33 = scmp.eq.s32.totalorder %s16, 1
      %p34 = por %p32, %p33
      %p35 = scmp.ne.s32.totalorder %s24, %s25
      %p36 = scmp.eq.s32.totalorder %s16, 0
      %p37 = por %p35, %p36
      %p38 = scmp.ne.s32.totalorder %s24, %s25
      %p39 = scmp.eq.s32.totalorder %s17, 1
      %p40 = por %p38, %p39
      %p42 = scmp.ne.s32.totalorder %s25, %s41
      %p43 = scmp.eq.s32.totalorder %s17, 0
      %p44 = por %p42, %p43
      %s46 = sadd.s32 %s45, 1
      %p49 = scmp.eq.s32.totalorder %s11, 1
      %p50 = scmp.ne.s32.totalorder %s45, %s47
      %p51 = scmp.eq.s32.totalorder %s11, 0
      %p52 = por %p50, %p51
      %p53 = scmp.ne.s32.totalorder %s45, %s47
      %p54 = scmp.eq.s32.totalorder %s16, 1
      %p55 = por %p53, %p54
      %p56 = scmp.ne.s32.totalorder %s47, %s48
      %p57 = scmp.eq.s32.totalorder %s16, 0
      %p58 = por %p56, %p57
      %p59 = scmp.ne.s32.totalorder %s47, %s48
      %p60 = scmp.eq.s32.totalorder %s17, 1
      %p61 = por %p59, %p60
      %p63 = scmp.ne.s32.totalorder %s48, %s62
      %p64 = scmp.eq.s32.totalorder %s17, 0
      %p65 = por %p63, %p64
      %s66 = ssub.s32 %s11, %s18
      %p67 = scmp.eq.s32.totalorder %s66, 0
      %s69 = sadd.s32 %s68, 1
      %s70 = scalar_select %p67, %s68, %s69
      %p73 = pneg %p67
      %p74 = scmp.eq.s32.totalorder %s11, 1
      %p75 = por %p73, %p74
      %p76 = scmp.ne.s32.totalorder %s68, %s71
      %p77 = scmp.eq.s32.totalorder %s11, 0
      %p78 = por %p76, %p77
      %p79 = scmp.ne.s32.totalorder %s68, %s71
      %p80 = scmp.eq.s32.totalorder %s16, 1
      %p81 = por %p79, %p80
      %p82 = scmp.ne.s32.totalorder %s71, %s72
      %p83 = scmp.eq.s32.totalorder %s16, 0
      %p84 = por %p82, %p83
      %p85 = scmp.ne.s32.totalorder %s71, %s72
      %p86 = scmp.eq.s32.totalorder %s17, 1
      %p87 = por %p85, %p86
      %p89 = scmp.ne.s32.totalorder %s72, %s88
      %p90 = scmp.eq.s32.totalorder %s17, 0
      %p91 = por %p89, %p90
      %p92 = scmp.le.s32.totalorder 1, %s11
      %p93 = scmp.lt.s32.totalorder %s11, 3
      %p94 = pnand %p92, %p93
      %p95 = pneg %p94
      // Predicated region
      $region9: #{tpu_custom_call.1} parent=5 // pred_check
        _
      $region10: #{tpu_custom_call.1} parent=5 // pred_check_branch
        %97 = sbr.rel (%p94) target = $region12
      $region11: #{tpu_custom_call.1} parent=5 // pred_region
        %s98 = ssub.s32 %s11, 1
        // Predicated region
        $region13: #{tpu_custom_call.1} parent=11 // pred_check
          %p99 = pneg %p58
        $region14: #{tpu_custom_call.1} parent=11 // pred_check_branch
          %101 = sbr.rel (%p99) target = $region16
        $region15: #{tpu_custom_call.1} parent=11 // pred_region
          _
        $region16: #{tpu_custom_call.1} parent=11 // pred_fallthru
          _
      $region12: #{tpu_custom_call.1} parent=5 // pred_fallthru
        _
      %p102 = scmp.lt.s32.totalorder %s11, 2
      // Predicated region
      $region17: #{tpu_custom_call.1} parent=5 // pred_check
        %p103 = pneg %p102
      $region18: #{tpu_custom_call.1} parent=5 // pred_check_branch
        %105 = sbr.rel (%p103) target = $region20
      $region19: #{tpu_custom_call.1} parent=5 // pred_region
        // Predicated region
        $region21: #{tpu_custom_call.1} parent=19 // pred_check
          %p106 = pneg %p31
        $region22: #{tpu_custom_call.1} parent=19 // pred_check_branch
          %108 = sbr.rel (%p106) target = $region24
        $region23: #{tpu_custom_call.1} parent=19 // pred_region
          %s109 = smul.u32 64, %s11
          %p110 = scmp.lt.s32.totalorder %s109, 127
          %s111 = scalar_select %p110, %s109, 127
          %s112 = smul.addr %s111, 8
          %s113 = scalar_lea.vmem %s0, %s112
          %s114 = smul.u32 64, %s11
        $region24: #{tpu_custom_call.1} parent=19 // pred_fallthru
          _
      $region20: #{tpu_custom_call.1} parent=5 // pred_fallthru
        _
      %p115 = scmp.le.s32.totalorder 1, %s11
      %p116 = scmp.lt.s32.totalorder %s11, 3
      %p117 = pnand %p115, %p116
      %p118 = pneg %p117
      // Predicated region
      $region25: #{tpu_custom_call.1} parent=5 // pred_check
        _
      $region26: #{tpu_custom_call.1} parent=5 // pred_check_branch
        %120 = sbr.rel (%p117) target = $region28
      $region27: #{tpu_custom_call.1} parent=5 // pred_region
        %s121 = ssub.s32 %s11, 1
        %s122 = smul.u32 64, %s16
        %p123 = scmp.lt.s32.totalorder %s122, 127
        %s124 = scalar_select %p123, %s122, 127
        %s125 = smul.addr %s124, 8
        %s126 = scalar_lea.vmem %s0, %s125
        %p127 = pneg %p37
        %p128 = pneg %p34
        %p129 = pneg %p58
        %p130 = pneg %p55
        %p131 = pneg %p84
        %p132 = pneg %p81
        %s133 = sand.u32 %s71, 1
        %s134 = scalar_lea.sflag [#allocation3], %s133
        %s135 = sand.u32 %s71, 1
        %s136 = smul.addr %s135, 512
        %s137 = scalar_lea.vmem [#allocation2], %s136
        %s138 = smul.u32 64, %s16
        %p139 = scmp.lt.s32.totalorder %s138, 127
        %s140 = scalar_select %p139, %s138, 127
        %s141 = smul.addr %s140, 8
        %s142 = scalar_lea.vmem %s0, %s141
        %s143 = smul.u32 64, %s16
        %s144 = smul.u32 64, %s16
        %v145 = vld [vmem:[%s142] sm:$0xff]
        %v146 = vld [vmem:[%s142 + $0x8] sm:$0xff]
        %v147 = vld [vmem:[%s142 + $0x10] sm:$0xff]
        %v148 = vld [vmem:[%s142 + $0x18] sm:$0xff]
        %v149 = vld [vmem:[%s142 + $0x20] sm:$0xff]
        %v150 = vld [vmem:[%s142 + $0x28] sm:$0xff]
        %v151 = vld [vmem:[%s142 + $0x30] sm:$0xff]
        %v152 = vld [vmem:[%s142 + $0x38] sm:$0xff]
        %v153 = vld [vmem:[%s142 + $0x40] sm:$0xff]
        %v154 = vld [vmem:[%s142 + $0x48] sm:$0xff]
        %v155 = vld [vmem:[%s142 + $0x50] sm:$0xff]
        %v156 = vld [vmem:[%s142 + $0x58] sm:$0xff]
        %v157 = vld [vmem:[%s142 + $0x60] sm:$0xff]
        %v158 = vld [vmem:[%s142 + $0x68] sm:$0xff]
        %v159 = vld [vmem:[%s142 + $0x70] sm:$0xff]
        %v160 = vld [vmem:[%s142 + $0x78] sm:$0xff]
        %v161 = vld [vmem:[%s142 + $0x80] sm:$0xff]
        %v162 = vld [vmem:[%s142 + $0x88] sm:$0xff]
        %v163 = vld [vmem:[%s142 + $0x90] sm:$0xff]
        %v164 = vld [vmem:[%s142 + $0x98] sm:$0xff]
        %v165 = vld [vmem:[%s142 + $0xa0] sm:$0xff]
        %v166 = vld [vmem:[%s142 + $0xa8] sm:$0xff]
        %v167 = vld [vmem:[%s142 + $0xb0] sm:$0xff]
        %v168 = vld [vmem:[%s142 + $0xb8] sm:$0xff]
        %v169 = vld [vmem:[%s142 + $0xc0] sm:$0xff]
        %v170 = vld [vmem:[%s142 + $0xc8] sm:$0xff]
        %v171 = vld [vmem:[%s142 + $0xd0] sm:$0xff]
        %v172 = vld [vmem:[%s142 + $0xd8] sm:$0xff]
        %v173 = vld [vmem:[%s142 + $0xe0] sm:$0xff]
        %v174 = vld [vmem:[%s142 + $0xe8] sm:$0xff]
        %v175 = vld [vmem:[%s142 + $0xf0] sm:$0xff]
        %v176 = vld [vmem:[%s142 + $0xf8] sm:$0xff]
        %v177 = vld [vmem:[%s142 + $0x100] sm:$0xff]
        %v178 = vld [vmem:[%s142 + $0x108] sm:$0xff]
        %v179 = vld [vmem:[%s142 + $0x110] sm:$0xff]
        %v180 = vld [vmem:[%s142 + $0x118] sm:$0xff]
        %v181 = vld [vmem:[%s142 + $0x120] sm:$0xff]
        %v182 = vld [vmem:[%s142 + $0x128] sm:$0xff]
        %v183 = vld [vmem:[%s142 + $0x130] sm:$0xff]
        %v184 = vld [vmem:[%s142 + $0x138] sm:$0xff]
        %v185 = vld [vmem:[%s142 + $0x140] sm:$0xff]
        %v186 = vld [vmem:[%s142 + $0x148] sm:$0xff]
        %v187 = vld [vmem:[%s142 + $0x150] sm:$0xff]
        %v188 = vld [vmem:[%s142 + $0x158] sm:$0xff]
        %v189 = vld [vmem:[%s142 + $0x160] sm:$0xff]
        %v190 = vld [vmem:[%s142 + $0x168] sm:$0xff]
        %v191 = vld [vmem:[%s142 + $0x170] sm:$0xff]
        %v192 = vld [vmem:[%s142 + $0x178] sm:$0xff]
        %v193 = vld [vmem:[%s142 + $0x180] sm:$0xff]
        %v194 = vld [vmem:[%s142 + $0x188] sm:$0xff]
        %v195 = vld [vmem:[%s142 + $0x190] sm:$0xff]
        %v196 = vld [vmem:[%s142 + $0x198] sm:$0xff]
        %v197 = vld [vmem:[%s142 + $0x1a0] sm:$0xff]
        %v198 = vld [vmem:[%s142 + $0x1a8] sm:$0xff]
        %v199 = vld [vmem:[%s142 + $0x1b0] sm:$0xff]
        %v200 = vld [vmem:[%s142 + $0x1b8] sm:$0xff]
        %v201 = vld [vmem:[%s142 + $0x1c0] sm:$0xff]
        %v202 = vld [vmem:[%s142 + $0x1c8] sm:$0xff]
        %v203 = vld [vmem:[%s142 + $0x1d0] sm:$0xff]
        %v204 = vld [vmem:[%s142 + $0x1d8] sm:$0xff]
        %v205 = vld [vmem:[%s142 + $0x1e0] sm:$0xff]
        %v206 = vld [vmem:[%s142 + $0x1e8] sm:$0xff]
        %v207 = vld [vmem:[%s142 + $0x1f0] sm:$0xff]
        %v208 = vld [vmem:[%s142 + $0x1f8] sm:$0xff]
        %v209 = vlaneseq
        %v210 = vand.u32 %v209, 127
        %v211 = vadd.s32 %v210, 128
        %212 = vset.pattern.permute.xlu0 0
        %213 = vperm.xlu0 %212, %v145
        %v214 = vpop.permute.xlu0 %213
        %215 = vset.pattern.permute.xlu0 0
        %216 = vperm.xlu0 %215, %v146
        %v217 = vpop.permute.xlu0 %216
        %218 = vset.pattern.permute.xlu0 0
        %219 = vperm.xlu0 %218, %v147
        %v220 = vpop.permute.xlu0 %219
        %221 = vset.pattern.permute.xlu0 0
        %222 = vperm.xlu0 %221, %v148
        %v223 = vpop.permute.xlu0 %222
        %224 = vset.pattern.permute.xlu0 0
        %225 = vperm.xlu0 %224, %v149
        %v226 = vpop.permute.xlu0 %225
        %227 = vset.pattern.permute.xlu0 0
        %228 = vperm.xlu0 %227, %v150
        %v229 = vpop.permute.xlu0 %228
        %230 = vset.pattern.permute.xlu0 0
        %231 = vperm.xlu0 %230, %v151
        %v232 = vpop.permute.xlu0 %231
        %233 = vset.pattern.permute.xlu0 0
        %234 = vperm.xlu0 %233, %v152
        %v235 = vpop.permute.xlu0 %234
        %236 = vset.pattern.permute.xlu0 0
        %237 = vperm.xlu0 %236, %v153
        %v238 = vpop.permute.xlu0 %237
        %239 = vset.pattern.permute.xlu0 0
        %240 = vperm.xlu0 %239, %v154
        %v241 = vpop.permute.xlu0 %240
        %242 = vset.pattern.permute.xlu0 0
        %243 = vperm.xlu0 %242, %v155
        %v244 = vpop.permute.xlu0 %243
        %245 = vset.pattern.permute.xlu0 0
        %246 = vperm.xlu0 %245, %v156
        %v247 = vpop.permute.xlu0 %246
        %248 = vset.pattern.permute.xlu0 0
        %249 = vperm.xlu0 %248, %v157
        %v250 = vpop.permute.xlu0 %249
        %251 = vset.pattern.permute.xlu0 0
        %252 = vperm.xlu0 %251, %v158
        %v253 = vpop.permute.xlu0 %252
        %254 = vset.pattern.permute.xlu0 0
        %255 = vperm.xlu0 %254, %v159
        %v256 = vpop.permute.xlu0 %255
        %257 = vset.pattern.permute.xlu0 0
        %258 = vperm.xlu0 %257, %v160
        %v259 = vpop.permute.xlu0 %258
        %260 = vset.pattern.permute.xlu0 0
        %261 = vperm.xlu0 %260, %v161
        %v262 = vpop.permute.xlu0 %261
        %263 = vset.pattern.permute.xlu0 0
        %264 = vperm.xlu0 %263, %v162
        %v265 = vpop.permute.xlu0 %264
        %266 = vset.pattern.permute.xlu0 0
        %267 = vperm.xlu0 %266, %v163
        %v268 = vpop.permute.xlu0 %267
        %269 = vset.pattern.permute.xlu0 0
        %270 = vperm.xlu0 %269, %v164
        %v271 = vpop.permute.xlu0 %270
        %272 = vset.pattern.permute.xlu0 0
        %273 = vperm.xlu0 %272, %v165
        %v274 = vpop.permute.xlu0 %273
        %275 = vset.pattern.permute.xlu0 0
        %276 = vperm.xlu0 %275, %v166
        %v277 = vpop.permute.xlu0 %276
        %278 = vset.pattern.permute.xlu0 0
        %279 = vperm.xlu0 %278, %v167
        %v280 = vpop.permute.xlu0 %279
        %281 = vset.pattern.permute.xlu0 0
        %282 = vperm.xlu0 %281, %v168
        %v283 = vpop.permute.xlu0 %282
        %284 = vset.pattern.permute.xlu0 0
        %285 = vperm.xlu0 %284, %v169
        %v286 = vpop.permute.xlu0 %285
        %287 = vset.pattern.permute.xlu0 0
        %288 = vperm.xlu0 %287, %v170
        %v289 = vpop.permute.xlu0 %288
        %290 = vset.pattern.permute.xlu0 0
        %291 = vperm.xlu0 %290, %v171
        %v292 = vpop.permute.xlu0 %291
        %293 = vset.pattern.permute.xlu0 0
        %294 = vperm.xlu0 %293, %v172
        %v295 = vpop.permute.xlu0 %294
        %296 = vset.pattern.permute.xlu0 0
        %297 = vperm.xlu0 %296, %v173
        %v298 = vpop.permute.xlu0 %297
        %299 = vset.pattern.permute.xlu0 0
        %300 = vperm.xlu0 %299, %v174
        %v301 = vpop.permute.xlu0 %300
        %302 = vset.pattern.permute.xlu0 0
        %303 = vperm.xlu0 %302, %v175
        %v304 = vpop.permute.xlu0 %303
        %305 = vset.pattern.permute.xlu0 0
        %306 = vperm.xlu0 %305, %v176
        %v307 = vpop.permute.xlu0 %306
        %308 = vset.pattern.permute.xlu0 0
        %309 = vperm.xlu0 %308, %v177
        %v310 = vpop.permute.xlu0 %309
        %311 = vset.pattern.permute.xlu0 0
        %312 = vperm.xlu0 %311, %v178
        %v313 = vpop.permute.xlu0 %312
        %314 = vset.pattern.permute.xlu0 0
        %315 = vperm.xlu0 %314, %v179
        %v316 = vpop.permute.xlu0 %315
        %317 = vset.pattern.permute.xlu0 0
        %318 = vperm.xlu0 %317, %v180
        %v319 = vpop.permute.xlu0 %318
        %320 = vset.pattern.permute.xlu0 0
        %321 = vperm.xlu0 %320, %v181
        %v322 = vpop.permute.xlu0 %321
        %323 = vset.pattern.permute.xlu0 0
        %324 = vperm.xlu0 %323, %v182
        %v325 = vpop.permute.xlu0 %324
        %326 = vset.pattern.permute.xlu0 0
        %327 = vperm.xlu0 %326, %v183
        %v328 = vpop.permute.xlu0 %327
        %329 = vset.pattern.permute.xlu0 0
        %330 = vperm.xlu0 %329, %v184
        %v331 = vpop.permute.xlu0 %330
        %332 = vset.pattern.permute.xlu0 0
        %333 = vperm.xlu0 %332, %v185
        %v334 = vpop.permute.xlu0 %333
        %335 = vset.pattern.permute.xlu0 0
        %336 = vperm.xlu0 %335, %v186
        %v337 = vpop.permute.xlu0 %336
        %338 = vset.pattern.permute.xlu0 0
        %339 = vperm.xlu0 %338, %v187
        %v340 = vpop.permute.xlu0 %339
        %341 = vset.pattern.permute.xlu0 0
        %342 = vperm.xlu0 %341, %v188
        %v343 = vpop.permute.xlu0 %342
        %344 = vset.pattern.permute.xlu0 0
        %345 = vperm.xlu0 %344, %v189
        %v346 = vpop.permute.xlu0 %345
        %347 = vset.pattern.permute.xlu0 0
        %348 = vperm.xlu0 %347, %v190
        %v349 = vpop.permute.xlu0 %348
        %350 = vset.pattern.permute.xlu0 0
        %351 = vperm.xlu0 %350, %v191
        %v352 = vpop.permute.xlu0 %351
        %353 = vset.pattern.permute.xlu0 0
        %354 = vperm.xlu0 %353, %v192
        %v355 = vpop.permute.xlu0 %354
        %356 = vset.pattern.permute.xlu0 0
        %357 = vperm.xlu0 %356, %v193
        %v358 = vpop.permute.xlu0 %357
        %359 = vset.pattern.permute.xlu0 0
        %360 = vperm.xlu0 %359, %v194
        %v361 = vpop.permute.xlu0 %360
        %362 = vset.pattern.permute.xlu0 0
        %363 = vperm.xlu0 %362, %v195
        %v364 = vpop.permute.xlu0 %363
        %365 = vset.pattern.permute.xlu0 0
        %366 = vperm.xlu0 %365, %v196
        %v367 = vpop.permute.xlu0 %366
        %368 = vset.pattern.permute.xlu0 0
        %369 = vperm.xlu0 %368, %v197
        %v370 = vpop.permute.xlu0 %369
        %371 = vset.pattern.permute.xlu0 0
        %372 = vperm.xlu0 %371, %v198
        %v373 = vpop.permute.xlu0 %372
        %374 = vset.pattern.permute.xlu0 0
        %375 = vperm.xlu0 %374, %v199
        %v376 = vpop.permute.xlu0 %375
        %377 = vset.pattern.permute.xlu0 0
        %378 = vperm.xlu0 %377, %v200
        %v379 = vpop.permute.xlu0 %378
        %380 = vset.pattern.permute.xlu0 0
        %381 = vperm.xlu0 %380, %v201
        %v382 = vpop.permute.xlu0 %381
        %383 = vset.pattern.permute.xlu0 0
        %384 = vperm.xlu0 %383, %v202
        %v385 = vpop.permute.xlu0 %384
        %386 = vset.pattern.permute.xlu0 0
        %387 = vperm.xlu0 %386, %v203
        %v388 = vpop.permute.xlu0 %387
        %389 = vset.pattern.permute.xlu0 0
        %390 = vperm.xlu0 %389, %v204
        %v391 = vpop.permute.xlu0 %390
        %392 = vset.pattern.permute.xlu0 0
        %393 = vperm.xlu0 %392, %v205
        %v394 = vpop.permute.xlu0 %393
        %395 = vset.pattern.permute.xlu0 0
        %396 = vperm.xlu0 %395, %v206
        %v397 = vpop.permute.xlu0 %396
        %398 = vset.pattern.permute.xlu0 0
        %399 = vperm.xlu0 %398, %v207
        %v400 = vpop.permute.xlu0 %399
        %401 = vset.pattern.permute.xlu0 0
        %402 = vperm.xlu0 %401, %v208
        %v403 = vpop.permute.xlu0 %402
        %vm404 = vcmp.eq.s32.totalorder %v214, %v210
        %vm405 = vcmp.eq.s32.totalorder %v214, %v211
        %vm406 = vcmp.eq.s32.totalorder %v217, %v210
        %vm407 = vcmp.eq.s32.totalorder %v217, %v211
        %vm408 = vcmp.eq.s32.totalorder %v220, %v210
        %vm409 = vcmp.eq.s32.totalorder %v220, %v211
        %vm410 = vcmp.eq.s32.totalorder %v223, %v210
        %vm411 = vcmp.eq.s32.totalorder %v223, %v211
        %vm412 = vcmp.eq.s32.totalorder %v226, %v210
        %vm413 = vcmp.eq.s32.totalorder %v226, %v211
        %vm414 = vcmp.eq.s32.totalorder %v229, %v210
        %vm415 = vcmp.eq.s32.totalorder %v229, %v211
        %vm416 = vcmp.eq.s32.totalorder %v232, %v210
        %vm417 = vcmp.eq.s32.totalorder %v232, %v211
        %vm418 = vcmp.eq.s32.totalorder %v235, %v210
        %vm419 = vcmp.eq.s32.totalorder %v235, %v211
        %vm420 = vcmp.eq.s32.totalorder %v238, %v210
        %vm421 = vcmp.eq.s32.totalorder %v238, %v211
        %vm422 = vcmp.eq.s32.totalorder %v241, %v210
        %vm423 = vcmp.eq.s32.totalorder %v241, %v211
        %vm424 = vcmp.eq.s32.totalorder %v244, %v210
        %vm425 = vcmp.eq.s32.totalorder %v244, %v211
        %vm426 = vcmp.eq.s32.totalorder %v247, %v210
        %vm427 = vcmp.eq.s32.totalorder %v247, %v211
        %vm428 = vcmp.eq.s32.totalorder %v250, %v210
        %vm429 = vcmp.eq.s32.totalorder %v250, %v211
        %vm430 = vcmp.eq.s32.totalorder %v253, %v210
        %vm431 = vcmp.eq.s32.totalorder %v253, %v211
        %vm432 = vcmp.eq.s32.totalorder %v256, %v210
        %vm433 = vcmp.eq.s32.totalorder %v256, %v211
        %vm434 = vcmp.eq.s32.totalorder %v259, %v210
        %vm435 = vcmp.eq.s32.totalorder %v259, %v211
        %vm436 = vcmp.eq.s32.totalorder %v262, %v210
        %vm437 = vcmp.eq.s32.totalorder %v262, %v211
        %vm438 = vcmp.eq.s32.totalorder %v265, %v210
        %vm439 = vcmp.eq.s32.totalorder %v265, %v211
        %vm440 = vcmp.eq.s32.totalorder %v268, %v210
        %vm441 = vcmp.eq.s32.totalorder %v268, %v211
        %vm442 = vcmp.eq.s32.totalorder %v271, %v210
        %vm443 = vcmp.eq.s32.totalorder %v271, %v211
        %vm444 = vcmp.eq.s32.totalorder %v274, %v210
        %vm445 = vcmp.eq.s32.totalorder %v274, %v211
        %vm446 = vcmp.eq.s32.totalorder %v277, %v210
        %vm447 = vcmp.eq.s32.totalorder %v277, %v211
        %vm448 = vcmp.eq.s32.totalorder %v280, %v210
        %vm449 = vcmp.eq.s32.totalorder %v280, %v211
        %vm450 = vcmp.eq.s32.totalorder %v283, %v210
        %vm451 = vcmp.eq.s32.totalorder %v283, %v211
        %vm452 = vcmp.eq.s32.totalorder %v286, %v210
        %vm453 = vcmp.eq.s32.totalorder %v286, %v211
        %vm454 = vcmp.eq.s32.totalorder %v289, %v210
        %vm455 = vcmp.eq.s32.totalorder %v289, %v211
        %vm456 = vcmp.eq.s32.totalorder %v292, %v210
        %vm457 = vcmp.eq.s32.totalorder %v292, %v211
        %vm458 = vcmp.eq.s32.totalorder %v295, %v210
        %vm459 = vcmp.eq.s32.totalorder %v295, %v211
        %vm460 = vcmp.eq.s32.totalorder %v298, %v210
        %vm461 = vcmp.eq.s32.totalorder %v298, %v211
        %vm462 = vcmp.eq.s32.totalorder %v301, %v210
        %vm463 = vcmp.eq.s32.totalorder %v301, %v211
        %vm464 = vcmp.eq.s32.totalorder %v304, %v210
        %vm465 = vcmp.eq.s32.totalorder %v304, %v211
        %vm466 = vcmp.eq.s32.totalorder %v307, %v210
        %vm467 = vcmp.eq.s32.totalorder %v307, %v211
        %vm468 = vcmp.eq.s32.totalorder %v310, %v210
        %vm469 = vcmp.eq.s32.totalorder %v310, %v211
        %vm470 = vcmp.eq.s32.totalorder %v313, %v210
        %vm471 = vcmp.eq.s32.totalorder %v313, %v211
        %vm472 = vcmp.eq.s32.totalorder %v316, %v210
        %vm473 = vcmp.eq.s32.totalorder %v316, %v211
        %vm474 = vcmp.eq.s32.totalorder %v319, %v210
        %vm475 = vcmp.eq.s32.totalorder %v319, %v211
        %vm476 = vcmp.eq.s32.totalorder %v322, %v210
        %vm477 = vcmp.eq.s32.totalorder %v322, %v211
        %vm478 = vcmp.eq.s32.totalorder %v325, %v210
        %vm479 = vcmp.eq.s32.totalorder %v325, %v211
        %vm480 = vcmp.eq.s32.totalorder %v328, %v210
        %vm481 = vcmp.eq.s32.totalorder %v328, %v211
        %vm482 = vcmp.eq.s32.totalorder %v331, %v210
        %vm483 = vcmp.eq.s32.totalorder %v331, %v211
        %vm484 = vcmp.eq.s32.totalorder %v334, %v210
        %vm485 = vcmp.eq.s32.totalorder %v334, %v211
        %vm486 = vcmp.eq.s32.totalorder %v337, %v210
        %vm487 = vcmp.eq.s32.totalorder %v337, %v211
        %vm488 = vcmp.eq.s32.totalorder %v340, %v210
        %vm489 = vcmp.eq.s32.totalorder %v340, %v211
        %vm490 = vcmp.eq.s32.totalorder %v343, %v210
        %vm491 = vcmp.eq.s32.totalorder %v343, %v211
        %vm492 = vcmp.eq.s32.totalorder %v346, %v210
        %vm493 = vcmp.eq.s32.totalorder %v346, %v211
        %vm494 = vcmp.eq.s32.totalorder %v349, %v210
        %vm495 = vcmp.eq.s32.totalorder %v349, %v211
        %vm496 = vcmp.eq.s32.totalorder %v352, %v210
        %vm497 = vcmp.eq.s32.totalorder %v352, %v211
        %vm498 = vcmp.eq.s32.totalorder %v355, %v210
        %vm499 = vcmp.eq.s32.totalorder %v355, %v211
        %vm500 = vcmp.eq.s32.totalorder %v358, %v210
        %vm501 = vcmp.eq.s32.totalorder %v358, %v211
        %vm502 = vcmp.eq.s32.totalorder %v361, %v210
        %vm503 = vcmp.eq.s32.totalorder %v361, %v211
        %vm504 = vcmp.eq.s32.totalorder %v364, %v210
        %vm505 = vcmp.eq.s32.totalorder %v364, %v211
        %vm506 = vcmp.eq.s32.totalorder %v367, %v210
        %vm507 = vcmp.eq.s32.totalorder %v367, %v211
        %vm508 = vcmp.eq.s32.totalorder %v370, %v210
        %vm509 = vcmp.eq.s32.totalorder %v370, %v211
        %vm510 = vcmp.eq.s32.totalorder %v373, %v210
        %vm511 = vcmp.eq.s32.totalorder %v373, %v211
        %vm512 = vcmp.eq.s32.totalorder %v376, %v210
        %vm513 = vcmp.eq.s32.totalorder %v376, %v211
        %vm514 = vcmp.eq.s32.totalorder %v379, %v210
        %vm515 = vcmp.eq.s32.totalorder %v379, %v211
        %vm516 = vcmp.eq.s32.totalorder %v382, %v210
        %vm517 = vcmp.eq.s32.totalorder %v382, %v211
        %vm518 = vcmp.eq.s32.totalorder %v385, %v210
        %vm519 = vcmp.eq.s32.totalorder %v385, %v211
        %vm520 = vcmp.eq.s32.totalorder %v388, %v210
        %vm521 = vcmp.eq.s32.totalorder %v388, %v211
        %vm522 = vcmp.eq.s32.totalorder %v391, %v210
        %vm523 = vcmp.eq.s32.totalorder %v391, %v211
        %vm524 = vcmp.eq.s32.totalorder %v394, %v210
        %vm525 = vcmp.eq.s32.totalorder %v394, %v211
        %vm526 = vcmp.eq.s32.totalorder %v397, %v210
        %vm527 = vcmp.eq.s32.totalorder %v397, %v211
        %vm528 = vcmp.eq.s32.totalorder %v400, %v210
        %vm529 = vcmp.eq.s32.totalorder %v400, %v211
        %vm530 = vcmp.eq.s32.totalorder %v403, %v210
        %vm531 = vcmp.eq.s32.totalorder %v403, %v211
        %v532 = vsel %vm404, 1, 0
        %v533 = vsel %vm405, 1, 0
        %v534 = vsel %vm406, 1, 0
        %v535 = vsel %vm407, 1, 0
        %v536 = vsel %vm408, 1, 0
        %v537 = vsel %vm409, 1, 0
        %v538 = vsel %vm410, 1, 0
        %v539 = vsel %vm411, 1, 0
        %v540 = vsel %vm412, 1, 0
        %v541 = vsel %vm413, 1, 0
        %v542 = vsel %vm414, 1, 0
        %v543 = vsel %vm415, 1, 0
        %v544 = vsel %vm416, 1, 0
        %v545 = vsel %vm417, 1, 0
        %v546 = vsel %vm418, 1, 0
        %v547 = vsel %vm419, 1, 0
        %v548 = vsel %vm420, 1, 0
        %v549 = vsel %vm421, 1, 0
        %v550 = vsel %vm422, 1, 0
        %v551 = vsel %vm423, 1, 0
        %v552 = vsel %vm424, 1, 0
        %v553 = vsel %vm425, 1, 0
        %v554 = vsel %vm426, 1, 0
        %v555 = vsel %vm427, 1, 0
        %v556 = vsel %vm428, 1, 0
        %v557 = vsel %vm429, 1, 0
        %v558 = vsel %vm430, 1, 0
        %v559 = vsel %vm431, 1, 0
        %v560 = vsel %vm432, 1, 0
        %v561 = vsel %vm433, 1, 0
        %v562 = vsel %vm434, 1, 0
        %v563 = vsel %vm435, 1, 0
        %v564 = vsel %vm436, 1, 0
        %v565 = vsel %vm437, 1, 0
        %v566 = vsel %vm438, 1, 0
        %v567 = vsel %vm439, 1, 0
        %v568 = vsel %vm440, 1, 0
        %v569 = vsel %vm441, 1, 0
        %v570 = vsel %vm442, 1, 0
        %v571 = vsel %vm443, 1, 0
        %v572 = vsel %vm444, 1, 0
        %v573 = vsel %vm445, 1, 0
        %v574 = vsel %vm446, 1, 0
        %v575 = vsel %vm447, 1, 0
        %v576 = vsel %vm448, 1, 0
        %v577 = vsel %vm449, 1, 0
        %v578 = vsel %vm450, 1, 0
        %v579 = vsel %vm451, 1, 0
        %v580 = vsel %vm452, 1, 0
        %v581 = vsel %vm453, 1, 0
        %v582 = vsel %vm454, 1, 0
        %v583 = vsel %vm455, 1, 0
        %v584 = vsel %vm456, 1, 0
        %v585 = vsel %vm457, 1, 0
        %v586 = vsel %vm458, 1, 0
        %v587 = vsel %vm459, 1, 0
        %v588 = vsel %vm460, 1, 0
        %v589 = vsel %vm461, 1, 0
        %v590 = vsel %vm462, 1, 0
        %v591 = vsel %vm463, 1, 0
        %v592 = vsel %vm464, 1, 0
        %v593 = vsel %vm465, 1, 0
        %v594 = vsel %vm466, 1, 0
        %v595 = vsel %vm467, 1, 0
        %v596 = vsel %vm468, 1, 0
        %v597 = vsel %vm469, 1, 0
        %v598 = vsel %vm470, 1, 0
        %v599 = vsel %vm471, 1, 0
        %v600 = vsel %vm472, 1, 0
        %v601 = vsel %vm473, 1, 0
        %v602 = vsel %vm474, 1, 0
        %v603 = vsel %vm475, 1, 0
        %v604 = vsel %vm476, 1, 0
        %v605 = vsel %vm477, 1, 0
        %v606 = vsel %vm478, 1, 0
        %v607 = vsel %vm479, 1, 0
        %v608 = vsel %vm480, 1, 0
        %v609 = vsel %vm481, 1, 0
        %v610 = vsel %vm482, 1, 0
        %v611 = vsel %vm483, 1, 0
        %v612 = vsel %vm484, 1, 0
        %v613 = vsel %vm485, 1, 0
        %v614 = vsel %vm486, 1, 0
        %v615 = vsel %vm487, 1, 0
        %v616 = vsel %vm488, 1, 0
        %v617 = vsel %vm489, 1, 0
        %v618 = vsel %vm490, 1, 0
        %v619 = vsel %vm491, 1, 0
        %v620 = vsel %vm492, 1, 0
        %v621 = vsel %vm493, 1, 0
        %v622 = vsel %vm494, 1, 0
        %v623 = vsel %vm495, 1, 0
        %v624 = vsel %vm496, 1, 0
        %v625 = vsel %vm497, 1, 0
        %v626 = vsel %vm498, 1, 0
        %v627 = vsel %vm499, 1, 0
        %v628 = vsel %vm500, 1, 0
        %v629 = vsel %vm501, 1, 0
        %v630 = vsel %vm502, 1, 0
        %v631 = vsel %vm503, 1, 0
        %v632 = vsel %vm504, 1, 0
        %v633 = vsel %vm505, 1, 0
        %v634 = vsel %vm506, 1, 0
        %v635 = vsel %vm507, 1, 0
        %v636 = vsel %vm508, 1, 0
        %v637 = vsel %vm509, 1, 0
        %v638 = vsel %vm510, 1, 0
        %v639 = vsel %vm511, 1, 0
        %v640 = vsel %vm512, 1, 0
        %v641 = vsel %vm513, 1, 0
        %v642 = vsel %vm514, 1, 0
        %v643 = vsel %vm515, 1, 0
        %v644 = vsel %vm516, 1, 0
        %v645 = vsel %vm517, 1, 0
        %v646 = vsel %vm518, 1, 0
        %v647 = vsel %vm519, 1, 0
        %v648 = vsel %vm520, 1, 0
        %v649 = vsel %vm521, 1, 0
        %v650 = vsel %vm522, 1, 0
        %v651 = vsel %vm523, 1, 0
        %v652 = vsel %vm524, 1, 0
        %v653 = vsel %vm525, 1, 0
        %v654 = vsel %vm526, 1, 0
        %v655 = vsel %vm527, 1, 0
        %v656 = vsel %vm528, 1, 0
        %v657 = vsel %vm529, 1, 0
        %v658 = vsel %vm530, 1, 0
        %v659 = vsel %vm531, 1, 0
        %v660 = vcvt.s32.f32 %v532
        %v661 = vcvt.s32.f32 %v533
        %v662 = vcvt.s32.f32 %v534
        %v663 = vcvt.s32.f32 %v535
        %v664 = vcvt.s32.f32 %v536
        %v665 = vcvt.s32.f32 %v537
        %v666 = vcvt.s32.f32 %v538
        %v667 = vcvt.s32.f32 %v539
        %v668 = vcvt.s32.f32 %v540
        %v669 = vcvt.s32.f32 %v541
        %v670 = vcvt.s32.f32 %v542
        %v671 = vcvt.s32.f32 %v543
        %v672 = vcvt.s32.f32 %v544
        %v673 = vcvt.s32.f32 %v545
        %v674 = vcvt.s32.f32 %v546
        %v675 = vcvt.s32.f32 %v547
        %v676 = vcvt.s32.f32 %v548
        %v677 = vcvt.s32.f32 %v549
        %v678 = vcvt.s32.f32 %v550
        %v679 = vcvt.s32.f32 %v551
        %v680 = vcvt.s32.f32 %v552
        %v681 = vcvt.s32.f32 %v553
        %v682 = vcvt.s32.f32 %v554
        %v683 = vcvt.s32.f32 %v555
        %v684 = vcvt.s32.f32 %v556
        %v685 = vcvt.s32.f32 %v557
        %v686 = vcvt.s32.f32 %v558
        %v687 = vcvt.s32.f32 %v559
        %v688 = vcvt.s32.f32 %v560
        %v689 = vcvt.s32.f32 %v561
        %v690 = vcvt.s32.f32 %v562
        %v691 = vcvt.s32.f32 %v563
        %v692 = vcvt.s32.f32 %v564
        %v693 = vcvt.s32.f32 %v565
        %v694 = vcvt.s32.f32 %v566
        %v695 = vcvt.s32.f32 %v567
        %v696 = vcvt.s32.f32 %v568
        %v697 = vcvt.s32.f32 %v569
        %v698 = vcvt.s32.f32 %v570
        %v699 = vcvt.s32.f32 %v571
        %v700 = vcvt.s32.f32 %v572
        %v701 = vcvt.s32.f32 %v573
        %v702 = vcvt.s32.f32 %v574
        %v703 = vcvt.s32.f32 %v575
        %v704 = vcvt.s32.f32 %v576
        %v705 = vcvt.s32.f32 %v577
        %v706 = vcvt.s32.f32 %v578
        %v707 = vcvt.s32.f32 %v579
        %v708 = vcvt.s32.f32 %v580
        %v709 = vcvt.s32.f32 %v581
        %v710 = vcvt.s32.f32 %v582
        %v711 = vcvt.s32.f32 %v583
        %v712 = vcvt.s32.f32 %v584
        %v713 = vcvt.s32.f32 %v585
        %v714 = vcvt.s32.f32 %v586
        %v715 = vcvt.s32.f32 %v587
        %v716 = vcvt.s32.f32 %v588
        %v717 = vcvt.s32.f32 %v589
        %v718 = vcvt.s32.f32 %v590
        %v719 = vcvt.s32.f32 %v591
        %v720 = vcvt.s32.f32 %v592
        %v721 = vcvt.s32.f32 %v593
        %v722 = vcvt.s32.f32 %v594
        %v723 = vcvt.s32.f32 %v595
        %v724 = vcvt.s32.f32 %v596
        %v725 = vcvt.s32.f32 %v597
        %v726 = vcvt.s32.f32 %v598
        %v727 = vcvt.s32.f32 %v599
        %v728 = vcvt.s32.f32 %v600
        %v729 = vcvt.s32.f32 %v601
        %v730 = vcvt.s32.f32 %v602
        %v731 = vcvt.s32.f32 %v603
        %v732 = vcvt.s32.f32 %v604
        %v733 = vcvt.s32.f32 %v605
        %v734 = vcvt.s32.f32 %v606
        %v735 = vcvt.s32.f32 %v607
        %v736 = vcvt.s32.f32 %v608
        %v737 = vcvt.s32.f32 %v609
        %v738 = vcvt.s32.f32 %v610
        %v739 = vcvt.s32.f32 %v611
        %v740 = vcvt.s32.f32 %v612
        %v741 = vcvt.s32.f32 %v613
        %v742 = vcvt.s32.f32 %v614
        %v743 = vcvt.s32.f32 %v615
        %v744 = vcvt.s32.f32 %v616
        %v745 = vcvt.s32.f32 %v617
        %v746 = vcvt.s32.f32 %v618
        %v747 = vcvt.s32.f32 %v619
        %v748 = vcvt.s32.f32 %v620
        %v749 = vcvt.s32.f32 %v621
        %v750 = vcvt.s32.f32 %v622
        %v751 = vcvt.s32.f32 %v623
        %v752 = vcvt.s32.f32 %v624
        %v753 = vcvt.s32.f32 %v625
        %v754 = vcvt.s32.f32 %v626
        %v755 = vcvt.s32.f32 %v627
        %v756 = vcvt.s32.f32 %v628
        %v757 = vcvt.s32.f32 %v629
        %v758 = vcvt.s32.f32 %v630
        %v759 = vcvt.s32.f32 %v631
        %v760 = vcvt.s32.f32 %v632
        %v761 = vcvt.s32.f32 %v633
        %v762 = vcvt.s32.f32 %v634
        %v763 = vcvt.s32.f32 %v635
        %v764 = vcvt.s32.f32 %v636
        %v765 = vcvt.s32.f32 %v637
        %v766 = vcvt.s32.f32 %v638
        %v767 = vcvt.s32.f32 %v639
        %v768 = vcvt.s32.f32 %v640
        %v769 = vcvt.s32.f32 %v641
        %v770 = vcvt.s32.f32 %v642
        %v771 = vcvt.s32.f32 %v643
        %v772 = vcvt.s32.f32 %v644
        %v773 = vcvt.s32.f32 %v645
        %v774 = vcvt.s32.f32 %v646
        %v775 = vcvt.s32.f32 %v647
        %v776 = vcvt.s32.f32 %v648
        %v777 = vcvt.s32.f32 %v649
        %v778 = vcvt.s32.f32 %v650
        %v779 = vcvt.s32.f32 %v651
        %v780 = vcvt.s32.f32 %v652
        %v781 = vcvt.s32.f32 %v653
        %v782 = vcvt.s32.f32 %v654
        %v783 = vcvt.s32.f32 %v655
        %v784 = vcvt.s32.f32 %v656
        %v785 = vcvt.s32.f32 %v657
        %v786 = vcvt.s32.f32 %v658
        %v787 = vcvt.s32.f32 %v659
        %v788 = vadd.f32 %v660, 0.0
        %v789 = vadd.f32 %v661, 0.0
        %v790 = vadd.f32 %v662, 0.0
        %v791 = vadd.f32 %v663, 0.0
        %v792 = vadd.f32 %v664, 0.0
        %v793 = vadd.f32 %v665, 0.0
        %v794 = vadd.f32 %v666, 0.0
        %v795 = vadd.f32 %v667, 0.0
        %v796 = vadd.f32 %v668, 0.0
        %v797 = vadd.f32 %v669, 0.0
        %v798 = vadd.f32 %v670, 0.0
        %v799 = vadd.f32 %v671, 0.0
        %v800 = vadd.f32 %v672, 0.0
        %v801 = vadd.f32 %v673, 0.0
        %v802 = vadd.f32 %v674, 0.0
        %v803 = vadd.f32 %v675, 0.0
        %v804 = vadd.f32 %v676, 0.0
        %v805 = vadd.f32 %v677, 0.0
        %v806 = vadd.f32 %v678, 0.0
        %v807 = vadd.f32 %v679, 0.0
        %v808 = vadd.f32 %v680, 0.0
        %v809 = vadd.f32 %v681, 0.0
        %v810 = vadd.f32 %v682, 0.0
        %v811 = vadd.f32 %v683, 0.0
        %v812 = vadd.f32 %v684, 0.0
        %v813 = vadd.f32 %v685, 0.0
        %v814 = vadd.f32 %v686, 0.0
        %v815 = vadd.f32 %v687, 0.0
        %v816 = vadd.f32 %v688, 0.0
        %v817 = vadd.f32 %v689, 0.0
        %v818 = vadd.f32 %v690, 0.0
        %v819 = vadd.f32 %v691, 0.0
        %v820 = vadd.f32 %v692, 0.0
        %v821 = vadd.f32 %v693, 0.0
        %v822 = vadd.f32 %v694, 0.0
        %v823 = vadd.f32 %v695, 0.0
        %v824 = vadd.f32 %v696, 0.0
        %v825 = vadd.f32 %v697, 0.0
        %v826 = vadd.f32 %v698, 0.0
        %v827 = vadd.f32 %v699, 0.0
        %v828 = vadd.f32 %v700, 0.0
        %v829 = vadd.f32 %v701, 0.0
        %v830 = vadd.f32 %v702, 0.0
        %v831 = vadd.f32 %v703, 0.0
        %v832 = vadd.f32 %v704, 0.0
        %v833 = vadd.f32 %v705, 0.0
        %v834 = vadd.f32 %v706, 0.0
        %v835 = vadd.f32 %v707, 0.0
        %v836 = vadd.f32 %v708, 0.0
        %v837 = vadd.f32 %v709, 0.0
        %v838 = vadd.f32 %v710, 0.0
        %v839 = vadd.f32 %v711, 0.0
        %v840 = vadd.f32 %v712, 0.0
        %v841 = vadd.f32 %v713, 0.0
        %v842 = vadd.f32 %v714, 0.0
        %v843 = vadd.f32 %v715, 0.0
        %v844 = vadd.f32 %v716, 0.0
        %v845 = vadd.f32 %v717, 0.0
        %v846 = vadd.f32 %v718, 0.0
        %v847 = vadd.f32 %v719, 0.0
        %v848 = vadd.f32 %v720, 0.0
        %v849 = vadd.f32 %v721, 0.0
        %v850 = vadd.f32 %v722, 0.0
        %v851 = vadd.f32 %v723, 0.0
        %v852 = vadd.f32 %v724, 0.0
        %v853 = vadd.f32 %v725, 0.0
        %v854 = vadd.f32 %v726, 0.0
        %v855 = vadd.f32 %v727, 0.0
        %v856 = vadd.f32 %v728, 0.0
        %v857 = vadd.f32 %v729, 0.0
        %v858 = vadd.f32 %v730, 0.0
        %v859 = vadd.f32 %v731, 0.0
        %v860 = vadd.f32 %v732, 0.0
        %v861 = vadd.f32 %v733, 0.0
        %v862 = vadd.f32 %v734, 0.0
        %v863 = vadd.f32 %v735, 0.0
        %v864 = vadd.f32 %v736, 0.0
        %v865 = vadd.f32 %v737, 0.0
        %v866 = vadd.f32 %v738, 0.0
        %v867 = vadd.f32 %v739, 0.0
        %v868 = vadd.f32 %v740, 0.0
        %v869 = vadd.f32 %v741, 0.0
        %v870 = vadd.f32 %v742, 0.0
        %v871 = vadd.f32 %v743, 0.0
        %v872 = vadd.f32 %v744, 0.0
        %v873 = vadd.f32 %v745, 0.0
        %v874 = vadd.f32 %v746, 0.0
        %v875 = vadd.f32 %v747, 0.0
        %v876 = vadd.f32 %v748, 0.0
        %v877 = vadd.f32 %v749, 0.0
        %v878 = vadd.f32 %v750, 0.0
        %v879 = vadd.f32 %v751, 0.0
        %v880 = vadd.f32 %v752, 0.0
        %v881 = vadd.f32 %v753, 0.0
        %v882 = vadd.f32 %v754, 0.0
        %v883 = vadd.f32 %v755, 0.0
        %v884 = vadd.f32 %v756, 0.0
        %v885 = vadd.f32 %v757, 0.0
        %v886 = vadd.f32 %v758, 0.0
        %v887 = vadd.f32 %v759, 0.0
        %v888 = vadd.f32 %v760, 0.0
        %v889 = vadd.f32 %v761, 0.0
        %v890 = vadd.f32 %v762, 0.0
        %v891 = vadd.f32 %v763, 0.0
        %v892 = vadd.f32 %v764, 0.0
        %v893 = vadd.f32 %v765, 0.0
        %v894 = vadd.f32 %v766, 0.0
        %v895 = vadd.f32 %v767, 0.0
        %v896 = vadd.f32 %v768, 0.0
        %v897 = vadd.f32 %v769, 0.0
        %v898 = vadd.f32 %v770, 0.0
        %v899 = vadd.f32 %v771, 0.0
        %v900 = vadd.f32 %v772, 0.0
        %v901 = vadd.f32 %v773, 0.0
        %v902 = vadd.f32 %v774, 0.0
        %v903 = vadd.f32 %v775, 0.0
        %v904 = vadd.f32 %v776, 0.0
        %v905 = vadd.f32 %v777, 0.0
        %v906 = vadd.f32 %v778, 0.0
        %v907 = vadd.f32 %v779, 0.0
        %v908 = vadd.f32 %v780, 0.0
        %v909 = vadd.f32 %v781, 0.0
        %v910 = vadd.f32 %v782, 0.0
        %v911 = vadd.f32 %v783, 0.0
        %v912 = vadd.f32 %v784, 0.0
        %v913 = vadd.f32 %v785, 0.0
        %v914 = vadd.f32 %v786, 0.0
        %v915 = vadd.f32 %v787, 0.0
        %v916 = vadd.s32 %v145, 119
        %v917 = vadd.s32 %v146, 119
        %v918 = vadd.s32 %v147, 119
        %v919 = vadd.s32 %v148, 119
        %v920 = vadd.s32 %v149, 119
        %v921 = vadd.s32 %v150, 119
        %v922 = vadd.s32 %v151, 119
        %v923 = vadd.s32 %v152, 119
        %v924 = vadd.s32 %v153, 119
        %v925 = vadd.s32 %v154, 119
        %v926 = vadd.s32 %v155, 119
        %v927 = vadd.s32 %v156, 119
        %v928 = vadd.s32 %v157, 119
        %v929 = vadd.s32 %v158, 119
        %v930 = vadd.s32 %v159, 119
        %v931 = vadd.s32 %v160, 119
        %v932 = vadd.s32 %v161, 119
        %v933 = vadd.s32 %v162, 119
        %v934 = vadd.s32 %v163, 119
        %v935 = vadd.s32 %v164, 119
        %v936 = vadd.s32 %v165, 119
        %v937 = vadd.s32 %v166, 119
        %v938 = vadd.s32 %v167, 119
        %v939 = vadd.s32 %v168, 119
        %v940 = vadd.s32 %v169, 119
        %v941 = vadd.s32 %v170, 119
        %v942 = vadd.s32 %v171, 119
        %v943 = vadd.s32 %v172, 119
        %v944 = vadd.s32 %v173, 119
        %v945 = vadd.s32 %v174, 119
        %v946 = vadd.s32 %v175, 119
        %v947 = vadd.s32 %v176, 119
        %v948 = vadd.s32 %v177, 119
        %v949 = vadd.s32 %v178, 119
        %v950 = vadd.s32 %v179, 119
        %v951 = vadd.s32 %v180, 119
        %v952 = vadd.s32 %v181, 119
        %v953 = vadd.s32 %v182, 119
        %v954 = vadd.s32 %v183, 119
        %v955 = vadd.s32 %v184, 119
        %v956 = vadd.s32 %v185, 119
        %v957 = vadd.s32 %v186, 119
        %v958 = vadd.s32 %v187, 119
        %v959 = vadd.s32 %v188, 119
        %v960 = vadd.s32 %v189, 119
        %v961 = vadd.s32 %v190, 119
        %v962 = vadd.s32 %v191, 119
        %v963 = vadd.s32 %v192, 119
        %v964 = vadd.s32 %v193, 119
        %v965 = vadd.s32 %v194, 119
        %v966 = vadd.s32 %v195, 119
        %v967 = vadd.s32 %v196, 119
        %v968 = vadd.s32 %v197, 119
        %v969 = vadd.s32 %v198, 119
        %v970 = vadd.s32 %v199, 119
        %v971 = vadd.s32 %v200, 119
        %v972 = vadd.s32 %v201, 119
        %v973 = vadd.s32 %v202, 119
        %v974 = vadd.s32 %v203, 119
        %v975 = vadd.s32 %v204, 119
        %v976 = vadd.s32 %v205, 119
        %v977 = vadd.s32 %v206, 119
        %v978 = vadd.s32 %v207, 119
        %v979 = vadd.s32 %v208, 119
        %980 = vset.pattern.permute.xlu0 1
        %981 = vperm.xlu0 %980, %v916
        %v982 = vpop.permute.xlu0 %981
        %983 = vset.pattern.permute.xlu0 1
        %984 = vperm.xlu0 %983, %v917
        %v985 = vpop.permute.xlu0 %984
        %986 = vset.pattern.permute.xlu0 1
        %987 = vperm.xlu0 %986, %v918
        %v988 = vpop.permute.xlu0 %987
        %989 = vset.pattern.permute.xlu0 1
        %990 = vperm.xlu0 %989, %v919
        %v991 = vpop.permute.xlu0 %990
        %992 = vset.pattern.permute.xlu0 1
        %993 = vperm.xlu0 %992, %v920
        %v994 = vpop.permute.xlu0 %993
        %995 = vset.pattern.permute.xlu0 1
        %996 = vperm.xlu0 %995, %v921
        %v997 = vpop.permute.xlu0 %996
        %998 = vset.pattern.permute.xlu0 1
        %999 = vperm.xlu0 %998, %v922
        %v1000 = vpop.permute.xlu0 %999
        %1001 = vset.pattern.permute.xlu0 1
        %1002 = vperm.xlu0 %1001, %v923
        %v1003 = vpop.permute.xlu0 %1002
        %1004 = vset.pattern.permute.xlu0 1
        %1005 = vperm.xlu0 %1004, %v924
        %v1006 = vpop.permute.xlu0 %1005
        %1007 = vset.pattern.permute.xlu0 1
        %1008 = vperm.xlu0 %1007, %v925
        %v1009 = vpop.permute.xlu0 %1008
        %1010 = vset.pattern.permute.xlu0 1
        %1011 = vperm.xlu0 %1010, %v926
        %v1012 = vpop.permute.xlu0 %1011
        %1013 = vset.pattern.permute.xlu0 1
        %1014 = vperm.xlu0 %1013, %v927
        %v1015 = vpop.permute.xlu0 %1014
        %1016 = vset.pattern.permute.xlu0 1
        %1017 = vperm.xlu0 %1016, %v928
        %v1018 = vpop.permute.xlu0 %1017
        %1019 = vset.pattern.permute.xlu0 1
        %1020 = vperm.xlu0 %1019, %v929
        %v1021 = vpop.permute.xlu0 %1020
        %1022 = vset.pattern.permute.xlu0 1
        %1023 = vperm.xlu0 %1022, %v930
        %v1024 = vpop.permute.xlu0 %1023
        %1025 = vset.pattern.permute.xlu0 1
        %1026 = vperm.xlu0 %1025, %v931
        %v1027 = vpop.permute.xlu0 %1026
        %1028 = vset.pattern.permute.xlu0 1
        %1029 = vperm.xlu0 %1028, %v932
        %v1030 = vpop.permute.xlu0 %1029
        %1031 = vset.pattern.permute.xlu0 1
        %1032 = vperm.xlu0 %1031, %v933
        %v1033 = vpop.permute.xlu0 %1032
        %1034 = vset.pattern.permute.xlu0 1
        %1035 = vperm.xlu0 %1034, %v934
        %v1036 = vpop.permute.xlu0 %1035
        %1037 = vset.pattern.permute.xlu0 1
        %1038 = vperm.xlu0 %1037, %v935
        %v1039 = vpop.permute.xlu0 %1038
        %1040 = vset.pattern.permute.xlu0 1
        %1041 = vperm.xlu0 %1040, %v936
        %v1042 = vpop.permute.xlu0 %1041
        %1043 = vset.pattern.permute.xlu0 1
        %1044 = vperm.xlu0 %1043, %v937
        %v1045 = vpop.permute.xlu0 %1044
        %1046 = vset.pattern.permute.xlu0 1
        %1047 = vperm.xlu0 %1046, %v938
        %v1048 = vpop.permute.xlu0 %1047
        %1049 = vset.pattern.permute.xlu0 1
        %1050 = vperm.xlu0 %1049, %v939
        %v1051 = vpop.permute.xlu0 %1050
        %1052 = vset.pattern.permute.xlu0 1
        %1053 = vperm.xlu0 %1052, %v940
        %v1054 = vpop.permute.xlu0 %1053
        %1055 = vset.pattern.permute.xlu0 1
        %1056 = vperm.xlu0 %1055, %v941
        %v1057 = vpop.permute.xlu0 %1056
        %1058 = vset.pattern.permute.xlu0 1
        %1059 = vperm.xlu0 %1058, %v942
        %v1060 = vpop.permute.xlu0 %1059
        %1061 = vset.pattern.permute.xlu0 1
        %1062 = vperm.xlu0 %1061, %v943
        %v1063 = vpop.permute.xlu0 %1062
        %1064 = vset.pattern.permute.xlu0 1
        %1065 = vperm.xlu0 %1064, %v944
        %v1066 = vpop.permute.xlu0 %1065
        %1067 = vset.pattern.permute.xlu0 1
        %1068 = vperm.xlu0 %1067, %v945
        %v1069 = vpop.permute.xlu0 %1068
        %1070 = vset.pattern.permute.xlu0 1
        %1071 = vperm.xlu0 %1070, %v946
        %v1072 = vpop.permute.xlu0 %1071
        %1073 = vset.pattern.permute.xlu0 1
        %1074 = vperm.xlu0 %1073, %v947
        %v1075 = vpop.permute.xlu0 %1074
        %1076 = vset.pattern.permute.xlu0 1
        %1077 = vperm.xlu0 %1076, %v948
        %v1078 = vpop.permute.xlu0 %1077
        %1079 = vset.pattern.permute.xlu0 1
        %1080 = vperm.xlu0 %1079, %v949
        %v1081 = vpop.permute.xlu0 %1080
        %1082 = vset.pattern.permute.xlu0 1
        %1083 = vperm.xlu0 %1082, %v950
        %v1084 = vpop.permute.xlu0 %1083
        %1085 = vset.pattern.permute.xlu0 1
        %1086 = vperm.xlu0 %1085, %v951
        %v1087 = vpop.permute.xlu0 %1086
        %1088 = vset.pattern.permute.xlu0 1
        %1089 = vperm.xlu0 %1088, %v952
        %v1090 = vpop.permute.xlu0 %1089
        %1091 = vset.pattern.permute.xlu0 1
        %1092 = vperm.xlu0 %1091, %v953
        %v1093 = vpop.permute.xlu0 %1092
        %1094 = vset.pattern.permute.xlu0 1
        %1095 = vperm.xlu0 %1094, %v954
        %v1096 = vpop.permute.xlu0 %1095
        %1097 = vset.pattern.permute.xlu0 1
        %1098 = vperm.xlu0 %1097, %v955
        %v1099 = vpop.permute.xlu0 %1098
        %1100 = vset.pattern.permute.xlu0 1
        %1101 = vperm.xlu0 %1100, %v956
        %v1102 = vpop.permute.xlu0 %1101
        %1103 = vset.pattern.permute.xlu0 1
        %1104 = vperm.xlu0 %1103, %v957
        %v1105 = vpop.permute.xlu0 %1104
        %1106 = vset.pattern.permute.xlu0 1
        %1107 = vperm.xlu0 %1106, %v958
        %v1108 = vpop.permute.xlu0 %1107
        %1109 = vset.pattern.permute.xlu0 1
        %1110 = vperm.xlu0 %1109, %v959
        %v1111 = vpop.permute.xlu0 %1110
        %1112 = vset.pattern.permute.xlu0 1
        %1113 = vperm.xlu0 %1112, %v960
        %v1114 = vpop.permute.xlu0 %1113
        %1115 = vset.pattern.permute.xlu0 1
        %1116 = vperm.xlu0 %1115, %v961
        %v1117 = vpop.permute.xlu0 %1116
        %1118 = vset.pattern.permute.xlu0 1
        %1119 = vperm.xlu0 %1118, %v962
        %v1120 = vpop.permute.xlu0 %1119
        %1121 = vset.pattern.permute.xlu0 1
        %1122 = vperm.xlu0 %1121, %v963
        %v1123 = vpop.permute.xlu0 %1122
        %1124 = vset.pattern.permute.xlu0 1
        %1125 = vperm.xlu0 %1124, %v964
        %v1126 = vpop.permute.xlu0 %1125
        %1127 = vset.pattern.permute.xlu0 1
        %1128 = vperm.xlu0 %1127, %v965
        %v1129 = vpop.permute.xlu0 %1128
        %1130 = vset.pattern.permute.xlu0 1
        %1131 = vperm.xlu0 %1130, %v966
        %v1132 = vpop.permute.xlu0 %1131
        %1133 = vset.pattern.permute.xlu0 1
        %1134 = vperm.xlu0 %1133, %v967
        %v1135 = vpop.permute.xlu0 %1134
        %1136 = vset.pattern.permute.xlu0 1
        %1137 = vperm.xlu0 %1136, %v968
        %v1138 = vpop.permute.xlu0 %1137
        %1139 = vset.pattern.permute.xlu0 1
        %1140 = vperm.xlu0 %1139, %v969
        %v1141 = vpop.permute.xlu0 %1140
        %1142 = vset.pattern.permute.xlu0 1
        %1143 = vperm.xlu0 %1142, %v970
        %v1144 = vpop.permute.xlu0 %1143
        %1145 = vset.pattern.permute.xlu0 1
        %1146 = vperm.xlu0 %1145, %v971
        %v1147 = vpop.permute.xlu0 %1146
        %1148 = vset.pattern.permute.xlu0 1
        %1149 = vperm.xlu0 %1148, %v972
        %v1150 = vpop.permute.xlu0 %1149
        %1151 = vset.pattern.permute.xlu0 1
        %1152 = vperm.xlu0 %1151, %v973
        %v1153 = vpop.permute.xlu0 %1152
        %1154 = vset.pattern.permute.xlu0 1
        %1155 = vperm.xlu0 %1154, %v974
        %v1156 = vpop.permute.xlu0 %1155
        %1157 = vset.pattern.permute.xlu0 1
        %1158 = vperm.xlu0 %1157, %v975
        %v1159 = vpop.permute.xlu0 %1158
        %1160 = vset.pattern.permute.xlu0 1
        %1161 = vperm.xlu0 %1160, %v976
        %v1162 = vpop.permute.xlu0 %1161
        %1163 = vset.pattern.permute.xlu0 1
        %1164 = vperm.xlu0 %1163, %v977
        %v1165 = vpop.permute.xlu0 %1164
        %1166 = vset.pattern.permute.xlu0 1
        %1167 = vperm.xlu0 %1166, %v978
        %v1168 = vpop.permute.xlu0 %1167
        %1169 = vset.pattern.permute.xlu0 1
        %1170 = vperm.xlu0 %1169, %v979
        %v1171 = vpop.permute.xlu0 %1170
        %vm1172 = vcmp.eq.s32.totalorder %v982, %v210
        %vm1173 = vcmp.eq.s32.totalorder %v982, %v211
        %vm1174 = vcmp.eq.s32.totalorder %v985, %v210
        %vm1175 = vcmp.eq.s32.totalorder %v985, %v211
        %vm1176 = vcmp.eq.s32.totalorder %v988, %v210
        %vm1177 = vcmp.eq.s32.totalorder %v988, %v211
        %vm1178 = vcmp.eq.s32.totalorder %v991, %v210
        %vm1179 = vcmp.eq.s32.totalorder %v991, %v211
        %vm1180 = vcmp.eq.s32.totalorder %v994, %v210
        %vm1181 = vcmp.eq.s32.totalorder %v994, %v211
        %vm1182 = vcmp.eq.s32.totalorder %v997, %v210
        %vm1183 = vcmp.eq.s32.totalorder %v997, %v211
        %vm1184 = vcmp.eq.s32.totalorder %v1000, %v210
        %vm1185 = vcmp.eq.s32.totalorder %v1000, %v211
        %vm1186 = vcmp.eq.s32.totalorder %v1003, %v210
        %vm1187 = vcmp.eq.s32.totalorder %v1003, %v211
        %vm1188 = vcmp.eq.s32.totalorder %v1006, %v210
        %vm1189 = vcmp.eq.s32.totalorder %v1006, %v211
        %vm1190 = vcmp.eq.s32.totalorder %v1009, %v210
        %vm1191 = vcmp.eq.s32.totalorder %v1009, %v211
        %vm1192 = vcmp.eq.s32.totalorder %v1012, %v210
        %vm1193 = vcmp.eq.s32.totalorder %v1012, %v211
        %vm1194 = vcmp.eq.s32.totalorder %v1015, %v210
        %vm1195 = vcmp.eq.s32.totalorder %v1015, %v211
        %vm1196 = vcmp.eq.s32.totalorder %v1018, %v210
        %vm1197 = vcmp.eq.s32.totalorder %v1018, %v211
        %vm1198 = vcmp.eq.s32.totalorder %v1021, %v210
        %vm1199 = vcmp.eq.s32.totalorder %v1021, %v211
        %vm1200 = vcmp.eq.s32.totalorder %v1024, %v210
        %vm1201 = vcmp.eq.s32.totalorder %v1024, %v211
        %vm1202 = vcmp.eq.s32.totalorder %v1027, %v210
        %vm1203 = vcmp.eq.s32.totalorder %v1027, %v211
        %vm1204 = vcmp.eq.s32.totalorder %v1030, %v210
        %vm1205 = vcmp.eq.s32.totalorder %v1030, %v211
        %vm1206 = vcmp.eq.s32.totalorder %v1033, %v210
        %vm1207 = vcmp.eq.s32.totalorder %v1033, %v211
        %vm1208 = vcmp.eq.s32.totalorder %v1036, %v210
        %vm1209 = vcmp.eq.s32.totalorder %v1036, %v211
        %vm1210 = vcmp.eq.s32.totalorder %v1039, %v210
        %vm1211 = vcmp.eq.s32.totalorder %v1039, %v211
        %vm1212 = vcmp.eq.s32.totalorder %v1042, %v210
        %vm1213 = vcmp.eq.s32.totalorder %v1042, %v211
        %vm1214 = vcmp.eq.s32.totalorder %v1045, %v210
        %vm1215 = vcmp.eq.s32.totalorder %v1045, %v211
        %vm1216 = vcmp.eq.s32.totalorder %v1048, %v210
        %vm1217 = vcmp.eq.s32.totalorder %v1048, %v211
        %vm1218 = vcmp.eq.s32.totalorder %v1051, %v210
        %vm1219 = vcmp.eq.s32.totalorder %v1051, %v211
        %vm1220 = vcmp.eq.s32.totalorder %v1054, %v210
        %vm1221 = vcmp.eq.s32.totalorder %v1054, %v211
        %vm1222 = vcmp.eq.s32.totalorder %v1057, %v210
        %vm1223 = vcmp.eq.s32.totalorder %v1057, %v211
        %vm1224 = vcmp.eq.s32.totalorder %v1060, %v210
        %vm1225 = vcmp.eq.s32.totalorder %v1060, %v211
        %vm1226 = vcmp.eq.s32.totalorder %v1063, %v210
        %vm1227 = vcmp.eq.s32.totalorder %v1063, %v211
        %vm1228 = vcmp.eq.s32.totalorder %v1066, %v210
        %vm1229 = vcmp.eq.s32.totalorder %v1066, %v211
        %vm1230 = vcmp.eq.s32.totalorder %v1069, %v210
        %vm1231 = vcmp.eq.s32.totalorder %v1069, %v211
        %vm1232 = vcmp.eq.s32.totalorder %v1072, %v210
        %vm1233 = vcmp.eq.s32.totalorder %v1072, %v211
        %vm1234 = vcmp.eq.s32.totalorder %v1075, %v210
        %vm1235 = vcmp.eq.s32.totalorder %v1075, %v211
        %vm1236 = vcmp.eq.s32.totalorder %v1078, %v210
        %vm1237 = vcmp.eq.s32.totalorder %v1078, %v211
        %vm1238 = vcmp.eq.s32.totalorder %v1081, %v210
        %vm1239 = vcmp.eq.s32.totalorder %v1081, %v211
        %vm1240 = vcmp.eq.s32.totalorder %v1084, %v210
        %vm1241 = vcmp.eq.s32.totalorder %v1084, %v211
        %vm1242 = vcmp.eq.s32.totalorder %v1087, %v210
        %vm1243 = vcmp.eq.s32.totalorder %v1087, %v211
        %vm1244 = vcmp.eq.s32.totalorder %v1090, %v210
        %vm1245 = vcmp.eq.s32.totalorder %v1090, %v211
        %vm1246 = vcmp.eq.s32.totalorder %v1093, %v210
        %vm1247 = vcmp.eq.s32.totalorder %v1093, %v211
        %vm1248 = vcmp.eq.s32.totalorder %v1096, %v210
        %vm1249 = vcmp.eq.s32.totalorder %v1096, %v211
        %vm1250 = vcmp.eq.s32.totalorder %v1099, %v210
        %vm1251 = vcmp.eq.s32.totalorder %v1099, %v211
        %vm1252 = vcmp.eq.s32.totalorder %v1102, %v210
        %vm1253 = vcmp.eq.s32.totalorder %v1102, %v211
        %vm1254 = vcmp.eq.s32.totalorder %v1105, %v210
        %vm1255 = vcmp.eq.s32.totalorder %v1105, %v211
        %vm1256 = vcmp.eq.s32.totalorder %v1108, %v210
        %vm1257 = vcmp.eq.s32.totalorder %v1108, %v211
        %vm1258 = vcmp.eq.s32.totalorder %v1111, %v210
        %vm1259 = vcmp.eq.s32.totalorder %v1111, %v211
        %vm1260 = vcmp.eq.s32.totalorder %v1114, %v210
        %vm1261 = vcmp.eq.s32.totalorder %v1114, %v211
        %vm1262 = vcmp.eq.s32.totalorder %v1117, %v210
        %vm1263 = vcmp.eq.s32.totalorder %v1117, %v211
        %vm1264 = vcmp.eq.s32.totalorder %v1120, %v210
        %vm1265 = vcmp.eq.s32.totalorder %v1120, %v211
        %vm1266 = vcmp.eq.s32.totalorder %v1123, %v210
        %vm1267 = vcmp.eq.s32.totalorder %v1123, %v211
        %vm1268 = vcmp.eq.s32.totalorder %v1126, %v210
        %vm1269 = vcmp.eq.s32.totalorder %v1126, %v211
        %vm1270 = vcmp.eq.s32.totalorder %v1129, %v210
        %vm1271 = vcmp.eq.s32.totalorder %v1129, %v211
        %vm1272 = vcmp.eq.s32.totalorder %v1132, %v210
        %vm1273 = vcmp.eq.s32.totalorder %v1132, %v211
        %vm1274 = vcmp.eq.s32.totalorder %v1135, %v210
        %vm1275 = vcmp.eq.s32.totalorder %v1135, %v211
        %vm1276 = vcmp.eq.s32.totalorder %v1138, %v210
        %vm1277 = vcmp.eq.s32.totalorder %v1138, %v211
        %vm1278 = vcmp.eq.s32.totalorder %v1141, %v210
        %vm1279 = vcmp.eq.s32.totalorder %v1141, %v211
        %vm1280 = vcmp.eq.s32.totalorder %v1144, %v210
        %vm1281 = vcmp.eq.s32.totalorder %v1144, %v211
        %vm1282 = vcmp.eq.s32.totalorder %v1147, %v210
        %vm1283 = vcmp.eq.s32.totalorder %v1147, %v211
        %vm1284 = vcmp.eq.s32.totalorder %v1150, %v210
        %vm1285 = vcmp.eq.s32.totalorder %v1150, %v211
        %vm1286 = vcmp.eq.s32.totalorder %v1153, %v210
        %vm1287 = vcmp.eq.s32.totalorder %v1153, %v211
        %vm1288 = vcmp.eq.s32.totalorder %v1156, %v210
        %vm1289 = vcmp.eq.s32.totalorder %v1156, %v211
        %vm1290 = vcmp.eq.s32.totalorder %v1159, %v210
        %vm1291 = vcmp.eq.s32.totalorder %v1159, %v211
        %vm1292 = vcmp.eq.s32.totalorder %v1162, %v210
        %vm1293 = vcmp.eq.s32.totalorder %v1162, %v211
        %vm1294 = vcmp.eq.s32.totalorder %v1165, %v210
        %vm1295 = vcmp.eq.s32.totalorder %v1165, %v211
        %vm1296 = vcmp.eq.s32.totalorder %v1168, %v210
        %vm1297 = vcmp.eq.s32.totalorder %v1168, %v211
        %vm1298 = vcmp.eq.s32.totalorder %v1171, %v210
        %vm1299 = vcmp.eq.s32.totalorder %v1171, %v211
        %v1300 = vsel %vm1172, 1, 0
        %v1301 = vsel %vm1173, 1, 0
        %v1302 = vsel %vm1174, 1, 0
        %v1303 = vsel %vm1175, 1, 0
        %v1304 = vsel %vm1176, 1, 0
        %v1305 = vsel %vm1177, 1, 0
        %v1306 = vsel %vm1178, 1, 0
        %v1307 = vsel %vm1179, 1, 0
        %v1308 = vsel %vm1180, 1, 0
        %v1309 = vsel %vm1181, 1, 0
        %v1310 = vsel %vm1182, 1, 0
        %v1311 = vsel %vm1183, 1, 0
        %v1312 = vsel %vm1184, 1, 0
        %v1313 = vsel %vm1185, 1, 0
        %v1314 = vsel %vm1186, 1, 0
        %v1315 = vsel %vm1187, 1, 0
        %v1316 = vsel %vm1188, 1, 0
        %v1317 = vsel %vm1189, 1, 0
        %v1318 = vsel %vm1190, 1, 0
        %v1319 = vsel %vm1191, 1, 0
        %v1320 = vsel %vm1192, 1, 0
        %v1321 = vsel %vm1193, 1, 0
        %v1322 = vsel %vm1194, 1, 0
        %v1323 = vsel %vm1195, 1, 0
        %v1324 = vsel %vm1196, 1, 0
        %v1325 = vsel %vm1197, 1, 0
        %v1326 = vsel %vm1198, 1, 0
        %v1327 = vsel %vm1199, 1, 0
        %v1328 = vsel %vm1200, 1, 0
        %v1329 = vsel %vm1201, 1, 0
        %v1330 = vsel %vm1202, 1, 0
        %v1331 = vsel %vm1203, 1, 0
        %v1332 = vsel %vm1204, 1, 0
        %v1333 = vsel %vm1205, 1, 0
        %v1334 = vsel %vm1206, 1, 0
        %v1335 = vsel %vm1207, 1, 0
        %v1336 = vsel %vm1208, 1, 0
        %v1337 = vsel %vm1209, 1, 0
        %v1338 = vsel %vm1210, 1, 0
        %v1339 = vsel %vm1211, 1, 0
        %v1340 = vsel %vm1212, 1, 0
        %v1341 = vsel %vm1213, 1, 0
        %v1342 = vsel %vm1214, 1, 0
        %v1343 = vsel %vm1215, 1, 0
        %v1344 = vsel %vm1216, 1, 0
        %v1345 = vsel %vm1217, 1, 0
        %v1346 = vsel %vm1218, 1, 0
        %v1347 = vsel %vm1219, 1, 0
        %v1348 = vsel %vm1220, 1, 0
        %v1349 = vsel %vm1221, 1, 0
        %v1350 = vsel %vm1222, 1, 0
        %v1351 = vsel %vm1223, 1, 0
        %v1352 = vsel %vm1224, 1, 0
        %v1353 = vsel %vm1225, 1, 0
        %v1354 = vsel %vm1226, 1, 0
        %v1355 = vsel %vm1227, 1, 0
        %v1356 = vsel %vm1228, 1, 0
        %v1357 = vsel %vm1229, 1, 0
        %v1358 = vsel %vm1230, 1, 0
        %v1359 = vsel %vm1231, 1, 0
        %v1360 = vsel %vm1232, 1, 0
        %v1361 = vsel %vm1233, 1, 0
        %v1362 = vsel %vm1234, 1, 0
        %v1363 = vsel %vm1235, 1, 0
        %v1364 = vsel %vm1236, 1, 0
        %v1365 = vsel %vm1237, 1, 0
        %v1366 = vsel %vm1238, 1, 0
        %v1367 = vsel %vm1239, 1, 0
        %v1368 = vsel %vm1240, 1, 0
        %v1369 = vsel %vm1241, 1, 0
        %v1370 = vsel %vm1242, 1, 0
        %v1371 = vsel %vm1243, 1, 0
        %v1372 = vsel %vm1244, 1, 0
        %v1373 = vsel %vm1245, 1, 0
        %v1374 = vsel %vm1246, 1, 0
        %v1375 = vsel %vm1247, 1, 0
        %v1376 = vsel %vm1248, 1, 0
        %v1377 = vsel %vm1249, 1, 0
        %v1378 = vsel %vm1250, 1, 0
        %v1379 = vsel %vm1251, 1, 0
        %v1380 = vsel %vm1252, 1, 0
        %v1381 = vsel %vm1253, 1, 0
        %v1382 = vsel %vm1254, 1, 0
        %v1383 = vsel %vm1255, 1, 0
        %v1384 = vsel %vm1256, 1, 0
        %v1385 = vsel %vm1257, 1, 0
        %v1386 = vsel %vm1258, 1, 0
        %v1387 = vsel %vm1259, 1, 0
        %v1388 = vsel %vm1260, 1, 0
        %v1389 = vsel %vm1261, 1, 0
        %v1390 = vsel %vm1262, 1, 0
        %v1391 = vsel %vm1263, 1, 0
        %v1392 = vsel %vm1264, 1, 0
        %v1393 = vsel %vm1265, 1, 0
        %v1394 = vsel %vm1266, 1, 0
        %v1395 = vsel %vm1267, 1, 0
        %v1396 = vsel %vm1268, 1, 0
        %v1397 = vsel %vm1269, 1, 0
        %v1398 = vsel %vm1270, 1, 0
        %v1399 = vsel %vm1271, 1, 0
        %v1400 = vsel %vm1272, 1, 0
        %v1401 = vsel %vm1273, 1, 0
        %v1402 = vsel %vm1274, 1, 0
        %v1403 = vsel %vm1275, 1, 0
        %v1404 = vsel %vm1276, 1, 0
        %v1405 = vsel %vm1277, 1, 0
        %v1406 = vsel %vm1278, 1, 0
        %v1407 = vsel %vm1279, 1, 0
        %v1408 = vsel %vm1280, 1, 0
        %v1409 = vsel %vm1281, 1, 0
        %v1410 = vsel %vm1282, 1, 0
        %v1411 = vsel %vm1283, 1, 0
        %v1412 = vsel %vm1284, 1, 0
        %v1413 = vsel %vm1285, 1, 0
        %v1414 = vsel %vm1286, 1, 0
        %v1415 = vsel %vm1287, 1, 0
        %v1416 = vsel %vm1288, 1, 0
        %v1417 = vsel %vm1289, 1, 0
        %v1418 = vsel %vm1290, 1, 0
        %v1419 = vsel %vm1291, 1, 0
        %v1420 = vsel %vm1292, 1, 0
        %v1421 = vsel %vm1293, 1, 0
        %v1422 = vsel %vm1294, 1, 0
        %v1423 = vsel %vm1295, 1, 0
        %v1424 = vsel %vm1296, 1, 0
        %v1425 = vsel %vm1297, 1, 0
        %v1426 = vsel %vm1298, 1, 0
        %v1427 = vsel %vm1299, 1, 0
        %v1428 = vcvt.s32.f32 %v1300
        %v1429 = vcvt.s32.f32 %v1301
        %v1430 = vcvt.s32.f32 %v1302
        %v1431 = vcvt.s32.f32 %v1303
        %v1432 = vcvt.s32.f32 %v1304
        %v1433 = vcvt.s32.f32 %v1305
        %v1434 = vcvt.s32.f32 %v1306
        %v1435 = vcvt.s32.f32 %v1307
        %v1436 = vcvt.s32.f32 %v1308
        %v1437 = vcvt.s32.f32 %v1309
        %v1438 = vcvt.s32.f32 %v1310
        %v1439 = vcvt.s32.f32 %v1311
        %v1440 = vcvt.s32.f32 %v1312
        %v1441 = vcvt.s32.f32 %v1313
        %v1442 = vcvt.s32.f32 %v1314
        %v1443 = vcvt.s32.f32 %v1315
        %v1444 = vcvt.s32.f32 %v1316
        %v1445 = vcvt.s32.f32 %v1317
        %v1446 = vcvt.s32.f32 %v1318
        %v1447 = vcvt.s32.f32 %v1319
        %v1448 = vcvt.s32.f32 %v1320
        %v1449 = vcvt.s32.f32 %v1321
        %v1450 = vcvt.s32.f32 %v1322
        %v1451 = vcvt.s32.f32 %v1323
        %v1452 = vcvt.s32.f32 %v1324
        %v1453 = vcvt.s32.f32 %v1325
        %v1454 = vcvt.s32.f32 %v1326
        %v1455 = vcvt.s32.f32 %v1327
        %v1456 = vcvt.s32.f32 %v1328
        %v1457 = vcvt.s32.f32 %v1329
        %v1458 = vcvt.s32.f32 %v1330
        %v1459 = vcvt.s32.f32 %v1331
        %v1460 = vcvt.s32.f32 %v1332
        %v1461 = vcvt.s32.f32 %v1333
        %v1462 = vcvt.s32.f32 %v1334
        %v1463 = vcvt.s32.f32 %v1335
        %v1464 = vcvt.s32.f32 %v1336
        %v1465 = vcvt.s32.f32 %v1337
        %v1466 = vcvt.s32.f32 %v1338
        %v1467 = vcvt.s32.f32 %v1339
        %v1468 = vcvt.s32.f32 %v1340
        %v1469 = vcvt.s32.f32 %v1341
        %v1470 = vcvt.s32.f32 %v1342
        %v1471 = vcvt.s32.f32 %v1343
        %v1472 = vcvt.s32.f32 %v1344
        %v1473 = vcvt.s32.f32 %v1345
        %v1474 = vcvt.s32.f32 %v1346
        %v1475 = vcvt.s32.f32 %v1347
        %v1476 = vcvt.s32.f32 %v1348
        %v1477 = vcvt.s32.f32 %v1349
        %v1478 = vcvt.s32.f32 %v1350
        %v1479 = vcvt.s32.f32 %v1351
        %v1480 = vcvt.s32.f32 %v1352
        %v1481 = vcvt.s32.f32 %v1353
        %v1482 = vcvt.s32.f32 %v1354
        %v1483 = vcvt.s32.f32 %v1355
        %v1484 = vcvt.s32.f32 %v1356
        %v1485 = vcvt.s32.f32 %v1357
        %v1486 = vcvt.s32.f32 %v1358
        %v1487 = vcvt.s32.f32 %v1359
        %v1488 = vcvt.s32.f32 %v1360
        %v1489 = vcvt.s32.f32 %v1361
        %v1490 = vcvt.s32.f32 %v1362
        %v1491 = vcvt.s32.f32 %v1363
        %v1492 = vcvt.s32.f32 %v1364
        %v1493 = vcvt.s32.f32 %v1365
        %v1494 = vcvt.s32.f32 %v1366
        %v1495 = vcvt.s32.f32 %v1367
        %v1496 = vcvt.s32.f32 %v1368
        %v1497 = vcvt.s32.f32 %v1369
        %v1498 = vcvt.s32.f32 %v1370
        %v1499 = vcvt.s32.f32 %v1371
        %v1500 = vcvt.s32.f32 %v1372
        %v1501 = vcvt.s32.f32 %v1373
        %v1502 = vcvt.s32.f32 %v1374
        %v1503 = vcvt.s32.f32 %v1375
        %v1504 = vcvt.s32.f32 %v1376
        %v1505 = vcvt.s32.f32 %v1377
        %v1506 = vcvt.s32.f32 %v1378
        %v1507 = vcvt.s32.f32 %v1379
        %v1508 = vcvt.s32.f32 %v1380
        %v1509 = vcvt.s32.f32 %v1381
        %v1510 = vcvt.s32.f32 %v1382
        %v1511 = vcvt.s32.f32 %v1383
        %v1512 = vcvt.s32.f32 %v1384
        %v1513 = vcvt.s32.f32 %v1385
        %v1514 = vcvt.s32.f32 %v1386
        %v1515 = vcvt.s32.f32 %v1387
        %v1516 = vcvt.s32.f32 %v1388
        %v1517 = vcvt.s32.f32 %v1389
        %v1518 = vcvt.s32.f32 %v1390
        %v1519 = vcvt.s32.f32 %v1391
        %v1520 = vcvt.s32.f32 %v1392
        %v1521 = vcvt.s32.f32 %v1393
        %v1522 = vcvt.s32.f32 %v1394
        %v1523 = vcvt.s32.f32 %v1395
        %v1524 = vcvt.s32.f32 %v1396
        %v1525 = vcvt.s32.f32 %v1397
        %v1526 = vcvt.s32.f32 %v1398
        %v1527 = vcvt.s32.f32 %v1399
        %v1528 = vcvt.s32.f32 %v1400
        %v1529 = vcvt.s32.f32 %v1401
        %v1530 = vcvt.s32.f32 %v1402
        %v1531 = vcvt.s32.f32 %v1403
        %v1532 = vcvt.s32.f32 %v1404
        %v1533 = vcvt.s32.f32 %v1405
        %v1534 = vcvt.s32.f32 %v1406
        %v1535 = vcvt.s32.f32 %v1407
        %v1536 = vcvt.s32.f32 %v1408
        %v1537 = vcvt.s32.f32 %v1409
        %v1538 = vcvt.s32.f32 %v1410
        %v1539 = vcvt.s32.f32 %v1411
        %v1540 = vcvt.s32.f32 %v1412
        %v1541 = vcvt.s32.f32 %v1413
        %v1542 = vcvt.s32.f32 %v1414
        %v1543 = vcvt.s32.f32 %v1415
        %v1544 = vcvt.s32.f32 %v1416
        %v1545 = vcvt.s32.f32 %v1417
        %v1546 = vcvt.s32.f32 %v1418
        %v1547 = vcvt.s32.f32 %v1419
        %v1548 = vcvt.s32.f32 %v1420
        %v1549 = vcvt.s32.f32 %v1421
        %v1550 = vcvt.s32.f32 %v1422
        %v1551 = vcvt.s32.f32 %v1423
        %v1552 = vcvt.s32.f32 %v1424
        %v1553 = vcvt.s32.f32 %v1425
        %v1554 = vcvt.s32.f32 %v1426
        %v1555 = vcvt.s32.f32 %v1427
        %v1556 = vadd.f32 %v788, %v1428
        %v1557 = vadd.f32 %v789, %v1429
        %v1558 = vadd.f32 %v790, %v1430
        %v1559 = vadd.f32 %v791, %v1431
        %v1560 = vadd.f32 %v792, %v1432
        %v1561 = vadd.f32 %v793, %v1433
        %v1562 = vadd.f32 %v794, %v1434
        %v1563 = vadd.f32 %v795, %v1435
        %v1564 = vadd.f32 %v796, %v1436
        %v1565 = vadd.f32 %v797, %v1437
        %v1566 = vadd.f32 %v798, %v1438
        %v1567 = vadd.f32 %v799, %v1439
        %v1568 = vadd.f32 %v800, %v1440
        %v1569 = vadd.f32 %v801, %v1441
        %v1570 = vadd.f32 %v802, %v1442
        %v1571 = vadd.f32 %v803, %v1443
        %v1572 = vadd.f32 %v804, %v1444
        %v1573 = vadd.f32 %v805, %v1445
        %v1574 = vadd.f32 %v806, %v1446
        %v1575 = vadd.f32 %v807, %v1447
        %v1576 = vadd.f32 %v808, %v1448
        %v1577 = vadd.f32 %v809, %v1449
        %v1578 = vadd.f32 %v810, %v1450
        %v1579 = vadd.f32 %v811, %v1451
        %v1580 = vadd.f32 %v812, %v1452
        %v1581 = vadd.f32 %v813, %v1453
        %v1582 = vadd.f32 %v814, %v1454
        %v1583 = vadd.f32 %v815, %v1455
        %v1584 = vadd.f32 %v816, %v1456
        %v1585 = vadd.f32 %v817, %v1457
        %v1586 = vadd.f32 %v818, %v1458
        %v1587 = vadd.f32 %v819, %v1459
        %v1588 = vadd.f32 %v820, %v1460
        %v1589 = vadd.f32 %v821, %v1461
        %v1590 = vadd.f32 %v822, %v1462
        %v1591 = vadd.f32 %v823, %v1463
        %v1592 = vadd.f32 %v824, %v1464
        %v1593 = vadd.f32 %v825, %v1465
        %v1594 = vadd.f32 %v826, %v1466
        %v1595 = vadd.f32 %v827, %v1467
        %v1596 = vadd.f32 %v828, %v1468
        %v1597 = vadd.f32 %v829, %v1469
        %v1598 = vadd.f32 %v830, %v1470
        %v1599 = vadd.f32 %v831, %v1471
        %v1600 = vadd.f32 %v832, %v1472
        %v1601 = vadd.f32 %v833, %v1473
        %v1602 = vadd.f32 %v834, %v1474
        %v1603 = vadd.f32 %v835, %v1475
        %v1604 = vadd.f32 %v836, %v1476
        %v1605 = vadd.f32 %v837, %v1477
        %v1606 = vadd.f32 %v838, %v1478
        %v1607 = vadd.f32 %v839, %v1479
        %v1608 = vadd.f32 %v840, %v1480
        %v1609 = vadd.f32 %v841, %v1481
        %v1610 = vadd.f32 %v842, %v1482
        %v1611 = vadd.f32 %v843, %v1483
        %v1612 = vadd.f32 %v844, %v1484
        %v1613 = vadd.f32 %v845, %v1485
        %v1614 = vadd.f32 %v846, %v1486
        %v1615 = vadd.f32 %v847, %v1487
        %v1616 = vadd.f32 %v848, %v1488
        %v1617 = vadd.f32 %v849, %v1489
        %v1618 = vadd.f32 %v850, %v1490
        %v1619 = vadd.f32 %v851, %v1491
        %v1620 = vadd.f32 %v852, %v1492
        %v1621 = vadd.f32 %v853, %v1493
        %v1622 = vadd.f32 %v854, %v1494
        %v1623 = vadd.f32 %v855, %v1495
        %v1624 = vadd.f32 %v856, %v1496
        %v1625 = vadd.f32 %v857, %v1497
        %v1626 = vadd.f32 %v858, %v1498
        %v1627 = vadd.f32 %v859, %v1499
        %v1628 = vadd.f32 %v860, %v1500
        %v1629 = vadd.f32 %v861, %v1501
        %v1630 = vadd.f32 %v862, %v1502
        %v1631 = vadd.f32 %v863, %v1503
        %v1632 = vadd.f32 %v864, %v1504
        %v1633 = vadd.f32 %v865, %v1505
        %v1634 = vadd.f32 %v866, %v1506
        %v1635 = vadd.f32 %v867, %v1507
        %v1636 = vadd.f32 %v868, %v1508
        %v1637 = vadd.f32 %v869, %v1509
        %v1638 = vadd.f32 %v870, %v1510
        %v1639 = vadd.f32 %v871, %v1511
        %v1640 = vadd.f32 %v872, %v1512
        %v1641 = vadd.f32 %v873, %v1513
        %v1642 = vadd.f32 %v874, %v1514
        %v1643 = vadd.f32 %v875, %v1515
        %v1644 = vadd.f32 %v876, %v1516
        %v1645 = vadd.f32 %v877, %v1517
        %v1646 = vadd.f32 %v878, %v1518
        %v1647 = vadd.f32 %v879, %v1519
        %v1648 = vadd.f32 %v880, %v1520
        %v1649 = vadd.f32 %v881, %v1521
        %v1650 = vadd.f32 %v882, %v1522
        %v1651 = vadd.f32 %v883, %v1523
        %v1652 = vadd.f32 %v884, %v1524
        %v1653 = vadd.f32 %v885, %v1525
        %v1654 = vadd.f32 %v886, %v1526
        %v1655 = vadd.f32 %v887, %v1527
        %v1656 = vadd.f32 %v888, %v1528
        %v1657 = vadd.f32 %v889, %v1529
        %v1658 = vadd.f32 %v890, %v1530
        %v1659 = vadd.f32 %v891, %v1531
        %v1660 = vadd.f32 %v892, %v1532
        %v1661 = vadd.f32 %v893, %v1533
        %v1662 = vadd.f32 %v894, %v1534
        %v1663 = vadd.f32 %v895, %v1535
        %v1664 = vadd.f32 %v896, %v1536
        %v1665 = vadd.f32 %v897, %v1537
        %v1666 = vadd.f32 %v898, %v1538
        %v1667 = vadd.f32 %v899, %v1539
        %v1668 = vadd.f32 %v900, %v1540
        %v1669 = vadd.f32 %v901, %v1541
        %v1670 = vadd.f32 %v902, %v1542
        %v1671 = vadd.f32 %v903, %v1543
        %v1672 = vadd.f32 %v904, %v1544
        %v1673 = vadd.f32 %v905, %v1545
        %v1674 = vadd.f32 %v906, %v1546
        %v1675 = vadd.f32 %v907, %v1547
        %v1676 = vadd.f32 %v908, %v1548
        %v1677 = vadd.f32 %v909, %v1549
        %v1678 = vadd.f32 %v910, %v1550
        %v1679 = vadd.f32 %v911, %v1551
        %v1680 = vadd.f32 %v912, %v1552
        %v1681 = vadd.f32 %v913, %v1553
        %v1682 = vadd.f32 %v914, %v1554
        %v1683 = vadd.f32 %v915, %v1555
        %v1684 = vadd.s32 %v145, 123
        %v1685 = vadd.s32 %v146, 123
        %v1686 = vadd.s32 %v147, 123
        %v1687 = vadd.s32 %v148, 123
        %v1688 = vadd.s32 %v149, 123
        %v1689 = vadd.s32 %v150, 123
        %v1690 = vadd.s32 %v151, 123
        %v1691 = vadd.s32 %v152, 123
        %v1692 = vadd.s32 %v153, 123
        %v1693 = vadd.s32 %v154, 123
        %v1694 = vadd.s32 %v155, 123
        %v1695 = vadd.s32 %v156, 123
        %v1696 = vadd.s32 %v157, 123
        %v1697 = vadd.s32 %v158, 123
        %v1698 = vadd.s32 %v159, 123
        %v1699 = vadd.s32 %v160, 123
        %v1700 = vadd.s32 %v161, 123
        %v1701 = vadd.s32 %v162, 123
        %v1702 = vadd.s32 %v163, 123
        %v1703 = vadd.s32 %v164, 123
        %v1704 = vadd.s32 %v165, 123
        %v1705 = vadd.s32 %v166, 123
        %v1706 = vadd.s32 %v167, 123
        %v1707 = vadd.s32 %v168, 123
        %v1708 = vadd.s32 %v169, 123
        %v1709 = vadd.s32 %v170, 123
        %v1710 = vadd.s32 %v171, 123
        %v1711 = vadd.s32 %v172, 123
        %v1712 = vadd.s32 %v173, 123
        %v1713 = vadd.s32 %v174, 123
        %v1714 = vadd.s32 %v175, 123
        %v1715 = vadd.s32 %v176, 123
        %v1716 = vadd.s32 %v177, 123
        %v1717 = vadd.s32 %v178, 123
        %v1718 = vadd.s32 %v179, 123
        %v1719 = vadd.s32 %v180, 123
        %v1720 = vadd.s32 %v181, 123
        %v1721 = vadd.s32 %v182, 123
        %v1722 = vadd.s32 %v183, 123
        %v1723 = vadd.s32 %v184, 123
        %v1724 = vadd.s32 %v185, 123
        %v1725 = vadd.s32 %v186, 123
        %v1726 = vadd.s32 %v187, 123
        %v1727 = vadd.s32 %v188, 123
        %v1728 = vadd.s32 %v189, 123
        %v1729 = vadd.s32 %v190, 123
        %v1730 = vadd.s32 %v191, 123
        %v1731 = vadd.s32 %v192, 123
        %v1732 = vadd.s32 %v193, 123
        %v1733 = vadd.s32 %v194, 123
        %v1734 = vadd.s32 %v195, 123
        %v1735 = vadd.s32 %v196, 123
        %v1736 = vadd.s32 %v197, 123
        %v1737 = vadd.s32 %v198, 123
        %v1738 = vadd.s32 %v199, 123
        %v1739 = vadd.s32 %v200, 123
        %v1740 = vadd.s32 %v201, 123
        %v1741 = vadd.s32 %v202, 123
        %v1742 = vadd.s32 %v203, 123
        %v1743 = vadd.s32 %v204, 123
        %v1744 = vadd.s32 %v205, 123
        %v1745 = vadd.s32 %v206, 123
        %v1746 = vadd.s32 %v207, 123
        %v1747 = vadd.s32 %v208, 123
        %1748 = vset.pattern.permute.xlu0 2
        %1749 = vperm.xlu0 %1748, %v1684
        %v1750 = vpop.permute.xlu0 %1749
        %1751 = vset.pattern.permute.xlu0 2
        %1752 = vperm.xlu0 %1751, %v1685
        %v1753 = vpop.permute.xlu0 %1752
        %1754 = vset.pattern.permute.xlu0 2
        %1755 = vperm.xlu0 %1754, %v1686
        %v1756 = vpop.permute.xlu0 %1755
        %1757 = vset.pattern.permute.xlu0 2
        %1758 = vperm.xlu0 %1757, %v1687
        %v1759 = vpop.permute.xlu0 %1758
        %1760 = vset.pattern.permute.xlu0 2
        %1761 = vperm.xlu0 %1760, %v1688
        %v1762 = vpop.permute.xlu0 %1761
        %1763 = vset.pattern.permute.xlu0 2
        %1764 = vperm.xlu0 %1763, %v1689
        %v1765 = vpop.permute.xlu0 %1764
        %1766 = vset.pattern.permute.xlu0 2
        %1767 = vperm.xlu0 %1766, %v1690
        %v1768 = vpop.permute.xlu0 %1767
        %1769 = vset.pattern.permute.xlu0 2
        %1770 = vperm.xlu0 %1769, %v1691
        %v1771 = vpop.permute.xlu0 %1770
        %1772 = vset.pattern.permute.xlu0 2
        %1773 = vperm.xlu0 %1772, %v1692
        %v1774 = vpop.permute.xlu0 %1773
        %1775 = vset.pattern.permute.xlu0 2
        %1776 = vperm.xlu0 %1775, %v1693
        %v1777 = vpop.permute.xlu0 %1776
        %1778 = vset.pattern.permute.xlu0 2
        %1779 = vperm.xlu0 %1778, %v1694
        %v1780 = vpop.permute.xlu0 %1779
        %1781 = vset.pattern.permute.xlu0 2
        %1782 = vperm.xlu0 %1781, %v1695
        %v1783 = vpop.permute.xlu0 %1782
        %1784 = vset.pattern.permute.xlu0 2
        %1785 = vperm.xlu0 %1784, %v1696
        %v1786 = vpop.permute.xlu0 %1785
        %1787 = vset.pattern.permute.xlu0 2
        %1788 = vperm.xlu0 %1787, %v1697
        %v1789 = vpop.permute.xlu0 %1788
        %1790 = vset.pattern.permute.xlu0 2
        %1791 = vperm.xlu0 %1790, %v1698
        %v1792 = vpop.permute.xlu0 %1791
        %1793 = vset.pattern.permute.xlu0 2
        %1794 = vperm.xlu0 %1793, %v1699
        %v1795 = vpop.permute.xlu0 %1794
        %1796 = vset.pattern.permute.xlu0 2
        %1797 = vperm.xlu0 %1796, %v1700
        %v1798 = vpop.permute.xlu0 %1797
        %1799 = vset.pattern.permute.xlu0 2
        %1800 = vperm.xlu0 %1799, %v1701
        %v1801 = vpop.permute.xlu0 %1800
        %1802 = vset.pattern.permute.xlu0 2
        %1803 = vperm.xlu0 %1802, %v1702
        %v1804 = vpop.permute.xlu0 %1803
        %1805 = vset.pattern.permute.xlu0 2
        %1806 = vperm.xlu0 %1805, %v1703
        %v1807 = vpop.permute.xlu0 %1806
        %1808 = vset.pattern.permute.xlu0 2
        %1809 = vperm.xlu0 %1808, %v1704
        %v1810 = vpop.permute.xlu0 %1809
        %1811 = vset.pattern.permute.xlu0 2
        %1812 = vperm.xlu0 %1811, %v1705
        %v1813 = vpop.permute.xlu0 %1812
        %1814 = vset.pattern.permute.xlu0 2
        %1815 = vperm.xlu0 %1814, %v1706
        %v1816 = vpop.permute.xlu0 %1815
        %1817 = vset.pattern.permute.xlu0 2
        %1818 = vperm.xlu0 %1817, %v1707
        %v1819 = vpop.permute.xlu0 %1818
        %1820 = vset.pattern.permute.xlu0 2
        %1821 = vperm.xlu0 %1820, %v1708
        %v1822 = vpop.permute.xlu0 %1821
        %1823 = vset.pattern.permute.xlu0 2
        %1824 = vperm.xlu0 %1823, %v1709
        %v1825 = vpop.permute.xlu0 %1824
        %1826 = vset.pattern.permute.xlu0 2
        %1827 = vperm.xlu0 %1826, %v1710
        %v1828 = vpop.permute.xlu0 %1827
        %1829 = vset.pattern.permute.xlu0 2
        %1830 = vperm.xlu0 %1829, %v1711
        %v1831 = vpop.permute.xlu0 %1830
        %1832 = vset.pattern.permute.xlu0 2
        %1833 = vperm.xlu0 %1832, %v1712
        %v1834 = vpop.permute.xlu0 %1833
        %1835 = vset.pattern.permute.xlu0 2
        %1836 = vperm.xlu0 %1835, %v1713
        %v1837 = vpop.permute.xlu0 %1836
        %1838 = vset.pattern.permute.xlu0 2
        %1839 = vperm.xlu0 %1838, %v1714
        %v1840 = vpop.permute.xlu0 %1839
        %1841 = vset.pattern.permute.xlu0 2
        %1842 = vperm.xlu0 %1841, %v1715
        %v1843 = vpop.permute.xlu0 %1842
        %1844 = vset.pattern.permute.xlu0 2
        %1845 = vperm.xlu0 %1844, %v1716
        %v1846 = vpop.permute.xlu0 %1845
        %1847 = vset.pattern.permute.xlu0 2
        %1848 = vperm.xlu0 %1847, %v1717
        %v1849 = vpop.permute.xlu0 %1848
        %1850 = vset.pattern.permute.xlu0 2
        %1851 = vperm.xlu0 %1850, %v1718
        %v1852 = vpop.permute.xlu0 %1851
        %1853 = vset.pattern.permute.xlu0 2
        %1854 = vperm.xlu0 %1853, %v1719
        %v1855 = vpop.permute.xlu0 %1854
        %1856 = vset.pattern.permute.xlu0 2
        %1857 = vperm.xlu0 %1856, %v1720
        %v1858 = vpop.permute.xlu0 %1857
        %1859 = vset.pattern.permute.xlu0 2
        %1860 = vperm.xlu0 %1859, %v1721
        %v1861 = vpop.permute.xlu0 %1860
        %1862 = vset.pattern.permute.xlu0 2
        %1863 = vperm.xlu0 %1862, %v1722
        %v1864 = vpop.permute.xlu0 %1863
        %1865 = vset.pattern.permute.xlu0 2
        %1866 = vperm.xlu0 %1865, %v1723
        %v1867 = vpop.permute.xlu0 %1866
        %1868 = vset.pattern.permute.xlu0 2
        %1869 = vperm.xlu0 %1868, %v1724
        %v1870 = vpop.permute.xlu0 %1869
        %1871 = vset.pattern.permute.xlu0 2
        %1872 = vperm.xlu0 %1871, %v1725
        %v1873 = vpop.permute.xlu0 %1872
        %1874 = vset.pattern.permute.xlu0 2
        %1875 = vperm.xlu0 %1874, %v1726
        %v1876 = vpop.permute.xlu0 %1875
        %1877 = vset.pattern.permute.xlu0 2
        %1878 = vperm.xlu0 %1877, %v1727
        %v1879 = vpop.permute.xlu0 %1878
        %1880 = vset.pattern.permute.xlu0 2
        %1881 = vperm.xlu0 %1880, %v1728
        %v1882 = vpop.permute.xlu0 %1881
        %1883 = vset.pattern.permute.xlu0 2
        %1884 = vperm.xlu0 %1883, %v1729
        %v1885 = vpop.permute.xlu0 %1884
        %1886 = vset.pattern.permute.xlu0 2
        %1887 = vperm.xlu0 %1886, %v1730
        %v1888 = vpop.permute.xlu0 %1887
        %1889 = vset.pattern.permute.xlu0 2
        %1890 = vperm.xlu0 %1889, %v1731
        %v1891 = vpop.permute.xlu0 %1890
        %1892 = vset.pattern.permute.xlu0 2
        %1893 = vperm.xlu0 %1892, %v1732
        %v1894 = vpop.permute.xlu0 %1893
        %1895 = vset.pattern.permute.xlu0 2
        %1896 = vperm.xlu0 %1895, %v1733
        %v1897 = vpop.permute.xlu0 %1896
        %1898 = vset.pattern.permute.xlu0 2
        %1899 = vperm.xlu0 %1898, %v1734
        %v1900 = vpop.permute.xlu0 %1899
        %1901 = vset.pattern.permute.xlu0 2
        %1902 = vperm.xlu0 %1901, %v1735
        %v1903 = vpop.permute.xlu0 %1902
        %1904 = vset.pattern.permute.xlu0 2
        %1905 = vperm.xlu0 %1904, %v1736
        %v1906 = vpop.permute.xlu0 %1905
        %1907 = vset.pattern.permute.xlu0 2
        %1908 = vperm.xlu0 %1907, %v1737
        %v1909 = vpop.permute.xlu0 %1908
        %1910 = vset.pattern.permute.xlu0 2
        %1911 = vperm.xlu0 %1910, %v1738
        %v1912 = vpop.permute.xlu0 %1911
        %1913 = vset.pattern.permute.xlu0 2
        %1914 = vperm.xlu0 %1913, %v1739
        %v1915 = vpop.permute.xlu0 %1914
        %1916 = vset.pattern.permute.xlu0 2
        %1917 = vperm.xlu0 %1916, %v1740
        %v1918 = vpop.permute.xlu0 %1917
        %1919 = vset.pattern.permute.xlu0 2
        %1920 = vperm.xlu0 %1919, %v1741
        %v1921 = vpop.permute.xlu0 %1920
        %1922 = vset.pattern.permute.xlu0 2
        %1923 = vperm.xlu0 %1922, %v1742
        %v1924 = vpop.permute.xlu0 %1923
        %1925 = vset.pattern.permute.xlu0 2
        %1926 = vperm.xlu0 %1925, %v1743
        %v1927 = vpop.permute.xlu0 %1926
        %1928 = vset.pattern.permute.xlu0 2
        %1929 = vperm.xlu0 %1928, %v1744
        %v1930 = vpop.permute.xlu0 %1929
        %1931 = vset.pattern.permute.xlu0 2
        %1932 = vperm.xlu0 %1931, %v1745
        %v1933 = vpop.permute.xlu0 %1932
        %1934 = vset.pattern.permute.xlu0 2
        %1935 = vperm.xlu0 %1934, %v1746
        %v1936 = vpop.permute.xlu0 %1935
        %1937 = vset.pattern.permute.xlu0 2
        %1938 = vperm.xlu0 %1937, %v1747
        %v1939 = vpop.permute.xlu0 %1938
        %vm1940 = vcmp.eq.s32.totalorder %v1750, %v210
        %vm1941 = vcmp.eq.s32.totalorder %v1750, %v211
        %vm1942 = vcmp.eq.s32.totalorder %v1753, %v210
        %vm1943 = vcmp.eq.s32.totalorder %v1753, %v211
        %vm1944 = vcmp.eq.s32.totalorder %v1756, %v210
        %vm1945 = vcmp.eq.s32.totalorder %v1756, %v211
        %vm1946 = vcmp.eq.s32.totalorder %v1759, %v210
        %vm1947 = vcmp.eq.s32.totalorder %v1759, %v211
        %vm1948 = vcmp.eq.s32.totalorder %v1762, %v210
        %vm1949 = vcmp.eq.s32.totalorder %v1762, %v211
        %vm1950 = vcmp.eq.s32.totalorder %v1765, %v210
        %vm1951 = vcmp.eq.s32.totalorder %v1765, %v211
        %vm1952 = vcmp.eq.s32.totalorder %v1768, %v210
        %vm1953 = vcmp.eq.s32.totalorder %v1768, %v211
        %vm1954 = vcmp.eq.s32.totalorder %v1771, %v210
        %vm1955 = vcmp.eq.s32.totalorder %v1771, %v211
        %vm1956 = vcmp.eq.s32.totalorder %v1774, %v210
        %vm1957 = vcmp.eq.s32.totalorder %v1774, %v211
        %vm1958 = vcmp.eq.s32.totalorder %v1777, %v210
        %vm1959 = vcmp.eq.s32.totalorder %v1777, %v211
        %vm1960 = vcmp.eq.s32.totalorder %v1780, %v210
        %vm1961 = vcmp.eq.s32.totalorder %v1780, %v211
        %vm1962 = vcmp.eq.s32.totalorder %v1783, %v210
        %vm1963 = vcmp.eq.s32.totalorder %v1783, %v211
        %vm1964 = vcmp.eq.s32.totalorder %v1786, %v210
        %vm1965 = vcmp.eq.s32.totalorder %v1786, %v211
        %vm1966 = vcmp.eq.s32.totalorder %v1789, %v210
        %vm1967 = vcmp.eq.s32.totalorder %v1789, %v211
        %vm1968 = vcmp.eq.s32.totalorder %v1792, %v210
        %vm1969 = vcmp.eq.s32.totalorder %v1792, %v211
        %vm1970 = vcmp.eq.s32.totalorder %v1795, %v210
        %vm1971 = vcmp.eq.s32.totalorder %v1795, %v211
        %vm1972 = vcmp.eq.s32.totalorder %v1798, %v210
        %vm1973 = vcmp.eq.s32.totalorder %v1798, %v211
        %vm1974 = vcmp.eq.s32.totalorder %v1801, %v210
        %vm1975 = vcmp.eq.s32.totalorder %v1801, %v211
        %vm1976 = vcmp.eq.s32.totalorder %v1804, %v210
        %vm1977 = vcmp.eq.s32.totalorder %v1804, %v211
        %vm1978 = vcmp.eq.s32.totalorder %v1807, %v210
        %vm1979 = vcmp.eq.s32.totalorder %v1807, %v211
        %vm1980 = vcmp.eq.s32.totalorder %v1810, %v210
        %vm1981 = vcmp.eq.s32.totalorder %v1810, %v211
        %vm1982 = vcmp.eq.s32.totalorder %v1813, %v210
        %vm1983 = vcmp.eq.s32.totalorder %v1813, %v211
        %vm1984 = vcmp.eq.s32.totalorder %v1816, %v210
        %vm1985 = vcmp.eq.s32.totalorder %v1816, %v211
        %vm1986 = vcmp.eq.s32.totalorder %v1819, %v210
        %vm1987 = vcmp.eq.s32.totalorder %v1819, %v211
        %vm1988 = vcmp.eq.s32.totalorder %v1822, %v210
        %vm1989 = vcmp.eq.s32.totalorder %v1822, %v211
        %vm1990 = vcmp.eq.s32.totalorder %v1825, %v210
        %vm1991 = vcmp.eq.s32.totalorder %v1825, %v211
        %vm1992 = vcmp.eq.s32.totalorder %v1828, %v210
        %vm1993 = vcmp.eq.s32.totalorder %v1828, %v211
        %vm1994 = vcmp.eq.s32.totalorder %v1831, %v210
        %vm1995 = vcmp.eq.s32.totalorder %v1831, %v211
        %vm1996 = vcmp.eq.s32.totalorder %v1834, %v210
        %vm1997 = vcmp.eq.s32.totalorder %v1834, %v211
        %vm1998 = vcmp.eq.s32.totalorder %v1837, %v210
        %vm1999 = vcmp.eq.s32.totalorder %v1837, %v211
        %vm2000 = vcmp.eq.s32.totalorder %v1840, %v210
        %vm2001 = vcmp.eq.s32.totalorder %v1840, %v211
        %vm2002 = vcmp.eq.s32.totalorder %v1843, %v210
        %vm2003 = vcmp.eq.s32.totalorder %v1843, %v211
        %vm2004 = vcmp.eq.s32.totalorder %v1846, %v210
        %vm2005 = vcmp.eq.s32.totalorder %v1846, %v211
        %vm2006 = vcmp.eq.s32.totalorder %v1849, %v210
        %vm2007 = vcmp.eq.s32.totalorder %v1849, %v211
        %vm2008 = vcmp.eq.s32.totalorder %v1852, %v210
        %vm2009 = vcmp.eq.s32.totalorder %v1852, %v211
        %vm2010 = vcmp.eq.s32.totalorder %v1855, %v210
        %vm2011 = vcmp.eq.s32.totalorder %v1855, %v211
        %vm2012 = vcmp.eq.s32.totalorder %v1858, %v210
        %vm2013 = vcmp.eq.s32.totalorder %v1858, %v211
        %vm2014 = vcmp.eq.s32.totalorder %v1861, %v210
        %vm2015 = vcmp.eq.s32.totalorder %v1861, %v211
        %vm2016 = vcmp.eq.s32.totalorder %v1864, %v210
        %vm2017 = vcmp.eq.s32.totalorder %v1864, %v211
        %vm2018 = vcmp.eq.s32.totalorder %v1867, %v210
        %vm2019 = vcmp.eq.s32.totalorder %v1867, %v211
        %vm2020 = vcmp.eq.s32.totalorder %v1870, %v210
        %vm2021 = vcmp.eq.s32.totalorder %v1870, %v211
        %vm2022 = vcmp.eq.s32.totalorder %v1873, %v210
        %vm2023 = vcmp.eq.s32.totalorder %v1873, %v211
        %vm2024 = vcmp.eq.s32.totalorder %v1876, %v210
        %vm2025 = vcmp.eq.s32.totalorder %v1876, %v211
        %vm2026 = vcmp.eq.s32.totalorder %v1879, %v210
        %vm2027 = vcmp.eq.s32.totalorder %v1879, %v211
        %vm2028 = vcmp.eq.s32.totalorder %v1882, %v210
        %vm2029 = vcmp.eq.s32.totalorder %v1882, %v211
        %vm2030 = vcmp.eq.s32.totalorder %v1885, %v210
        %vm2031 = vcmp.eq.s32.totalorder %v1885, %v211
        %vm2032 = vcmp.eq.s32.totalorder %v1888, %v210
        %vm2033 = vcmp.eq.s32.totalorder %v1888, %v211
        %vm2034 = vcmp.eq.s32.totalorder %v1891, %v210
        %vm2035 = vcmp.eq.s32.totalorder %v1891, %v211
        %vm2036 = vcmp.eq.s32.totalorder %v1894, %v210
        %vm2037 = vcmp.eq.s32.totalorder %v1894, %v211
        %vm2038 = vcmp.eq.s32.totalorder %v1897, %v210
        %vm2039 = vcmp.eq.s32.totalorder %v1897, %v211
        %vm2040 = vcmp.eq.s32.totalorder %v1900, %v210
        %vm2041 = vcmp.eq.s32.totalorder %v1900, %v211
        %vm2042 = vcmp.eq.s32.totalorder %v1903, %v210
        %vm2043 = vcmp.eq.s32.totalorder %v1903, %v211
        %vm2044 = vcmp.eq.s32.totalorder %v1906, %v210
        %vm2045 = vcmp.eq.s32.totalorder %v1906, %v211
        %vm2046 = vcmp.eq.s32.totalorder %v1909, %v210
        %vm2047 = vcmp.eq.s32.totalorder %v1909, %v211
        %vm2048 = vcmp.eq.s32.totalorder %v1912, %v210
        %vm2049 = vcmp.eq.s32.totalorder %v1912, %v211
        %vm2050 = vcmp.eq.s32.totalorder %v1915, %v210
        %vm2051 = vcmp.eq.s32.totalorder %v1915, %v211
        %vm2052 = vcmp.eq.s32.totalorder %v1918, %v210
        %vm2053 = vcmp.eq.s32.totalorder %v1918, %v211
        %vm2054 = vcmp.eq.s32.totalorder %v1921, %v210
        %vm2055 = vcmp.eq.s32.totalorder %v1921, %v211
        %vm2056 = vcmp.eq.s32.totalorder %v1924, %v210
        %vm2057 = vcmp.eq.s32.totalorder %v1924, %v211
        %vm2058 = vcmp.eq.s32.totalorder %v1927, %v210
        %vm2059 = vcmp.eq.s32.totalorder %v1927, %v211
        %vm2060 = vcmp.eq.s32.totalorder %v1930, %v210
        %vm2061 = vcmp.eq.s32.totalorder %v1930, %v211
        %vm2062 = vcmp.eq.s32.totalorder %v1933, %v210
        %vm2063 = vcmp.eq.s32.totalorder %v1933, %v211
        %vm2064 = vcmp.eq.s32.totalorder %v1936, %v210
        %vm2065 = vcmp.eq.s32.totalorder %v1936, %v211
        %vm2066 = vcmp.eq.s32.totalorder %v1939, %v210
        %vm2067 = vcmp.eq.s32.totalorder %v1939, %v211
        %v2068 = vsel %vm1940, 1, 0
        %v2069 = vsel %vm1941, 1, 0
        %v2070 = vsel %vm1942, 1, 0
        %v2071 = vsel %vm1943, 1, 0
        %v2072 = vsel %vm1944, 1, 0
        %v2073 = vsel %vm1945, 1, 0
        %v2074 = vsel %vm1946, 1, 0
        %v2075 = vsel %vm1947, 1, 0
        %v2076 = vsel %vm1948, 1, 0
        %v2077 = vsel %vm1949, 1, 0
        %v2078 = vsel %vm1950, 1, 0
        %v2079 = vsel %vm1951, 1, 0
        %v2080 = vsel %vm1952, 1, 0
        %v2081 = vsel %vm1953, 1, 0
        %v2082 = vsel %vm1954, 1, 0
        %v2083 = vsel %vm1955, 1, 0
        %v2084 = vsel %vm1956, 1, 0
        %v2085 = vsel %vm1957, 1, 0
        %v2086 = vsel %vm1958, 1, 0
        %v2087 = vsel %vm1959, 1, 0
        %v2088 = vsel %vm1960, 1, 0
        %v2089 = vsel %vm1961, 1, 0
        %v2090 = vsel %vm1962, 1, 0
        %v2091 = vsel %vm1963, 1, 0
        %v2092 = vsel %vm1964, 1, 0
        %v2093 = vsel %vm1965, 1, 0
        %v2094 = vsel %vm1966, 1, 0
        %v2095 = vsel %vm1967, 1, 0
        %v2096 = vsel %vm1968, 1, 0
        %v2097 = vsel %vm1969, 1, 0
        %v2098 = vsel %vm1970, 1, 0
        %v2099 = vsel %vm1971, 1, 0
        %v2100 = vsel %vm1972, 1, 0
        %v2101 = vsel %vm1973, 1, 0
        %v2102 = vsel %vm1974, 1, 0
        %v2103 = vsel %vm1975, 1, 0
        %v2104 = vsel %vm1976, 1, 0
        %v2105 = vsel %vm1977, 1, 0
        %v2106 = vsel %vm1978, 1, 0
        %v2107 = vsel %vm1979, 1, 0
        %v2108 = vsel %vm1980, 1, 0
        %v2109 = vsel %vm1981, 1, 0
        %v2110 = vsel %vm1982, 1, 0
        %v2111 = vsel %vm1983, 1, 0
        %v2112 = vsel %vm1984, 1, 0
        %v2113 = vsel %vm1985, 1, 0
        %v2114 = vsel %vm1986, 1, 0
        %v2115 = vsel %vm1987, 1, 0
        %v2116 = vsel %vm1988, 1, 0
        %v2117 = vsel %vm1989, 1, 0
        %v2118 = vsel %vm1990, 1, 0
        %v2119 = vsel %vm1991, 1, 0
        %v2120 = vsel %vm1992, 1, 0
        %v2121 = vsel %vm1993, 1, 0
        %v2122 = vsel %vm1994, 1, 0
        %v2123 = vsel %vm1995, 1, 0
        %v2124 = vsel %vm1996, 1, 0
        %v2125 = vsel %vm1997, 1, 0
        %v2126 = vsel %vm1998, 1, 0
        %v2127 = vsel %vm1999, 1, 0
        %v2128 = vsel %vm2000, 1, 0
        %v2129 = vsel %vm2001, 1, 0
        %v2130 = vsel %vm2002, 1, 0
        %v2131 = vsel %vm2003, 1, 0
        %v2132 = vsel %vm2004, 1, 0
        %v2133 = vsel %vm2005, 1, 0
        %v2134 = vsel %vm2006, 1, 0
        %v2135 = vsel %vm2007, 1, 0
        %v2136 = vsel %vm2008, 1, 0
        %v2137 = vsel %vm2009, 1, 0
        %v2138 = vsel %vm2010, 1, 0
        %v2139 = vsel %vm2011, 1, 0
        %v2140 = vsel %vm2012, 1, 0
        %v2141 = vsel %vm2013, 1, 0
        %v2142 = vsel %vm2014, 1, 0
        %v2143 = vsel %vm2015, 1, 0
        %v2144 = vsel %vm2016, 1, 0
        %v2145 = vsel %vm2017, 1, 0
        %v2146 = vsel %vm2018, 1, 0
        %v2147 = vsel %vm2019, 1, 0
        %v2148 = vsel %vm2020, 1, 0
        %v2149 = vsel %vm2021, 1, 0
        %v2150 = vsel %vm2022, 1, 0
        %v2151 = vsel %vm2023, 1, 0
        %v2152 = vsel %vm2024, 1, 0
        %v2153 = vsel %vm2025, 1, 0
        %v2154 = vsel %vm2026, 1, 0
        %v2155 = vsel %vm2027, 1, 0
        %v2156 = vsel %vm2028, 1, 0
        %v2157 = vsel %vm2029, 1, 0
        %v2158 = vsel %vm2030, 1, 0
        %v2159 = vsel %vm2031, 1, 0
        %v2160 = vsel %vm2032, 1, 0
        %v2161 = vsel %vm2033, 1, 0
        %v2162 = vsel %vm2034, 1, 0
        %v2163 = vsel %vm2035, 1, 0
        %v2164 = vsel %vm2036, 1, 0
        %v2165 = vsel %vm2037, 1, 0
        %v2166 = vsel %vm2038, 1, 0
        %v2167 = vsel %vm2039, 1, 0
        %v2168 = vsel %vm2040, 1, 0
        %v2169 = vsel %vm2041, 1, 0
        %v2170 = vsel %vm2042, 1, 0
        %v2171 = vsel %vm2043, 1, 0
        %v2172 = vsel %vm2044, 1, 0
        %v2173 = vsel %vm2045, 1, 0
        %v2174 = vsel %vm2046, 1, 0
        %v2175 = vsel %vm2047, 1, 0
        %v2176 = vsel %vm2048, 1, 0
        %v2177 = vsel %vm2049, 1, 0
        %v2178 = vsel %vm2050, 1, 0
        %v2179 = vsel %vm2051, 1, 0
        %v2180 = vsel %vm2052, 1, 0
        %v2181 = vsel %vm2053, 1, 0
        %v2182 = vsel %vm2054, 1, 0
        %v2183 = vsel %vm2055, 1, 0
        %v2184 = vsel %vm2056, 1, 0
        %v2185 = vsel %vm2057, 1, 0
        %v2186 = vsel %vm2058, 1, 0
        %v2187 = vsel %vm2059, 1, 0
        %v2188 = vsel %vm2060, 1, 0
        %v2189 = vsel %vm2061, 1, 0
        %v2190 = vsel %vm2062, 1, 0
        %v2191 = vsel %vm2063, 1, 0
        %v2192 = vsel %vm2064, 1, 0
        %v2193 = vsel %vm2065, 1, 0
        %v2194 = vsel %vm2066, 1, 0
        %v2195 = vsel %vm2067, 1, 0
        %v2196 = vcvt.s32.f32 %v2068
        %v2197 = vcvt.s32.f32 %v2069
        %v2198 = vcvt.s32.f32 %v2070
        %v2199 = vcvt.s32.f32 %v2071
        %v2200 = vcvt.s32.f32 %v2072
        %v2201 = vcvt.s32.f32 %v2073
        %v2202 = vcvt.s32.f32 %v2074
        %v2203 = vcvt.s32.f32 %v2075
        %v2204 = vcvt.s32.f32 %v2076
        %v2205 = vcvt.s32.f32 %v2077
        %v2206 = vcvt.s32.f32 %v2078
        %v2207 = vcvt.s32.f32 %v2079
        %v2208 = vcvt.s32.f32 %v2080
        %v2209 = vcvt.s32.f32 %v2081
        %v2210 = vcvt.s32.f32 %v2082
        %v2211 = vcvt.s32.f32 %v2083
        %v2212 = vcvt.s32.f32 %v2084
        %v2213 = vcvt.s32.f32 %v2085
        %v2214 = vcvt.s32.f32 %v2086
        %v2215 = vcvt.s32.f32 %v2087
        %v2216 = vcvt.s32.f32 %v2088
        %v2217 = vcvt.s32.f32 %v2089
        %v2218 = vcvt.s32.f32 %v2090
        %v2219 = vcvt.s32.f32 %v2091
        %v2220 = vcvt.s32.f32 %v2092
        %v2221 = vcvt.s32.f32 %v2093
        %v2222 = vcvt.s32.f32 %v2094
        %v2223 = vcvt.s32.f32 %v2095
        %v2224 = vcvt.s32.f32 %v2096
        %v2225 = vcvt.s32.f32 %v2097
        %v2226 = vcvt.s32.f32 %v2098
        %v2227 = vcvt.s32.f32 %v2099
        %v2228 = vcvt.s32.f32 %v2100
        %v2229 = vcvt.s32.f32 %v2101
        %v2230 = vcvt.s32.f32 %v2102
        %v2231 = vcvt.s32.f32 %v2103
        %v2232 = vcvt.s32.f32 %v2104
        %v2233 = vcvt.s32.f32 %v2105
        %v2234 = vcvt.s32.f32 %v2106
        %v2235 = vcvt.s32.f32 %v2107
        %v2236 = vcvt.s32.f32 %v2108
        %v2237 = vcvt.s32.f32 %v2109
        %v2238 = vcvt.s32.f32 %v2110
        %v2239 = vcvt.s32.f32 %v2111
        %v2240 = vcvt.s32.f32 %v2112
        %v2241 = vcvt.s32.f32 %v2113
        %v2242 = vcvt.s32.f32 %v2114
        %v2243 = vcvt.s32.f32 %v2115
        %v2244 = vcvt.s32.f32 %v2116
        %v2245 = vcvt.s32.f32 %v2117
        %v2246 = vcvt.s32.f32 %v2118
        %v2247 = vcvt.s32.f32 %v2119
        %v2248 = vcvt.s32.f32 %v2120
        %v2249 = vcvt.s32.f32 %v2121
        %v2250 = vcvt.s32.f32 %v2122
        %v2251 = vcvt.s32.f32 %v2123
        %v2252 = vcvt.s32.f32 %v2124
        %v2253 = vcvt.s32.f32 %v2125
        %v2254 = vcvt.s32.f32 %v2126
        %v2255 = vcvt.s32.f32 %v2127
        %v2256 = vcvt.s32.f32 %v2128
        %v2257 = vcvt.s32.f32 %v2129
        %v2258 = vcvt.s32.f32 %v2130
        %v2259 = vcvt.s32.f32 %v2131
        %v2260 = vcvt.s32.f32 %v2132
        %v2261 = vcvt.s32.f32 %v2133
        %v2262 = vcvt.s32.f32 %v2134
        %v2263 = vcvt.s32.f32 %v2135
        %v2264 = vcvt.s32.f32 %v2136
        %v2265 = vcvt.s32.f32 %v2137
        %v2266 = vcvt.s32.f32 %v2138
        %v2267 = vcvt.s32.f32 %v2139
        %v2268 = vcvt.s32.f32 %v2140
        %v2269 = vcvt.s32.f32 %v2141
        %v2270 = vcvt.s32.f32 %v2142
        %v2271 = vcvt.s32.f32 %v2143
        %v2272 = vcvt.s32.f32 %v2144
        %v2273 = vcvt.s32.f32 %v2145
        %v2274 = vcvt.s32.f32 %v2146
        %v2275 = vcvt.s32.f32 %v2147
        %v2276 = vcvt.s32.f32 %v2148
        %v2277 = vcvt.s32.f32 %v2149
        %v2278 = vcvt.s32.f32 %v2150
        %v2279 = vcvt.s32.f32 %v2151
        %v2280 = vcvt.s32.f32 %v2152
        %v2281 = vcvt.s32.f32 %v2153
        %v2282 = vcvt.s32.f32 %v2154
        %v2283 = vcvt.s32.f32 %v2155
        %v2284 = vcvt.s32.f32 %v2156
        %v2285 = vcvt.s32.f32 %v2157
        %v2286 = vcvt.s32.f32 %v2158
        %v2287 = vcvt.s32.f32 %v2159
        %v2288 = vcvt.s32.f32 %v2160
        %v2289 = vcvt.s32.f32 %v2161
        %v2290 = vcvt.s32.f32 %v2162
        %v2291 = vcvt.s32.f32 %v2163
        %v2292 = vcvt.s32.f32 %v2164
        %v2293 = vcvt.s32.f32 %v2165
        %v2294 = vcvt.s32.f32 %v2166
        %v2295 = vcvt.s32.f32 %v2167
        %v2296 = vcvt.s32.f32 %v2168
        %v2297 = vcvt.s32.f32 %v2169
        %v2298 = vcvt.s32.f32 %v2170
        %v2299 = vcvt.s32.f32 %v2171
        %v2300 = vcvt.s32.f32 %v2172
        %v2301 = vcvt.s32.f32 %v2173
        %v2302 = vcvt.s32.f32 %v2174
        %v2303 = vcvt.s32.f32 %v2175
        %v2304 = vcvt.s32.f32 %v2176
        %v2305 = vcvt.s32.f32 %v2177
        %v2306 = vcvt.s32.f32 %v2178
        %v2307 = vcvt.s32.f32 %v2179
        %v2308 = vcvt.s32.f32 %v2180
        %v2309 = vcvt.s32.f32 %v2181
        %v2310 = vcvt.s32.f32 %v2182
        %v2311 = vcvt.s32.f32 %v2183
        %v2312 = vcvt.s32.f32 %v2184
        %v2313 = vcvt.s32.f32 %v2185
        %v2314 = vcvt.s32.f32 %v2186
        %v2315 = vcvt.s32.f32 %v2187
        %v2316 = vcvt.s32.f32 %v2188
        %v2317 = vcvt.s32.f32 %v2189
        %v2318 = vcvt.s32.f32 %v2190
        %v2319 = vcvt.s32.f32 %v2191
        %v2320 = vcvt.s32.f32 %v2192
        %v2321 = vcvt.s32.f32 %v2193
        %v2322 = vcvt.s32.f32 %v2194
        %v2323 = vcvt.s32.f32 %v2195
        %v2324 = vadd.f32 %v1556, %v2196
        %v2325 = vadd.f32 %v1557, %v2197
        %v2326 = vadd.f32 %v1558, %v2198
        %v2327 = vadd.f32 %v1559, %v2199
        %v2328 = vadd.f32 %v1560, %v2200
        %v2329 = vadd.f32 %v1561, %v2201
        %v2330 = vadd.f32 %v1562, %v2202
        %v2331 = vadd.f32 %v1563, %v2203
        %v2332 = vadd.f32 %v1564, %v2204
        %v2333 = vadd.f32 %v1565, %v2205
        %v2334 = vadd.f32 %v1566, %v2206
        %v2335 = vadd.f32 %v1567, %v2207
        %v2336 = vadd.f32 %v1568, %v2208
        %v2337 = vadd.f32 %v1569, %v2209
        %v2338 = vadd.f32 %v1570, %v2210
        %v2339 = vadd.f32 %v1571, %v2211
        %v2340 = vadd.f32 %v1572, %v2212
        %v2341 = vadd.f32 %v1573, %v2213
        %v2342 = vadd.f32 %v1574, %v2214
        %v2343 = vadd.f32 %v1575, %v2215
        %v2344 = vadd.f32 %v1576, %v2216
        %v2345 = vadd.f32 %v1577, %v2217
        %v2346 = vadd.f32 %v1578, %v2218
        %v2347 = vadd.f32 %v1579, %v2219
        %v2348 = vadd.f32 %v1580, %v2220
        %v2349 = vadd.f32 %v1581, %v2221
        %v2350 = vadd.f32 %v1582, %v2222
        %v2351 = vadd.f32 %v1583, %v2223
        %v2352 = vadd.f32 %v1584, %v2224
        %v2353 = vadd.f32 %v1585, %v2225
        %v2354 = vadd.f32 %v1586, %v2226
        %v2355 = vadd.f32 %v1587, %v2227
        %v2356 = vadd.f32 %v1588, %v2228
        %v2357 = vadd.f32 %v1589, %v2229
        %v2358 = vadd.f32 %v1590, %v2230
        %v2359 = vadd.f32 %v1591, %v2231
        %v2360 = vadd.f32 %v1592, %v2232
        %v2361 = vadd.f32 %v1593, %v2233
        %v2362 = vadd.f32 %v1594, %v2234
        %v2363 = vadd.f32 %v1595, %v2235
        %v2364 = vadd.f32 %v1596, %v2236
        %v2365 = vadd.f32 %v1597, %v2237
        %v2366 = vadd.f32 %v1598, %v2238
        %v2367 = vadd.f32 %v1599, %v2239
        %v2368 = vadd.f32 %v1600, %v2240
        %v2369 = vadd.f32 %v1601, %v2241
        %v2370 = vadd.f32 %v1602, %v2242
        %v2371 = vadd.f32 %v1603, %v2243
        %v2372 = vadd.f32 %v1604, %v2244
        %v2373 = vadd.f32 %v1605, %v2245
        %v2374 = vadd.f32 %v1606, %v2246
        %v2375 = vadd.f32 %v1607, %v2247
        %v2376 = vadd.f32 %v1608, %v2248
        %v2377 = vadd.f32 %v1609, %v2249
        %v2378 = vadd.f32 %v1610, %v2250
        %v2379 = vadd.f32 %v1611, %v2251
        %v2380 = vadd.f32 %v1612, %v2252
        %v2381 = vadd.f32 %v1613, %v2253
        %v2382 = vadd.f32 %v1614, %v2254
        %v2383 = vadd.f32 %v1615, %v2255
        %v2384 = vadd.f32 %v1616, %v2256
        %v2385 = vadd.f32 %v1617, %v2257
        %v2386 = vadd.f32 %v1618, %v2258
        %v2387 = vadd.f32 %v1619, %v2259
        %v2388 = vadd.f32 %v1620, %v2260
        %v2389 = vadd.f32 %v1621, %v2261
        %v2390 = vadd.f32 %v1622, %v2262
        %v2391 = vadd.f32 %v1623, %v2263
        %v2392 = vadd.f32 %v1624, %v2264
        %v2393 = vadd.f32 %v1625, %v2265
        %v2394 = vadd.f32 %v1626, %v2266
        %v2395 = vadd.f32 %v1627, %v2267
        %v2396 = vadd.f32 %v1628, %v2268
        %v2397 = vadd.f32 %v1629, %v2269
        %v2398 = vadd.f32 %v1630, %v2270
        %v2399 = vadd.f32 %v1631, %v2271
        %v2400 = vadd.f32 %v1632, %v2272
        %v2401 = vadd.f32 %v1633, %v2273
        %v2402 = vadd.f32 %v1634, %v2274
        %v2403 = vadd.f32 %v1635, %v2275
        %v2404 = vadd.f32 %v1636, %v2276
        %v2405 = vadd.f32 %v1637, %v2277
        %v2406 = vadd.f32 %v1638, %v2278
        %v2407 = vadd.f32 %v1639, %v2279
        %v2408 = vadd.f32 %v1640, %v2280
        %v2409 = vadd.f32 %v1641, %v2281
        %v2410 = vadd.f32 %v1642, %v2282
        %v2411 = vadd.f32 %v1643, %v2283
        %v2412 = vadd.f32 %v1644, %v2284
        %v2413 = vadd.f32 %v1645, %v2285
        %v2414 = vadd.f32 %v1646, %v2286
        %v2415 = vadd.f32 %v1647, %v2287
        %v2416 = vadd.f32 %v1648, %v2288
        %v2417 = vadd.f32 %v1649, %v2289
        %v2418 = vadd.f32 %v1650, %v2290
        %v2419 = vadd.f32 %v1651, %v2291
        %v2420 = vadd.f32 %v1652, %v2292
        %v2421 = vadd.f32 %v1653, %v2293
        %v2422 = vadd.f32 %v1654, %v2294
        %v2423 = vadd.f32 %v1655, %v2295
        %v2424 = vadd.f32 %v1656, %v2296
        %v2425 = vadd.f32 %v1657, %v2297
        %v2426 = vadd.f32 %v1658, %v2298
        %v2427 = vadd.f32 %v1659, %v2299
        %v2428 = vadd.f32 %v1660, %v2300
        %v2429 = vadd.f32 %v1661, %v2301
        %v2430 = vadd.f32 %v1662, %v2302
        %v2431 = vadd.f32 %v1663, %v2303
        %v2432 = vadd.f32 %v1664, %v2304
        %v2433 = vadd.f32 %v1665, %v2305
        %v2434 = vadd.f32 %v1666, %v2306
        %v2435 = vadd.f32 %v1667, %v2307
        %v2436 = vadd.f32 %v1668, %v2308
        %v2437 = vadd.f32 %v1669, %v2309
        %v2438 = vadd.f32 %v1670, %v2310
        %v2439 = vadd.f32 %v1671, %v2311
        %v2440 = vadd.f32 %v1672, %v2312
        %v2441 = vadd.f32 %v1673, %v2313
        %v2442 = vadd.f32 %v1674, %v2314
        %v2443 = vadd.f32 %v1675, %v2315
        %v2444 = vadd.f32 %v1676, %v2316
        %v2445 = vadd.f32 %v1677, %v2317
        %v2446 = vadd.f32 %v1678, %v2318
        %v2447 = vadd.f32 %v1679, %v2319
        %v2448 = vadd.f32 %v1680, %v2320
        %v2449 = vadd.f32 %v1681, %v2321
        %v2450 = vadd.f32 %v1682, %v2322
        %v2451 = vadd.f32 %v1683, %v2323
        %v2452 = vadd.s32 %v145, 135
        %v2453 = vadd.s32 %v146, 135
        %v2454 = vadd.s32 %v147, 135
        %v2455 = vadd.s32 %v148, 135
        %v2456 = vadd.s32 %v149, 135
        %v2457 = vadd.s32 %v150, 135
        %v2458 = vadd.s32 %v151, 135
        %v2459 = vadd.s32 %v152, 135
        %v2460 = vadd.s32 %v153, 135
        %v2461 = vadd.s32 %v154, 135
        %v2462 = vadd.s32 %v155, 135
        %v2463 = vadd.s32 %v156, 135
        %v2464 = vadd.s32 %v157, 135
        %v2465 = vadd.s32 %v158, 135
        %v2466 = vadd.s32 %v159, 135
        %v2467 = vadd.s32 %v160, 135
        %v2468 = vadd.s32 %v161, 135
        %v2469 = vadd.s32 %v162, 135
        %v2470 = vadd.s32 %v163, 135
        %v2471 = vadd.s32 %v164, 135
        %v2472 = vadd.s32 %v165, 135
        %v2473 = vadd.s32 %v166, 135
        %v2474 = vadd.s32 %v167, 135
        %v2475 = vadd.s32 %v168, 135
        %v2476 = vadd.s32 %v169, 135
        %v2477 = vadd.s32 %v170, 135
        %v2478 = vadd.s32 %v171, 135
        %v2479 = vadd.s32 %v172, 135
        %v2480 = vadd.s32 %v173, 135
        %v2481 = vadd.s32 %v174, 135
        %v2482 = vadd.s32 %v175, 135
        %v2483 = vadd.s32 %v176, 135
        %v2484 = vadd.s32 %v177, 135
        %v2485 = vadd.s32 %v178, 135
        %v2486 = vadd.s32 %v179, 135
        %v2487 = vadd.s32 %v180, 135
        %v2488 = vadd.s32 %v181, 135
        %v2489 = vadd.s32 %v182, 135
        %v2490 = vadd.s32 %v183, 135
        %v2491 = vadd.s32 %v184, 135
        %v2492 = vadd.s32 %v185, 135
        %v2493 = vadd.s32 %v186, 135
        %v2494 = vadd.s32 %v187, 135
        %v2495 = vadd.s32 %v188, 135
        %v2496 = vadd.s32 %v189, 135
        %v2497 = vadd.s32 %v190, 135
        %v2498 = vadd.s32 %v191, 135
        %v2499 = vadd.s32 %v192, 135
        %v2500 = vadd.s32 %v193, 135
        %v2501 = vadd.s32 %v194, 135
        %v2502 = vadd.s32 %v195, 135
        %v2503 = vadd.s32 %v196, 135
        %v2504 = vadd.s32 %v197, 135
        %v2505 = vadd.s32 %v198, 135
        %v2506 = vadd.s32 %v199, 135
        %v2507 = vadd.s32 %v200, 135
        %v2508 = vadd.s32 %v201, 135
        %v2509 = vadd.s32 %v202, 135
        %v2510 = vadd.s32 %v203, 135
        %v2511 = vadd.s32 %v204, 135
        %v2512 = vadd.s32 %v205, 135
        %v2513 = vadd.s32 %v206, 135
        %v2514 = vadd.s32 %v207, 135
        %v2515 = vadd.s32 %v208, 135
        %2516 = vset.pattern.permute.xlu0 3
        %2517 = vperm.xlu0 %2516, %v2452
        %v2518 = vpop.permute.xlu0 %2517
        %2519 = vset.pattern.permute.xlu0 3
        %2520 = vperm.xlu0 %2519, %v2453
        %v2521 = vpop.permute.xlu0 %2520
        %2522 = vset.pattern.permute.xlu0 3
        %2523 = vperm.xlu0 %2522, %v2454
        %v2524 = vpop.permute.xlu0 %2523
        %2525 = vset.pattern.permute.xlu0 3
        %2526 = vperm.xlu0 %2525, %v2455
        %v2527 = vpop.permute.xlu0 %2526
        %2528 = vset.pattern.permute.xlu0 3
        %2529 = vperm.xlu0 %2528, %v2456
        %v2530 = vpop.permute.xlu0 %2529
        %2531 = vset.pattern.permute.xlu0 3
        %2532 = vperm.xlu0 %2531, %v2457
        %v2533 = vpop.permute.xlu0 %2532
        %2534 = vset.pattern.permute.xlu0 3
        %2535 = vperm.xlu0 %2534, %v2458
        %v2536 = vpop.permute.xlu0 %2535
        %2537 = vset.pattern.permute.xlu0 3
        %2538 = vperm.xlu0 %2537, %v2459
        %v2539 = vpop.permute.xlu0 %2538
        %2540 = vset.pattern.permute.xlu0 3
        %2541 = vperm.xlu0 %2540, %v2460
        %v2542 = vpop.permute.xlu0 %2541
        %2543 = vset.pattern.permute.xlu0 3
        %2544 = vperm.xlu0 %2543, %v2461
        %v2545 = vpop.permute.xlu0 %2544
        %2546 = vset.pattern.permute.xlu0 3
        %2547 = vperm.xlu0 %2546, %v2462
        %v2548 = vpop.permute.xlu0 %2547
        %2549 = vset.pattern.permute.xlu0 3
        %2550 = vperm.xlu0 %2549, %v2463
        %v2551 = vpop.permute.xlu0 %2550
        %2552 = vset.pattern.permute.xlu0 3
        %2553 = vperm.xlu0 %2552, %v2464
        %v2554 = vpop.permute.xlu0 %2553
        %2555 = vset.pattern.permute.xlu0 3
        %2556 = vperm.xlu0 %2555, %v2465
        %v2557 = vpop.permute.xlu0 %2556
        %2558 = vset.pattern.permute.xlu0 3
        %2559 = vperm.xlu0 %2558, %v2466
        %v2560 = vpop.permute.xlu0 %2559
        %2561 = vset.pattern.permute.xlu0 3
        %2562 = vperm.xlu0 %2561, %v2467
        %v2563 = vpop.permute.xlu0 %2562
        %2564 = vset.pattern.permute.xlu0 3
        %2565 = vperm.xlu0 %2564, %v2468
        %v2566 = vpop.permute.xlu0 %2565
        %2567 = vset.pattern.permute.xlu0 3
        %2568 = vperm.xlu0 %2567, %v2469
        %v2569 = vpop.permute.xlu0 %2568
        %2570 = vset.pattern.permute.xlu0 3
        %2571 = vperm.xlu0 %2570, %v2470
        %v2572 = vpop.permute.xlu0 %2571
        %2573 = vset.pattern.permute.xlu0 3
        %2574 = vperm.xlu0 %2573, %v2471
        %v2575 = vpop.permute.xlu0 %2574
        %2576 = vset.pattern.permute.xlu0 3
        %2577 = vperm.xlu0 %2576, %v2472
        %v2578 = vpop.permute.xlu0 %2577
        %2579 = vset.pattern.permute.xlu0 3
        %2580 = vperm.xlu0 %2579, %v2473
        %v2581 = vpop.permute.xlu0 %2580
        %2582 = vset.pattern.permute.xlu0 3
        %2583 = vperm.xlu0 %2582, %v2474
        %v2584 = vpop.permute.xlu0 %2583
        %2585 = vset.pattern.permute.xlu0 3
        %2586 = vperm.xlu0 %2585, %v2475
        %v2587 = vpop.permute.xlu0 %2586
        %2588 = vset.pattern.permute.xlu0 3
        %2589 = vperm.xlu0 %2588, %v2476
        %v2590 = vpop.permute.xlu0 %2589
        %2591 = vset.pattern.permute.xlu0 3
        %2592 = vperm.xlu0 %2591, %v2477
        %v2593 = vpop.permute.xlu0 %2592
        %2594 = vset.pattern.permute.xlu0 3
        %2595 = vperm.xlu0 %2594, %v2478
        %v2596 = vpop.permute.xlu0 %2595
        %2597 = vset.pattern.permute.xlu0 3
        %2598 = vperm.xlu0 %2597, %v2479
        %v2599 = vpop.permute.xlu0 %2598
        %2600 = vset.pattern.permute.xlu0 3
        %2601 = vperm.xlu0 %2600, %v2480
        %v2602 = vpop.permute.xlu0 %2601
        %2603 = vset.pattern.permute.xlu0 3
        %2604 = vperm.xlu0 %2603, %v2481
        %v2605 = vpop.permute.xlu0 %2604
        %2606 = vset.pattern.permute.xlu0 3
        %2607 = vperm.xlu0 %2606, %v2482
        %v2608 = vpop.permute.xlu0 %2607
        %2609 = vset.pattern.permute.xlu0 3
        %2610 = vperm.xlu0 %2609, %v2483
        %v2611 = vpop.permute.xlu0 %2610
        %2612 = vset.pattern.permute.xlu0 3
        %2613 = vperm.xlu0 %2612, %v2484
        %v2614 = vpop.permute.xlu0 %2613
        %2615 = vset.pattern.permute.xlu0 3
        %2616 = vperm.xlu0 %2615, %v2485
        %v2617 = vpop.permute.xlu0 %2616
        %2618 = vset.pattern.permute.xlu0 3
        %2619 = vperm.xlu0 %2618, %v2486
        %v2620 = vpop.permute.xlu0 %2619
        %2621 = vset.pattern.permute.xlu0 3
        %2622 = vperm.xlu0 %2621, %v2487
        %v2623 = vpop.permute.xlu0 %2622
        %2624 = vset.pattern.permute.xlu0 3
        %2625 = vperm.xlu0 %2624, %v2488
        %v2626 = vpop.permute.xlu0 %2625
        %2627 = vset.pattern.permute.xlu0 3
        %2628 = vperm.xlu0 %2627, %v2489
        %v2629 = vpop.permute.xlu0 %2628
        %2630 = vset.pattern.permute.xlu0 3
        %2631 = vperm.xlu0 %2630, %v2490
        %v2632 = vpop.permute.xlu0 %2631
        %2633 = vset.pattern.permute.xlu0 3
        %2634 = vperm.xlu0 %2633, %v2491
        %v2635 = vpop.permute.xlu0 %2634
        %2636 = vset.pattern.permute.xlu0 3
        %2637 = vperm.xlu0 %2636, %v2492
        %v2638 = vpop.permute.xlu0 %2637
        %2639 = vset.pattern.permute.xlu0 3
        %2640 = vperm.xlu0 %2639, %v2493
        %v2641 = vpop.permute.xlu0 %2640
        %2642 = vset.pattern.permute.xlu0 3
        %2643 = vperm.xlu0 %2642, %v2494
        %v2644 = vpop.permute.xlu0 %2643
        %2645 = vset.pattern.permute.xlu0 3
        %2646 = vperm.xlu0 %2645, %v2495
        %v2647 = vpop.permute.xlu0 %2646
        %2648 = vset.pattern.permute.xlu0 3
        %2649 = vperm.xlu0 %2648, %v2496
        %v2650 = vpop.permute.xlu0 %2649
        %2651 = vset.pattern.permute.xlu0 3
        %2652 = vperm.xlu0 %2651, %v2497
        %v2653 = vpop.permute.xlu0 %2652
        %2654 = vset.pattern.permute.xlu0 3
        %2655 = vperm.xlu0 %2654, %v2498
        %v2656 = vpop.permute.xlu0 %2655
        %2657 = vset.pattern.permute.xlu0 3
        %2658 = vperm.xlu0 %2657, %v2499
        %v2659 = vpop.permute.xlu0 %2658
        %2660 = vset.pattern.permute.xlu0 3
        %2661 = vperm.xlu0 %2660, %v2500
        %v2662 = vpop.permute.xlu0 %2661
        %2663 = vset.pattern.permute.xlu0 3
        %2664 = vperm.xlu0 %2663, %v2501
        %v2665 = vpop.permute.xlu0 %2664
        %2666 = vset.pattern.permute.xlu0 3
        %2667 = vperm.xlu0 %2666, %v2502
        %v2668 = vpop.permute.xlu0 %2667
        %2669 = vset.pattern.permute.xlu0 3
        %2670 = vperm.xlu0 %2669, %v2503
        %v2671 = vpop.permute.xlu0 %2670
        %2672 = vset.pattern.permute.xlu0 3
        %2673 = vperm.xlu0 %2672, %v2504
        %v2674 = vpop.permute.xlu0 %2673
        %2675 = vset.pattern.permute.xlu0 3
        %2676 = vperm.xlu0 %2675, %v2505
        %v2677 = vpop.permute.xlu0 %2676
        %2678 = vset.pattern.permute.xlu0 3
        %2679 = vperm.xlu0 %2678, %v2506
        %v2680 = vpop.permute.xlu0 %2679
        %2681 = vset.pattern.permute.xlu0 3
        %2682 = vperm.xlu0 %2681, %v2507
        %v2683 = vpop.permute.xlu0 %2682
        %2684 = vset.pattern.permute.xlu0 3
        %2685 = vperm.xlu0 %2684, %v2508
        %v2686 = vpop.permute.xlu0 %2685
        %2687 = vset.pattern.permute.xlu0 3
        %2688 = vperm.xlu0 %2687, %v2509
        %v2689 = vpop.permute.xlu0 %2688
        %2690 = vset.pattern.permute.xlu0 3
        %2691 = vperm.xlu0 %2690, %v2510
        %v2692 = vpop.permute.xlu0 %2691
        %2693 = vset.pattern.permute.xlu0 3
        %2694 = vperm.xlu0 %2693, %v2511
        %v2695 = vpop.permute.xlu0 %2694
        %2696 = vset.pattern.permute.xlu0 3
        %2697 = vperm.xlu0 %2696, %v2512
        %v2698 = vpop.permute.xlu0 %2697
        %2699 = vset.pattern.permute.xlu0 3
        %2700 = vperm.xlu0 %2699, %v2513
        %v2701 = vpop.permute.xlu0 %2700
        %2702 = vset.pattern.permute.xlu0 3
        %2703 = vperm.xlu0 %2702, %v2514
        %v2704 = vpop.permute.xlu0 %2703
        %2705 = vset.pattern.permute.xlu0 3
        %2706 = vperm.xlu0 %2705, %v2515
        %v2707 = vpop.permute.xlu0 %2706
        %vm2708 = vcmp.eq.s32.totalorder %v2518, %v210
        %vm2709 = vcmp.eq.s32.totalorder %v2518, %v211
        %vm2710 = vcmp.eq.s32.totalorder %v2521, %v210
        %vm2711 = vcmp.eq.s32.totalorder %v2521, %v211
        %vm2712 = vcmp.eq.s32.totalorder %v2524, %v210
        %vm2713 = vcmp.eq.s32.totalorder %v2524, %v211
        %vm2714 = vcmp.eq.s32.totalorder %v2527, %v210
        %vm2715 = vcmp.eq.s32.totalorder %v2527, %v211
        %vm2716 = vcmp.eq.s32.totalorder %v2530, %v210
        %vm2717 = vcmp.eq.s32.totalorder %v2530, %v211
        %vm2718 = vcmp.eq.s32.totalorder %v2533, %v210
        %vm2719 = vcmp.eq.s32.totalorder %v2533, %v211
        %vm2720 = vcmp.eq.s32.totalorder %v2536, %v210
        %vm2721 = vcmp.eq.s32.totalorder %v2536, %v211
        %vm2722 = vcmp.eq.s32.totalorder %v2539, %v210
        %vm2723 = vcmp.eq.s32.totalorder %v2539, %v211
        %vm2724 = vcmp.eq.s32.totalorder %v2542, %v210
        %vm2725 = vcmp.eq.s32.totalorder %v2542, %v211
        %vm2726 = vcmp.eq.s32.totalorder %v2545, %v210
        %vm2727 = vcmp.eq.s32.totalorder %v2545, %v211
        %vm2728 = vcmp.eq.s32.totalorder %v2548, %v210
        %vm2729 = vcmp.eq.s32.totalorder %v2548, %v211
        %vm2730 = vcmp.eq.s32.totalorder %v2551, %v210
        %vm2731 = vcmp.eq.s32.totalorder %v2551, %v211
        %vm2732 = vcmp.eq.s32.totalorder %v2554, %v210
        %vm2733 = vcmp.eq.s32.totalorder %v2554, %v211
        %vm2734 = vcmp.eq.s32.totalorder %v2557, %v210
        %vm2735 = vcmp.eq.s32.totalorder %v2557, %v211
        %vm2736 = vcmp.eq.s32.totalorder %v2560, %v210
        %vm2737 = vcmp.eq.s32.totalorder %v2560, %v211
        %vm2738 = vcmp.eq.s32.totalorder %v2563, %v210
        %vm2739 = vcmp.eq.s32.totalorder %v2563, %v211
        %vm2740 = vcmp.eq.s32.totalorder %v2566, %v210
        %vm2741 = vcmp.eq.s32.totalorder %v2566, %v211
        %vm2742 = vcmp.eq.s32.totalorder %v2569, %v210
        %vm2743 = vcmp.eq.s32.totalorder %v2569, %v211
        %vm2744 = vcmp.eq.s32.totalorder %v2572, %v210
        %vm2745 = vcmp.eq.s32.totalorder %v2572, %v211
        %vm2746 = vcmp.eq.s32.totalorder %v2575, %v210
        %vm2747 = vcmp.eq.s32.totalorder %v2575, %v211
        %vm2748 = vcmp.eq.s32.totalorder %v2578, %v210
        %vm2749 = vcmp.eq.s32.totalorder %v2578, %v211
        %vm2750 = vcmp.eq.s32.totalorder %v2581, %v210
        %vm2751 = vcmp.eq.s32.totalorder %v2581, %v211
        %vm2752 = vcmp.eq.s32.totalorder %v2584, %v210
        %vm2753 = vcmp.eq.s32.totalorder %v2584, %v211
        %vm2754 = vcmp.eq.s32.totalorder %v2587, %v210
        %vm2755 = vcmp.eq.s32.totalorder %v2587, %v211
        %vm2756 = vcmp.eq.s32.totalorder %v2590, %v210
        %vm2757 = vcmp.eq.s32.totalorder %v2590, %v211
        %vm2758 = vcmp.eq.s32.totalorder %v2593, %v210
        %vm2759 = vcmp.eq.s32.totalorder %v2593, %v211
        %vm2760 = vcmp.eq.s32.totalorder %v2596, %v210
        %vm2761 = vcmp.eq.s32.totalorder %v2596, %v211
        %vm2762 = vcmp.eq.s32.totalorder %v2599, %v210
        %vm2763 = vcmp.eq.s32.totalorder %v2599, %v211
        %vm2764 = vcmp.eq.s32.totalorder %v2602, %v210
        %vm2765 = vcmp.eq.s32.totalorder %v2602, %v211
        %vm2766 = vcmp.eq.s32.totalorder %v2605, %v210
        %vm2767 = vcmp.eq.s32.totalorder %v2605, %v211
        %vm2768 = vcmp.eq.s32.totalorder %v2608, %v210
        %vm2769 = vcmp.eq.s32.totalorder %v2608, %v211
        %vm2770 = vcmp.eq.s32.totalorder %v2611, %v210
        %vm2771 = vcmp.eq.s32.totalorder %v2611, %v211
        %vm2772 = vcmp.eq.s32.totalorder %v2614, %v210
        %vm2773 = vcmp.eq.s32.totalorder %v2614, %v211
        %vm2774 = vcmp.eq.s32.totalorder %v2617, %v210
        %vm2775 = vcmp.eq.s32.totalorder %v2617, %v211
        %vm2776 = vcmp.eq.s32.totalorder %v2620, %v210
        %vm2777 = vcmp.eq.s32.totalorder %v2620, %v211
        %vm2778 = vcmp.eq.s32.totalorder %v2623, %v210
        %vm2779 = vcmp.eq.s32.totalorder %v2623, %v211
        %vm2780 = vcmp.eq.s32.totalorder %v2626, %v210
        %vm2781 = vcmp.eq.s32.totalorder %v2626, %v211
        %vm2782 = vcmp.eq.s32.totalorder %v2629, %v210
        %vm2783 = vcmp.eq.s32.totalorder %v2629, %v211
        %vm2784 = vcmp.eq.s32.totalorder %v2632, %v210
        %vm2785 = vcmp.eq.s32.totalorder %v2632, %v211
        %vm2786 = vcmp.eq.s32.totalorder %v2635, %v210
        %vm2787 = vcmp.eq.s32.totalorder %v2635, %v211
        %vm2788 = vcmp.eq.s32.totalorder %v2638, %v210
        %vm2789 = vcmp.eq.s32.totalorder %v2638, %v211
        %vm2790 = vcmp.eq.s32.totalorder %v2641, %v210
        %vm2791 = vcmp.eq.s32.totalorder %v2641, %v211
        %vm2792 = vcmp.eq.s32.totalorder %v2644, %v210
        %vm2793 = vcmp.eq.s32.totalorder %v2644, %v211
        %vm2794 = vcmp.eq.s32.totalorder %v2647, %v210
        %vm2795 = vcmp.eq.s32.totalorder %v2647, %v211
        %vm2796 = vcmp.eq.s32.totalorder %v2650, %v210
        %vm2797 = vcmp.eq.s32.totalorder %v2650, %v211
        %vm2798 = vcmp.eq.s32.totalorder %v2653, %v210
        %vm2799 = vcmp.eq.s32.totalorder %v2653, %v211
        %vm2800 = vcmp.eq.s32.totalorder %v2656, %v210
        %vm2801 = vcmp.eq.s32.totalorder %v2656, %v211
        %vm2802 = vcmp.eq.s32.totalorder %v2659, %v210
        %vm2803 = vcmp.eq.s32.totalorder %v2659, %v211
        %vm2804 = vcmp.eq.s32.totalorder %v2662, %v210
        %vm2805 = vcmp.eq.s32.totalorder %v2662, %v211
        %vm2806 = vcmp.eq.s32.totalorder %v2665, %v210
        %vm2807 = vcmp.eq.s32.totalorder %v2665, %v211
        %vm2808 = vcmp.eq.s32.totalorder %v2668, %v210
        %vm2809 = vcmp.eq.s32.totalorder %v2668, %v211
        %vm2810 = vcmp.eq.s32.totalorder %v2671, %v210
        %vm2811 = vcmp.eq.s32.totalorder %v2671, %v211
        %vm2812 = vcmp.eq.s32.totalorder %v2674, %v210
        %vm2813 = vcmp.eq.s32.totalorder %v2674, %v211
        %vm2814 = vcmp.eq.s32.totalorder %v2677, %v210
        %vm2815 = vcmp.eq.s32.totalorder %v2677, %v211
        %vm2816 = vcmp.eq.s32.totalorder %v2680, %v210
        %vm2817 = vcmp.eq.s32.totalorder %v2680, %v211
        %vm2818 = vcmp.eq.s32.totalorder %v2683, %v210
        %vm2819 = vcmp.eq.s32.totalorder %v2683, %v211
        %vm2820 = vcmp.eq.s32.totalorder %v2686, %v210
        %vm2821 = vcmp.eq.s32.totalorder %v2686, %v211
        %vm2822 = vcmp.eq.s32.totalorder %v2689, %v210
        %vm2823 = vcmp.eq.s32.totalorder %v2689, %v211
        %vm2824 = vcmp.eq.s32.totalorder %v2692, %v210
        %vm2825 = vcmp.eq.s32.totalorder %v2692, %v211
        %vm2826 = vcmp.eq.s32.totalorder %v2695, %v210
        %vm2827 = vcmp.eq.s32.totalorder %v2695, %v211
        %vm2828 = vcmp.eq.s32.totalorder %v2698, %v210
        %vm2829 = vcmp.eq.s32.totalorder %v2698, %v211
        %vm2830 = vcmp.eq.s32.totalorder %v2701, %v210
        %vm2831 = vcmp.eq.s32.totalorder %v2701, %v211
        %vm2832 = vcmp.eq.s32.totalorder %v2704, %v210
        %vm2833 = vcmp.eq.s32.totalorder %v2704, %v211
        %vm2834 = vcmp.eq.s32.totalorder %v2707, %v210
        %vm2835 = vcmp.eq.s32.totalorder %v2707, %v211
        %v2836 = vsel %vm2708, 1, 0
        %v2837 = vsel %vm2709, 1, 0
        %v2838 = vsel %vm2710, 1, 0
        %v2839 = vsel %vm2711, 1, 0
        %v2840 = vsel %vm2712, 1, 0
        %v2841 = vsel %vm2713, 1, 0
        %v2842 = vsel %vm2714, 1, 0
        %v2843 = vsel %vm2715, 1, 0
        %v2844 = vsel %vm2716, 1, 0
        %v2845 = vsel %vm2717, 1, 0
        %v2846 = vsel %vm2718, 1, 0
        %v2847 = vsel %vm2719, 1, 0
        %v2848 = vsel %vm2720, 1, 0
        %v2849 = vsel %vm2721, 1, 0
        %v2850 = vsel %vm2722, 1, 0
        %v2851 = vsel %vm2723, 1, 0
        %v2852 = vsel %vm2724, 1, 0
        %v2853 = vsel %vm2725, 1, 0
        %v2854 = vsel %vm2726, 1, 0
        %v2855 = vsel %vm2727, 1, 0
        %v2856 = vsel %vm2728, 1, 0
        %v2857 = vsel %vm2729, 1, 0
        %v2858 = vsel %vm2730, 1, 0
        %v2859 = vsel %vm2731, 1, 0
        %v2860 = vsel %vm2732, 1, 0
        %v2861 = vsel %vm2733, 1, 0
        %v2862 = vsel %vm2734, 1, 0
        %v2863 = vsel %vm2735, 1, 0
        %v2864 = vsel %vm2736, 1, 0
        %v2865 = vsel %vm2737, 1, 0
        %v2866 = vsel %vm2738, 1, 0
        %v2867 = vsel %vm2739, 1, 0
        %v2868 = vsel %vm2740, 1, 0
        %v2869 = vsel %vm2741, 1, 0
        %v2870 = vsel %vm2742, 1, 0
        %v2871 = vsel %vm2743, 1, 0
        %v2872 = vsel %vm2744, 1, 0
        %v2873 = vsel %vm2745, 1, 0
        %v2874 = vsel %vm2746, 1, 0
        %v2875 = vsel %vm2747, 1, 0
        %v2876 = vsel %vm2748, 1, 0
        %v2877 = vsel %vm2749, 1, 0
        %v2878 = vsel %vm2750, 1, 0
        %v2879 = vsel %vm2751, 1, 0
        %v2880 = vsel %vm2752, 1, 0
        %v2881 = vsel %vm2753, 1, 0
        %v2882 = vsel %vm2754, 1, 0
        %v2883 = vsel %vm2755, 1, 0
        %v2884 = vsel %vm2756, 1, 0
        %v2885 = vsel %vm2757, 1, 0
        %v2886 = vsel %vm2758, 1, 0
        %v2887 = vsel %vm2759, 1, 0
        %v2888 = vsel %vm2760, 1, 0
        %v2889 = vsel %vm2761, 1, 0
        %v2890 = vsel %vm2762, 1, 0
        %v2891 = vsel %vm2763, 1, 0
        %v2892 = vsel %vm2764, 1, 0
        %v2893 = vsel %vm2765, 1, 0
        %v2894 = vsel %vm2766, 1, 0
        %v2895 = vsel %vm2767, 1, 0
        %v2896 = vsel %vm2768, 1, 0
        %v2897 = vsel %vm2769, 1, 0
        %v2898 = vsel %vm2770, 1, 0
        %v2899 = vsel %vm2771, 1, 0
        %v2900 = vsel %vm2772, 1, 0
        %v2901 = vsel %vm2773, 1, 0
        %v2902 = vsel %vm2774, 1, 0
        %v2903 = vsel %vm2775, 1, 0
        %v2904 = vsel %vm2776, 1, 0
        %v2905 = vsel %vm2777, 1, 0
        %v2906 = vsel %vm2778, 1, 0
        %v2907 = vsel %vm2779, 1, 0
        %v2908 = vsel %vm2780, 1, 0
        %v2909 = vsel %vm2781, 1, 0
        %v2910 = vsel %vm2782, 1, 0
        %v2911 = vsel %vm2783, 1, 0
        %v2912 = vsel %vm2784, 1, 0
        %v2913 = vsel %vm2785, 1, 0
        %v2914 = vsel %vm2786, 1, 0
        %v2915 = vsel %vm2787, 1, 0
        %v2916 = vsel %vm2788, 1, 0
        %v2917 = vsel %vm2789, 1, 0
        %v2918 = vsel %vm2790, 1, 0
        %v2919 = vsel %vm2791, 1, 0
        %v2920 = vsel %vm2792, 1, 0
        %v2921 = vsel %vm2793, 1, 0
        %v2922 = vsel %vm2794, 1, 0
        %v2923 = vsel %vm2795, 1, 0
        %v2924 = vsel %vm2796, 1, 0
        %v2925 = vsel %vm2797, 1, 0
        %v2926 = vsel %vm2798, 1, 0
        %v2927 = vsel %vm2799, 1, 0
        %v2928 = vsel %vm2800, 1, 0
        %v2929 = vsel %vm2801, 1, 0
        %v2930 = vsel %vm2802, 1, 0
        %v2931 = vsel %vm2803, 1, 0
        %v2932 = vsel %vm2804, 1, 0
        %v2933 = vsel %vm2805, 1, 0
        %v2934 = vsel %vm2806, 1, 0
        %v2935 = vsel %vm2807, 1, 0
        %v2936 = vsel %vm2808, 1, 0
        %v2937 = vsel %vm2809, 1, 0
        %v2938 = vsel %vm2810, 1, 0
        %v2939 = vsel %vm2811, 1, 0
        %v2940 = vsel %vm2812, 1, 0
        %v2941 = vsel %vm2813, 1, 0
        %v2942 = vsel %vm2814, 1, 0
        %v2943 = vsel %vm2815, 1, 0
        %v2944 = vsel %vm2816, 1, 0
        %v2945 = vsel %vm2817, 1, 0
        %v2946 = vsel %vm2818, 1, 0
        %v2947 = vsel %vm2819, 1, 0
        %v2948 = vsel %vm2820, 1, 0
        %v2949 = vsel %vm2821, 1, 0
        %v2950 = vsel %vm2822, 1, 0
        %v2951 = vsel %vm2823, 1, 0
        %v2952 = vsel %vm2824, 1, 0
        %v2953 = vsel %vm2825, 1, 0
        %v2954 = vsel %vm2826, 1, 0
        %v2955 = vsel %vm2827, 1, 0
        %v2956 = vsel %vm2828, 1, 0
        %v2957 = vsel %vm2829, 1, 0
        %v2958 = vsel %vm2830, 1, 0
        %v2959 = vsel %vm2831, 1, 0
        %v2960 = vsel %vm2832, 1, 0
        %v2961 = vsel %vm2833, 1, 0
        %v2962 = vsel %vm2834, 1, 0
        %v2963 = vsel %vm2835, 1, 0
        %v2964 = vcvt.s32.f32 %v2836
        %v2965 = vcvt.s32.f32 %v2837
        %v2966 = vcvt.s32.f32 %v2838
        %v2967 = vcvt.s32.f32 %v2839
        %v2968 = vcvt.s32.f32 %v2840
        %v2969 = vcvt.s32.f32 %v2841
        %v2970 = vcvt.s32.f32 %v2842
        %v2971 = vcvt.s32.f32 %v2843
        %v2972 = vcvt.s32.f32 %v2844
        %v2973 = vcvt.s32.f32 %v2845
        %v2974 = vcvt.s32.f32 %v2846
        %v2975 = vcvt.s32.f32 %v2847
        %v2976 = vcvt.s32.f32 %v2848
        %v2977 = vcvt.s32.f32 %v2849
        %v2978 = vcvt.s32.f32 %v2850
        %v2979 = vcvt.s32.f32 %v2851
        %v2980 = vcvt.s32.f32 %v2852
        %v2981 = vcvt.s32.f32 %v2853
        %v2982 = vcvt.s32.f32 %v2854
        %v2983 = vcvt.s32.f32 %v2855
        %v2984 = vcvt.s32.f32 %v2856
        %v2985 = vcvt.s32.f32 %v2857
        %v2986 = vcvt.s32.f32 %v2858
        %v2987 = vcvt.s32.f32 %v2859
        %v2988 = vcvt.s32.f32 %v2860
        %v2989 = vcvt.s32.f32 %v2861
        %v2990 = vcvt.s32.f32 %v2862
        %v2991 = vcvt.s32.f32 %v2863
        %v2992 = vcvt.s32.f32 %v2864
        %v2993 = vcvt.s32.f32 %v2865
        %v2994 = vcvt.s32.f32 %v2866
        %v2995 = vcvt.s32.f32 %v2867
        %v2996 = vcvt.s32.f32 %v2868
        %v2997 = vcvt.s32.f32 %v2869
        %v2998 = vcvt.s32.f32 %v2870
        %v2999 = vcvt.s32.f32 %v2871
        %v3000 = vcvt.s32.f32 %v2872
        %v3001 = vcvt.s32.f32 %v2873
        %v3002 = vcvt.s32.f32 %v2874
        %v3003 = vcvt.s32.f32 %v2875
        %v3004 = vcvt.s32.f32 %v2876
        %v3005 = vcvt.s32.f32 %v2877
        %v3006 = vcvt.s32.f32 %v2878
        %v3007 = vcvt.s32.f32 %v2879
        %v3008 = vcvt.s32.f32 %v2880
        %v3009 = vcvt.s32.f32 %v2881
        %v3010 = vcvt.s32.f32 %v2882
        %v3011 = vcvt.s32.f32 %v2883
        %v3012 = vcvt.s32.f32 %v2884
        %v3013 = vcvt.s32.f32 %v2885
        %v3014 = vcvt.s32.f32 %v2886
        %v3015 = vcvt.s32.f32 %v2887
        %v3016 = vcvt.s32.f32 %v2888
        %v3017 = vcvt.s32.f32 %v2889
        %v3018 = vcvt.s32.f32 %v2890
        %v3019 = vcvt.s32.f32 %v2891
        %v3020 = vcvt.s32.f32 %v2892
        %v3021 = vcvt.s32.f32 %v2893
        %v3022 = vcvt.s32.f32 %v2894
        %v3023 = vcvt.s32.f32 %v2895
        %v3024 = vcvt.s32.f32 %v2896
        %v3025 = vcvt.s32.f32 %v2897
        %v3026 = vcvt.s32.f32 %v2898
        %v3027 = vcvt.s32.f32 %v2899
        %v3028 = vcvt.s32.f32 %v2900
        %v3029 = vcvt.s32.f32 %v2901
        %v3030 = vcvt.s32.f32 %v2902
        %v3031 = vcvt.s32.f32 %v2903
        %v3032 = vcvt.s32.f32 %v2904
        %v3033 = vcvt.s32.f32 %v2905
        %v3034 = vcvt.s32.f32 %v2906
        %v3035 = vcvt.s32.f32 %v2907
        %v3036 = vcvt.s32.f32 %v2908
        %v3037 = vcvt.s32.f32 %v2909
        %v3038 = vcvt.s32.f32 %v2910
        %v3039 = vcvt.s32.f32 %v2911
        %v3040 = vcvt.s32.f32 %v2912
        %v3041 = vcvt.s32.f32 %v2913
        %v3042 = vcvt.s32.f32 %v2914
        %v3043 = vcvt.s32.f32 %v2915
        %v3044 = vcvt.s32.f32 %v2916
        %v3045 = vcvt.s32.f32 %v2917
        %v3046 = vcvt.s32.f32 %v2918
        %v3047 = vcvt.s32.f32 %v2919
        %v3048 = vcvt.s32.f32 %v2920
        %v3049 = vcvt.s32.f32 %v2921
        %v3050 = vcvt.s32.f32 %v2922
        %v3051 = vcvt.s32.f32 %v2923
        %v3052 = vcvt.s32.f32 %v2924
        %v3053 = vcvt.s32.f32 %v2925
        %v3054 = vcvt.s32.f32 %v2926
        %v3055 = vcvt.s32.f32 %v2927
        %v3056 = vcvt.s32.f32 %v2928
        %v3057 = vcvt.s32.f32 %v2929
        %v3058 = vcvt.s32.f32 %v2930
        %v3059 = vcvt.s32.f32 %v2931
        %v3060 = vcvt.s32.f32 %v2932
        %v3061 = vcvt.s32.f32 %v2933
        %v3062 = vcvt.s32.f32 %v2934
        %v3063 = vcvt.s32.f32 %v2935
        %v3064 = vcvt.s32.f32 %v2936
        %v3065 = vcvt.s32.f32 %v2937
        %v3066 = vcvt.s32.f32 %v2938
        %v3067 = vcvt.s32.f32 %v2939
        %v3068 = vcvt.s32.f32 %v2940
        %v3069 = vcvt.s32.f32 %v2941
        %v3070 = vcvt.s32.f32 %v2942
        %v3071 = vcvt.s32.f32 %v2943
        %v3072 = vcvt.s32.f32 %v2944
        %v3073 = vcvt.s32.f32 %v2945
        %v3074 = vcvt.s32.f32 %v2946
        %v3075 = vcvt.s32.f32 %v2947
        %v3076 = vcvt.s32.f32 %v2948
        %v3077 = vcvt.s32.f32 %v2949
        %v3078 = vcvt.s32.f32 %v2950
        %v3079 = vcvt.s32.f32 %v2951
        %v3080 = vcvt.s32.f32 %v2952
        %v3081 = vcvt.s32.f32 %v2953
        %v3082 = vcvt.s32.f32 %v2954
        %v3083 = vcvt.s32.f32 %v2955
        %v3084 = vcvt.s32.f32 %v2956
        %v3085 = vcvt.s32.f32 %v2957
        %v3086 = vcvt.s32.f32 %v2958
        %v3087 = vcvt.s32.f32 %v2959
        %v3088 = vcvt.s32.f32 %v2960
        %v3089 = vcvt.s32.f32 %v2961
        %v3090 = vcvt.s32.f32 %v2962
        %v3091 = vcvt.s32.f32 %v2963
        %v3092 = vadd.f32 %v2324, %v2964
        %v3093 = vadd.f32 %v2325, %v2965
        %v3094 = vadd.f32 %v2326, %v2966
        %v3095 = vadd.f32 %v2327, %v2967
        %v3096 = vadd.f32 %v2328, %v2968
        %v3097 = vadd.f32 %v2329, %v2969
        %v3098 = vadd.f32 %v2330, %v2970
        %v3099 = vadd.f32 %v2331, %v2971
        %v3100 = vadd.f32 %v2332, %v2972
        %v3101 = vadd.f32 %v2333, %v2973
        %v3102 = vadd.f32 %v2334, %v2974
        %v3103 = vadd.f32 %v2335, %v2975
        %v3104 = vadd.f32 %v2336, %v2976
        %v3105 = vadd.f32 %v2337, %v2977
        %v3106 = vadd.f32 %v2338, %v2978
        %v3107 = vadd.f32 %v2339, %v2979
        %v3108 = vadd.f32 %v2340, %v2980
        %v3109 = vadd.f32 %v2341, %v2981
        %v3110 = vadd.f32 %v2342, %v2982
        %v3111 = vadd.f32 %v2343, %v2983
        %v3112 = vadd.f32 %v2344, %v2984
        %v3113 = vadd.f32 %v2345, %v2985
        %v3114 = vadd.f32 %v2346, %v2986
        %v3115 = vadd.f32 %v2347, %v2987
        %v3116 = vadd.f32 %v2348, %v2988
        %v3117 = vadd.f32 %v2349, %v2989
        %v3118 = vadd.f32 %v2350, %v2990
        %v3119 = vadd.f32 %v2351, %v2991
        %v3120 = vadd.f32 %v2352, %v2992
        %v3121 = vadd.f32 %v2353, %v2993
        %v3122 = vadd.f32 %v2354, %v2994
        %v3123 = vadd.f32 %v2355, %v2995
        %v3124 = vadd.f32 %v2356, %v2996
        %v3125 = vadd.f32 %v2357, %v2997
        %v3126 = vadd.f32 %v2358, %v2998
        %v3127 = vadd.f32 %v2359, %v2999
        %v3128 = vadd.f32 %v2360, %v3000
        %v3129 = vadd.f32 %v2361, %v3001
        %v3130 = vadd.f32 %v2362, %v3002
        %v3131 = vadd.f32 %v2363, %v3003
        %v3132 = vadd.f32 %v2364, %v3004
        %v3133 = vadd.f32 %v2365, %v3005
        %v3134 = vadd.f32 %v2366, %v3006
        %v3135 = vadd.f32 %v2367, %v3007
        %v3136 = vadd.f32 %v2368, %v3008
        %v3137 = vadd.f32 %v2369, %v3009
        %v3138 = vadd.f32 %v2370, %v3010
        %v3139 = vadd.f32 %v2371, %v3011
        %v3140 = vadd.f32 %v2372, %v3012
        %v3141 = vadd.f32 %v2373, %v3013
        %v3142 = vadd.f32 %v2374, %v3014
        %v3143 = vadd.f32 %v2375, %v3015
        %v3144 = vadd.f32 %v2376, %v3016
        %v3145 = vadd.f32 %v2377, %v3017
        %v3146 = vadd.f32 %v2378, %v3018
        %v3147 = vadd.f32 %v2379, %v3019
        %v3148 = vadd.f32 %v2380, %v3020
        %v3149 = vadd.f32 %v2381, %v3021
        %v3150 = vadd.f32 %v2382, %v3022
        %v3151 = vadd.f32 %v2383, %v3023
        %v3152 = vadd.f32 %v2384, %v3024
        %v3153 = vadd.f32 %v2385, %v3025
        %v3154 = vadd.f32 %v2386, %v3026
        %v3155 = vadd.f32 %v2387, %v3027
        %v3156 = vadd.f32 %v2388, %v3028
        %v3157 = vadd.f32 %v2389, %v3029
        %v3158 = vadd.f32 %v2390, %v3030
        %v3159 = vadd.f32 %v2391, %v3031
        %v3160 = vadd.f32 %v2392, %v3032
        %v3161 = vadd.f32 %v2393, %v3033
        %v3162 = vadd.f32 %v2394, %v3034
        %v3163 = vadd.f32 %v2395, %v3035
        %v3164 = vadd.f32 %v2396, %v3036
        %v3165 = vadd.f32 %v2397, %v3037
        %v3166 = vadd.f32 %v2398, %v3038
        %v3167 = vadd.f32 %v2399, %v3039
        %v3168 = vadd.f32 %v2400, %v3040
        %v3169 = vadd.f32 %v2401, %v3041
        %v3170 = vadd.f32 %v2402, %v3042
        %v3171 = vadd.f32 %v2403, %v3043
        %v3172 = vadd.f32 %v2404, %v3044
        %v3173 = vadd.f32 %v2405, %v3045
        %v3174 = vadd.f32 %v2406, %v3046
        %v3175 = vadd.f32 %v2407, %v3047
        %v3176 = vadd.f32 %v2408, %v3048
        %v3177 = vadd.f32 %v2409, %v3049
        %v3178 = vadd.f32 %v2410, %v3050
        %v3179 = vadd.f32 %v2411, %v3051
        %v3180 = vadd.f32 %v2412, %v3052
        %v3181 = vadd.f32 %v2413, %v3053
        %v3182 = vadd.f32 %v2414, %v3054
        %v3183 = vadd.f32 %v2415, %v3055
        %v3184 = vadd.f32 %v2416, %v3056
        %v3185 = vadd.f32 %v2417, %v3057
        %v3186 = vadd.f32 %v2418, %v3058
        %v3187 = vadd.f32 %v2419, %v3059
        %v3188 = vadd.f32 %v2420, %v3060
        %v3189 = vadd.f32 %v2421, %v3061
        %v3190 = vadd.f32 %v2422, %v3062
        %v3191 = vadd.f32 %v2423, %v3063
        %v3192 = vadd.f32 %v2424, %v3064
        %v3193 = vadd.f32 %v2425, %v3065
        %v3194 = vadd.f32 %v2426, %v3066
        %v3195 = vadd.f32 %v2427, %v3067
        %v3196 = vadd.f32 %v2428, %v3068
        %v3197 = vadd.f32 %v2429, %v3069
        %v3198 = vadd.f32 %v2430, %v3070
        %v3199 = vadd.f32 %v2431, %v3071
        %v3200 = vadd.f32 %v2432, %v3072
        %v3201 = vadd.f32 %v2433, %v3073
        %v3202 = vadd.f32 %v2434, %v3074
        %v3203 = vadd.f32 %v2435, %v3075
        %v3204 = vadd.f32 %v2436, %v3076
        %v3205 = vadd.f32 %v2437, %v3077
        %v3206 = vadd.f32 %v2438, %v3078
        %v3207 = vadd.f32 %v2439, %v3079
        %v3208 = vadd.f32 %v2440, %v3080
        %v3209 = vadd.f32 %v2441, %v3081
        %v3210 = vadd.f32 %v2442, %v3082
        %v3211 = vadd.f32 %v2443, %v3083
        %v3212 = vadd.f32 %v2444, %v3084
        %v3213 = vadd.f32 %v2445, %v3085
        %v3214 = vadd.f32 %v2446, %v3086
        %v3215 = vadd.f32 %v2447, %v3087
        %v3216 = vadd.f32 %v2448, %v3088
        %v3217 = vadd.f32 %v2449, %v3089
        %v3218 = vadd.f32 %v2450, %v3090
        %v3219 = vadd.f32 %v2451, %v3091
        %v3220 = vadd.s32 %v145, 147
        %v3221 = vadd.s32 %v146, 147
        %v3222 = vadd.s32 %v147, 147
        %v3223 = vadd.s32 %v148, 147
        %v3224 = vadd.s32 %v149, 147
        %v3225 = vadd.s32 %v150, 147
        %v3226 = vadd.s32 %v151, 147
        %v3227 = vadd.s32 %v152, 147
        %v3228 = vadd.s32 %v153, 147
        %v3229 = vadd.s32 %v154, 147
        %v3230 = vadd.s32 %v155, 147
        %v3231 = vadd.s32 %v156, 147
        %v3232 = vadd.s32 %v157, 147
        %v3233 = vadd.s32 %v158, 147
        %v3234 = vadd.s32 %v159, 147
        %v3235 = vadd.s32 %v160, 147
        %v3236 = vadd.s32 %v161, 147
        %v3237 = vadd.s32 %v162, 147
        %v3238 = vadd.s32 %v163, 147
        %v3239 = vadd.s32 %v164, 147
        %v3240 = vadd.s32 %v165, 147
        %v3241 = vadd.s32 %v166, 147
        %v3242 = vadd.s32 %v167, 147
        %v3243 = vadd.s32 %v168, 147
        %v3244 = vadd.s32 %v169, 147
        %v3245 = vadd.s32 %v170, 147
        %v3246 = vadd.s32 %v171, 147
        %v3247 = vadd.s32 %v172, 147
        %v3248 = vadd.s32 %v173, 147
        %v3249 = vadd.s32 %v174, 147
        %v3250 = vadd.s32 %v175, 147
        %v3251 = vadd.s32 %v176, 147
        %v3252 = vadd.s32 %v177, 147
        %v3253 = vadd.s32 %v178, 147
        %v3254 = vadd.s32 %v179, 147
        %v3255 = vadd.s32 %v180, 147
        %v3256 = vadd.s32 %v181, 147
        %v3257 = vadd.s32 %v182, 147
        %v3258 = vadd.s32 %v183, 147
        %v3259 = vadd.s32 %v184, 147
        %v3260 = vadd.s32 %v185, 147
        %v3261 = vadd.s32 %v186, 147
        %v3262 = vadd.s32 %v187, 147
        %v3263 = vadd.s32 %v188, 147
        %v3264 = vadd.s32 %v189, 147
        %v3265 = vadd.s32 %v190, 147
        %v3266 = vadd.s32 %v191, 147
        %v3267 = vadd.s32 %v192, 147
        %v3268 = vadd.s32 %v193, 147
        %v3269 = vadd.s32 %v194, 147
        %v3270 = vadd.s32 %v195, 147
        %v3271 = vadd.s32 %v196, 147
        %v3272 = vadd.s32 %v197, 147
        %v3273 = vadd.s32 %v198, 147
        %v3274 = vadd.s32 %v199, 147
        %v3275 = vadd.s32 %v200, 147
        %v3276 = vadd.s32 %v201, 147
        %v3277 = vadd.s32 %v202, 147
        %v3278 = vadd.s32 %v203, 147
        %v3279 = vadd.s32 %v204, 147
        %v3280 = vadd.s32 %v205, 147
        %v3281 = vadd.s32 %v206, 147
        %v3282 = vadd.s32 %v207, 147
        %v3283 = vadd.s32 %v208, 147
        %3284 = vset.pattern.permute.xlu0 4
        %3285 = vperm.xlu0 %3284, %v3220
        %v3286 = vpop.permute.xlu0 %3285
        %3287 = vset.pattern.permute.xlu0 4
        %3288 = vperm.xlu0 %3287, %v3221
        %v3289 = vpop.permute.xlu0 %3288
        %3290 = vset.pattern.permute.xlu0 4
        %3291 = vperm.xlu0 %3290, %v3222
        %v3292 = vpop.permute.xlu0 %3291
        %3293 = vset.pattern.permute.xlu0 4
        %3294 = vperm.xlu0 %3293, %v3223
        %v3295 = vpop.permute.xlu0 %3294
        %3296 = vset.pattern.permute.xlu0 4
        %3297 = vperm.xlu0 %3296, %v3224
        %v3298 = vpop.permute.xlu0 %3297
        %3299 = vset.pattern.permute.xlu0 4
        %3300 = vperm.xlu0 %3299, %v3225
        %v3301 = vpop.permute.xlu0 %3300
        %3302 = vset.pattern.permute.xlu0 4
        %3303 = vperm.xlu0 %3302, %v3226
        %v3304 = vpop.permute.xlu0 %3303
        %3305 = vset.pattern.permute.xlu0 4
        %3306 = vperm.xlu0 %3305, %v3227
        %v3307 = vpop.permute.xlu0 %3306
        %3308 = vset.pattern.permute.xlu0 4
        %3309 = vperm.xlu0 %3308, %v3228
        %v3310 = vpop.permute.xlu0 %3309
        %3311 = vset.pattern.permute.xlu0 4
        %3312 = vperm.xlu0 %3311, %v3229
        %v3313 = vpop.permute.xlu0 %3312
        %3314 = vset.pattern.permute.xlu0 4
        %3315 = vperm.xlu0 %3314, %v3230
        %v3316 = vpop.permute.xlu0 %3315
        %3317 = vset.pattern.permute.xlu0 4
        %3318 = vperm.xlu0 %3317, %v3231
        %v3319 = vpop.permute.xlu0 %3318
        %3320 = vset.pattern.permute.xlu0 4
        %3321 = vperm.xlu0 %3320, %v3232
        %v3322 = vpop.permute.xlu0 %3321
        %3323 = vset.pattern.permute.xlu0 4
        %3324 = vperm.xlu0 %3323, %v3233
        %v3325 = vpop.permute.xlu0 %3324
        %3326 = vset.pattern.permute.xlu0 4
        %3327 = vperm.xlu0 %3326, %v3234
        %v3328 = vpop.permute.xlu0 %3327
        %3329 = vset.pattern.permute.xlu0 4
        %3330 = vperm.xlu0 %3329, %v3235
        %v3331 = vpop.permute.xlu0 %3330
        %3332 = vset.pattern.permute.xlu0 4
        %3333 = vperm.xlu0 %3332, %v3236
        %v3334 = vpop.permute.xlu0 %3333
        %3335 = vset.pattern.permute.xlu0 4
        %3336 = vperm.xlu0 %3335, %v3237
        %v3337 = vpop.permute.xlu0 %3336
        %3338 = vset.pattern.permute.xlu0 4
        %3339 = vperm.xlu0 %3338, %v3238
        %v3340 = vpop.permute.xlu0 %3339
        %3341 = vset.pattern.permute.xlu0 4
        %3342 = vperm.xlu0 %3341, %v3239
        %v3343 = vpop.permute.xlu0 %3342
        %3344 = vset.pattern.permute.xlu0 4
        %3345 = vperm.xlu0 %3344, %v3240
        %v3346 = vpop.permute.xlu0 %3345
        %3347 = vset.pattern.permute.xlu0 4
        %3348 = vperm.xlu0 %3347, %v3241
        %v3349 = vpop.permute.xlu0 %3348
        %3350 = vset.pattern.permute.xlu0 4
        %3351 = vperm.xlu0 %3350, %v3242
        %v3352 = vpop.permute.xlu0 %3351
        %3353 = vset.pattern.permute.xlu0 4
        %3354 = vperm.xlu0 %3353, %v3243
        %v3355 = vpop.permute.xlu0 %3354
        %3356 = vset.pattern.permute.xlu0 4
        %3357 = vperm.xlu0 %3356, %v3244
        %v3358 = vpop.permute.xlu0 %3357
        %3359 = vset.pattern.permute.xlu0 4
        %3360 = vperm.xlu0 %3359, %v3245
        %v3361 = vpop.permute.xlu0 %3360
        %3362 = vset.pattern.permute.xlu0 4
        %3363 = vperm.xlu0 %3362, %v3246
        %v3364 = vpop.permute.xlu0 %3363
        %3365 = vset.pattern.permute.xlu0 4
        %3366 = vperm.xlu0 %3365, %v3247
        %v3367 = vpop.permute.xlu0 %3366
        %3368 = vset.pattern.permute.xlu0 4
        %3369 = vperm.xlu0 %3368, %v3248
        %v3370 = vpop.permute.xlu0 %3369
        %3371 = vset.pattern.permute.xlu0 4
        %3372 = vperm.xlu0 %3371, %v3249
        %v3373 = vpop.permute.xlu0 %3372
        %3374 = vset.pattern.permute.xlu0 4
        %3375 = vperm.xlu0 %3374, %v3250
        %v3376 = vpop.permute.xlu0 %3375
        %3377 = vset.pattern.permute.xlu0 4
        %3378 = vperm.xlu0 %3377, %v3251
        %v3379 = vpop.permute.xlu0 %3378
        %3380 = vset.pattern.permute.xlu0 4
        %3381 = vperm.xlu0 %3380, %v3252
        %v3382 = vpop.permute.xlu0 %3381
        %3383 = vset.pattern.permute.xlu0 4
        %3384 = vperm.xlu0 %3383, %v3253
        %v3385 = vpop.permute.xlu0 %3384
        %3386 = vset.pattern.permute.xlu0 4
        %3387 = vperm.xlu0 %3386, %v3254
        %v3388 = vpop.permute.xlu0 %3387
        %3389 = vset.pattern.permute.xlu0 4
        %3390 = vperm.xlu0 %3389, %v3255
        %v3391 = vpop.permute.xlu0 %3390
        %3392 = vset.pattern.permute.xlu0 4
        %3393 = vperm.xlu0 %3392, %v3256
        %v3394 = vpop.permute.xlu0 %3393
        %3395 = vset.pattern.permute.xlu0 4
        %3396 = vperm.xlu0 %3395, %v3257
        %v3397 = vpop.permute.xlu0 %3396
        %3398 = vset.pattern.permute.xlu0 4
        %3399 = vperm.xlu0 %3398, %v3258
        %v3400 = vpop.permute.xlu0 %3399
        %3401 = vset.pattern.permute.xlu0 4
        %3402 = vperm.xlu0 %3401, %v3259
        %v3403 = vpop.permute.xlu0 %3402
        %3404 = vset.pattern.permute.xlu0 4
        %3405 = vperm.xlu0 %3404, %v3260
        %v3406 = vpop.permute.xlu0 %3405
        %3407 = vset.pattern.permute.xlu0 4
        %3408 = vperm.xlu0 %3407, %v3261
        %v3409 = vpop.permute.xlu0 %3408
        %3410 = vset.pattern.permute.xlu0 4
        %3411 = vperm.xlu0 %3410, %v3262
        %v3412 = vpop.permute.xlu0 %3411
        %3413 = vset.pattern.permute.xlu0 4
        %3414 = vperm.xlu0 %3413, %v3263
        %v3415 = vpop.permute.xlu0 %3414
        %3416 = vset.pattern.permute.xlu0 4
        %3417 = vperm.xlu0 %3416, %v3264
        %v3418 = vpop.permute.xlu0 %3417
        %3419 = vset.pattern.permute.xlu0 4
        %3420 = vperm.xlu0 %3419, %v3265
        %v3421 = vpop.permute.xlu0 %3420
        %3422 = vset.pattern.permute.xlu0 4
        %3423 = vperm.xlu0 %3422, %v3266
        %v3424 = vpop.permute.xlu0 %3423
        %3425 = vset.pattern.permute.xlu0 4
        %3426 = vperm.xlu0 %3425, %v3267
        %v3427 = vpop.permute.xlu0 %3426
        %3428 = vset.pattern.permute.xlu0 4
        %3429 = vperm.xlu0 %3428, %v3268
        %v3430 = vpop.permute.xlu0 %3429
        %3431 = vset.pattern.permute.xlu0 4
        %3432 = vperm.xlu0 %3431, %v3269
        %v3433 = vpop.permute.xlu0 %3432
        %3434 = vset.pattern.permute.xlu0 4
        %3435 = vperm.xlu0 %3434, %v3270
        %v3436 = vpop.permute.xlu0 %3435
        %3437 = vset.pattern.permute.xlu0 4
        %3438 = vperm.xlu0 %3437, %v3271
        %v3439 = vpop.permute.xlu0 %3438
        %3440 = vset.pattern.permute.xlu0 4
        %3441 = vperm.xlu0 %3440, %v3272
        %v3442 = vpop.permute.xlu0 %3441
        %3443 = vset.pattern.permute.xlu0 4
        %3444 = vperm.xlu0 %3443, %v3273
        %v3445 = vpop.permute.xlu0 %3444
        %3446 = vset.pattern.permute.xlu0 4
        %3447 = vperm.xlu0 %3446, %v3274
        %v3448 = vpop.permute.xlu0 %3447
        %3449 = vset.pattern.permute.xlu0 4
        %3450 = vperm.xlu0 %3449, %v3275
        %v3451 = vpop.permute.xlu0 %3450
        %3452 = vset.pattern.permute.xlu0 4
        %3453 = vperm.xlu0 %3452, %v3276
        %v3454 = vpop.permute.xlu0 %3453
        %3455 = vset.pattern.permute.xlu0 4
        %3456 = vperm.xlu0 %3455, %v3277
        %v3457 = vpop.permute.xlu0 %3456
        %3458 = vset.pattern.permute.xlu0 4
        %3459 = vperm.xlu0 %3458, %v3278
        %v3460 = vpop.permute.xlu0 %3459
        %3461 = vset.pattern.permute.xlu0 4
        %3462 = vperm.xlu0 %3461, %v3279
        %v3463 = vpop.permute.xlu0 %3462
        %3464 = vset.pattern.permute.xlu0 4
        %3465 = vperm.xlu0 %3464, %v3280
        %v3466 = vpop.permute.xlu0 %3465
        %3467 = vset.pattern.permute.xlu0 4
        %3468 = vperm.xlu0 %3467, %v3281
        %v3469 = vpop.permute.xlu0 %3468
        %3470 = vset.pattern.permute.xlu0 4
        %3471 = vperm.xlu0 %3470, %v3282
        %v3472 = vpop.permute.xlu0 %3471
        %3473 = vset.pattern.permute.xlu0 4
        %3474 = vperm.xlu0 %3473, %v3283
        %v3475 = vpop.permute.xlu0 %3474
        %vm3476 = vcmp.eq.s32.totalorder %v3286, %v210
        %vm3477 = vcmp.eq.s32.totalorder %v3286, %v211
        %vm3478 = vcmp.eq.s32.totalorder %v3289, %v210
        %vm3479 = vcmp.eq.s32.totalorder %v3289, %v211
        %vm3480 = vcmp.eq.s32.totalorder %v3292, %v210
        %vm3481 = vcmp.eq.s32.totalorder %v3292, %v211
        %vm3482 = vcmp.eq.s32.totalorder %v3295, %v210
        %vm3483 = vcmp.eq.s32.totalorder %v3295, %v211
        %vm3484 = vcmp.eq.s32.totalorder %v3298, %v210
        %vm3485 = vcmp.eq.s32.totalorder %v3298, %v211
        %vm3486 = vcmp.eq.s32.totalorder %v3301, %v210
        %vm3487 = vcmp.eq.s32.totalorder %v3301, %v211
        %vm3488 = vcmp.eq.s32.totalorder %v3304, %v210
        %vm3489 = vcmp.eq.s32.totalorder %v3304, %v211
        %vm3490 = vcmp.eq.s32.totalorder %v3307, %v210
        %vm3491 = vcmp.eq.s32.totalorder %v3307, %v211
        %vm3492 = vcmp.eq.s32.totalorder %v3310, %v210
        %vm3493 = vcmp.eq.s32.totalorder %v3310, %v211
        %vm3494 = vcmp.eq.s32.totalorder %v3313, %v210
        %vm3495 = vcmp.eq.s32.totalorder %v3313, %v211
        %vm3496 = vcmp.eq.s32.totalorder %v3316, %v210
        %vm3497 = vcmp.eq.s32.totalorder %v3316, %v211
        %vm3498 = vcmp.eq.s32.totalorder %v3319, %v210
        %vm3499 = vcmp.eq.s32.totalorder %v3319, %v211
        %vm3500 = vcmp.eq.s32.totalorder %v3322, %v210
        %vm3501 = vcmp.eq.s32.totalorder %v3322, %v211
        %vm3502 = vcmp.eq.s32.totalorder %v3325, %v210
        %vm3503 = vcmp.eq.s32.totalorder %v3325, %v211
        %vm3504 = vcmp.eq.s32.totalorder %v3328, %v210
        %vm3505 = vcmp.eq.s32.totalorder %v3328, %v211
        %vm3506 = vcmp.eq.s32.totalorder %v3331, %v210
        %vm3507 = vcmp.eq.s32.totalorder %v3331, %v211
        %vm3508 = vcmp.eq.s32.totalorder %v3334, %v210
        %vm3509 = vcmp.eq.s32.totalorder %v3334, %v211
        %vm3510 = vcmp.eq.s32.totalorder %v3337, %v210
        %vm3511 = vcmp.eq.s32.totalorder %v3337, %v211
        %vm3512 = vcmp.eq.s32.totalorder %v3340, %v210
        %vm3513 = vcmp.eq.s32.totalorder %v3340, %v211
        %vm3514 = vcmp.eq.s32.totalorder %v3343, %v210
        %vm3515 = vcmp.eq.s32.totalorder %v3343, %v211
        %vm3516 = vcmp.eq.s32.totalorder %v3346, %v210
        %vm3517 = vcmp.eq.s32.totalorder %v3346, %v211
        %vm3518 = vcmp.eq.s32.totalorder %v3349, %v210
        %vm3519 = vcmp.eq.s32.totalorder %v3349, %v211
        %vm3520 = vcmp.eq.s32.totalorder %v3352, %v210
        %vm3521 = vcmp.eq.s32.totalorder %v3352, %v211
        %vm3522 = vcmp.eq.s32.totalorder %v3355, %v210
        %vm3523 = vcmp.eq.s32.totalorder %v3355, %v211
        %vm3524 = vcmp.eq.s32.totalorder %v3358, %v210
        %vm3525 = vcmp.eq.s32.totalorder %v3358, %v211
        %vm3526 = vcmp.eq.s32.totalorder %v3361, %v210
        %vm3527 = vcmp.eq.s32.totalorder %v3361, %v211
        %vm3528 = vcmp.eq.s32.totalorder %v3364, %v210
        %vm3529 = vcmp.eq.s32.totalorder %v3364, %v211
        %vm3530 = vcmp.eq.s32.totalorder %v3367, %v210
        %vm3531 = vcmp.eq.s32.totalorder %v3367, %v211
        %vm3532 = vcmp.eq.s32.totalorder %v3370, %v210
        %vm3533 = vcmp.eq.s32.totalorder %v3370, %v211
        %vm3534 = vcmp.eq.s32.totalorder %v3373, %v210
        %vm3535 = vcmp.eq.s32.totalorder %v3373, %v211
        %vm3536 = vcmp.eq.s32.totalorder %v3376, %v210
        %vm3537 = vcmp.eq.s32.totalorder %v3376, %v211
        %vm3538 = vcmp.eq.s32.totalorder %v3379, %v210
        %vm3539 = vcmp.eq.s32.totalorder %v3379, %v211
        %vm3540 = vcmp.eq.s32.totalorder %v3382, %v210
        %vm3541 = vcmp.eq.s32.totalorder %v3382, %v211
        %vm3542 = vcmp.eq.s32.totalorder %v3385, %v210
        %vm3543 = vcmp.eq.s32.totalorder %v3385, %v211
        %vm3544 = vcmp.eq.s32.totalorder %v3388, %v210
        %vm3545 = vcmp.eq.s32.totalorder %v3388, %v211
        %vm3546 = vcmp.eq.s32.totalorder %v3391, %v210
        %vm3547 = vcmp.eq.s32.totalorder %v3391, %v211
        %vm3548 = vcmp.eq.s32.totalorder %v3394, %v210
        %vm3549 = vcmp.eq.s32.totalorder %v3394, %v211
        %vm3550 = vcmp.eq.s32.totalorder %v3397, %v210
        %vm3551 = vcmp.eq.s32.totalorder %v3397, %v211
        %vm3552 = vcmp.eq.s32.totalorder %v3400, %v210
        %vm3553 = vcmp.eq.s32.totalorder %v3400, %v211
        %vm3554 = vcmp.eq.s32.totalorder %v3403, %v210
        %vm3555 = vcmp.eq.s32.totalorder %v3403, %v211
        %vm3556 = vcmp.eq.s32.totalorder %v3406, %v210
        %vm3557 = vcmp.eq.s32.totalorder %v3406, %v211
        %vm3558 = vcmp.eq.s32.totalorder %v3409, %v210
        %vm3559 = vcmp.eq.s32.totalorder %v3409, %v211
        %vm3560 = vcmp.eq.s32.totalorder %v3412, %v210
        %vm3561 = vcmp.eq.s32.totalorder %v3412, %v211
        %vm3562 = vcmp.eq.s32.totalorder %v3415, %v210
        %vm3563 = vcmp.eq.s32.totalorder %v3415, %v211
        %vm3564 = vcmp.eq.s32.totalorder %v3418, %v210
        %vm3565 = vcmp.eq.s32.totalorder %v3418, %v211
        %vm3566 = vcmp.eq.s32.totalorder %v3421, %v210
        %vm3567 = vcmp.eq.s32.totalorder %v3421, %v211
        %vm3568 = vcmp.eq.s32.totalorder %v3424, %v210
        %vm3569 = vcmp.eq.s32.totalorder %v3424, %v211
        %vm3570 = vcmp.eq.s32.totalorder %v3427, %v210
        %vm3571 = vcmp.eq.s32.totalorder %v3427, %v211
        %vm3572 = vcmp.eq.s32.totalorder %v3430, %v210
        %vm3573 = vcmp.eq.s32.totalorder %v3430, %v211
        %vm3574 = vcmp.eq.s32.totalorder %v3433, %v210
        %vm3575 = vcmp.eq.s32.totalorder %v3433, %v211
        %vm3576 = vcmp.eq.s32.totalorder %v3436, %v210
        %vm3577 = vcmp.eq.s32.totalorder %v3436, %v211
        %vm3578 = vcmp.eq.s32.totalorder %v3439, %v210
        %vm3579 = vcmp.eq.s32.totalorder %v3439, %v211
        %vm3580 = vcmp.eq.s32.totalorder %v3442, %v210
        %vm3581 = vcmp.eq.s32.totalorder %v3442, %v211
        %vm3582 = vcmp.eq.s32.totalorder %v3445, %v210
        %vm3583 = vcmp.eq.s32.totalorder %v3445, %v211
        %vm3584 = vcmp.eq.s32.totalorder %v3448, %v210
        %vm3585 = vcmp.eq.s32.totalorder %v3448, %v211
        %vm3586 = vcmp.eq.s32.totalorder %v3451, %v210
        %vm3587 = vcmp.eq.s32.totalorder %v3451, %v211
        %vm3588 = vcmp.eq.s32.totalorder %v3454, %v210
        %vm3589 = vcmp.eq.s32.totalorder %v3454, %v211
        %vm3590 = vcmp.eq.s32.totalorder %v3457, %v210
        %vm3591 = vcmp.eq.s32.totalorder %v3457, %v211
        %vm3592 = vcmp.eq.s32.totalorder %v3460, %v210
        %vm3593 = vcmp.eq.s32.totalorder %v3460, %v211
        %vm3594 = vcmp.eq.s32.totalorder %v3463, %v210
        %vm3595 = vcmp.eq.s32.totalorder %v3463, %v211
        %vm3596 = vcmp.eq.s32.totalorder %v3466, %v210
        %vm3597 = vcmp.eq.s32.totalorder %v3466, %v211
        %vm3598 = vcmp.eq.s32.totalorder %v3469, %v210
        %vm3599 = vcmp.eq.s32.totalorder %v3469, %v211
        %vm3600 = vcmp.eq.s32.totalorder %v3472, %v210
        %vm3601 = vcmp.eq.s32.totalorder %v3472, %v211
        %vm3602 = vcmp.eq.s32.totalorder %v3475, %v210
        %vm3603 = vcmp.eq.s32.totalorder %v3475, %v211
        %v3604 = vsel %vm3476, 1, 0
        %v3605 = vsel %vm3477, 1, 0
        %v3606 = vsel %vm3478, 1, 0
        %v3607 = vsel %vm3479, 1, 0
        %v3608 = vsel %vm3480, 1, 0
        %v3609 = vsel %vm3481, 1, 0
        %v3610 = vsel %vm3482, 1, 0
        %v3611 = vsel %vm3483, 1, 0
        %v3612 = vsel %vm3484, 1, 0
        %v3613 = vsel %vm3485, 1, 0
        %v3614 = vsel %vm3486, 1, 0
        %v3615 = vsel %vm3487, 1, 0
        %v3616 = vsel %vm3488, 1, 0
        %v3617 = vsel %vm3489, 1, 0
        %v3618 = vsel %vm3490, 1, 0
        %v3619 = vsel %vm3491, 1, 0
        %v3620 = vsel %vm3492, 1, 0
        %v3621 = vsel %vm3493, 1, 0
        %v3622 = vsel %vm3494, 1, 0
        %v3623 = vsel %vm3495, 1, 0
        %v3624 = vsel %vm3496, 1, 0
        %v3625 = vsel %vm3497, 1, 0
        %v3626 = vsel %vm3498, 1, 0
        %v3627 = vsel %vm3499, 1, 0
        %v3628 = vsel %vm3500, 1, 0
        %v3629 = vsel %vm3501, 1, 0
        %v3630 = vsel %vm3502, 1, 0
        %v3631 = vsel %vm3503, 1, 0
        %v3632 = vsel %vm3504, 1, 0
        %v3633 = vsel %vm3505, 1, 0
        %v3634 = vsel %vm3506, 1, 0
        %v3635 = vsel %vm3507, 1, 0
        %v3636 = vsel %vm3508, 1, 0
        %v3637 = vsel %vm3509, 1, 0
        %v3638 = vsel %vm3510, 1, 0
        %v3639 = vsel %vm3511, 1, 0
        %v3640 = vsel %vm3512, 1, 0
        %v3641 = vsel %vm3513, 1, 0
        %v3642 = vsel %vm3514, 1, 0
        %v3643 = vsel %vm3515, 1, 0
        %v3644 = vsel %vm3516, 1, 0
        %v3645 = vsel %vm3517, 1, 0
        %v3646 = vsel %vm3518, 1, 0
        %v3647 = vsel %vm3519, 1, 0
        %v3648 = vsel %vm3520, 1, 0
        %v3649 = vsel %vm3521, 1, 0
        %v3650 = vsel %vm3522, 1, 0
        %v3651 = vsel %vm3523, 1, 0
        %v3652 = vsel %vm3524, 1, 0
        %v3653 = vsel %vm3525, 1, 0
        %v3654 = vsel %vm3526, 1, 0
        %v3655 = vsel %vm3527, 1, 0
        %v3656 = vsel %vm3528, 1, 0
        %v3657 = vsel %vm3529, 1, 0
        %v3658 = vsel %vm3530, 1, 0
        %v3659 = vsel %vm3531, 1, 0
        %v3660 = vsel %vm3532, 1, 0
        %v3661 = vsel %vm3533, 1, 0
        %v3662 = vsel %vm3534, 1, 0
        %v3663 = vsel %vm3535, 1, 0
        %v3664 = vsel %vm3536, 1, 0
        %v3665 = vsel %vm3537, 1, 0
        %v3666 = vsel %vm3538, 1, 0
        %v3667 = vsel %vm3539, 1, 0
        %v3668 = vsel %vm3540, 1, 0
        %v3669 = vsel %vm3541, 1, 0
        %v3670 = vsel %vm3542, 1, 0
        %v3671 = vsel %vm3543, 1, 0
        %v3672 = vsel %vm3544, 1, 0
        %v3673 = vsel %vm3545, 1, 0
        %v3674 = vsel %vm3546, 1, 0
        %v3675 = vsel %vm3547, 1, 0
        %v3676 = vsel %vm3548, 1, 0
        %v3677 = vsel %vm3549, 1, 0
        %v3678 = vsel %vm3550, 1, 0
        %v3679 = vsel %vm3551, 1, 0
        %v3680 = vsel %vm3552, 1, 0
        %v3681 = vsel %vm3553, 1, 0
        %v3682 = vsel %vm3554, 1, 0
        %v3683 = vsel %vm3555, 1, 0
        %v3684 = vsel %vm3556, 1, 0
        %v3685 = vsel %vm3557, 1, 0
        %v3686 = vsel %vm3558, 1, 0
        %v3687 = vsel %vm3559, 1, 0
        %v3688 = vsel %vm3560, 1, 0
        %v3689 = vsel %vm3561, 1, 0
        %v3690 = vsel %vm3562, 1, 0
        %v3691 = vsel %vm3563, 1, 0
        %v3692 = vsel %vm3564, 1, 0
        %v3693 = vsel %vm3565, 1, 0
        %v3694 = vsel %vm3566, 1, 0
        %v3695 = vsel %vm3567, 1, 0
        %v3696 = vsel %vm3568, 1, 0
        %v3697 = vsel %vm3569, 1, 0
        %v3698 = vsel %vm3570, 1, 0
        %v3699 = vsel %vm3571, 1, 0
        %v3700 = vsel %vm3572, 1, 0
        %v3701 = vsel %vm3573, 1, 0
        %v3702 = vsel %vm3574, 1, 0
        %v3703 = vsel %vm3575, 1, 0
        %v3704 = vsel %vm3576, 1, 0
        %v3705 = vsel %vm3577, 1, 0
        %v3706 = vsel %vm3578, 1, 0
        %v3707 = vsel %vm3579, 1, 0
        %v3708 = vsel %vm3580, 1, 0
        %v3709 = vsel %vm3581, 1, 0
        %v3710 = vsel %vm3582, 1, 0
        %v3711 = vsel %vm3583, 1, 0
        %v3712 = vsel %vm3584, 1, 0
        %v3713 = vsel %vm3585, 1, 0
        %v3714 = vsel %vm3586, 1, 0
        %v3715 = vsel %vm3587, 1, 0
        %v3716 = vsel %vm3588, 1, 0
        %v3717 = vsel %vm3589, 1, 0
        %v3718 = vsel %vm3590, 1, 0
        %v3719 = vsel %vm3591, 1, 0
        %v3720 = vsel %vm3592, 1, 0
        %v3721 = vsel %vm3593, 1, 0
        %v3722 = vsel %vm3594, 1, 0
        %v3723 = vsel %vm3595, 1, 0
        %v3724 = vsel %vm3596, 1, 0
        %v3725 = vsel %vm3597, 1, 0
        %v3726 = vsel %vm3598, 1, 0
        %v3727 = vsel %vm3599, 1, 0
        %v3728 = vsel %vm3600, 1, 0
        %v3729 = vsel %vm3601, 1, 0
        %v3730 = vsel %vm3602, 1, 0
        %v3731 = vsel %vm3603, 1, 0
        %v3732 = vcvt.s32.f32 %v3604
        %v3733 = vcvt.s32.f32 %v3605
        %v3734 = vcvt.s32.f32 %v3606
        %v3735 = vcvt.s32.f32 %v3607
        %v3736 = vcvt.s32.f32 %v3608
        %v3737 = vcvt.s32.f32 %v3609
        %v3738 = vcvt.s32.f32 %v3610
        %v3739 = vcvt.s32.f32 %v3611
        %v3740 = vcvt.s32.f32 %v3612
        %v3741 = vcvt.s32.f32 %v3613
        %v3742 = vcvt.s32.f32 %v3614
        %v3743 = vcvt.s32.f32 %v3615
        %v3744 = vcvt.s32.f32 %v3616
        %v3745 = vcvt.s32.f32 %v3617
        %v3746 = vcvt.s32.f32 %v3618
        %v3747 = vcvt.s32.f32 %v3619
        %v3748 = vcvt.s32.f32 %v3620
        %v3749 = vcvt.s32.f32 %v3621
        %v3750 = vcvt.s32.f32 %v3622
        %v3751 = vcvt.s32.f32 %v3623
        %v3752 = vcvt.s32.f32 %v3624
        %v3753 = vcvt.s32.f32 %v3625
        %v3754 = vcvt.s32.f32 %v3626
        %v3755 = vcvt.s32.f32 %v3627
        %v3756 = vcvt.s32.f32 %v3628
        %v3757 = vcvt.s32.f32 %v3629
        %v3758 = vcvt.s32.f32 %v3630
        %v3759 = vcvt.s32.f32 %v3631
        %v3760 = vcvt.s32.f32 %v3632
        %v3761 = vcvt.s32.f32 %v3633
        %v3762 = vcvt.s32.f32 %v3634
        %v3763 = vcvt.s32.f32 %v3635
        %v3764 = vcvt.s32.f32 %v3636
        %v3765 = vcvt.s32.f32 %v3637
        %v3766 = vcvt.s32.f32 %v3638
        %v3767 = vcvt.s32.f32 %v3639
        %v3768 = vcvt.s32.f32 %v3640
        %v3769 = vcvt.s32.f32 %v3641
        %v3770 = vcvt.s32.f32 %v3642
        %v3771 = vcvt.s32.f32 %v3643
        %v3772 = vcvt.s32.f32 %v3644
        %v3773 = vcvt.s32.f32 %v3645
        %v3774 = vcvt.s32.f32 %v3646
        %v3775 = vcvt.s32.f32 %v3647
        %v3776 = vcvt.s32.f32 %v3648
        %v3777 = vcvt.s32.f32 %v3649
        %v3778 = vcvt.s32.f32 %v3650
        %v3779 = vcvt.s32.f32 %v3651
        %v3780 = vcvt.s32.f32 %v3652
        %v3781 = vcvt.s32.f32 %v3653
        %v3782 = vcvt.s32.f32 %v3654
        %v3783 = vcvt.s32.f32 %v3655
        %v3784 = vcvt.s32.f32 %v3656
        %v3785 = vcvt.s32.f32 %v3657
        %v3786 = vcvt.s32.f32 %v3658
        %v3787 = vcvt.s32.f32 %v3659
        %v3788 = vcvt.s32.f32 %v3660
        %v3789 = vcvt.s32.f32 %v3661
        %v3790 = vcvt.s32.f32 %v3662
        %v3791 = vcvt.s32.f32 %v3663
        %v3792 = vcvt.s32.f32 %v3664
        %v3793 = vcvt.s32.f32 %v3665
        %v3794 = vcvt.s32.f32 %v3666
        %v3795 = vcvt.s32.f32 %v3667
        %v3796 = vcvt.s32.f32 %v3668
        %v3797 = vcvt.s32.f32 %v3669
        %v3798 = vcvt.s32.f32 %v3670
        %v3799 = vcvt.s32.f32 %v3671
        %v3800 = vcvt.s32.f32 %v3672
        %v3801 = vcvt.s32.f32 %v3673
        %v3802 = vcvt.s32.f32 %v3674
        %v3803 = vcvt.s32.f32 %v3675
        %v3804 = vcvt.s32.f32 %v3676
        %v3805 = vcvt.s32.f32 %v3677
        %v3806 = vcvt.s32.f32 %v3678
        %v3807 = vcvt.s32.f32 %v3679
        %v3808 = vcvt.s32.f32 %v3680
        %v3809 = vcvt.s32.f32 %v3681
        %v3810 = vcvt.s32.f32 %v3682
        %v3811 = vcvt.s32.f32 %v3683
        %v3812 = vcvt.s32.f32 %v3684
        %v3813 = vcvt.s32.f32 %v3685
        %v3814 = vcvt.s32.f32 %v3686
        %v3815 = vcvt.s32.f32 %v3687
        %v3816 = vcvt.s32.f32 %v3688
        %v3817 = vcvt.s32.f32 %v3689
        %v3818 = vcvt.s32.f32 %v3690
        %v3819 = vcvt.s32.f32 %v3691
        %v3820 = vcvt.s32.f32 %v3692
        %v3821 = vcvt.s32.f32 %v3693
        %v3822 = vcvt.s32.f32 %v3694
        %v3823 = vcvt.s32.f32 %v3695
        %v3824 = vcvt.s32.f32 %v3696
        %v3825 = vcvt.s32.f32 %v3697
        %v3826 = vcvt.s32.f32 %v3698
        %v3827 = vcvt.s32.f32 %v3699
        %v3828 = vcvt.s32.f32 %v3700
        %v3829 = vcvt.s32.f32 %v3701
        %v3830 = vcvt.s32.f32 %v3702
        %v3831 = vcvt.s32.f32 %v3703
        %v3832 = vcvt.s32.f32 %v3704
        %v3833 = vcvt.s32.f32 %v3705
        %v3834 = vcvt.s32.f32 %v3706
        %v3835 = vcvt.s32.f32 %v3707
        %v3836 = vcvt.s32.f32 %v3708
        %v3837 = vcvt.s32.f32 %v3709
        %v3838 = vcvt.s32.f32 %v3710
        %v3839 = vcvt.s32.f32 %v3711
        %v3840 = vcvt.s32.f32 %v3712
        %v3841 = vcvt.s32.f32 %v3713
        %v3842 = vcvt.s32.f32 %v3714
        %v3843 = vcvt.s32.f32 %v3715
        %v3844 = vcvt.s32.f32 %v3716
        %v3845 = vcvt.s32.f32 %v3717
        %v3846 = vcvt.s32.f32 %v3718
        %v3847 = vcvt.s32.f32 %v3719
        %v3848 = vcvt.s32.f32 %v3720
        %v3849 = vcvt.s32.f32 %v3721
        %v3850 = vcvt.s32.f32 %v3722
        %v3851 = vcvt.s32.f32 %v3723
        %v3852 = vcvt.s32.f32 %v3724
        %v3853 = vcvt.s32.f32 %v3725
        %v3854 = vcvt.s32.f32 %v3726
        %v3855 = vcvt.s32.f32 %v3727
        %v3856 = vcvt.s32.f32 %v3728
        %v3857 = vcvt.s32.f32 %v3729
        %v3858 = vcvt.s32.f32 %v3730
        %v3859 = vcvt.s32.f32 %v3731
        %v3860 = vadd.f32 %v3092, %v3732
        %v3861 = vadd.f32 %v3093, %v3733
        %v3862 = vadd.f32 %v3094, %v3734
        %v3863 = vadd.f32 %v3095, %v3735
        %v3864 = vadd.f32 %v3096, %v3736
        %v3865 = vadd.f32 %v3097, %v3737
        %v3866 = vadd.f32 %v3098, %v3738
        %v3867 = vadd.f32 %v3099, %v3739
        %v3868 = vadd.f32 %v3100, %v3740
        %v3869 = vadd.f32 %v3101, %v3741
        %v3870 = vadd.f32 %v3102, %v3742
        %v3871 = vadd.f32 %v3103, %v3743
        %v3872 = vadd.f32 %v3104, %v3744
        %v3873 = vadd.f32 %v3105, %v3745
        %v3874 = vadd.f32 %v3106, %v3746
        %v3875 = vadd.f32 %v3107, %v3747
        %v3876 = vadd.f32 %v3108, %v3748
        %v3877 = vadd.f32 %v3109, %v3749
        %v3878 = vadd.f32 %v3110, %v3750
        %v3879 = vadd.f32 %v3111, %v3751
        %v3880 = vadd.f32 %v3112, %v3752
        %v3881 = vadd.f32 %v3113, %v3753
        %v3882 = vadd.f32 %v3114, %v3754
        %v3883 = vadd.f32 %v3115, %v3755
        %v3884 = vadd.f32 %v3116, %v3756
        %v3885 = vadd.f32 %v3117, %v3757
        %v3886 = vadd.f32 %v3118, %v3758
        %v3887 = vadd.f32 %v3119, %v3759
        %v3888 = vadd.f32 %v3120, %v3760
        %v3889 = vadd.f32 %v3121, %v3761
        %v3890 = vadd.f32 %v3122, %v3762
        %v3891 = vadd.f32 %v3123, %v3763
        %v3892 = vadd.f32 %v3124, %v3764
        %v3893 = vadd.f32 %v3125, %v3765
        %v3894 = vadd.f32 %v3126, %v3766
        %v3895 = vadd.f32 %v3127, %v3767
        %v3896 = vadd.f32 %v3128, %v3768
        %v3897 = vadd.f32 %v3129, %v3769
        %v3898 = vadd.f32 %v3130, %v3770
        %v3899 = vadd.f32 %v3131, %v3771
        %v3900 = vadd.f32 %v3132, %v3772
        %v3901 = vadd.f32 %v3133, %v3773
        %v3902 = vadd.f32 %v3134, %v3774
        %v3903 = vadd.f32 %v3135, %v3775
        %v3904 = vadd.f32 %v3136, %v3776
        %v3905 = vadd.f32 %v3137, %v3777
        %v3906 = vadd.f32 %v3138, %v3778
        %v3907 = vadd.f32 %v3139, %v3779
        %v3908 = vadd.f32 %v3140, %v3780
        %v3909 = vadd.f32 %v3141, %v3781
        %v3910 = vadd.f32 %v3142, %v3782
        %v3911 = vadd.f32 %v3143, %v3783
        %v3912 = vadd.f32 %v3144, %v3784
        %v3913 = vadd.f32 %v3145, %v3785
        %v3914 = vadd.f32 %v3146, %v3786
        %v3915 = vadd.f32 %v3147, %v3787
        %v3916 = vadd.f32 %v3148, %v3788
        %v3917 = vadd.f32 %v3149, %v3789
        %v3918 = vadd.f32 %v3150, %v3790
        %v3919 = vadd.f32 %v3151, %v3791
        %v3920 = vadd.f32 %v3152, %v3792
        %v3921 = vadd.f32 %v3153, %v3793
        %v3922 = vadd.f32 %v3154, %v3794
        %v3923 = vadd.f32 %v3155, %v3795
        %v3924 = vadd.f32 %v3156, %v3796
        %v3925 = vadd.f32 %v3157, %v3797
        %v3926 = vadd.f32 %v3158, %v3798
        %v3927 = vadd.f32 %v3159, %v3799
        %v3928 = vadd.f32 %v3160, %v3800
        %v3929 = vadd.f32 %v3161, %v3801
        %v3930 = vadd.f32 %v3162, %v3802
        %v3931 = vadd.f32 %v3163, %v3803
        %v3932 = vadd.f32 %v3164, %v3804
        %v3933 = vadd.f32 %v3165, %v3805
        %v3934 = vadd.f32 %v3166, %v3806
        %v3935 = vadd.f32 %v3167, %v3807
        %v3936 = vadd.f32 %v3168, %v3808
        %v3937 = vadd.f32 %v3169, %v3809
        %v3938 = vadd.f32 %v3170, %v3810
        %v3939 = vadd.f32 %v3171, %v3811
        %v3940 = vadd.f32 %v3172, %v3812
        %v3941 = vadd.f32 %v3173, %v3813
        %v3942 = vadd.f32 %v3174, %v3814
        %v3943 = vadd.f32 %v3175, %v3815
        %v3944 = vadd.f32 %v3176, %v3816
        %v3945 = vadd.f32 %v3177, %v3817
        %v3946 = vadd.f32 %v3178, %v3818
        %v3947 = vadd.f32 %v3179, %v3819
        %v3948 = vadd.f32 %v3180, %v3820
        %v3949 = vadd.f32 %v3181, %v3821
        %v3950 = vadd.f32 %v3182, %v3822
        %v3951 = vadd.f32 %v3183, %v3823
        %v3952 = vadd.f32 %v3184, %v3824
        %v3953 = vadd.f32 %v3185, %v3825
        %v3954 = vadd.f32 %v3186, %v3826
        %v3955 = vadd.f32 %v3187, %v3827
        %v3956 = vadd.f32 %v3188, %v3828
        %v3957 = vadd.f32 %v3189, %v3829
        %v3958 = vadd.f32 %v3190, %v3830
        %v3959 = vadd.f32 %v3191, %v3831
        %v3960 = vadd.f32 %v3192, %v3832
        %v3961 = vadd.f32 %v3193, %v3833
        %v3962 = vadd.f32 %v3194, %v3834
        %v3963 = vadd.f32 %v3195, %v3835
        %v3964 = vadd.f32 %v3196, %v3836
        %v3965 = vadd.f32 %v3197, %v3837
        %v3966 = vadd.f32 %v3198, %v3838
        %v3967 = vadd.f32 %v3199, %v3839
        %v3968 = vadd.f32 %v3200, %v3840
        %v3969 = vadd.f32 %v3201, %v3841
        %v3970 = vadd.f32 %v3202, %v3842
        %v3971 = vadd.f32 %v3203, %v3843
        %v3972 = vadd.f32 %v3204, %v3844
        %v3973 = vadd.f32 %v3205, %v3845
        %v3974 = vadd.f32 %v3206, %v3846
        %v3975 = vadd.f32 %v3207, %v3847
        %v3976 = vadd.f32 %v3208, %v3848
        %v3977 = vadd.f32 %v3209, %v3849
        %v3978 = vadd.f32 %v3210, %v3850
        %v3979 = vadd.f32 %v3211, %v3851
        %v3980 = vadd.f32 %v3212, %v3852
        %v3981 = vadd.f32 %v3213, %v3853
        %v3982 = vadd.f32 %v3214, %v3854
        %v3983 = vadd.f32 %v3215, %v3855
        %v3984 = vadd.f32 %v3216, %v3856
        %v3985 = vadd.f32 %v3217, %v3857
        %v3986 = vadd.f32 %v3218, %v3858
        %v3987 = vadd.f32 %v3219, %v3859
        %v3988 = vadd.s32 %v145, 157
        %v3989 = vadd.s32 %v146, 157
        %v3990 = vadd.s32 %v147, 157
        %v3991 = vadd.s32 %v148, 157
        %v3992 = vadd.s32 %v149, 157
        %v3993 = vadd.s32 %v150, 157
        %v3994 = vadd.s32 %v151, 157
        %v3995 = vadd.s32 %v152, 157
        %v3996 = vadd.s32 %v153, 157
        %v3997 = vadd.s32 %v154, 157
        %v3998 = vadd.s32 %v155, 157
        %v3999 = vadd.s32 %v156, 157
        %v4000 = vadd.s32 %v157, 157
        %v4001 = vadd.s32 %v158, 157
        %v4002 = vadd.s32 %v159, 157
        %v4003 = vadd.s32 %v160, 157
        %v4004 = vadd.s32 %v161, 157
        %v4005 = vadd.s32 %v162, 157
        %v4006 = vadd.s32 %v163, 157
        %v4007 = vadd.s32 %v164, 157
        %v4008 = vadd.s32 %v165, 157
        %v4009 = vadd.s32 %v166, 157
        %v4010 = vadd.s32 %v167, 157
        %v4011 = vadd.s32 %v168, 157
        %v4012 = vadd.s32 %v169, 157
        %v4013 = vadd.s32 %v170, 157
        %v4014 = vadd.s32 %v171, 157
        %v4015 = vadd.s32 %v172, 157
        %v4016 = vadd.s32 %v173, 157
        %v4017 = vadd.s32 %v174, 157
        %v4018 = vadd.s32 %v175, 157
        %v4019 = vadd.s32 %v176, 157
        %v4020 = vadd.s32 %v177, 157
        %v4021 = vadd.s32 %v178, 157
        %v4022 = vadd.s32 %v179, 157
        %v4023 = vadd.s32 %v180, 157
        %v4024 = vadd.s32 %v181, 157
        %v4025 = vadd.s32 %v182, 157
        %v4026 = vadd.s32 %v183, 157
        %v4027 = vadd.s32 %v184, 157
        %v4028 = vadd.s32 %v185, 157
        %v4029 = vadd.s32 %v186, 157
        %v4030 = vadd.s32 %v187, 157
        %v4031 = vadd.s32 %v188, 157
        %v4032 = vadd.s32 %v189, 157
        %v4033 = vadd.s32 %v190, 157
        %v4034 = vadd.s32 %v191, 157
        %v4035 = vadd.s32 %v192, 157
        %v4036 = vadd.s32 %v193, 157
        %v4037 = vadd.s32 %v194, 157
        %v4038 = vadd.s32 %v195, 157
        %v4039 = vadd.s32 %v196, 157
        %v4040 = vadd.s32 %v197, 157
        %v4041 = vadd.s32 %v198, 157
        %v4042 = vadd.s32 %v199, 157
        %v4043 = vadd.s32 %v200, 157
        %v4044 = vadd.s32 %v201, 157
        %v4045 = vadd.s32 %v202, 157
        %v4046 = vadd.s32 %v203, 157
        %v4047 = vadd.s32 %v204, 157
        %v4048 = vadd.s32 %v205, 157
        %v4049 = vadd.s32 %v206, 157
        %v4050 = vadd.s32 %v207, 157
        %v4051 = vadd.s32 %v208, 157
        %4052 = vset.pattern.permute.xlu0 5
        %4053 = vperm.xlu0 %4052, %v3988
        %v4054 = vpop.permute.xlu0 %4053
        %4055 = vset.pattern.permute.xlu0 5
        %4056 = vperm.xlu0 %4055, %v3989
        %v4057 = vpop.permute.xlu0 %4056
        %4058 = vset.pattern.permute.xlu0 5
        %4059 = vperm.xlu0 %4058, %v3990
        %v4060 = vpop.permute.xlu0 %4059
        %4061 = vset.pattern.permute.xlu0 5
        %4062 = vperm.xlu0 %4061, %v3991
        %v4063 = vpop.permute.xlu0 %4062
        %4064 = vset.pattern.permute.xlu0 5
        %4065 = vperm.xlu0 %4064, %v3992
        %v4066 = vpop.permute.xlu0 %4065
        %4067 = vset.pattern.permute.xlu0 5
        %4068 = vperm.xlu0 %4067, %v3993
        %v4069 = vpop.permute.xlu0 %4068
        %4070 = vset.pattern.permute.xlu0 5
        %4071 = vperm.xlu0 %4070, %v3994
        %v4072 = vpop.permute.xlu0 %4071
        %4073 = vset.pattern.permute.xlu0 5
        %4074 = vperm.xlu0 %4073, %v3995
        %v4075 = vpop.permute.xlu0 %4074
        %4076 = vset.pattern.permute.xlu0 5
        %4077 = vperm.xlu0 %4076, %v3996
        %v4078 = vpop.permute.xlu0 %4077
        %4079 = vset.pattern.permute.xlu0 5
        %4080 = vperm.xlu0 %4079, %v3997
        %v4081 = vpop.permute.xlu0 %4080
        %4082 = vset.pattern.permute.xlu0 5
        %4083 = vperm.xlu0 %4082, %v3998
        %v4084 = vpop.permute.xlu0 %4083
        %4085 = vset.pattern.permute.xlu0 5
        %4086 = vperm.xlu0 %4085, %v3999
        %v4087 = vpop.permute.xlu0 %4086
        %4088 = vset.pattern.permute.xlu0 5
        %4089 = vperm.xlu0 %4088, %v4000
        %v4090 = vpop.permute.xlu0 %4089
        %4091 = vset.pattern.permute.xlu0 5
        %4092 = vperm.xlu0 %4091, %v4001
        %v4093 = vpop.permute.xlu0 %4092
        %4094 = vset.pattern.permute.xlu0 5
        %4095 = vperm.xlu0 %4094, %v4002
        %v4096 = vpop.permute.xlu0 %4095
        %4097 = vset.pattern.permute.xlu0 5
        %4098 = vperm.xlu0 %4097, %v4003
        %v4099 = vpop.permute.xlu0 %4098
        %4100 = vset.pattern.permute.xlu0 5
        %4101 = vperm.xlu0 %4100, %v4004
        %v4102 = vpop.permute.xlu0 %4101
        %4103 = vset.pattern.permute.xlu0 5
        %4104 = vperm.xlu0 %4103, %v4005
        %v4105 = vpop.permute.xlu0 %4104
        %4106 = vset.pattern.permute.xlu0 5
        %4107 = vperm.xlu0 %4106, %v4006
        %v4108 = vpop.permute.xlu0 %4107
        %4109 = vset.pattern.permute.xlu0 5
        %4110 = vperm.xlu0 %4109, %v4007
        %v4111 = vpop.permute.xlu0 %4110
        %4112 = vset.pattern.permute.xlu0 5
        %4113 = vperm.xlu0 %4112, %v4008
        %v4114 = vpop.permute.xlu0 %4113
        %4115 = vset.pattern.permute.xlu0 5
        %4116 = vperm.xlu0 %4115, %v4009
        %v4117 = vpop.permute.xlu0 %4116
        %4118 = vset.pattern.permute.xlu0 5
        %4119 = vperm.xlu0 %4118, %v4010
        %v4120 = vpop.permute.xlu0 %4119
        %4121 = vset.pattern.permute.xlu0 5
        %4122 = vperm.xlu0 %4121, %v4011
        %v4123 = vpop.permute.xlu0 %4122
        %4124 = vset.pattern.permute.xlu0 5
        %4125 = vperm.xlu0 %4124, %v4012
        %v4126 = vpop.permute.xlu0 %4125
        %4127 = vset.pattern.permute.xlu0 5
        %4128 = vperm.xlu0 %4127, %v4013
        %v4129 = vpop.permute.xlu0 %4128
        %4130 = vset.pattern.permute.xlu0 5
        %4131 = vperm.xlu0 %4130, %v4014
        %v4132 = vpop.permute.xlu0 %4131
        %4133 = vset.pattern.permute.xlu0 5
        %4134 = vperm.xlu0 %4133, %v4015
        %v4135 = vpop.permute.xlu0 %4134
        %4136 = vset.pattern.permute.xlu0 5
        %4137 = vperm.xlu0 %4136, %v4016
        %v4138 = vpop.permute.xlu0 %4137
        %4139 = vset.pattern.permute.xlu0 5
        %4140 = vperm.xlu0 %4139, %v4017
        %v4141 = vpop.permute.xlu0 %4140
        %4142 = vset.pattern.permute.xlu0 5
        %4143 = vperm.xlu0 %4142, %v4018
        %v4144 = vpop.permute.xlu0 %4143
        %4145 = vset.pattern.permute.xlu0 5
        %4146 = vperm.xlu0 %4145, %v4019
        %v4147 = vpop.permute.xlu0 %4146
        %4148 = vset.pattern.permute.xlu0 5
        %4149 = vperm.xlu0 %4148, %v4020
        %v4150 = vpop.permute.xlu0 %4149
        %4151 = vset.pattern.permute.xlu0 5
        %4152 = vperm.xlu0 %4151, %v4021
        %v4153 = vpop.permute.xlu0 %4152
        %4154 = vset.pattern.permute.xlu0 5
        %4155 = vperm.xlu0 %4154, %v4022
        %v4156 = vpop.permute.xlu0 %4155
        %4157 = vset.pattern.permute.xlu0 5
        %4158 = vperm.xlu0 %4157, %v4023
        %v4159 = vpop.permute.xlu0 %4158
        %4160 = vset.pattern.permute.xlu0 5
        %4161 = vperm.xlu0 %4160, %v4024
        %v4162 = vpop.permute.xlu0 %4161
        %4163 = vset.pattern.permute.xlu0 5
        %4164 = vperm.xlu0 %4163, %v4025
        %v4165 = vpop.permute.xlu0 %4164
        %4166 = vset.pattern.permute.xlu0 5
        %4167 = vperm.xlu0 %4166, %v4026
        %v4168 = vpop.permute.xlu0 %4167
        %4169 = vset.pattern.permute.xlu0 5
        %4170 = vperm.xlu0 %4169, %v4027
        %v4171 = vpop.permute.xlu0 %4170
        %4172 = vset.pattern.permute.xlu0 5
        %4173 = vperm.xlu0 %4172, %v4028
        %v4174 = vpop.permute.xlu0 %4173
        %4175 = vset.pattern.permute.xlu0 5
        %4176 = vperm.xlu0 %4175, %v4029
        %v4177 = vpop.permute.xlu0 %4176
        %4178 = vset.pattern.permute.xlu0 5
        %4179 = vperm.xlu0 %4178, %v4030
        %v4180 = vpop.permute.xlu0 %4179
        %4181 = vset.pattern.permute.xlu0 5
        %4182 = vperm.xlu0 %4181, %v4031
        %v4183 = vpop.permute.xlu0 %4182
        %4184 = vset.pattern.permute.xlu0 5
        %4185 = vperm.xlu0 %4184, %v4032
        %v4186 = vpop.permute.xlu0 %4185
        %4187 = vset.pattern.permute.xlu0 5
        %4188 = vperm.xlu0 %4187, %v4033
        %v4189 = vpop.permute.xlu0 %4188
        %4190 = vset.pattern.permute.xlu0 5
        %4191 = vperm.xlu0 %4190, %v4034
        %v4192 = vpop.permute.xlu0 %4191
        %4193 = vset.pattern.permute.xlu0 5
        %4194 = vperm.xlu0 %4193, %v4035
        %v4195 = vpop.permute.xlu0 %4194
        %4196 = vset.pattern.permute.xlu0 5
        %4197 = vperm.xlu0 %4196, %v4036
        %v4198 = vpop.permute.xlu0 %4197
        %4199 = vset.pattern.permute.xlu0 5
        %4200 = vperm.xlu0 %4199, %v4037
        %v4201 = vpop.permute.xlu0 %4200
        %4202 = vset.pattern.permute.xlu0 5
        %4203 = vperm.xlu0 %4202, %v4038
        %v4204 = vpop.permute.xlu0 %4203
        %4205 = vset.pattern.permute.xlu0 5
        %4206 = vperm.xlu0 %4205, %v4039
        %v4207 = vpop.permute.xlu0 %4206
        %4208 = vset.pattern.permute.xlu0 5
        %4209 = vperm.xlu0 %4208, %v4040
        %v4210 = vpop.permute.xlu0 %4209
        %4211 = vset.pattern.permute.xlu0 5
        %4212 = vperm.xlu0 %4211, %v4041
        %v4213 = vpop.permute.xlu0 %4212
        %4214 = vset.pattern.permute.xlu0 5
        %4215 = vperm.xlu0 %4214, %v4042
        %v4216 = vpop.permute.xlu0 %4215
        %4217 = vset.pattern.permute.xlu0 5
        %4218 = vperm.xlu0 %4217, %v4043
        %v4219 = vpop.permute.xlu0 %4218
        %4220 = vset.pattern.permute.xlu0 5
        %4221 = vperm.xlu0 %4220, %v4044
        %v4222 = vpop.permute.xlu0 %4221
        %4223 = vset.pattern.permute.xlu0 5
        %4224 = vperm.xlu0 %4223, %v4045
        %v4225 = vpop.permute.xlu0 %4224
        %4226 = vset.pattern.permute.xlu0 5
        %4227 = vperm.xlu0 %4226, %v4046
        %v4228 = vpop.permute.xlu0 %4227
        %4229 = vset.pattern.permute.xlu0 5
        %4230 = vperm.xlu0 %4229, %v4047
        %v4231 = vpop.permute.xlu0 %4230
        %4232 = vset.pattern.permute.xlu0 5
        %4233 = vperm.xlu0 %4232, %v4048
        %v4234 = vpop.permute.xlu0 %4233
        %4235 = vset.pattern.permute.xlu0 5
        %4236 = vperm.xlu0 %4235, %v4049
        %v4237 = vpop.permute.xlu0 %4236
        %4238 = vset.pattern.permute.xlu0 5
        %4239 = vperm.xlu0 %4238, %v4050
        %v4240 = vpop.permute.xlu0 %4239
        %4241 = vset.pattern.permute.xlu0 5
        %4242 = vperm.xlu0 %4241, %v4051
        %v4243 = vpop.permute.xlu0 %4242
        %vm4244 = vcmp.eq.s32.totalorder %v4054, %v210
        %vm4245 = vcmp.eq.s32.totalorder %v4054, %v211
        %vm4246 = vcmp.eq.s32.totalorder %v4057, %v210
        %vm4247 = vcmp.eq.s32.totalorder %v4057, %v211
        %vm4248 = vcmp.eq.s32.totalorder %v4060, %v210
        %vm4249 = vcmp.eq.s32.totalorder %v4060, %v211
        %vm4250 = vcmp.eq.s32.totalorder %v4063, %v210
        %vm4251 = vcmp.eq.s32.totalorder %v4063, %v211
        %vm4252 = vcmp.eq.s32.totalorder %v4066, %v210
        %vm4253 = vcmp.eq.s32.totalorder %v4066, %v211
        %vm4254 = vcmp.eq.s32.totalorder %v4069, %v210
        %vm4255 = vcmp.eq.s32.totalorder %v4069, %v211
        %vm4256 = vcmp.eq.s32.totalorder %v4072, %v210
        %vm4257 = vcmp.eq.s32.totalorder %v4072, %v211
        %vm4258 = vcmp.eq.s32.totalorder %v4075, %v210
        %vm4259 = vcmp.eq.s32.totalorder %v4075, %v211
        %vm4260 = vcmp.eq.s32.totalorder %v4078, %v210
        %vm4261 = vcmp.eq.s32.totalorder %v4078, %v211
        %vm4262 = vcmp.eq.s32.totalorder %v4081, %v210
        %vm4263 = vcmp.eq.s32.totalorder %v4081, %v211
        %vm4264 = vcmp.eq.s32.totalorder %v4084, %v210
        %vm4265 = vcmp.eq.s32.totalorder %v4084, %v211
        %vm4266 = vcmp.eq.s32.totalorder %v4087, %v210
        %vm4267 = vcmp.eq.s32.totalorder %v4087, %v211
        %vm4268 = vcmp.eq.s32.totalorder %v4090, %v210
        %vm4269 = vcmp.eq.s32.totalorder %v4090, %v211
        %vm4270 = vcmp.eq.s32.totalorder %v4093, %v210
        %vm4271 = vcmp.eq.s32.totalorder %v4093, %v211
        %vm4272 = vcmp.eq.s32.totalorder %v4096, %v210
        %vm4273 = vcmp.eq.s32.totalorder %v4096, %v211
        %vm4274 = vcmp.eq.s32.totalorder %v4099, %v210
        %vm4275 = vcmp.eq.s32.totalorder %v4099, %v211
        %vm4276 = vcmp.eq.s32.totalorder %v4102, %v210
        %vm4277 = vcmp.eq.s32.totalorder %v4102, %v211
        %vm4278 = vcmp.eq.s32.totalorder %v4105, %v210
        %vm4279 = vcmp.eq.s32.totalorder %v4105, %v211
        %vm4280 = vcmp.eq.s32.totalorder %v4108, %v210
        %vm4281 = vcmp.eq.s32.totalorder %v4108, %v211
        %vm4282 = vcmp.eq.s32.totalorder %v4111, %v210
        %vm4283 = vcmp.eq.s32.totalorder %v4111, %v211
        %vm4284 = vcmp.eq.s32.totalorder %v4114, %v210
        %vm4285 = vcmp.eq.s32.totalorder %v4114, %v211
        %vm4286 = vcmp.eq.s32.totalorder %v4117, %v210
        %vm4287 = vcmp.eq.s32.totalorder %v4117, %v211
        %vm4288 = vcmp.eq.s32.totalorder %v4120, %v210
        %vm4289 = vcmp.eq.s32.totalorder %v4120, %v211
        %vm4290 = vcmp.eq.s32.totalorder %v4123, %v210
        %vm4291 = vcmp.eq.s32.totalorder %v4123, %v211
        %vm4292 = vcmp.eq.s32.totalorder %v4126, %v210
        %vm4293 = vcmp.eq.s32.totalorder %v4126, %v211
        %vm4294 = vcmp.eq.s32.totalorder %v4129, %v210
        %vm4295 = vcmp.eq.s32.totalorder %v4129, %v211
        %vm4296 = vcmp.eq.s32.totalorder %v4132, %v210
        %vm4297 = vcmp.eq.s32.totalorder %v4132, %v211
        %vm4298 = vcmp.eq.s32.totalorder %v4135, %v210
        %vm4299 = vcmp.eq.s32.totalorder %v4135, %v211
        %vm4300 = vcmp.eq.s32.totalorder %v4138, %v210
        %vm4301 = vcmp.eq.s32.totalorder %v4138, %v211
        %vm4302 = vcmp.eq.s32.totalorder %v4141, %v210
        %vm4303 = vcmp.eq.s32.totalorder %v4141, %v211
        %vm4304 = vcmp.eq.s32.totalorder %v4144, %v210
        %vm4305 = vcmp.eq.s32.totalorder %v4144, %v211
        %vm4306 = vcmp.eq.s32.totalorder %v4147, %v210
        %vm4307 = vcmp.eq.s32.totalorder %v4147, %v211
        %vm4308 = vcmp.eq.s32.totalorder %v4150, %v210
        %vm4309 = vcmp.eq.s32.totalorder %v4150, %v211
        %vm4310 = vcmp.eq.s32.totalorder %v4153, %v210
        %vm4311 = vcmp.eq.s32.totalorder %v4153, %v211
        %vm4312 = vcmp.eq.s32.totalorder %v4156, %v210
        %vm4313 = vcmp.eq.s32.totalorder %v4156, %v211
        %vm4314 = vcmp.eq.s32.totalorder %v4159, %v210
        %vm4315 = vcmp.eq.s32.totalorder %v4159, %v211
        %vm4316 = vcmp.eq.s32.totalorder %v4162, %v210
        %vm4317 = vcmp.eq.s32.totalorder %v4162, %v211
        %vm4318 = vcmp.eq.s32.totalorder %v4165, %v210
        %vm4319 = vcmp.eq.s32.totalorder %v4165, %v211
        %vm4320 = vcmp.eq.s32.totalorder %v4168, %v210
        %vm4321 = vcmp.eq.s32.totalorder %v4168, %v211
        %vm4322 = vcmp.eq.s32.totalorder %v4171, %v210
        %vm4323 = vcmp.eq.s32.totalorder %v4171, %v211
        %vm4324 = vcmp.eq.s32.totalorder %v4174, %v210
        %vm4325 = vcmp.eq.s32.totalorder %v4174, %v211
        %vm4326 = vcmp.eq.s32.totalorder %v4177, %v210
        %vm4327 = vcmp.eq.s32.totalorder %v4177, %v211
        %vm4328 = vcmp.eq.s32.totalorder %v4180, %v210
        %vm4329 = vcmp.eq.s32.totalorder %v4180, %v211
        %vm4330 = vcmp.eq.s32.totalorder %v4183, %v210
        %vm4331 = vcmp.eq.s32.totalorder %v4183, %v211
        %vm4332 = vcmp.eq.s32.totalorder %v4186, %v210
        %vm4333 = vcmp.eq.s32.totalorder %v4186, %v211
        %vm4334 = vcmp.eq.s32.totalorder %v4189, %v210
        %vm4335 = vcmp.eq.s32.totalorder %v4189, %v211
        %vm4336 = vcmp.eq.s32.totalorder %v4192, %v210
        %vm4337 = vcmp.eq.s32.totalorder %v4192, %v211
        %vm4338 = vcmp.eq.s32.totalorder %v4195, %v210
        %vm4339 = vcmp.eq.s32.totalorder %v4195, %v211
        %vm4340 = vcmp.eq.s32.totalorder %v4198, %v210
        %vm4341 = vcmp.eq.s32.totalorder %v4198, %v211
        %vm4342 = vcmp.eq.s32.totalorder %v4201, %v210
        %vm4343 = vcmp.eq.s32.totalorder %v4201, %v211
        %vm4344 = vcmp.eq.s32.totalorder %v4204, %v210
        %vm4345 = vcmp.eq.s32.totalorder %v4204, %v211
        %vm4346 = vcmp.eq.s32.totalorder %v4207, %v210
        %vm4347 = vcmp.eq.s32.totalorder %v4207, %v211
        %vm4348 = vcmp.eq.s32.totalorder %v4210, %v210
        %vm4349 = vcmp.eq.s32.totalorder %v4210, %v211
        %vm4350 = vcmp.eq.s32.totalorder %v4213, %v210
        %vm4351 = vcmp.eq.s32.totalorder %v4213, %v211
        %vm4352 = vcmp.eq.s32.totalorder %v4216, %v210
        %vm4353 = vcmp.eq.s32.totalorder %v4216, %v211
        %vm4354 = vcmp.eq.s32.totalorder %v4219, %v210
        %vm4355 = vcmp.eq.s32.totalorder %v4219, %v211
        %vm4356 = vcmp.eq.s32.totalorder %v4222, %v210
        %vm4357 = vcmp.eq.s32.totalorder %v4222, %v211
        %vm4358 = vcmp.eq.s32.totalorder %v4225, %v210
        %vm4359 = vcmp.eq.s32.totalorder %v4225, %v211
        %vm4360 = vcmp.eq.s32.totalorder %v4228, %v210
        %vm4361 = vcmp.eq.s32.totalorder %v4228, %v211
        %vm4362 = vcmp.eq.s32.totalorder %v4231, %v210
        %vm4363 = vcmp.eq.s32.totalorder %v4231, %v211
        %vm4364 = vcmp.eq.s32.totalorder %v4234, %v210
        %vm4365 = vcmp.eq.s32.totalorder %v4234, %v211
        %vm4366 = vcmp.eq.s32.totalorder %v4237, %v210
        %vm4367 = vcmp.eq.s32.totalorder %v4237, %v211
        %vm4368 = vcmp.eq.s32.totalorder %v4240, %v210
        %vm4369 = vcmp.eq.s32.totalorder %v4240, %v211
        %vm4370 = vcmp.eq.s32.totalorder %v4243, %v210
        %vm4371 = vcmp.eq.s32.totalorder %v4243, %v211
        %v4372 = vsel %vm4244, 1, 0
        %v4373 = vsel %vm4245, 1, 0
        %v4374 = vsel %vm4246, 1, 0
        %v4375 = vsel %vm4247, 1, 0
        %v4376 = vsel %vm4248, 1, 0
        %v4377 = vsel %vm4249, 1, 0
        %v4378 = vsel %vm4250, 1, 0
        %v4379 = vsel %vm4251, 1, 0
        %v4380 = vsel %vm4252, 1, 0
        %v4381 = vsel %vm4253, 1, 0
        %v4382 = vsel %vm4254, 1, 0
        %v4383 = vsel %vm4255, 1, 0
        %v4384 = vsel %vm4256, 1, 0
        %v4385 = vsel %vm4257, 1, 0
        %v4386 = vsel %vm4258, 1, 0
        %v4387 = vsel %vm4259, 1, 0
        %v4388 = vsel %vm4260, 1, 0
        %v4389 = vsel %vm4261, 1, 0
        %v4390 = vsel %vm4262, 1, 0
        %v4391 = vsel %vm4263, 1, 0
        %v4392 = vsel %vm4264, 1, 0
        %v4393 = vsel %vm4265, 1, 0
        %v4394 = vsel %vm4266, 1, 0
        %v4395 = vsel %vm4267, 1, 0
        %v4396 = vsel %vm4268, 1, 0
        %v4397 = vsel %vm4269, 1, 0
        %v4398 = vsel %vm4270, 1, 0
        %v4399 = vsel %vm4271, 1, 0
        %v4400 = vsel %vm4272, 1, 0
        %v4401 = vsel %vm4273, 1, 0
        %v4402 = vsel %vm4274, 1, 0
        %v4403 = vsel %vm4275, 1, 0
        %v4404 = vsel %vm4276, 1, 0
        %v4405 = vsel %vm4277, 1, 0
        %v4406 = vsel %vm4278, 1, 0
        %v4407 = vsel %vm4279, 1, 0
        %v4408 = vsel %vm4280, 1, 0
        %v4409 = vsel %vm4281, 1, 0
        %v4410 = vsel %vm4282, 1, 0
        %v4411 = vsel %vm4283, 1, 0
        %v4412 = vsel %vm4284, 1, 0
        %v4413 = vsel %vm4285, 1, 0
        %v4414 = vsel %vm4286, 1, 0
        %v4415 = vsel %vm4287, 1, 0
        %v4416 = vsel %vm4288, 1, 0
        %v4417 = vsel %vm4289, 1, 0
        %v4418 = vsel %vm4290, 1, 0
        %v4419 = vsel %vm4291, 1, 0
        %v4420 = vsel %vm4292, 1, 0
        %v4421 = vsel %vm4293, 1, 0
        %v4422 = vsel %vm4294, 1, 0
        %v4423 = vsel %vm4295, 1, 0
        %v4424 = vsel %vm4296, 1, 0
        %v4425 = vsel %vm4297, 1, 0
        %v4426 = vsel %vm4298, 1, 0
        %v4427 = vsel %vm4299, 1, 0
        %v4428 = vsel %vm4300, 1, 0
        %v4429 = vsel %vm4301, 1, 0
        %v4430 = vsel %vm4302, 1, 0
        %v4431 = vsel %vm4303, 1, 0
        %v4432 = vsel %vm4304, 1, 0
        %v4433 = vsel %vm4305, 1, 0
        %v4434 = vsel %vm4306, 1, 0
        %v4435 = vsel %vm4307, 1, 0
        %v4436 = vsel %vm4308, 1, 0
        %v4437 = vsel %vm4309, 1, 0
        %v4438 = vsel %vm4310, 1, 0
        %v4439 = vsel %vm4311, 1, 0
        %v4440 = vsel %vm4312, 1, 0
        %v4441 = vsel %vm4313, 1, 0
        %v4442 = vsel %vm4314, 1, 0
        %v4443 = vsel %vm4315, 1, 0
        %v4444 = vsel %vm4316, 1, 0
        %v4445 = vsel %vm4317, 1, 0
        %v4446 = vsel %vm4318, 1, 0
        %v4447 = vsel %vm4319, 1, 0
        %v4448 = vsel %vm4320, 1, 0
        %v4449 = vsel %vm4321, 1, 0
        %v4450 = vsel %vm4322, 1, 0
        %v4451 = vsel %vm4323, 1, 0
        %v4452 = vsel %vm4324, 1, 0
        %v4453 = vsel %vm4325, 1, 0
        %v4454 = vsel %vm4326, 1, 0
        %v4455 = vsel %vm4327, 1, 0
        %v4456 = vsel %vm4328, 1, 0
        %v4457 = vsel %vm4329, 1, 0
        %v4458 = vsel %vm4330, 1, 0
        %v4459 = vsel %vm4331, 1, 0
        %v4460 = vsel %vm4332, 1, 0
        %v4461 = vsel %vm4333, 1, 0
        %v4462 = vsel %vm4334, 1, 0
        %v4463 = vsel %vm4335, 1, 0
        %v4464 = vsel %vm4336, 1, 0
        %v4465 = vsel %vm4337, 1, 0
        %v4466 = vsel %vm4338, 1, 0
        %v4467 = vsel %vm4339, 1, 0
        %v4468 = vsel %vm4340, 1, 0
        %v4469 = vsel %vm4341, 1, 0
        %v4470 = vsel %vm4342, 1, 0
        %v4471 = vsel %vm4343, 1, 0
        %v4472 = vsel %vm4344, 1, 0
        %v4473 = vsel %vm4345, 1, 0
        %v4474 = vsel %vm4346, 1, 0
        %v4475 = vsel %vm4347, 1, 0
        %v4476 = vsel %vm4348, 1, 0
        %v4477 = vsel %vm4349, 1, 0
        %v4478 = vsel %vm4350, 1, 0
        %v4479 = vsel %vm4351, 1, 0
        %v4480 = vsel %vm4352, 1, 0
        %v4481 = vsel %vm4353, 1, 0
        %v4482 = vsel %vm4354, 1, 0
        %v4483 = vsel %vm4355, 1, 0
        %v4484 = vsel %vm4356, 1, 0
        %v4485 = vsel %vm4357, 1, 0
        %v4486 = vsel %vm4358, 1, 0
        %v4487 = vsel %vm4359, 1, 0
        %v4488 = vsel %vm4360, 1, 0
        %v4489 = vsel %vm4361, 1, 0
        %v4490 = vsel %vm4362, 1, 0
        %v4491 = vsel %vm4363, 1, 0
        %v4492 = vsel %vm4364, 1, 0
        %v4493 = vsel %vm4365, 1, 0
        %v4494 = vsel %vm4366, 1, 0
        %v4495 = vsel %vm4367, 1, 0
        %v4496 = vsel %vm4368, 1, 0
        %v4497 = vsel %vm4369, 1, 0
        %v4498 = vsel %vm4370, 1, 0
        %v4499 = vsel %vm4371, 1, 0
        %v4500 = vcvt.s32.f32 %v4372
        %v4501 = vcvt.s32.f32 %v4373
        %v4502 = vcvt.s32.f32 %v4374
        %v4503 = vcvt.s32.f32 %v4375
        %v4504 = vcvt.s32.f32 %v4376
        %v4505 = vcvt.s32.f32 %v4377
        %v4506 = vcvt.s32.f32 %v4378
        %v4507 = vcvt.s32.f32 %v4379
        %v4508 = vcvt.s32.f32 %v4380
        %v4509 = vcvt.s32.f32 %v4381
        %v4510 = vcvt.s32.f32 %v4382
        %v4511 = vcvt.s32.f32 %v4383
        %v4512 = vcvt.s32.f32 %v4384
        %v4513 = vcvt.s32.f32 %v4385
        %v4514 = vcvt.s32.f32 %v4386
        %v4515 = vcvt.s32.f32 %v4387
        %v4516 = vcvt.s32.f32 %v4388
        %v4517 = vcvt.s32.f32 %v4389
        %v4518 = vcvt.s32.f32 %v4390
        %v4519 = vcvt.s32.f32 %v4391
        %v4520 = vcvt.s32.f32 %v4392
        %v4521 = vcvt.s32.f32 %v4393
        %v4522 = vcvt.s32.f32 %v4394
        %v4523 = vcvt.s32.f32 %v4395
        %v4524 = vcvt.s32.f32 %v4396
        %v4525 = vcvt.s32.f32 %v4397
        %v4526 = vcvt.s32.f32 %v4398
        %v4527 = vcvt.s32.f32 %v4399
        %v4528 = vcvt.s32.f32 %v4400
        %v4529 = vcvt.s32.f32 %v4401
        %v4530 = vcvt.s32.f32 %v4402
        %v4531 = vcvt.s32.f32 %v4403
        %v4532 = vcvt.s32.f32 %v4404
        %v4533 = vcvt.s32.f32 %v4405
        %v4534 = vcvt.s32.f32 %v4406
        %v4535 = vcvt.s32.f32 %v4407
        %v4536 = vcvt.s32.f32 %v4408
        %v4537 = vcvt.s32.f32 %v4409
        %v4538 = vcvt.s32.f32 %v4410
        %v4539 = vcvt.s32.f32 %v4411
        %v4540 = vcvt.s32.f32 %v4412
        %v4541 = vcvt.s32.f32 %v4413
        %v4542 = vcvt.s32.f32 %v4414
        %v4543 = vcvt.s32.f32 %v4415
        %v4544 = vcvt.s32.f32 %v4416
        %v4545 = vcvt.s32.f32 %v4417
        %v4546 = vcvt.s32.f32 %v4418
        %v4547 = vcvt.s32.f32 %v4419
        %v4548 = vcvt.s32.f32 %v4420
        %v4549 = vcvt.s32.f32 %v4421
        %v4550 = vcvt.s32.f32 %v4422
        %v4551 = vcvt.s32.f32 %v4423
        %v4552 = vcvt.s32.f32 %v4424
        %v4553 = vcvt.s32.f32 %v4425
        %v4554 = vcvt.s32.f32 %v4426
        %v4555 = vcvt.s32.f32 %v4427
        %v4556 = vcvt.s32.f32 %v4428
        %v4557 = vcvt.s32.f32 %v4429
        %v4558 = vcvt.s32.f32 %v4430
        %v4559 = vcvt.s32.f32 %v4431
        %v4560 = vcvt.s32.f32 %v4432
        %v4561 = vcvt.s32.f32 %v4433
        %v4562 = vcvt.s32.f32 %v4434
        %v4563 = vcvt.s32.f32 %v4435
        %v4564 = vcvt.s32.f32 %v4436
        %v4565 = vcvt.s32.f32 %v4437
        %v4566 = vcvt.s32.f32 %v4438
        %v4567 = vcvt.s32.f32 %v4439
        %v4568 = vcvt.s32.f32 %v4440
        %v4569 = vcvt.s32.f32 %v4441
        %v4570 = vcvt.s32.f32 %v4442
        %v4571 = vcvt.s32.f32 %v4443
        %v4572 = vcvt.s32.f32 %v4444
        %v4573 = vcvt.s32.f32 %v4445
        %v4574 = vcvt.s32.f32 %v4446
        %v4575 = vcvt.s32.f32 %v4447
        %v4576 = vcvt.s32.f32 %v4448
        %v4577 = vcvt.s32.f32 %v4449
        %v4578 = vcvt.s32.f32 %v4450
        %v4579 = vcvt.s32.f32 %v4451
        %v4580 = vcvt.s32.f32 %v4452
        %v4581 = vcvt.s32.f32 %v4453
        %v4582 = vcvt.s32.f32 %v4454
        %v4583 = vcvt.s32.f32 %v4455
        %v4584 = vcvt.s32.f32 %v4456
        %v4585 = vcvt.s32.f32 %v4457
        %v4586 = vcvt.s32.f32 %v4458
        %v4587 = vcvt.s32.f32 %v4459
        %v4588 = vcvt.s32.f32 %v4460
        %v4589 = vcvt.s32.f32 %v4461
        %v4590 = vcvt.s32.f32 %v4462
        %v4591 = vcvt.s32.f32 %v4463
        %v4592 = vcvt.s32.f32 %v4464
        %v4593 = vcvt.s32.f32 %v4465
        %v4594 = vcvt.s32.f32 %v4466
        %v4595 = vcvt.s32.f32 %v4467
        %v4596 = vcvt.s32.f32 %v4468
        %v4597 = vcvt.s32.f32 %v4469
        %v4598 = vcvt.s32.f32 %v4470
        %v4599 = vcvt.s32.f32 %v4471
        %v4600 = vcvt.s32.f32 %v4472
        %v4601 = vcvt.s32.f32 %v4473
        %v4602 = vcvt.s32.f32 %v4474
        %v4603 = vcvt.s32.f32 %v4475
        %v4604 = vcvt.s32.f32 %v4476
        %v4605 = vcvt.s32.f32 %v4477
        %v4606 = vcvt.s32.f32 %v4478
        %v4607 = vcvt.s32.f32 %v4479
        %v4608 = vcvt.s32.f32 %v4480
        %v4609 = vcvt.s32.f32 %v4481
        %v4610 = vcvt.s32.f32 %v4482
        %v4611 = vcvt.s32.f32 %v4483
        %v4612 = vcvt.s32.f32 %v4484
        %v4613 = vcvt.s32.f32 %v4485
        %v4614 = vcvt.s32.f32 %v4486
        %v4615 = vcvt.s32.f32 %v4487
        %v4616 = vcvt.s32.f32 %v4488
        %v4617 = vcvt.s32.f32 %v4489
        %v4618 = vcvt.s32.f32 %v4490
        %v4619 = vcvt.s32.f32 %v4491
        %v4620 = vcvt.s32.f32 %v4492
        %v4621 = vcvt.s32.f32 %v4493
        %v4622 = vcvt.s32.f32 %v4494
        %v4623 = vcvt.s32.f32 %v4495
        %v4624 = vcvt.s32.f32 %v4496
        %v4625 = vcvt.s32.f32 %v4497
        %v4626 = vcvt.s32.f32 %v4498
        %v4627 = vcvt.s32.f32 %v4499
        %v4628 = vadd.f32 %v3860, %v4500
        %v4629 = vadd.f32 %v3861, %v4501
        %v4630 = vadd.f32 %v3862, %v4502
        %v4631 = vadd.f32 %v3863, %v4503
        %v4632 = vadd.f32 %v3864, %v4504
        %v4633 = vadd.f32 %v3865, %v4505
        %v4634 = vadd.f32 %v3866, %v4506
        %v4635 = vadd.f32 %v3867, %v4507
        %v4636 = vadd.f32 %v3868, %v4508
        %v4637 = vadd.f32 %v3869, %v4509
        %v4638 = vadd.f32 %v3870, %v4510
        %v4639 = vadd.f32 %v3871, %v4511
        %v4640 = vadd.f32 %v3872, %v4512
        %v4641 = vadd.f32 %v3873, %v4513
        %v4642 = vadd.f32 %v3874, %v4514
        %v4643 = vadd.f32 %v3875, %v4515
        %v4644 = vadd.f32 %v3876, %v4516
        %v4645 = vadd.f32 %v3877, %v4517
        %v4646 = vadd.f32 %v3878, %v4518
        %v4647 = vadd.f32 %v3879, %v4519
        %v4648 = vadd.f32 %v3880, %v4520
        %v4649 = vadd.f32 %v3881, %v4521
        %v4650 = vadd.f32 %v3882, %v4522
        %v4651 = vadd.f32 %v3883, %v4523
        %v4652 = vadd.f32 %v3884, %v4524
        %v4653 = vadd.f32 %v3885, %v4525
        %v4654 = vadd.f32 %v3886, %v4526
        %v4655 = vadd.f32 %v3887, %v4527
        %v4656 = vadd.f32 %v3888, %v4528
        %v4657 = vadd.f32 %v3889, %v4529
        %v4658 = vadd.f32 %v3890, %v4530
        %v4659 = vadd.f32 %v3891, %v4531
        %v4660 = vadd.f32 %v3892, %v4532
        %v4661 = vadd.f32 %v3893, %v4533
        %v4662 = vadd.f32 %v3894, %v4534
        %v4663 = vadd.f32 %v3895, %v4535
        %v4664 = vadd.f32 %v3896, %v4536
        %v4665 = vadd.f32 %v3897, %v4537
        %v4666 = vadd.f32 %v3898, %v4538
        %v4667 = vadd.f32 %v3899, %v4539
        %v4668 = vadd.f32 %v3900, %v4540
        %v4669 = vadd.f32 %v3901, %v4541
        %v4670 = vadd.f32 %v3902, %v4542
        %v4671 = vadd.f32 %v3903, %v4543
        %v4672 = vadd.f32 %v3904, %v4544
        %v4673 = vadd.f32 %v3905, %v4545
        %v4674 = vadd.f32 %v3906, %v4546
        %v4675 = vadd.f32 %v3907, %v4547
        %v4676 = vadd.f32 %v3908, %v4548
        %v4677 = vadd.f32 %v3909, %v4549
        %v4678 = vadd.f32 %v3910, %v4550
        %v4679 = vadd.f32 %v3911, %v4551
        %v4680 = vadd.f32 %v3912, %v4552
        %v4681 = vadd.f32 %v3913, %v4553
        %v4682 = vadd.f32 %v3914, %v4554
        %v4683 = vadd.f32 %v3915, %v4555
        %v4684 = vadd.f32 %v3916, %v4556
        %v4685 = vadd.f32 %v3917, %v4557
        %v4686 = vadd.f32 %v3918, %v4558
        %v4687 = vadd.f32 %v3919, %v4559
        %v4688 = vadd.f32 %v3920, %v4560
        %v4689 = vadd.f32 %v3921, %v4561
        %v4690 = vadd.f32 %v3922, %v4562
        %v4691 = vadd.f32 %v3923, %v4563
        %v4692 = vadd.f32 %v3924, %v4564
        %v4693 = vadd.f32 %v3925, %v4565
        %v4694 = vadd.f32 %v3926, %v4566
        %v4695 = vadd.f32 %v3927, %v4567
        %v4696 = vadd.f32 %v3928, %v4568
        %v4697 = vadd.f32 %v3929, %v4569
        %v4698 = vadd.f32 %v3930, %v4570
        %v4699 = vadd.f32 %v3931, %v4571
        %v4700 = vadd.f32 %v3932, %v4572
        %v4701 = vadd.f32 %v3933, %v4573
        %v4702 = vadd.f32 %v3934, %v4574
        %v4703 = vadd.f32 %v3935, %v4575
        %v4704 = vadd.f32 %v3936, %v4576
        %v4705 = vadd.f32 %v3937, %v4577
        %v4706 = vadd.f32 %v3938, %v4578
        %v4707 = vadd.f32 %v3939, %v4579
        %v4708 = vadd.f32 %v3940, %v4580
        %v4709 = vadd.f32 %v3941, %v4581
        %v4710 = vadd.f32 %v3942, %v4582
        %v4711 = vadd.f32 %v3943, %v4583
        %v4712 = vadd.f32 %v3944, %v4584
        %v4713 = vadd.f32 %v3945, %v4585
        %v4714 = vadd.f32 %v3946, %v4586
        %v4715 = vadd.f32 %v3947, %v4587
        %v4716 = vadd.f32 %v3948, %v4588
        %v4717 = vadd.f32 %v3949, %v4589
        %v4718 = vadd.f32 %v3950, %v4590
        %v4719 = vadd.f32 %v3951, %v4591
        %v4720 = vadd.f32 %v3952, %v4592
        %v4721 = vadd.f32 %v3953, %v4593
        %v4722 = vadd.f32 %v3954, %v4594
        %v4723 = vadd.f32 %v3955, %v4595
        %v4724 = vadd.f32 %v3956, %v4596
        %v4725 = vadd.f32 %v3957, %v4597
        %v4726 = vadd.f32 %v3958, %v4598
        %v4727 = vadd.f32 %v3959, %v4599
        %v4728 = vadd.f32 %v3960, %v4600
        %v4729 = vadd.f32 %v3961, %v4601
        %v4730 = vadd.f32 %v3962, %v4602
        %v4731 = vadd.f32 %v3963, %v4603
        %v4732 = vadd.f32 %v3964, %v4604
        %v4733 = vadd.f32 %v3965, %v4605
        %v4734 = vadd.f32 %v3966, %v4606
        %v4735 = vadd.f32 %v3967, %v4607
        %v4736 = vadd.f32 %v3968, %v4608
        %v4737 = vadd.f32 %v3969, %v4609
        %v4738 = vadd.f32 %v3970, %v4610
        %v4739 = vadd.f32 %v3971, %v4611
        %v4740 = vadd.f32 %v3972, %v4612
        %v4741 = vadd.f32 %v3973, %v4613
        %v4742 = vadd.f32 %v3974, %v4614
        %v4743 = vadd.f32 %v3975, %v4615
        %v4744 = vadd.f32 %v3976, %v4616
        %v4745 = vadd.f32 %v3977, %v4617
        %v4746 = vadd.f32 %v3978, %v4618
        %v4747 = vadd.f32 %v3979, %v4619
        %v4748 = vadd.f32 %v3980, %v4620
        %v4749 = vadd.f32 %v3981, %v4621
        %v4750 = vadd.f32 %v3982, %v4622
        %v4751 = vadd.f32 %v3983, %v4623
        %v4752 = vadd.f32 %v3984, %v4624
        %v4753 = vadd.f32 %v3985, %v4625
        %v4754 = vadd.f32 %v3986, %v4626
        %v4755 = vadd.f32 %v3987, %v4627
        %v4756 = vadd.s32 %v145, 163
        %v4757 = vadd.s32 %v146, 163
        %v4758 = vadd.s32 %v147, 163
        %v4759 = vadd.s32 %v148, 163
        %v4760 = vadd.s32 %v149, 163
        %v4761 = vadd.s32 %v150, 163
        %v4762 = vadd.s32 %v151, 163
        %v4763 = vadd.s32 %v152, 163
        %v4764 = vadd.s32 %v153, 163
        %v4765 = vadd.s32 %v154, 163
        %v4766 = vadd.s32 %v155, 163
        %v4767 = vadd.s32 %v156, 163
        %v4768 = vadd.s32 %v157, 163
        %v4769 = vadd.s32 %v158, 163
        %v4770 = vadd.s32 %v159, 163
        %v4771 = vadd.s32 %v160, 163
        %v4772 = vadd.s32 %v161, 163
        %v4773 = vadd.s32 %v162, 163
        %v4774 = vadd.s32 %v163, 163
        %v4775 = vadd.s32 %v164, 163
        %v4776 = vadd.s32 %v165, 163
        %v4777 = vadd.s32 %v166, 163
        %v4778 = vadd.s32 %v167, 163
        %v4779 = vadd.s32 %v168, 163
        %v4780 = vadd.s32 %v169, 163
        %v4781 = vadd.s32 %v170, 163
        %v4782 = vadd.s32 %v171, 163
        %v4783 = vadd.s32 %v172, 163
        %v4784 = vadd.s32 %v173, 163
        %v4785 = vadd.s32 %v174, 163
        %v4786 = vadd.s32 %v175, 163
        %v4787 = vadd.s32 %v176, 163
        %v4788 = vadd.s32 %v177, 163
        %v4789 = vadd.s32 %v178, 163
        %v4790 = vadd.s32 %v179, 163
        %v4791 = vadd.s32 %v180, 163
        %v4792 = vadd.s32 %v181, 163
        %v4793 = vadd.s32 %v182, 163
        %v4794 = vadd.s32 %v183, 163
        %v4795 = vadd.s32 %v184, 163
        %v4796 = vadd.s32 %v185, 163
        %v4797 = vadd.s32 %v186, 163
        %v4798 = vadd.s32 %v187, 163
        %v4799 = vadd.s32 %v188, 163
        %v4800 = vadd.s32 %v189, 163
        %v4801 = vadd.s32 %v190, 163
        %v4802 = vadd.s32 %v191, 163
        %v4803 = vadd.s32 %v192, 163
        %v4804 = vadd.s32 %v193, 163
        %v4805 = vadd.s32 %v194, 163
        %v4806 = vadd.s32 %v195, 163
        %v4807 = vadd.s32 %v196, 163
        %v4808 = vadd.s32 %v197, 163
        %v4809 = vadd.s32 %v198, 163
        %v4810 = vadd.s32 %v199, 163
        %v4811 = vadd.s32 %v200, 163
        %v4812 = vadd.s32 %v201, 163
        %v4813 = vadd.s32 %v202, 163
        %v4814 = vadd.s32 %v203, 163
        %v4815 = vadd.s32 %v204, 163
        %v4816 = vadd.s32 %v205, 163
        %v4817 = vadd.s32 %v206, 163
        %v4818 = vadd.s32 %v207, 163
        %v4819 = vadd.s32 %v208, 163
        %4820 = vset.pattern.permute.xlu0 6
        %4821 = vperm.xlu0 %4820, %v4756
        %v4822 = vpop.permute.xlu0 %4821
        %4823 = vset.pattern.permute.xlu0 6
        %4824 = vperm.xlu0 %4823, %v4757
        %v4825 = vpop.permute.xlu0 %4824
        %4826 = vset.pattern.permute.xlu0 6
        %4827 = vperm.xlu0 %4826, %v4758
        %v4828 = vpop.permute.xlu0 %4827
        %4829 = vset.pattern.permute.xlu0 6
        %4830 = vperm.xlu0 %4829, %v4759
        %v4831 = vpop.permute.xlu0 %4830
        %4832 = vset.pattern.permute.xlu0 6
        %4833 = vperm.xlu0 %4832, %v4760
        %v4834 = vpop.permute.xlu0 %4833
        %4835 = vset.pattern.permute.xlu0 6
        %4836 = vperm.xlu0 %4835, %v4761
        %v4837 = vpop.permute.xlu0 %4836
        %4838 = vset.pattern.permute.xlu0 6
        %4839 = vperm.xlu0 %4838, %v4762
        %v4840 = vpop.permute.xlu0 %4839
        %4841 = vset.pattern.permute.xlu0 6
        %4842 = vperm.xlu0 %4841, %v4763
        %v4843 = vpop.permute.xlu0 %4842
        %4844 = vset.pattern.permute.xlu0 6
        %4845 = vperm.xlu0 %4844, %v4764
        %v4846 = vpop.permute.xlu0 %4845
        %4847 = vset.pattern.permute.xlu0 6
        %4848 = vperm.xlu0 %4847, %v4765
        %v4849 = vpop.permute.xlu0 %4848
        %4850 = vset.pattern.permute.xlu0 6
        %4851 = vperm.xlu0 %4850, %v4766
        %v4852 = vpop.permute.xlu0 %4851
        %4853 = vset.pattern.permute.xlu0 6
        %4854 = vperm.xlu0 %4853, %v4767
        %v4855 = vpop.permute.xlu0 %4854
        %4856 = vset.pattern.permute.xlu0 6
        %4857 = vperm.xlu0 %4856, %v4768
        %v4858 = vpop.permute.xlu0 %4857
        %4859 = vset.pattern.permute.xlu0 6
        %4860 = vperm.xlu0 %4859, %v4769
        %v4861 = vpop.permute.xlu0 %4860
        %4862 = vset.pattern.permute.xlu0 6
        %4863 = vperm.xlu0 %4862, %v4770
        %v4864 = vpop.permute.xlu0 %4863
        %4865 = vset.pattern.permute.xlu0 6
        %4866 = vperm.xlu0 %4865, %v4771
        %v4867 = vpop.permute.xlu0 %4866
        %4868 = vset.pattern.permute.xlu0 6
        %4869 = vperm.xlu0 %4868, %v4772
        %v4870 = vpop.permute.xlu0 %4869
        %4871 = vset.pattern.permute.xlu0 6
        %4872 = vperm.xlu0 %4871, %v4773
        %v4873 = vpop.permute.xlu0 %4872
        %4874 = vset.pattern.permute.xlu0 6
        %4875 = vperm.xlu0 %4874, %v4774
        %v4876 = vpop.permute.xlu0 %4875
        %4877 = vset.pattern.permute.xlu0 6
        %4878 = vperm.xlu0 %4877, %v4775
        %v4879 = vpop.permute.xlu0 %4878
        %4880 = vset.pattern.permute.xlu0 6
        %4881 = vperm.xlu0 %4880, %v4776
        %v4882 = vpop.permute.xlu0 %4881
        %4883 = vset.pattern.permute.xlu0 6
        %4884 = vperm.xlu0 %4883, %v4777
        %v4885 = vpop.permute.xlu0 %4884
        %4886 = vset.pattern.permute.xlu0 6
        %4887 = vperm.xlu0 %4886, %v4778
        %v4888 = vpop.permute.xlu0 %4887
        %4889 = vset.pattern.permute.xlu0 6
        %4890 = vperm.xlu0 %4889, %v4779
        %v4891 = vpop.permute.xlu0 %4890
        %4892 = vset.pattern.permute.xlu0 6
        %4893 = vperm.xlu0 %4892, %v4780
        %v4894 = vpop.permute.xlu0 %4893
        %4895 = vset.pattern.permute.xlu0 6
        %4896 = vperm.xlu0 %4895, %v4781
        %v4897 = vpop.permute.xlu0 %4896
        %4898 = vset.pattern.permute.xlu0 6
        %4899 = vperm.xlu0 %4898, %v4782
        %v4900 = vpop.permute.xlu0 %4899
        %4901 = vset.pattern.permute.xlu0 6
        %4902 = vperm.xlu0 %4901, %v4783
        %v4903 = vpop.permute.xlu0 %4902
        %4904 = vset.pattern.permute.xlu0 6
        %4905 = vperm.xlu0 %4904, %v4784
        %v4906 = vpop.permute.xlu0 %4905
        %4907 = vset.pattern.permute.xlu0 6
        %4908 = vperm.xlu0 %4907, %v4785
        %v4909 = vpop.permute.xlu0 %4908
        %4910 = vset.pattern.permute.xlu0 6
        %4911 = vperm.xlu0 %4910, %v4786
        %v4912 = vpop.permute.xlu0 %4911
        %4913 = vset.pattern.permute.xlu0 6
        %4914 = vperm.xlu0 %4913, %v4787
        %v4915 = vpop.permute.xlu0 %4914
        %4916 = vset.pattern.permute.xlu0 6
        %4917 = vperm.xlu0 %4916, %v4788
        %v4918 = vpop.permute.xlu0 %4917
        %4919 = vset.pattern.permute.xlu0 6
        %4920 = vperm.xlu0 %4919, %v4789
        %v4921 = vpop.permute.xlu0 %4920
        %4922 = vset.pattern.permute.xlu0 6
        %4923 = vperm.xlu0 %4922, %v4790
        %v4924 = vpop.permute.xlu0 %4923
        %4925 = vset.pattern.permute.xlu0 6
        %4926 = vperm.xlu0 %4925, %v4791
        %v4927 = vpop.permute.xlu0 %4926
        %4928 = vset.pattern.permute.xlu0 6
        %4929 = vperm.xlu0 %4928, %v4792
        %v4930 = vpop.permute.xlu0 %4929
        %4931 = vset.pattern.permute.xlu0 6
        %4932 = vperm.xlu0 %4931, %v4793
        %v4933 = vpop.permute.xlu0 %4932
        %4934 = vset.pattern.permute.xlu0 6
        %4935 = vperm.xlu0 %4934, %v4794
        %v4936 = vpop.permute.xlu0 %4935
        %4937 = vset.pattern.permute.xlu0 6
        %4938 = vperm.xlu0 %4937, %v4795
        %v4939 = vpop.permute.xlu0 %4938
        %4940 = vset.pattern.permute.xlu0 6
        %4941 = vperm.xlu0 %4940, %v4796
        %v4942 = vpop.permute.xlu0 %4941
        %4943 = vset.pattern.permute.xlu0 6
        %4944 = vperm.xlu0 %4943, %v4797
        %v4945 = vpop.permute.xlu0 %4944
        %4946 = vset.pattern.permute.xlu0 6
        %4947 = vperm.xlu0 %4946, %v4798
        %v4948 = vpop.permute.xlu0 %4947
        %4949 = vset.pattern.permute.xlu0 6
        %4950 = vperm.xlu0 %4949, %v4799
        %v4951 = vpop.permute.xlu0 %4950
        %4952 = vset.pattern.permute.xlu0 6
        %4953 = vperm.xlu0 %4952, %v4800
        %v4954 = vpop.permute.xlu0 %4953
        %4955 = vset.pattern.permute.xlu0 6
        %4956 = vperm.xlu0 %4955, %v4801
        %v4957 = vpop.permute.xlu0 %4956
        %4958 = vset.pattern.permute.xlu0 6
        %4959 = vperm.xlu0 %4958, %v4802
        %v4960 = vpop.permute.xlu0 %4959
        %4961 = vset.pattern.permute.xlu0 6
        %4962 = vperm.xlu0 %4961, %v4803
        %v4963 = vpop.permute.xlu0 %4962
        %4964 = vset.pattern.permute.xlu0 6
        %4965 = vperm.xlu0 %4964, %v4804
        %v4966 = vpop.permute.xlu0 %4965
        %4967 = vset.pattern.permute.xlu0 6
        %4968 = vperm.xlu0 %4967, %v4805
        %v4969 = vpop.permute.xlu0 %4968
        %4970 = vset.pattern.permute.xlu0 6
        %4971 = vperm.xlu0 %4970, %v4806
        %v4972 = vpop.permute.xlu0 %4971
        %4973 = vset.pattern.permute.xlu0 6
        %4974 = vperm.xlu0 %4973, %v4807
        %v4975 = vpop.permute.xlu0 %4974
        %4976 = vset.pattern.permute.xlu0 6
        %4977 = vperm.xlu0 %4976, %v4808
        %v4978 = vpop.permute.xlu0 %4977
        %4979 = vset.pattern.permute.xlu0 6
        %4980 = vperm.xlu0 %4979, %v4809
        %v4981 = vpop.permute.xlu0 %4980
        %4982 = vset.pattern.permute.xlu0 6
        %4983 = vperm.xlu0 %4982, %v4810
        %v4984 = vpop.permute.xlu0 %4983
        %4985 = vset.pattern.permute.xlu0 6
        %4986 = vperm.xlu0 %4985, %v4811
        %v4987 = vpop.permute.xlu0 %4986
        %4988 = vset.pattern.permute.xlu0 6
        %4989 = vperm.xlu0 %4988, %v4812
        %v4990 = vpop.permute.xlu0 %4989
        %4991 = vset.pattern.permute.xlu0 6
        %4992 = vperm.xlu0 %4991, %v4813
        %v4993 = vpop.permute.xlu0 %4992
        %4994 = vset.pattern.permute.xlu0 6
        %4995 = vperm.xlu0 %4994, %v4814
        %v4996 = vpop.permute.xlu0 %4995
        %4997 = vset.pattern.permute.xlu0 6
        %4998 = vperm.xlu0 %4997, %v4815
        %v4999 = vpop.permute.xlu0 %4998
        %5000 = vset.pattern.permute.xlu0 6
        %5001 = vperm.xlu0 %5000, %v4816
        %v5002 = vpop.permute.xlu0 %5001
        %5003 = vset.pattern.permute.xlu0 6
        %5004 = vperm.xlu0 %5003, %v4817
        %v5005 = vpop.permute.xlu0 %5004
        %5006 = vset.pattern.permute.xlu0 6
        %5007 = vperm.xlu0 %5006, %v4818
        %v5008 = vpop.permute.xlu0 %5007
        %5009 = vset.pattern.permute.xlu0 6
        %5010 = vperm.xlu0 %5009, %v4819
        %v5011 = vpop.permute.xlu0 %5010
        %vm5012 = vcmp.eq.s32.totalorder %v4822, %v210
        %vm5013 = vcmp.eq.s32.totalorder %v4822, %v211
        %vm5014 = vcmp.eq.s32.totalorder %v4825, %v210
        %vm5015 = vcmp.eq.s32.totalorder %v4825, %v211
        %vm5016 = vcmp.eq.s32.totalorder %v4828, %v210
        %vm5017 = vcmp.eq.s32.totalorder %v4828, %v211
        %vm5018 = vcmp.eq.s32.totalorder %v4831, %v210
        %vm5019 = vcmp.eq.s32.totalorder %v4831, %v211
        %vm5020 = vcmp.eq.s32.totalorder %v4834, %v210
        %vm5021 = vcmp.eq.s32.totalorder %v4834, %v211
        %vm5022 = vcmp.eq.s32.totalorder %v4837, %v210
        %vm5023 = vcmp.eq.s32.totalorder %v4837, %v211
        %vm5024 = vcmp.eq.s32.totalorder %v4840, %v210
        %vm5025 = vcmp.eq.s32.totalorder %v4840, %v211
        %vm5026 = vcmp.eq.s32.totalorder %v4843, %v210
        %vm5027 = vcmp.eq.s32.totalorder %v4843, %v211
        %vm5028 = vcmp.eq.s32.totalorder %v4846, %v210
        %vm5029 = vcmp.eq.s32.totalorder %v4846, %v211
        %vm5030 = vcmp.eq.s32.totalorder %v4849, %v210
        %vm5031 = vcmp.eq.s32.totalorder %v4849, %v211
        %vm5032 = vcmp.eq.s32.totalorder %v4852, %v210
        %vm5033 = vcmp.eq.s32.totalorder %v4852, %v211
        %vm5034 = vcmp.eq.s32.totalorder %v4855, %v210
        %vm5035 = vcmp.eq.s32.totalorder %v4855, %v211
        %vm5036 = vcmp.eq.s32.totalorder %v4858, %v210
        %vm5037 = vcmp.eq.s32.totalorder %v4858, %v211
        %vm5038 = vcmp.eq.s32.totalorder %v4861, %v210
        %vm5039 = vcmp.eq.s32.totalorder %v4861, %v211
        %vm5040 = vcmp.eq.s32.totalorder %v4864, %v210
        %vm5041 = vcmp.eq.s32.totalorder %v4864, %v211
        %vm5042 = vcmp.eq.s32.totalorder %v4867, %v210
        %vm5043 = vcmp.eq.s32.totalorder %v4867, %v211
        %vm5044 = vcmp.eq.s32.totalorder %v4870, %v210
        %vm5045 = vcmp.eq.s32.totalorder %v4870, %v211
        %vm5046 = vcmp.eq.s32.totalorder %v4873, %v210
        %vm5047 = vcmp.eq.s32.totalorder %v4873, %v211
        %vm5048 = vcmp.eq.s32.totalorder %v4876, %v210
        %vm5049 = vcmp.eq.s32.totalorder %v4876, %v211
        %vm5050 = vcmp.eq.s32.totalorder %v4879, %v210
        %vm5051 = vcmp.eq.s32.totalorder %v4879, %v211
        %vm5052 = vcmp.eq.s32.totalorder %v4882, %v210
        %vm5053 = vcmp.eq.s32.totalorder %v4882, %v211
        %vm5054 = vcmp.eq.s32.totalorder %v4885, %v210
        %vm5055 = vcmp.eq.s32.totalorder %v4885, %v211
        %vm5056 = vcmp.eq.s32.totalorder %v4888, %v210
        %vm5057 = vcmp.eq.s32.totalorder %v4888, %v211
        %vm5058 = vcmp.eq.s32.totalorder %v4891, %v210
        %vm5059 = vcmp.eq.s32.totalorder %v4891, %v211
        %vm5060 = vcmp.eq.s32.totalorder %v4894, %v210
        %vm5061 = vcmp.eq.s32.totalorder %v4894, %v211
        %vm5062 = vcmp.eq.s32.totalorder %v4897, %v210
        %vm5063 = vcmp.eq.s32.totalorder %v4897, %v211
        %vm5064 = vcmp.eq.s32.totalorder %v4900, %v210
        %vm5065 = vcmp.eq.s32.totalorder %v4900, %v211
        %vm5066 = vcmp.eq.s32.totalorder %v4903, %v210
        %vm5067 = vcmp.eq.s32.totalorder %v4903, %v211
        %vm5068 = vcmp.eq.s32.totalorder %v4906, %v210
        %vm5069 = vcmp.eq.s32.totalorder %v4906, %v211
        %vm5070 = vcmp.eq.s32.totalorder %v4909, %v210
        %vm5071 = vcmp.eq.s32.totalorder %v4909, %v211
        %vm5072 = vcmp.eq.s32.totalorder %v4912, %v210
        %vm5073 = vcmp.eq.s32.totalorder %v4912, %v211
        %vm5074 = vcmp.eq.s32.totalorder %v4915, %v210
        %vm5075 = vcmp.eq.s32.totalorder %v4915, %v211
        %vm5076 = vcmp.eq.s32.totalorder %v4918, %v210
        %vm5077 = vcmp.eq.s32.totalorder %v4918, %v211
        %vm5078 = vcmp.eq.s32.totalorder %v4921, %v210
        %vm5079 = vcmp.eq.s32.totalorder %v4921, %v211
        %vm5080 = vcmp.eq.s32.totalorder %v4924, %v210
        %vm5081 = vcmp.eq.s32.totalorder %v4924, %v211
        %vm5082 = vcmp.eq.s32.totalorder %v4927, %v210
        %vm5083 = vcmp.eq.s32.totalorder %v4927, %v211
        %vm5084 = vcmp.eq.s32.totalorder %v4930, %v210
        %vm5085 = vcmp.eq.s32.totalorder %v4930, %v211
        %vm5086 = vcmp.eq.s32.totalorder %v4933, %v210
        %vm5087 = vcmp.eq.s32.totalorder %v4933, %v211
        %vm5088 = vcmp.eq.s32.totalorder %v4936, %v210
        %vm5089 = vcmp.eq.s32.totalorder %v4936, %v211
        %vm5090 = vcmp.eq.s32.totalorder %v4939, %v210
        %vm5091 = vcmp.eq.s32.totalorder %v4939, %v211
        %vm5092 = vcmp.eq.s32.totalorder %v4942, %v210
        %vm5093 = vcmp.eq.s32.totalorder %v4942, %v211
        %vm5094 = vcmp.eq.s32.totalorder %v4945, %v210
        %vm5095 = vcmp.eq.s32.totalorder %v4945, %v211
        %vm5096 = vcmp.eq.s32.totalorder %v4948, %v210
        %vm5097 = vcmp.eq.s32.totalorder %v4948, %v211
        %vm5098 = vcmp.eq.s32.totalorder %v4951, %v210
        %vm5099 = vcmp.eq.s32.totalorder %v4951, %v211
        %vm5100 = vcmp.eq.s32.totalorder %v4954, %v210
        %vm5101 = vcmp.eq.s32.totalorder %v4954, %v211
        %vm5102 = vcmp.eq.s32.totalorder %v4957, %v210
        %vm5103 = vcmp.eq.s32.totalorder %v4957, %v211
        %vm5104 = vcmp.eq.s32.totalorder %v4960, %v210
        %vm5105 = vcmp.eq.s32.totalorder %v4960, %v211
        %vm5106 = vcmp.eq.s32.totalorder %v4963, %v210
        %vm5107 = vcmp.eq.s32.totalorder %v4963, %v211
        %vm5108 = vcmp.eq.s32.totalorder %v4966, %v210
        %vm5109 = vcmp.eq.s32.totalorder %v4966, %v211
        %vm5110 = vcmp.eq.s32.totalorder %v4969, %v210
        %vm5111 = vcmp.eq.s32.totalorder %v4969, %v211
        %vm5112 = vcmp.eq.s32.totalorder %v4972, %v210
        %vm5113 = vcmp.eq.s32.totalorder %v4972, %v211
        %vm5114 = vcmp.eq.s32.totalorder %v4975, %v210
        %vm5115 = vcmp.eq.s32.totalorder %v4975, %v211
        %vm5116 = vcmp.eq.s32.totalorder %v4978, %v210
        %vm5117 = vcmp.eq.s32.totalorder %v4978, %v211
        %vm5118 = vcmp.eq.s32.totalorder %v4981, %v210
        %vm5119 = vcmp.eq.s32.totalorder %v4981, %v211
        %vm5120 = vcmp.eq.s32.totalorder %v4984, %v210
        %vm5121 = vcmp.eq.s32.totalorder %v4984, %v211
        %vm5122 = vcmp.eq.s32.totalorder %v4987, %v210
        %vm5123 = vcmp.eq.s32.totalorder %v4987, %v211
        %vm5124 = vcmp.eq.s32.totalorder %v4990, %v210
        %vm5125 = vcmp.eq.s32.totalorder %v4990, %v211
        %vm5126 = vcmp.eq.s32.totalorder %v4993, %v210
        %vm5127 = vcmp.eq.s32.totalorder %v4993, %v211
        %vm5128 = vcmp.eq.s32.totalorder %v4996, %v210
        %vm5129 = vcmp.eq.s32.totalorder %v4996, %v211
        %vm5130 = vcmp.eq.s32.totalorder %v4999, %v210
        %vm5131 = vcmp.eq.s32.totalorder %v4999, %v211
        %vm5132 = vcmp.eq.s32.totalorder %v5002, %v210
        %vm5133 = vcmp.eq.s32.totalorder %v5002, %v211
        %vm5134 = vcmp.eq.s32.totalorder %v5005, %v210
        %vm5135 = vcmp.eq.s32.totalorder %v5005, %v211
        %vm5136 = vcmp.eq.s32.totalorder %v5008, %v210
        %vm5137 = vcmp.eq.s32.totalorder %v5008, %v211
        %vm5138 = vcmp.eq.s32.totalorder %v5011, %v210
        %vm5139 = vcmp.eq.s32.totalorder %v5011, %v211
        %v5140 = vsel %vm5012, 1, 0
        %v5141 = vsel %vm5013, 1, 0
        %v5142 = vsel %vm5014, 1, 0
        %v5143 = vsel %vm5015, 1, 0
        %v5144 = vsel %vm5016, 1, 0
        %v5145 = vsel %vm5017, 1, 0
        %v5146 = vsel %vm5018, 1, 0
        %v5147 = vsel %vm5019, 1, 0
        %v5148 = vsel %vm5020, 1, 0
        %v5149 = vsel %vm5021, 1, 0
        %v5150 = vsel %vm5022, 1, 0
        %v5151 = vsel %vm5023, 1, 0
        %v5152 = vsel %vm5024, 1, 0
        %v5153 = vsel %vm5025, 1, 0
        %v5154 = vsel %vm5026, 1, 0
        %v5155 = vsel %vm5027, 1, 0
        %v5156 = vsel %vm5028, 1, 0
        %v5157 = vsel %vm5029, 1, 0
        %v5158 = vsel %vm5030, 1, 0
        %v5159 = vsel %vm5031, 1, 0
        %v5160 = vsel %vm5032, 1, 0
        %v5161 = vsel %vm5033, 1, 0
        %v5162 = vsel %vm5034, 1, 0
        %v5163 = vsel %vm5035, 1, 0
        %v5164 = vsel %vm5036, 1, 0
        %v5165 = vsel %vm5037, 1, 0
        %v5166 = vsel %vm5038, 1, 0
        %v5167 = vsel %vm5039, 1, 0
        %v5168 = vsel %vm5040, 1, 0
        %v5169 = vsel %vm5041, 1, 0
        %v5170 = vsel %vm5042, 1, 0
        %v5171 = vsel %vm5043, 1, 0
        %v5172 = vsel %vm5044, 1, 0
        %v5173 = vsel %vm5045, 1, 0
        %v5174 = vsel %vm5046, 1, 0
        %v5175 = vsel %vm5047, 1, 0
        %v5176 = vsel %vm5048, 1, 0
        %v5177 = vsel %vm5049, 1, 0
        %v5178 = vsel %vm5050, 1, 0
        %v5179 = vsel %vm5051, 1, 0
        %v5180 = vsel %vm5052, 1, 0
        %v5181 = vsel %vm5053, 1, 0
        %v5182 = vsel %vm5054, 1, 0
        %v5183 = vsel %vm5055, 1, 0
        %v5184 = vsel %vm5056, 1, 0
        %v5185 = vsel %vm5057, 1, 0
        %v5186 = vsel %vm5058, 1, 0
        %v5187 = vsel %vm5059, 1, 0
        %v5188 = vsel %vm5060, 1, 0
        %v5189 = vsel %vm5061, 1, 0
        %v5190 = vsel %vm5062, 1, 0
        %v5191 = vsel %vm5063, 1, 0
        %v5192 = vsel %vm5064, 1, 0
        %v5193 = vsel %vm5065, 1, 0
        %v5194 = vsel %vm5066, 1, 0
        %v5195 = vsel %vm5067, 1, 0
        %v5196 = vsel %vm5068, 1, 0
        %v5197 = vsel %vm5069, 1, 0
        %v5198 = vsel %vm5070, 1, 0
        %v5199 = vsel %vm5071, 1, 0
        %v5200 = vsel %vm5072, 1, 0
        %v5201 = vsel %vm5073, 1, 0
        %v5202 = vsel %vm5074, 1, 0
        %v5203 = vsel %vm5075, 1, 0
        %v5204 = vsel %vm5076, 1, 0
        %v5205 = vsel %vm5077, 1, 0
        %v5206 = vsel %vm5078, 1, 0
        %v5207 = vsel %vm5079, 1, 0
        %v5208 = vsel %vm5080, 1, 0
        %v5209 = vsel %vm5081, 1, 0
        %v5210 = vsel %vm5082, 1, 0
        %v5211 = vsel %vm5083, 1, 0
        %v5212 = vsel %vm5084, 1, 0
        %v5213 = vsel %vm5085, 1, 0
        %v5214 = vsel %vm5086, 1, 0
        %v5215 = vsel %vm5087, 1, 0
        %v5216 = vsel %vm5088, 1, 0
        %v5217 = vsel %vm5089, 1, 0
        %v5218 = vsel %vm5090, 1, 0
        %v5219 = vsel %vm5091, 1, 0
        %v5220 = vsel %vm5092, 1, 0
        %v5221 = vsel %vm5093, 1, 0
        %v5222 = vsel %vm5094, 1, 0
        %v5223 = vsel %vm5095, 1, 0
        %v5224 = vsel %vm5096, 1, 0
        %v5225 = vsel %vm5097, 1, 0
        %v5226 = vsel %vm5098, 1, 0
        %v5227 = vsel %vm5099, 1, 0
        %v5228 = vsel %vm5100, 1, 0
        %v5229 = vsel %vm5101, 1, 0
        %v5230 = vsel %vm5102, 1, 0
        %v5231 = vsel %vm5103, 1, 0
        %v5232 = vsel %vm5104, 1, 0
        %v5233 = vsel %vm5105, 1, 0
        %v5234 = vsel %vm5106, 1, 0
        %v5235 = vsel %vm5107, 1, 0
        %v5236 = vsel %vm5108, 1, 0
        %v5237 = vsel %vm5109, 1, 0
        %v5238 = vsel %vm5110, 1, 0
        %v5239 = vsel %vm5111, 1, 0
        %v5240 = vsel %vm5112, 1, 0
        %v5241 = vsel %vm5113, 1, 0
        %v5242 = vsel %vm5114, 1, 0
        %v5243 = vsel %vm5115, 1, 0
        %v5244 = vsel %vm5116, 1, 0
        %v5245 = vsel %vm5117, 1, 0
        %v5246 = vsel %vm5118, 1, 0
        %v5247 = vsel %vm5119, 1, 0
        %v5248 = vsel %vm5120, 1, 0
        %v5249 = vsel %vm5121, 1, 0
        %v5250 = vsel %vm5122, 1, 0
        %v5251 = vsel %vm5123, 1, 0
        %v5252 = vsel %vm5124, 1, 0
        %v5253 = vsel %vm5125, 1, 0
        %v5254 = vsel %vm5126, 1, 0
        %v5255 = vsel %vm5127, 1, 0
        %v5256 = vsel %vm5128, 1, 0
        %v5257 = vsel %vm5129, 1, 0
        %v5258 = vsel %vm5130, 1, 0
        %v5259 = vsel %vm5131, 1, 0
        %v5260 = vsel %vm5132, 1, 0
        %v5261 = vsel %vm5133, 1, 0
        %v5262 = vsel %vm5134, 1, 0
        %v5263 = vsel %vm5135, 1, 0
        %v5264 = vsel %vm5136, 1, 0
        %v5265 = vsel %vm5137, 1, 0
        %v5266 = vsel %vm5138, 1, 0
        %v5267 = vsel %vm5139, 1, 0
        %v5268 = vcvt.s32.f32 %v5140
        %v5269 = vcvt.s32.f32 %v5141
        %v5270 = vcvt.s32.f32 %v5142
        %v5271 = vcvt.s32.f32 %v5143
        %v5272 = vcvt.s32.f32 %v5144
        %v5273 = vcvt.s32.f32 %v5145
        %v5274 = vcvt.s32.f32 %v5146
        %v5275 = vcvt.s32.f32 %v5147
        %v5276 = vcvt.s32.f32 %v5148
        %v5277 = vcvt.s32.f32 %v5149
        %v5278 = vcvt.s32.f32 %v5150
        %v5279 = vcvt.s32.f32 %v5151
        %v5280 = vcvt.s32.f32 %v5152
        %v5281 = vcvt.s32.f32 %v5153
        %v5282 = vcvt.s32.f32 %v5154
        %v5283 = vcvt.s32.f32 %v5155
        %v5284 = vcvt.s32.f32 %v5156
        %v5285 = vcvt.s32.f32 %v5157
        %v5286 = vcvt.s32.f32 %v5158
        %v5287 = vcvt.s32.f32 %v5159
        %v5288 = vcvt.s32.f32 %v5160
        %v5289 = vcvt.s32.f32 %v5161
        %v5290 = vcvt.s32.f32 %v5162
        %v5291 = vcvt.s32.f32 %v5163
        %v5292 = vcvt.s32.f32 %v5164
        %v5293 = vcvt.s32.f32 %v5165
        %v5294 = vcvt.s32.f32 %v5166
        %v5295 = vcvt.s32.f32 %v5167
        %v5296 = vcvt.s32.f32 %v5168
        %v5297 = vcvt.s32.f32 %v5169
        %v5298 = vcvt.s32.f32 %v5170
        %v5299 = vcvt.s32.f32 %v5171
        %v5300 = vcvt.s32.f32 %v5172
        %v5301 = vcvt.s32.f32 %v5173
        %v5302 = vcvt.s32.f32 %v5174
        %v5303 = vcvt.s32.f32 %v5175
        %v5304 = vcvt.s32.f32 %v5176
        %v5305 = vcvt.s32.f32 %v5177
        %v5306 = vcvt.s32.f32 %v5178
        %v5307 = vcvt.s32.f32 %v5179
        %v5308 = vcvt.s32.f32 %v5180
        %v5309 = vcvt.s32.f32 %v5181
        %v5310 = vcvt.s32.f32 %v5182
        %v5311 = vcvt.s32.f32 %v5183
        %v5312 = vcvt.s32.f32 %v5184
        %v5313 = vcvt.s32.f32 %v5185
        %v5314 = vcvt.s32.f32 %v5186
        %v5315 = vcvt.s32.f32 %v5187
        %v5316 = vcvt.s32.f32 %v5188
        %v5317 = vcvt.s32.f32 %v5189
        %v5318 = vcvt.s32.f32 %v5190
        %v5319 = vcvt.s32.f32 %v5191
        %v5320 = vcvt.s32.f32 %v5192
        %v5321 = vcvt.s32.f32 %v5193
        %v5322 = vcvt.s32.f32 %v5194
        %v5323 = vcvt.s32.f32 %v5195
        %v5324 = vcvt.s32.f32 %v5196
        %v5325 = vcvt.s32.f32 %v5197
        %v5326 = vcvt.s32.f32 %v5198
        %v5327 = vcvt.s32.f32 %v5199
        %v5328 = vcvt.s32.f32 %v5200
        %v5329 = vcvt.s32.f32 %v5201
        %v5330 = vcvt.s32.f32 %v5202
        %v5331 = vcvt.s32.f32 %v5203
        %v5332 = vcvt.s32.f32 %v5204
        %v5333 = vcvt.s32.f32 %v5205
        %v5334 = vcvt.s32.f32 %v5206
        %v5335 = vcvt.s32.f32 %v5207
        %v5336 = vcvt.s32.f32 %v5208
        %v5337 = vcvt.s32.f32 %v5209
        %v5338 = vcvt.s32.f32 %v5210
        %v5339 = vcvt.s32.f32 %v5211
        %v5340 = vcvt.s32.f32 %v5212
        %v5341 = vcvt.s32.f32 %v5213
        %v5342 = vcvt.s32.f32 %v5214
        %v5343 = vcvt.s32.f32 %v5215
        %v5344 = vcvt.s32.f32 %v5216
        %v5345 = vcvt.s32.f32 %v5217
        %v5346 = vcvt.s32.f32 %v5218
        %v5347 = vcvt.s32.f32 %v5219
        %v5348 = vcvt.s32.f32 %v5220
        %v5349 = vcvt.s32.f32 %v5221
        %v5350 = vcvt.s32.f32 %v5222
        %v5351 = vcvt.s32.f32 %v5223
        %v5352 = vcvt.s32.f32 %v5224
        %v5353 = vcvt.s32.f32 %v5225
        %v5354 = vcvt.s32.f32 %v5226
        %v5355 = vcvt.s32.f32 %v5227
        %v5356 = vcvt.s32.f32 %v5228
        %v5357 = vcvt.s32.f32 %v5229
        %v5358 = vcvt.s32.f32 %v5230
        %v5359 = vcvt.s32.f32 %v5231
        %v5360 = vcvt.s32.f32 %v5232
        %v5361 = vcvt.s32.f32 %v5233
        %v5362 = vcvt.s32.f32 %v5234
        %v5363 = vcvt.s32.f32 %v5235
        %v5364 = vcvt.s32.f32 %v5236
        %v5365 = vcvt.s32.f32 %v5237
        %v5366 = vcvt.s32.f32 %v5238
        %v5367 = vcvt.s32.f32 %v5239
        %v5368 = vcvt.s32.f32 %v5240
        %v5369 = vcvt.s32.f32 %v5241
        %v5370 = vcvt.s32.f32 %v5242
        %v5371 = vcvt.s32.f32 %v5243
        %v5372 = vcvt.s32.f32 %v5244
        %v5373 = vcvt.s32.f32 %v5245
        %v5374 = vcvt.s32.f32 %v5246
        %v5375 = vcvt.s32.f32 %v5247
        %v5376 = vcvt.s32.f32 %v5248
        %v5377 = vcvt.s32.f32 %v5249
        %v5378 = vcvt.s32.f32 %v5250
        %v5379 = vcvt.s32.f32 %v5251
        %v5380 = vcvt.s32.f32 %v5252
        %v5381 = vcvt.s32.f32 %v5253
        %v5382 = vcvt.s32.f32 %v5254
        %v5383 = vcvt.s32.f32 %v5255
        %v5384 = vcvt.s32.f32 %v5256
        %v5385 = vcvt.s32.f32 %v5257
        %v5386 = vcvt.s32.f32 %v5258
        %v5387 = vcvt.s32.f32 %v5259
        %v5388 = vcvt.s32.f32 %v5260
        %v5389 = vcvt.s32.f32 %v5261
        %v5390 = vcvt.s32.f32 %v5262
        %v5391 = vcvt.s32.f32 %v5263
        %v5392 = vcvt.s32.f32 %v5264
        %v5393 = vcvt.s32.f32 %v5265
        %v5394 = vcvt.s32.f32 %v5266
        %v5395 = vcvt.s32.f32 %v5267
        %v5396 = vadd.f32 %v4628, %v5268
        %v5397 = vadd.f32 %v4629, %v5269
        %v5398 = vadd.f32 %v4630, %v5270
        %v5399 = vadd.f32 %v4631, %v5271
        %v5400 = vadd.f32 %v4632, %v5272
        %v5401 = vadd.f32 %v4633, %v5273
        %v5402 = vadd.f32 %v4634, %v5274
        %v5403 = vadd.f32 %v4635, %v5275
        %v5404 = vadd.f32 %v4636, %v5276
        %v5405 = vadd.f32 %v4637, %v5277
        %v5406 = vadd.f32 %v4638, %v5278
        %v5407 = vadd.f32 %v4639, %v5279
        %v5408 = vadd.f32 %v4640, %v5280
        %v5409 = vadd.f32 %v4641, %v5281
        %v5410 = vadd.f32 %v4642, %v5282
        %v5411 = vadd.f32 %v4643, %v5283
        %v5412 = vadd.f32 %v4644, %v5284
        %v5413 = vadd.f32 %v4645, %v5285
        %v5414 = vadd.f32 %v4646, %v5286
        %v5415 = vadd.f32 %v4647, %v5287
        %v5416 = vadd.f32 %v4648, %v5288
        %v5417 = vadd.f32 %v4649, %v5289
        %v5418 = vadd.f32 %v4650, %v5290
        %v5419 = vadd.f32 %v4651, %v5291
        %v5420 = vadd.f32 %v4652, %v5292
        %v5421 = vadd.f32 %v4653, %v5293
        %v5422 = vadd.f32 %v4654, %v5294
        %v5423 = vadd.f32 %v4655, %v5295
        %v5424 = vadd.f32 %v4656, %v5296
        %v5425 = vadd.f32 %v4657, %v5297
        %v5426 = vadd.f32 %v4658, %v5298
        %v5427 = vadd.f32 %v4659, %v5299
        %v5428 = vadd.f32 %v4660, %v5300
        %v5429 = vadd.f32 %v4661, %v5301
        %v5430 = vadd.f32 %v4662, %v5302
        %v5431 = vadd.f32 %v4663, %v5303
        %v5432 = vadd.f32 %v4664, %v5304
        %v5433 = vadd.f32 %v4665, %v5305
        %v5434 = vadd.f32 %v4666, %v5306
        %v5435 = vadd.f32 %v4667, %v5307
        %v5436 = vadd.f32 %v4668, %v5308
        %v5437 = vadd.f32 %v4669, %v5309
        %v5438 = vadd.f32 %v4670, %v5310
        %v5439 = vadd.f32 %v4671, %v5311
        %v5440 = vadd.f32 %v4672, %v5312
        %v5441 = vadd.f32 %v4673, %v5313
        %v5442 = vadd.f32 %v4674, %v5314
        %v5443 = vadd.f32 %v4675, %v5315
        %v5444 = vadd.f32 %v4676, %v5316
        %v5445 = vadd.f32 %v4677, %v5317
        %v5446 = vadd.f32 %v4678, %v5318
        %v5447 = vadd.f32 %v4679, %v5319
        %v5448 = vadd.f32 %v4680, %v5320
        %v5449 = vadd.f32 %v4681, %v5321
        %v5450 = vadd.f32 %v4682, %v5322
        %v5451 = vadd.f32 %v4683, %v5323
        %v5452 = vadd.f32 %v4684, %v5324
        %v5453 = vadd.f32 %v4685, %v5325
        %v5454 = vadd.f32 %v4686, %v5326
        %v5455 = vadd.f32 %v4687, %v5327
        %v5456 = vadd.f32 %v4688, %v5328
        %v5457 = vadd.f32 %v4689, %v5329
        %v5458 = vadd.f32 %v4690, %v5330
        %v5459 = vadd.f32 %v4691, %v5331
        %v5460 = vadd.f32 %v4692, %v5332
        %v5461 = vadd.f32 %v4693, %v5333
        %v5462 = vadd.f32 %v4694, %v5334
        %v5463 = vadd.f32 %v4695, %v5335
        %v5464 = vadd.f32 %v4696, %v5336
        %v5465 = vadd.f32 %v4697, %v5337
        %v5466 = vadd.f32 %v4698, %v5338
        %v5467 = vadd.f32 %v4699, %v5339
        %v5468 = vadd.f32 %v4700, %v5340
        %v5469 = vadd.f32 %v4701, %v5341
        %v5470 = vadd.f32 %v4702, %v5342
        %v5471 = vadd.f32 %v4703, %v5343
        %v5472 = vadd.f32 %v4704, %v5344
        %v5473 = vadd.f32 %v4705, %v5345
        %v5474 = vadd.f32 %v4706, %v5346
        %v5475 = vadd.f32 %v4707, %v5347
        %v5476 = vadd.f32 %v4708, %v5348
        %v5477 = vadd.f32 %v4709, %v5349
        %v5478 = vadd.f32 %v4710, %v5350
        %v5479 = vadd.f32 %v4711, %v5351
        %v5480 = vadd.f32 %v4712, %v5352
        %v5481 = vadd.f32 %v4713, %v5353
        %v5482 = vadd.f32 %v4714, %v5354
        %v5483 = vadd.f32 %v4715, %v5355
        %v5484 = vadd.f32 %v4716, %v5356
        %v5485 = vadd.f32 %v4717, %v5357
        %v5486 = vadd.f32 %v4718, %v5358
        %v5487 = vadd.f32 %v4719, %v5359
        %v5488 = vadd.f32 %v4720, %v5360
        %v5489 = vadd.f32 %v4721, %v5361
        %v5490 = vadd.f32 %v4722, %v5362
        %v5491 = vadd.f32 %v4723, %v5363
        %v5492 = vadd.f32 %v4724, %v5364
        %v5493 = vadd.f32 %v4725, %v5365
        %v5494 = vadd.f32 %v4726, %v5366
        %v5495 = vadd.f32 %v4727, %v5367
        %v5496 = vadd.f32 %v4728, %v5368
        %v5497 = vadd.f32 %v4729, %v5369
        %v5498 = vadd.f32 %v4730, %v5370
        %v5499 = vadd.f32 %v4731, %v5371
        %v5500 = vadd.f32 %v4732, %v5372
        %v5501 = vadd.f32 %v4733, %v5373
        %v5502 = vadd.f32 %v4734, %v5374
        %v5503 = vadd.f32 %v4735, %v5375
        %v5504 = vadd.f32 %v4736, %v5376
        %v5505 = vadd.f32 %v4737, %v5377
        %v5506 = vadd.f32 %v4738, %v5378
        %v5507 = vadd.f32 %v4739, %v5379
        %v5508 = vadd.f32 %v4740, %v5380
        %v5509 = vadd.f32 %v4741, %v5381
        %v5510 = vadd.f32 %v4742, %v5382
        %v5511 = vadd.f32 %v4743, %v5383
        %v5512 = vadd.f32 %v4744, %v5384
        %v5513 = vadd.f32 %v4745, %v5385
        %v5514 = vadd.f32 %v4746, %v5386
        %v5515 = vadd.f32 %v4747, %v5387
        %v5516 = vadd.f32 %v4748, %v5388
        %v5517 = vadd.f32 %v4749, %v5389
        %v5518 = vadd.f32 %v4750, %v5390
        %v5519 = vadd.f32 %v4751, %v5391
        %v5520 = vadd.f32 %v4752, %v5392
        %v5521 = vadd.f32 %v4753, %v5393
        %v5522 = vadd.f32 %v4754, %v5394
        %v5523 = vadd.f32 %v4755, %v5395
        %v5524 = vadd.s32 %v145, 169
        %v5525 = vadd.s32 %v146, 169
        %v5526 = vadd.s32 %v147, 169
        %v5527 = vadd.s32 %v148, 169
        %v5528 = vadd.s32 %v149, 169
        %v5529 = vadd.s32 %v150, 169
        %v5530 = vadd.s32 %v151, 169
        %v5531 = vadd.s32 %v152, 169
        %v5532 = vadd.s32 %v153, 169
        %v5533 = vadd.s32 %v154, 169
        %v5534 = vadd.s32 %v155, 169
        %v5535 = vadd.s32 %v156, 169
        %v5536 = vadd.s32 %v157, 169
        %v5537 = vadd.s32 %v158, 169
        %v5538 = vadd.s32 %v159, 169
        %v5539 = vadd.s32 %v160, 169
        %v5540 = vadd.s32 %v161, 169
        %v5541 = vadd.s32 %v162, 169
        %v5542 = vadd.s32 %v163, 169
        %v5543 = vadd.s32 %v164, 169
        %v5544 = vadd.s32 %v165, 169
        %v5545 = vadd.s32 %v166, 169
        %v5546 = vadd.s32 %v167, 169
        %v5547 = vadd.s32 %v168, 169
        %v5548 = vadd.s32 %v169, 169
        %v5549 = vadd.s32 %v170, 169
        %v5550 = vadd.s32 %v171, 169
        %v5551 = vadd.s32 %v172, 169
        %v5552 = vadd.s32 %v173, 169
        %v5553 = vadd.s32 %v174, 169
        %v5554 = vadd.s32 %v175, 169
        %v5555 = vadd.s32 %v176, 169
        %v5556 = vadd.s32 %v177, 169
        %v5557 = vadd.s32 %v178, 169
        %v5558 = vadd.s32 %v179, 169
        %v5559 = vadd.s32 %v180, 169
        %v5560 = vadd.s32 %v181, 169
        %v5561 = vadd.s32 %v182, 169
        %v5562 = vadd.s32 %v183, 169
        %v5563 = vadd.s32 %v184, 169
        %v5564 = vadd.s32 %v185, 169
        %v5565 = vadd.s32 %v186, 169
        %v5566 = vadd.s32 %v187, 169
        %v5567 = vadd.s32 %v188, 169
        %v5568 = vadd.s32 %v189, 169
        %v5569 = vadd.s32 %v190, 169
        %v5570 = vadd.s32 %v191, 169
        %v5571 = vadd.s32 %v192, 169
        %v5572 = vadd.s32 %v193, 169
        %v5573 = vadd.s32 %v194, 169
        %v5574 = vadd.s32 %v195, 169
        %v5575 = vadd.s32 %v196, 169
        %v5576 = vadd.s32 %v197, 169
        %v5577 = vadd.s32 %v198, 169
        %v5578 = vadd.s32 %v199, 169
        %v5579 = vadd.s32 %v200, 169
        %v5580 = vadd.s32 %v201, 169
        %v5581 = vadd.s32 %v202, 169
        %v5582 = vadd.s32 %v203, 169
        %v5583 = vadd.s32 %v204, 169
        %v5584 = vadd.s32 %v205, 169
        %v5585 = vadd.s32 %v206, 169
        %v5586 = vadd.s32 %v207, 169
        %v5587 = vadd.s32 %v208, 169
        %5588 = vset.pattern.permute.xlu0 7
        %5589 = vperm.xlu0 %5588, %v5524
        %v5590 = vpop.permute.xlu0 %5589
        %5591 = vset.pattern.permute.xlu0 7
        %5592 = vperm.xlu0 %5591, %v5525
        %v5593 = vpop.permute.xlu0 %5592
        %5594 = vset.pattern.permute.xlu0 7
        %5595 = vperm.xlu0 %5594, %v5526
        %v5596 = vpop.permute.xlu0 %5595
        %5597 = vset.pattern.permute.xlu0 7
        %5598 = vperm.xlu0 %5597, %v5527
        %v5599 = vpop.permute.xlu0 %5598
        %5600 = vset.pattern.permute.xlu0 7
        %5601 = vperm.xlu0 %5600, %v5528
        %v5602 = vpop.permute.xlu0 %5601
        %5603 = vset.pattern.permute.xlu0 7
        %5604 = vperm.xlu0 %5603, %v5529
        %v5605 = vpop.permute.xlu0 %5604
        %5606 = vset.pattern.permute.xlu0 7
        %5607 = vperm.xlu0 %5606, %v5530
        %v5608 = vpop.permute.xlu0 %5607
        %5609 = vset.pattern.permute.xlu0 7
        %5610 = vperm.xlu0 %5609, %v5531
        %v5611 = vpop.permute.xlu0 %5610
        %5612 = vset.pattern.permute.xlu0 7
        %5613 = vperm.xlu0 %5612, %v5532
        %v5614 = vpop.permute.xlu0 %5613
        %5615 = vset.pattern.permute.xlu0 7
        %5616 = vperm.xlu0 %5615, %v5533
        %v5617 = vpop.permute.xlu0 %5616
        %5618 = vset.pattern.permute.xlu0 7
        %5619 = vperm.xlu0 %5618, %v5534
        %v5620 = vpop.permute.xlu0 %5619
        %5621 = vset.pattern.permute.xlu0 7
        %5622 = vperm.xlu0 %5621, %v5535
        %v5623 = vpop.permute.xlu0 %5622
        %5624 = vset.pattern.permute.xlu0 7
        %5625 = vperm.xlu0 %5624, %v5536
        %v5626 = vpop.permute.xlu0 %5625
        %5627 = vset.pattern.permute.xlu0 7
        %5628 = vperm.xlu0 %5627, %v5537
        %v5629 = vpop.permute.xlu0 %5628
        %5630 = vset.pattern.permute.xlu0 7
        %5631 = vperm.xlu0 %5630, %v5538
        %v5632 = vpop.permute.xlu0 %5631
        %5633 = vset.pattern.permute.xlu0 7
        %5634 = vperm.xlu0 %5633, %v5539
        %v5635 = vpop.permute.xlu0 %5634
        %5636 = vset.pattern.permute.xlu0 7
        %5637 = vperm.xlu0 %5636, %v5540
        %v5638 = vpop.permute.xlu0 %5637
        %5639 = vset.pattern.permute.xlu0 7
        %5640 = vperm.xlu0 %5639, %v5541
        %v5641 = vpop.permute.xlu0 %5640
        %5642 = vset.pattern.permute.xlu0 7
        %5643 = vperm.xlu0 %5642, %v5542
        %v5644 = vpop.permute.xlu0 %5643
        %5645 = vset.pattern.permute.xlu0 7
        %5646 = vperm.xlu0 %5645, %v5543
        %v5647 = vpop.permute.xlu0 %5646
        %5648 = vset.pattern.permute.xlu0 7
        %5649 = vperm.xlu0 %5648, %v5544
        %v5650 = vpop.permute.xlu0 %5649
        %5651 = vset.pattern.permute.xlu0 7
        %5652 = vperm.xlu0 %5651, %v5545
        %v5653 = vpop.permute.xlu0 %5652
        %5654 = vset.pattern.permute.xlu0 7
        %5655 = vperm.xlu0 %5654, %v5546
        %v5656 = vpop.permute.xlu0 %5655
        %5657 = vset.pattern.permute.xlu0 7
        %5658 = vperm.xlu0 %5657, %v5547
        %v5659 = vpop.permute.xlu0 %5658
        %5660 = vset.pattern.permute.xlu0 7
        %5661 = vperm.xlu0 %5660, %v5548
        %v5662 = vpop.permute.xlu0 %5661
        %5663 = vset.pattern.permute.xlu0 7
        %5664 = vperm.xlu0 %5663, %v5549
        %v5665 = vpop.permute.xlu0 %5664
        %5666 = vset.pattern.permute.xlu0 7
        %5667 = vperm.xlu0 %5666, %v5550
        %v5668 = vpop.permute.xlu0 %5667
        %5669 = vset.pattern.permute.xlu0 7
        %5670 = vperm.xlu0 %5669, %v5551
        %v5671 = vpop.permute.xlu0 %5670
        %5672 = vset.pattern.permute.xlu0 7
        %5673 = vperm.xlu0 %5672, %v5552
        %v5674 = vpop.permute.xlu0 %5673
        %5675 = vset.pattern.permute.xlu0 7
        %5676 = vperm.xlu0 %5675, %v5553
        %v5677 = vpop.permute.xlu0 %5676
        %5678 = vset.pattern.permute.xlu0 7
        %5679 = vperm.xlu0 %5678, %v5554
        %v5680 = vpop.permute.xlu0 %5679
        %5681 = vset.pattern.permute.xlu0 7
        %5682 = vperm.xlu0 %5681, %v5555
        %v5683 = vpop.permute.xlu0 %5682
        %5684 = vset.pattern.permute.xlu0 7
        %5685 = vperm.xlu0 %5684, %v5556
        %v5686 = vpop.permute.xlu0 %5685
        %5687 = vset.pattern.permute.xlu0 7
        %5688 = vperm.xlu0 %5687, %v5557
        %v5689 = vpop.permute.xlu0 %5688
        %5690 = vset.pattern.permute.xlu0 7
        %5691 = vperm.xlu0 %5690, %v5558
        %v5692 = vpop.permute.xlu0 %5691
        %5693 = vset.pattern.permute.xlu0 7
        %5694 = vperm.xlu0 %5693, %v5559
        %v5695 = vpop.permute.xlu0 %5694
        %5696 = vset.pattern.permute.xlu0 7
        %5697 = vperm.xlu0 %5696, %v5560
        %v5698 = vpop.permute.xlu0 %5697
        %5699 = vset.pattern.permute.xlu0 7
        %5700 = vperm.xlu0 %5699, %v5561
        %v5701 = vpop.permute.xlu0 %5700
        %5702 = vset.pattern.permute.xlu0 7
        %5703 = vperm.xlu0 %5702, %v5562
        %v5704 = vpop.permute.xlu0 %5703
        %5705 = vset.pattern.permute.xlu0 7
        %5706 = vperm.xlu0 %5705, %v5563
        %v5707 = vpop.permute.xlu0 %5706
        %5708 = vset.pattern.permute.xlu0 7
        %5709 = vperm.xlu0 %5708, %v5564
        %v5710 = vpop.permute.xlu0 %5709
        %5711 = vset.pattern.permute.xlu0 7
        %5712 = vperm.xlu0 %5711, %v5565
        %v5713 = vpop.permute.xlu0 %5712
        %5714 = vset.pattern.permute.xlu0 7
        %5715 = vperm.xlu0 %5714, %v5566
        %v5716 = vpop.permute.xlu0 %5715
        %5717 = vset.pattern.permute.xlu0 7
        %5718 = vperm.xlu0 %5717, %v5567
        %v5719 = vpop.permute.xlu0 %5718
        %5720 = vset.pattern.permute.xlu0 7
        %5721 = vperm.xlu0 %5720, %v5568
        %v5722 = vpop.permute.xlu0 %5721
        %5723 = vset.pattern.permute.xlu0 7
        %5724 = vperm.xlu0 %5723, %v5569
        %v5725 = vpop.permute.xlu0 %5724
        %5726 = vset.pattern.permute.xlu0 7
        %5727 = vperm.xlu0 %5726, %v5570
        %v5728 = vpop.permute.xlu0 %5727
        %5729 = vset.pattern.permute.xlu0 7
        %5730 = vperm.xlu0 %5729, %v5571
        %v5731 = vpop.permute.xlu0 %5730
        %5732 = vset.pattern.permute.xlu0 7
        %5733 = vperm.xlu0 %5732, %v5572
        %v5734 = vpop.permute.xlu0 %5733
        %5735 = vset.pattern.permute.xlu0 7
        %5736 = vperm.xlu0 %5735, %v5573
        %v5737 = vpop.permute.xlu0 %5736
        %5738 = vset.pattern.permute.xlu0 7
        %5739 = vperm.xlu0 %5738, %v5574
        %v5740 = vpop.permute.xlu0 %5739
        %5741 = vset.pattern.permute.xlu0 7
        %5742 = vperm.xlu0 %5741, %v5575
        %v5743 = vpop.permute.xlu0 %5742
        %5744 = vset.pattern.permute.xlu0 7
        %5745 = vperm.xlu0 %5744, %v5576
        %v5746 = vpop.permute.xlu0 %5745
        %5747 = vset.pattern.permute.xlu0 7
        %5748 = vperm.xlu0 %5747, %v5577
        %v5749 = vpop.permute.xlu0 %5748
        %5750 = vset.pattern.permute.xlu0 7
        %5751 = vperm.xlu0 %5750, %v5578
        %v5752 = vpop.permute.xlu0 %5751
        %5753 = vset.pattern.permute.xlu0 7
        %5754 = vperm.xlu0 %5753, %v5579
        %v5755 = vpop.permute.xlu0 %5754
        %5756 = vset.pattern.permute.xlu0 7
        %5757 = vperm.xlu0 %5756, %v5580
        %v5758 = vpop.permute.xlu0 %5757
        %5759 = vset.pattern.permute.xlu0 7
        %5760 = vperm.xlu0 %5759, %v5581
        %v5761 = vpop.permute.xlu0 %5760
        %5762 = vset.pattern.permute.xlu0 7
        %5763 = vperm.xlu0 %5762, %v5582
        %v5764 = vpop.permute.xlu0 %5763
        %5765 = vset.pattern.permute.xlu0 7
        %5766 = vperm.xlu0 %5765, %v5583
        %v5767 = vpop.permute.xlu0 %5766
        %5768 = vset.pattern.permute.xlu0 7
        %5769 = vperm.xlu0 %5768, %v5584
        %v5770 = vpop.permute.xlu0 %5769
        %5771 = vset.pattern.permute.xlu0 7
        %5772 = vperm.xlu0 %5771, %v5585
        %v5773 = vpop.permute.xlu0 %5772
        %5774 = vset.pattern.permute.xlu0 7
        %5775 = vperm.xlu0 %5774, %v5586
        %v5776 = vpop.permute.xlu0 %5775
        %5777 = vset.pattern.permute.xlu0 7
        %5778 = vperm.xlu0 %5777, %v5587
        %v5779 = vpop.permute.xlu0 %5778
        %vm5780 = vcmp.eq.s32.totalorder %v5590, %v210
        %vm5781 = vcmp.eq.s32.totalorder %v5590, %v211
        %vm5782 = vcmp.eq.s32.totalorder %v5593, %v210
        %vm5783 = vcmp.eq.s32.totalorder %v5593, %v211
        %vm5784 = vcmp.eq.s32.totalorder %v5596, %v210
        %vm5785 = vcmp.eq.s32.totalorder %v5596, %v211
        %vm5786 = vcmp.eq.s32.totalorder %v5599, %v210
        %vm5787 = vcmp.eq.s32.totalorder %v5599, %v211
        %vm5788 = vcmp.eq.s32.totalorder %v5602, %v210
        %vm5789 = vcmp.eq.s32.totalorder %v5602, %v211
        %vm5790 = vcmp.eq.s32.totalorder %v5605, %v210
        %vm5791 = vcmp.eq.s32.totalorder %v5605, %v211
        %vm5792 = vcmp.eq.s32.totalorder %v5608, %v210
        %vm5793 = vcmp.eq.s32.totalorder %v5608, %v211
        %vm5794 = vcmp.eq.s32.totalorder %v5611, %v210
        %vm5795 = vcmp.eq.s32.totalorder %v5611, %v211
        %vm5796 = vcmp.eq.s32.totalorder %v5614, %v210
        %vm5797 = vcmp.eq.s32.totalorder %v5614, %v211
        %vm5798 = vcmp.eq.s32.totalorder %v5617, %v210
        %vm5799 = vcmp.eq.s32.totalorder %v5617, %v211
        %vm5800 = vcmp.eq.s32.totalorder %v5620, %v210
        %vm5801 = vcmp.eq.s32.totalorder %v5620, %v211
        %vm5802 = vcmp.eq.s32.totalorder %v5623, %v210
        %vm5803 = vcmp.eq.s32.totalorder %v5623, %v211
        %vm5804 = vcmp.eq.s32.totalorder %v5626, %v210
        %vm5805 = vcmp.eq.s32.totalorder %v5626, %v211
        %vm5806 = vcmp.eq.s32.totalorder %v5629, %v210
        %vm5807 = vcmp.eq.s32.totalorder %v5629, %v211
        %vm5808 = vcmp.eq.s32.totalorder %v5632, %v210
        %vm5809 = vcmp.eq.s32.totalorder %v5632, %v211
        %vm5810 = vcmp.eq.s32.totalorder %v5635, %v210
        %vm5811 = vcmp.eq.s32.totalorder %v5635, %v211
        %vm5812 = vcmp.eq.s32.totalorder %v5638, %v210
        %vm5813 = vcmp.eq.s32.totalorder %v5638, %v211
        %vm5814 = vcmp.eq.s32.totalorder %v5641, %v210
        %vm5815 = vcmp.eq.s32.totalorder %v5641, %v211
        %vm5816 = vcmp.eq.s32.totalorder %v5644, %v210
        %vm5817 = vcmp.eq.s32.totalorder %v5644, %v211
        %vm5818 = vcmp.eq.s32.totalorder %v5647, %v210
        %vm5819 = vcmp.eq.s32.totalorder %v5647, %v211
        %vm5820 = vcmp.eq.s32.totalorder %v5650, %v210
        %vm5821 = vcmp.eq.s32.totalorder %v5650, %v211
        %vm5822 = vcmp.eq.s32.totalorder %v5653, %v210
        %vm5823 = vcmp.eq.s32.totalorder %v5653, %v211
        %vm5824 = vcmp.eq.s32.totalorder %v5656, %v210
        %vm5825 = vcmp.eq.s32.totalorder %v5656, %v211
        %vm5826 = vcmp.eq.s32.totalorder %v5659, %v210
        %vm5827 = vcmp.eq.s32.totalorder %v5659, %v211
        %vm5828 = vcmp.eq.s32.totalorder %v5662, %v210
        %vm5829 = vcmp.eq.s32.totalorder %v5662, %v211
        %vm5830 = vcmp.eq.s32.totalorder %v5665, %v210
        %vm5831 = vcmp.eq.s32.totalorder %v5665, %v211
        %vm5832 = vcmp.eq.s32.totalorder %v5668, %v210
        %vm5833 = vcmp.eq.s32.totalorder %v5668, %v211
        %vm5834 = vcmp.eq.s32.totalorder %v5671, %v210
        %vm5835 = vcmp.eq.s32.totalorder %v5671, %v211
        %vm5836 = vcmp.eq.s32.totalorder %v5674, %v210
        %vm5837 = vcmp.eq.s32.totalorder %v5674, %v211
        %vm5838 = vcmp.eq.s32.totalorder %v5677, %v210
        %vm5839 = vcmp.eq.s32.totalorder %v5677, %v211
        %vm5840 = vcmp.eq.s32.totalorder %v5680, %v210
        %vm5841 = vcmp.eq.s32.totalorder %v5680, %v211
        %vm5842 = vcmp.eq.s32.totalorder %v5683, %v210
        %vm5843 = vcmp.eq.s32.totalorder %v5683, %v211
        %vm5844 = vcmp.eq.s32.totalorder %v5686, %v210
        %vm5845 = vcmp.eq.s32.totalorder %v5686, %v211
        %vm5846 = vcmp.eq.s32.totalorder %v5689, %v210
        %vm5847 = vcmp.eq.s32.totalorder %v5689, %v211
        %vm5848 = vcmp.eq.s32.totalorder %v5692, %v210
        %vm5849 = vcmp.eq.s32.totalorder %v5692, %v211
        %vm5850 = vcmp.eq.s32.totalorder %v5695, %v210
        %vm5851 = vcmp.eq.s32.totalorder %v5695, %v211
        %vm5852 = vcmp.eq.s32.totalorder %v5698, %v210
        %vm5853 = vcmp.eq.s32.totalorder %v5698, %v211
        %vm5854 = vcmp.eq.s32.totalorder %v5701, %v210
        %vm5855 = vcmp.eq.s32.totalorder %v5701, %v211
        %vm5856 = vcmp.eq.s32.totalorder %v5704, %v210
        %vm5857 = vcmp.eq.s32.totalorder %v5704, %v211
        %vm5858 = vcmp.eq.s32.totalorder %v5707, %v210
        %vm5859 = vcmp.eq.s32.totalorder %v5707, %v211
        %vm5860 = vcmp.eq.s32.totalorder %v5710, %v210
        %vm5861 = vcmp.eq.s32.totalorder %v5710, %v211
        %vm5862 = vcmp.eq.s32.totalorder %v5713, %v210
        %vm5863 = vcmp.eq.s32.totalorder %v5713, %v211
        %vm5864 = vcmp.eq.s32.totalorder %v5716, %v210
        %vm5865 = vcmp.eq.s32.totalorder %v5716, %v211
        %vm5866 = vcmp.eq.s32.totalorder %v5719, %v210
        %vm5867 = vcmp.eq.s32.totalorder %v5719, %v211
        %vm5868 = vcmp.eq.s32.totalorder %v5722, %v210
        %vm5869 = vcmp.eq.s32.totalorder %v5722, %v211
        %vm5870 = vcmp.eq.s32.totalorder %v5725, %v210
        %vm5871 = vcmp.eq.s32.totalorder %v5725, %v211
        %vm5872 = vcmp.eq.s32.totalorder %v5728, %v210
        %vm5873 = vcmp.eq.s32.totalorder %v5728, %v211
        %vm5874 = vcmp.eq.s32.totalorder %v5731, %v210
        %vm5875 = vcmp.eq.s32.totalorder %v5731, %v211
        %vm5876 = vcmp.eq.s32.totalorder %v5734, %v210
        %vm5877 = vcmp.eq.s32.totalorder %v5734, %v211
        %vm5878 = vcmp.eq.s32.totalorder %v5737, %v210
        %vm5879 = vcmp.eq.s32.totalorder %v5737, %v211
        %vm5880 = vcmp.eq.s32.totalorder %v5740, %v210
        %vm5881 = vcmp.eq.s32.totalorder %v5740, %v211
        %vm5882 = vcmp.eq.s32.totalorder %v5743, %v210
        %vm5883 = vcmp.eq.s32.totalorder %v5743, %v211
        %vm5884 = vcmp.eq.s32.totalorder %v5746, %v210
        %vm5885 = vcmp.eq.s32.totalorder %v5746, %v211
        %vm5886 = vcmp.eq.s32.totalorder %v5749, %v210
        %vm5887 = vcmp.eq.s32.totalorder %v5749, %v211
        %vm5888 = vcmp.eq.s32.totalorder %v5752, %v210
        %vm5889 = vcmp.eq.s32.totalorder %v5752, %v211
        %vm5890 = vcmp.eq.s32.totalorder %v5755, %v210
        %vm5891 = vcmp.eq.s32.totalorder %v5755, %v211
        %vm5892 = vcmp.eq.s32.totalorder %v5758, %v210
        %vm5893 = vcmp.eq.s32.totalorder %v5758, %v211
        %vm5894 = vcmp.eq.s32.totalorder %v5761, %v210
        %vm5895 = vcmp.eq.s32.totalorder %v5761, %v211
        %vm5896 = vcmp.eq.s32.totalorder %v5764, %v210
        %vm5897 = vcmp.eq.s32.totalorder %v5764, %v211
        %vm5898 = vcmp.eq.s32.totalorder %v5767, %v210
        %vm5899 = vcmp.eq.s32.totalorder %v5767, %v211
        %vm5900 = vcmp.eq.s32.totalorder %v5770, %v210
        %vm5901 = vcmp.eq.s32.totalorder %v5770, %v211
        %vm5902 = vcmp.eq.s32.totalorder %v5773, %v210
        %vm5903 = vcmp.eq.s32.totalorder %v5773, %v211
        %vm5904 = vcmp.eq.s32.totalorder %v5776, %v210
        %vm5905 = vcmp.eq.s32.totalorder %v5776, %v211
        %vm5906 = vcmp.eq.s32.totalorder %v5779, %v210
        %vm5907 = vcmp.eq.s32.totalorder %v5779, %v211
        %v5908 = vsel %vm5780, 1, 0
        %v5909 = vsel %vm5781, 1, 0
        %v5910 = vsel %vm5782, 1, 0
        %v5911 = vsel %vm5783, 1, 0
        %v5912 = vsel %vm5784, 1, 0
        %v5913 = vsel %vm5785, 1, 0
        %v5914 = vsel %vm5786, 1, 0
        %v5915 = vsel %vm5787, 1, 0
        %v5916 = vsel %vm5788, 1, 0
        %v5917 = vsel %vm5789, 1, 0
        %v5918 = vsel %vm5790, 1, 0
        %v5919 = vsel %vm5791, 1, 0
        %v5920 = vsel %vm5792, 1, 0
        %v5921 = vsel %vm5793, 1, 0
        %v5922 = vsel %vm5794, 1, 0
        %v5923 = vsel %vm5795, 1, 0
        %v5924 = vsel %vm5796, 1, 0
        %v5925 = vsel %vm5797, 1, 0
        %v5926 = vsel %vm5798, 1, 0
        %v5927 = vsel %vm5799, 1, 0
        %v5928 = vsel %vm5800, 1, 0
        %v5929 = vsel %vm5801, 1, 0
        %v5930 = vsel %vm5802, 1, 0
        %v5931 = vsel %vm5803, 1, 0
        %v5932 = vsel %vm5804, 1, 0
        %v5933 = vsel %vm5805, 1, 0
        %v5934 = vsel %vm5806, 1, 0
        %v5935 = vsel %vm5807, 1, 0
        %v5936 = vsel %vm5808, 1, 0
        %v5937 = vsel %vm5809, 1, 0
        %v5938 = vsel %vm5810, 1, 0
        %v5939 = vsel %vm5811, 1, 0
        %v5940 = vsel %vm5812, 1, 0
        %v5941 = vsel %vm5813, 1, 0
        %v5942 = vsel %vm5814, 1, 0
        %v5943 = vsel %vm5815, 1, 0
        %v5944 = vsel %vm5816, 1, 0
        %v5945 = vsel %vm5817, 1, 0
        %v5946 = vsel %vm5818, 1, 0
        %v5947 = vsel %vm5819, 1, 0
        %v5948 = vsel %vm5820, 1, 0
        %v5949 = vsel %vm5821, 1, 0
        %v5950 = vsel %vm5822, 1, 0
        %v5951 = vsel %vm5823, 1, 0
        %v5952 = vsel %vm5824, 1, 0
        %v5953 = vsel %vm5825, 1, 0
        %v5954 = vsel %vm5826, 1, 0
        %v5955 = vsel %vm5827, 1, 0
        %v5956 = vsel %vm5828, 1, 0
        %v5957 = vsel %vm5829, 1, 0
        %v5958 = vsel %vm5830, 1, 0
        %v5959 = vsel %vm5831, 1, 0
        %v5960 = vsel %vm5832, 1, 0
        %v5961 = vsel %vm5833, 1, 0
        %v5962 = vsel %vm5834, 1, 0
        %v5963 = vsel %vm5835, 1, 0
        %v5964 = vsel %vm5836, 1, 0
        %v5965 = vsel %vm5837, 1, 0
        %v5966 = vsel %vm5838, 1, 0
        %v5967 = vsel %vm5839, 1, 0
        %v5968 = vsel %vm5840, 1, 0
        %v5969 = vsel %vm5841, 1, 0
        %v5970 = vsel %vm5842, 1, 0
        %v5971 = vsel %vm5843, 1, 0
        %v5972 = vsel %vm5844, 1, 0
        %v5973 = vsel %vm5845, 1, 0
        %v5974 = vsel %vm5846, 1, 0
        %v5975 = vsel %vm5847, 1, 0
        %v5976 = vsel %vm5848, 1, 0
        %v5977 = vsel %vm5849, 1, 0
        %v5978 = vsel %vm5850, 1, 0
        %v5979 = vsel %vm5851, 1, 0
        %v5980 = vsel %vm5852, 1, 0
        %v5981 = vsel %vm5853, 1, 0
        %v5982 = vsel %vm5854, 1, 0
        %v5983 = vsel %vm5855, 1, 0
        %v5984 = vsel %vm5856, 1, 0
        %v5985 = vsel %vm5857, 1, 0
        %v5986 = vsel %vm5858, 1, 0
        %v5987 = vsel %vm5859, 1, 0
        %v5988 = vsel %vm5860, 1, 0
        %v5989 = vsel %vm5861, 1, 0
        %v5990 = vsel %vm5862, 1, 0
        %v5991 = vsel %vm5863, 1, 0
        %v5992 = vsel %vm5864, 1, 0
        %v5993 = vsel %vm5865, 1, 0
        %v5994 = vsel %vm5866, 1, 0
        %v5995 = vsel %vm5867, 1, 0
        %v5996 = vsel %vm5868, 1, 0
        %v5997 = vsel %vm5869, 1, 0
        %v5998 = vsel %vm5870, 1, 0
        %v5999 = vsel %vm5871, 1, 0
        %v6000 = vsel %vm5872, 1, 0
        %v6001 = vsel %vm5873, 1, 0
        %v6002 = vsel %vm5874, 1, 0
        %v6003 = vsel %vm5875, 1, 0
        %v6004 = vsel %vm5876, 1, 0
        %v6005 = vsel %vm5877, 1, 0
        %v6006 = vsel %vm5878, 1, 0
        %v6007 = vsel %vm5879, 1, 0
        %v6008 = vsel %vm5880, 1, 0
        %v6009 = vsel %vm5881, 1, 0
        %v6010 = vsel %vm5882, 1, 0
        %v6011 = vsel %vm5883, 1, 0
        %v6012 = vsel %vm5884, 1, 0
        %v6013 = vsel %vm5885, 1, 0
        %v6014 = vsel %vm5886, 1, 0
        %v6015 = vsel %vm5887, 1, 0
        %v6016 = vsel %vm5888, 1, 0
        %v6017 = vsel %vm5889, 1, 0
        %v6018 = vsel %vm5890, 1, 0
        %v6019 = vsel %vm5891, 1, 0
        %v6020 = vsel %vm5892, 1, 0
        %v6021 = vsel %vm5893, 1, 0
        %v6022 = vsel %vm5894, 1, 0
        %v6023 = vsel %vm5895, 1, 0
        %v6024 = vsel %vm5896, 1, 0
        %v6025 = vsel %vm5897, 1, 0
        %v6026 = vsel %vm5898, 1, 0
        %v6027 = vsel %vm5899, 1, 0
        %v6028 = vsel %vm5900, 1, 0
        %v6029 = vsel %vm5901, 1, 0
        %v6030 = vsel %vm5902, 1, 0
        %v6031 = vsel %vm5903, 1, 0
        %v6032 = vsel %vm5904, 1, 0
        %v6033 = vsel %vm5905, 1, 0
        %v6034 = vsel %vm5906, 1, 0
        %v6035 = vsel %vm5907, 1, 0
        %v6036 = vcvt.s32.f32 %v5908
        %v6037 = vcvt.s32.f32 %v5909
        %v6038 = vcvt.s32.f32 %v5910
        %v6039 = vcvt.s32.f32 %v5911
        %v6040 = vcvt.s32.f32 %v5912
        %v6041 = vcvt.s32.f32 %v5913
        %v6042 = vcvt.s32.f32 %v5914
        %v6043 = vcvt.s32.f32 %v5915
        %v6044 = vcvt.s32.f32 %v5916
        %v6045 = vcvt.s32.f32 %v5917
        %v6046 = vcvt.s32.f32 %v5918
        %v6047 = vcvt.s32.f32 %v5919
        %v6048 = vcvt.s32.f32 %v5920
        %v6049 = vcvt.s32.f32 %v5921
        %v6050 = vcvt.s32.f32 %v5922
        %v6051 = vcvt.s32.f32 %v5923
        %v6052 = vcvt.s32.f32 %v5924
        %v6053 = vcvt.s32.f32 %v5925
        %v6054 = vcvt.s32.f32 %v5926
        %v6055 = vcvt.s32.f32 %v5927
        %v6056 = vcvt.s32.f32 %v5928
        %v6057 = vcvt.s32.f32 %v5929
        %v6058 = vcvt.s32.f32 %v5930
        %v6059 = vcvt.s32.f32 %v5931
        %v6060 = vcvt.s32.f32 %v5932
        %v6061 = vcvt.s32.f32 %v5933
        %v6062 = vcvt.s32.f32 %v5934
        %v6063 = vcvt.s32.f32 %v5935
        %v6064 = vcvt.s32.f32 %v5936
        %v6065 = vcvt.s32.f32 %v5937
        %v6066 = vcvt.s32.f32 %v5938
        %v6067 = vcvt.s32.f32 %v5939
        %v6068 = vcvt.s32.f32 %v5940
        %v6069 = vcvt.s32.f32 %v5941
        %v6070 = vcvt.s32.f32 %v5942
        %v6071 = vcvt.s32.f32 %v5943
        %v6072 = vcvt.s32.f32 %v5944
        %v6073 = vcvt.s32.f32 %v5945
        %v6074 = vcvt.s32.f32 %v5946
        %v6075 = vcvt.s32.f32 %v5947
        %v6076 = vcvt.s32.f32 %v5948
        %v6077 = vcvt.s32.f32 %v5949
        %v6078 = vcvt.s32.f32 %v5950
        %v6079 = vcvt.s32.f32 %v5951
        %v6080 = vcvt.s32.f32 %v5952
        %v6081 = vcvt.s32.f32 %v5953
        %v6082 = vcvt.s32.f32 %v5954
        %v6083 = vcvt.s32.f32 %v5955
        %v6084 = vcvt.s32.f32 %v5956
        %v6085 = vcvt.s32.f32 %v5957
        %v6086 = vcvt.s32.f32 %v5958
        %v6087 = vcvt.s32.f32 %v5959
        %v6088 = vcvt.s32.f32 %v5960
        %v6089 = vcvt.s32.f32 %v5961
        %v6090 = vcvt.s32.f32 %v5962
        %v6091 = vcvt.s32.f32 %v5963
        %v6092 = vcvt.s32.f32 %v5964
        %v6093 = vcvt.s32.f32 %v5965
        %v6094 = vcvt.s32.f32 %v5966
        %v6095 = vcvt.s32.f32 %v5967
        %v6096 = vcvt.s32.f32 %v5968
        %v6097 = vcvt.s32.f32 %v5969
        %v6098 = vcvt.s32.f32 %v5970
        %v6099 = vcvt.s32.f32 %v5971
        %v6100 = vcvt.s32.f32 %v5972
        %v6101 = vcvt.s32.f32 %v5973
        %v6102 = vcvt.s32.f32 %v5974
        %v6103 = vcvt.s32.f32 %v5975
        %v6104 = vcvt.s32.f32 %v5976
        %v6105 = vcvt.s32.f32 %v5977
        %v6106 = vcvt.s32.f32 %v5978
        %v6107 = vcvt.s32.f32 %v5979
        %v6108 = vcvt.s32.f32 %v5980
        %v6109 = vcvt.s32.f32 %v5981
        %v6110 = vcvt.s32.f32 %v5982
        %v6111 = vcvt.s32.f32 %v5983
        %v6112 = vcvt.s32.f32 %v5984
        %v6113 = vcvt.s32.f32 %v5985
        %v6114 = vcvt.s32.f32 %v5986
        %v6115 = vcvt.s32.f32 %v5987
        %v6116 = vcvt.s32.f32 %v5988
        %v6117 = vcvt.s32.f32 %v5989
        %v6118 = vcvt.s32.f32 %v5990
        %v6119 = vcvt.s32.f32 %v5991
        %v6120 = vcvt.s32.f32 %v5992
        %v6121 = vcvt.s32.f32 %v5993
        %v6122 = vcvt.s32.f32 %v5994
        %v6123 = vcvt.s32.f32 %v5995
        %v6124 = vcvt.s32.f32 %v5996
        %v6125 = vcvt.s32.f32 %v5997
        %v6126 = vcvt.s32.f32 %v5998
        %v6127 = vcvt.s32.f32 %v5999
        %v6128 = vcvt.s32.f32 %v6000
        %v6129 = vcvt.s32.f32 %v6001
        %v6130 = vcvt.s32.f32 %v6002
        %v6131 = vcvt.s32.f32 %v6003
        %v6132 = vcvt.s32.f32 %v6004
        %v6133 = vcvt.s32.f32 %v6005
        %v6134 = vcvt.s32.f32 %v6006
        %v6135 = vcvt.s32.f32 %v6007
        %v6136 = vcvt.s32.f32 %v6008
        %v6137 = vcvt.s32.f32 %v6009
        %v6138 = vcvt.s32.f32 %v6010
        %v6139 = vcvt.s32.f32 %v6011
        %v6140 = vcvt.s32.f32 %v6012
        %v6141 = vcvt.s32.f32 %v6013
        %v6142 = vcvt.s32.f32 %v6014
        %v6143 = vcvt.s32.f32 %v6015
        %v6144 = vcvt.s32.f32 %v6016
        %v6145 = vcvt.s32.f32 %v6017
        %v6146 = vcvt.s32.f32 %v6018
        %v6147 = vcvt.s32.f32 %v6019
        %v6148 = vcvt.s32.f32 %v6020
        %v6149 = vcvt.s32.f32 %v6021
        %v6150 = vcvt.s32.f32 %v6022
        %v6151 = vcvt.s32.f32 %v6023
        %v6152 = vcvt.s32.f32 %v6024
        %v6153 = vcvt.s32.f32 %v6025
        %v6154 = vcvt.s32.f32 %v6026
        %v6155 = vcvt.s32.f32 %v6027
        %v6156 = vcvt.s32.f32 %v6028
        %v6157 = vcvt.s32.f32 %v6029
        %v6158 = vcvt.s32.f32 %v6030
        %v6159 = vcvt.s32.f32 %v6031
        %v6160 = vcvt.s32.f32 %v6032
        %v6161 = vcvt.s32.f32 %v6033
        %v6162 = vcvt.s32.f32 %v6034
        %v6163 = vcvt.s32.f32 %v6035
        %v6164 = vadd.f32 %v5396, %v6036
        %v6165 = vadd.f32 %v5397, %v6037
        %v6166 = vadd.f32 %v5398, %v6038
        %v6167 = vadd.f32 %v5399, %v6039
        %v6168 = vadd.f32 %v5400, %v6040
        %v6169 = vadd.f32 %v5401, %v6041
        %v6170 = vadd.f32 %v5402, %v6042
        %v6171 = vadd.f32 %v5403, %v6043
        %v6172 = vadd.f32 %v5404, %v6044
        %v6173 = vadd.f32 %v5405, %v6045
        %v6174 = vadd.f32 %v5406, %v6046
        %v6175 = vadd.f32 %v5407, %v6047
        %v6176 = vadd.f32 %v5408, %v6048
        %v6177 = vadd.f32 %v5409, %v6049
        %v6178 = vadd.f32 %v5410, %v6050
        %v6179 = vadd.f32 %v5411, %v6051
        %v6180 = vadd.f32 %v5412, %v6052
        %v6181 = vadd.f32 %v5413, %v6053
        %v6182 = vadd.f32 %v5414, %v6054
        %v6183 = vadd.f32 %v5415, %v6055
        %v6184 = vadd.f32 %v5416, %v6056
        %v6185 = vadd.f32 %v5417, %v6057
        %v6186 = vadd.f32 %v5418, %v6058
        %v6187 = vadd.f32 %v5419, %v6059
        %v6188 = vadd.f32 %v5420, %v6060
        %v6189 = vadd.f32 %v5421, %v6061
        %v6190 = vadd.f32 %v5422, %v6062
        %v6191 = vadd.f32 %v5423, %v6063
        %v6192 = vadd.f32 %v5424, %v6064
        %v6193 = vadd.f32 %v5425, %v6065
        %v6194 = vadd.f32 %v5426, %v6066
        %v6195 = vadd.f32 %v5427, %v6067
        %v6196 = vadd.f32 %v5428, %v6068
        %v6197 = vadd.f32 %v5429, %v6069
        %v6198 = vadd.f32 %v5430, %v6070
        %v6199 = vadd.f32 %v5431, %v6071
        %v6200 = vadd.f32 %v5432, %v6072
        %v6201 = vadd.f32 %v5433, %v6073
        %v6202 = vadd.f32 %v5434, %v6074
        %v6203 = vadd.f32 %v5435, %v6075
        %v6204 = vadd.f32 %v5436, %v6076
        %v6205 = vadd.f32 %v5437, %v6077
        %v6206 = vadd.f32 %v5438, %v6078
        %v6207 = vadd.f32 %v5439, %v6079
        %v6208 = vadd.f32 %v5440, %v6080
        %v6209 = vadd.f32 %v5441, %v6081
        %v6210 = vadd.f32 %v5442, %v6082
        %v6211 = vadd.f32 %v5443, %v6083
        %v6212 = vadd.f32 %v5444, %v6084
        %v6213 = vadd.f32 %v5445, %v6085
        %v6214 = vadd.f32 %v5446, %v6086
        %v6215 = vadd.f32 %v5447, %v6087
        %v6216 = vadd.f32 %v5448, %v6088
        %v6217 = vadd.f32 %v5449, %v6089
        %v6218 = vadd.f32 %v5450, %v6090
        %v6219 = vadd.f32 %v5451, %v6091
        %v6220 = vadd.f32 %v5452, %v6092
        %v6221 = vadd.f32 %v5453, %v6093
        %v6222 = vadd.f32 %v5454, %v6094
        %v6223 = vadd.f32 %v5455, %v6095
        %v6224 = vadd.f32 %v5456, %v6096
        %v6225 = vadd.f32 %v5457, %v6097
        %v6226 = vadd.f32 %v5458, %v6098
        %v6227 = vadd.f32 %v5459, %v6099
        %v6228 = vadd.f32 %v5460, %v6100
        %v6229 = vadd.f32 %v5461, %v6101
        %v6230 = vadd.f32 %v5462, %v6102
        %v6231 = vadd.f32 %v5463, %v6103
        %v6232 = vadd.f32 %v5464, %v6104
        %v6233 = vadd.f32 %v5465, %v6105
        %v6234 = vadd.f32 %v5466, %v6106
        %v6235 = vadd.f32 %v5467, %v6107
        %v6236 = vadd.f32 %v5468, %v6108
        %v6237 = vadd.f32 %v5469, %v6109
        %v6238 = vadd.f32 %v5470, %v6110
        %v6239 = vadd.f32 %v5471, %v6111
        %v6240 = vadd.f32 %v5472, %v6112
        %v6241 = vadd.f32 %v5473, %v6113
        %v6242 = vadd.f32 %v5474, %v6114
        %v6243 = vadd.f32 %v5475, %v6115
        %v6244 = vadd.f32 %v5476, %v6116
        %v6245 = vadd.f32 %v5477, %v6117
        %v6246 = vadd.f32 %v5478, %v6118
        %v6247 = vadd.f32 %v5479, %v6119
        %v6248 = vadd.f32 %v5480, %v6120
        %v6249 = vadd.f32 %v5481, %v6121
        %v6250 = vadd.f32 %v5482, %v6122
        %v6251 = vadd.f32 %v5483, %v6123
        %v6252 = vadd.f32 %v5484, %v6124
        %v6253 = vadd.f32 %v5485, %v6125
        %v6254 = vadd.f32 %v5486, %v6126
        %v6255 = vadd.f32 %v5487, %v6127
        %v6256 = vadd.f32 %v5488, %v6128
        %v6257 = vadd.f32 %v5489, %v6129
        %v6258 = vadd.f32 %v5490, %v6130
        %v6259 = vadd.f32 %v5491, %v6131
        %v6260 = vadd.f32 %v5492, %v6132
        %v6261 = vadd.f32 %v5493, %v6133
        %v6262 = vadd.f32 %v5494, %v6134
        %v6263 = vadd.f32 %v5495, %v6135
        %v6264 = vadd.f32 %v5496, %v6136
        %v6265 = vadd.f32 %v5497, %v6137
        %v6266 = vadd.f32 %v5498, %v6138
        %v6267 = vadd.f32 %v5499, %v6139
        %v6268 = vadd.f32 %v5500, %v6140
        %v6269 = vadd.f32 %v5501, %v6141
        %v6270 = vadd.f32 %v5502, %v6142
        %v6271 = vadd.f32 %v5503, %v6143
        %v6272 = vadd.f32 %v5504, %v6144
        %v6273 = vadd.f32 %v5505, %v6145
        %v6274 = vadd.f32 %v5506, %v6146
        %v6275 = vadd.f32 %v5507, %v6147
        %v6276 = vadd.f32 %v5508, %v6148
        %v6277 = vadd.f32 %v5509, %v6149
        %v6278 = vadd.f32 %v5510, %v6150
        %v6279 = vadd.f32 %v5511, %v6151
        %v6280 = vadd.f32 %v5512, %v6152
        %v6281 = vadd.f32 %v5513, %v6153
        %v6282 = vadd.f32 %v5514, %v6154
        %v6283 = vadd.f32 %v5515, %v6155
        %v6284 = vadd.f32 %v5516, %v6156
        %v6285 = vadd.f32 %v5517, %v6157
        %v6286 = vadd.f32 %v5518, %v6158
        %v6287 = vadd.f32 %v5519, %v6159
        %v6288 = vadd.f32 %v5520, %v6160
        %v6289 = vadd.f32 %v5521, %v6161
        %v6290 = vadd.f32 %v5522, %v6162
        %v6291 = vadd.f32 %v5523, %v6163
        %v6292 = vadd.s32 %v145, 171
        %v6293 = vadd.s32 %v146, 171
        %v6294 = vadd.s32 %v147, 171
        %v6295 = vadd.s32 %v148, 171
        %v6296 = vadd.s32 %v149, 171
        %v6297 = vadd.s32 %v150, 171
        %v6298 = vadd.s32 %v151, 171
        %v6299 = vadd.s32 %v152, 171
        %v6300 = vadd.s32 %v153, 171
        %v6301 = vadd.s32 %v154, 171
        %v6302 = vadd.s32 %v155, 171
        %v6303 = vadd.s32 %v156, 171
        %v6304 = vadd.s32 %v157, 171
        %v6305 = vadd.s32 %v158, 171
        %v6306 = vadd.s32 %v159, 171
        %v6307 = vadd.s32 %v160, 171
        %v6308 = vadd.s32 %v161, 171
        %v6309 = vadd.s32 %v162, 171
        %v6310 = vadd.s32 %v163, 171
        %v6311 = vadd.s32 %v164, 171
        %v6312 = vadd.s32 %v165, 171
        %v6313 = vadd.s32 %v166, 171
        %v6314 = vadd.s32 %v167, 171
        %v6315 = vadd.s32 %v168, 171
        %v6316 = vadd.s32 %v169, 171
        %v6317 = vadd.s32 %v170, 171
        %v6318 = vadd.s32 %v171, 171
        %v6319 = vadd.s32 %v172, 171
        %v6320 = vadd.s32 %v173, 171
        %v6321 = vadd.s32 %v174, 171
        %v6322 = vadd.s32 %v175, 171
        %v6323 = vadd.s32 %v176, 171
        %v6324 = vadd.s32 %v177, 171
        %v6325 = vadd.s32 %v178, 171
        %v6326 = vadd.s32 %v179, 171
        %v6327 = vadd.s32 %v180, 171
        %v6328 = vadd.s32 %v181, 171
        %v6329 = vadd.s32 %v182, 171
        %v6330 = vadd.s32 %v183, 171
        %v6331 = vadd.s32 %v184, 171
        %v6332 = vadd.s32 %v185, 171
        %v6333 = vadd.s32 %v186, 171
        %v6334 = vadd.s32 %v187, 171
        %v6335 = vadd.s32 %v188, 171
        %v6336 = vadd.s32 %v189, 171
        %v6337 = vadd.s32 %v190, 171
        %v6338 = vadd.s32 %v191, 171
        %v6339 = vadd.s32 %v192, 171
        %v6340 = vadd.s32 %v193, 171
        %v6341 = vadd.s32 %v194, 171
        %v6342 = vadd.s32 %v195, 171
        %v6343 = vadd.s32 %v196, 171
        %v6344 = vadd.s32 %v197, 171
        %v6345 = vadd.s32 %v198, 171
        %v6346 = vadd.s32 %v199, 171
        %v6347 = vadd.s32 %v200, 171
        %v6348 = vadd.s32 %v201, 171
        %v6349 = vadd.s32 %v202, 171
        %v6350 = vadd.s32 %v203, 171
        %v6351 = vadd.s32 %v204, 171
        %v6352 = vadd.s32 %v205, 171
        %v6353 = vadd.s32 %v206, 171
        %v6354 = vadd.s32 %v207, 171
        %v6355 = vadd.s32 %v208, 171
        %6356 = vset.pattern.permute.xlu0 8
        %6357 = vperm.xlu0 %6356, %v6292
        %v6358 = vpop.permute.xlu0 %6357
        %6359 = vset.pattern.permute.xlu0 8
        %6360 = vperm.xlu0 %6359, %v6293
        %v6361 = vpop.permute.xlu0 %6360
        %6362 = vset.pattern.permute.xlu0 8
        %6363 = vperm.xlu0 %6362, %v6294
        %v6364 = vpop.permute.xlu0 %6363
        %6365 = vset.pattern.permute.xlu0 8
        %6366 = vperm.xlu0 %6365, %v6295
        %v6367 = vpop.permute.xlu0 %6366
        %6368 = vset.pattern.permute.xlu0 8
        %6369 = vperm.xlu0 %6368, %v6296
        %v6370 = vpop.permute.xlu0 %6369
        %6371 = vset.pattern.permute.xlu0 8
        %6372 = vperm.xlu0 %6371, %v6297
        %v6373 = vpop.permute.xlu0 %6372
        %6374 = vset.pattern.permute.xlu0 8
        %6375 = vperm.xlu0 %6374, %v6298
        %v6376 = vpop.permute.xlu0 %6375
        %6377 = vset.pattern.permute.xlu0 8
        %6378 = vperm.xlu0 %6377, %v6299
        %v6379 = vpop.permute.xlu0 %6378
        %6380 = vset.pattern.permute.xlu0 8
        %6381 = vperm.xlu0 %6380, %v6300
        %v6382 = vpop.permute.xlu0 %6381
        %6383 = vset.pattern.permute.xlu0 8
        %6384 = vperm.xlu0 %6383, %v6301
        %v6385 = vpop.permute.xlu0 %6384
        %6386 = vset.pattern.permute.xlu0 8
        %6387 = vperm.xlu0 %6386, %v6302
        %v6388 = vpop.permute.xlu0 %6387
        %6389 = vset.pattern.permute.xlu0 8
        %6390 = vperm.xlu0 %6389, %v6303
        %v6391 = vpop.permute.xlu0 %6390
        %6392 = vset.pattern.permute.xlu0 8
        %6393 = vperm.xlu0 %6392, %v6304
        %v6394 = vpop.permute.xlu0 %6393
        %6395 = vset.pattern.permute.xlu0 8
        %6396 = vperm.xlu0 %6395, %v6305
        %v6397 = vpop.permute.xlu0 %6396
        %6398 = vset.pattern.permute.xlu0 8
        %6399 = vperm.xlu0 %6398, %v6306
        %v6400 = vpop.permute.xlu0 %6399
        %6401 = vset.pattern.permute.xlu0 8
        %6402 = vperm.xlu0 %6401, %v6307
        %v6403 = vpop.permute.xlu0 %6402
        %6404 = vset.pattern.permute.xlu0 8
        %6405 = vperm.xlu0 %6404, %v6308
        %v6406 = vpop.permute.xlu0 %6405
        %6407 = vset.pattern.permute.xlu0 8
        %6408 = vperm.xlu0 %6407, %v6309
        %v6409 = vpop.permute.xlu0 %6408
        %6410 = vset.pattern.permute.xlu0 8
        %6411 = vperm.xlu0 %6410, %v6310
        %v6412 = vpop.permute.xlu0 %6411
        %6413 = vset.pattern.permute.xlu0 8
        %6414 = vperm.xlu0 %6413, %v6311
        %v6415 = vpop.permute.xlu0 %6414
        %6416 = vset.pattern.permute.xlu0 8
        %6417 = vperm.xlu0 %6416, %v6312
        %v6418 = vpop.permute.xlu0 %6417
        %6419 = vset.pattern.permute.xlu0 8
        %6420 = vperm.xlu0 %6419, %v6313
        %v6421 = vpop.permute.xlu0 %6420
        %6422 = vset.pattern.permute.xlu0 8
        %6423 = vperm.xlu0 %6422, %v6314
        %v6424 = vpop.permute.xlu0 %6423
        %6425 = vset.pattern.permute.xlu0 8
        %6426 = vperm.xlu0 %6425, %v6315
        %v6427 = vpop.permute.xlu0 %6426
        %6428 = vset.pattern.permute.xlu0 8
        %6429 = vperm.xlu0 %6428, %v6316
        %v6430 = vpop.permute.xlu0 %6429
        %6431 = vset.pattern.permute.xlu0 8
        %6432 = vperm.xlu0 %6431, %v6317
        %v6433 = vpop.permute.xlu0 %6432
        %6434 = vset.pattern.permute.xlu0 8
        %6435 = vperm.xlu0 %6434, %v6318
        %v6436 = vpop.permute.xlu0 %6435
        %6437 = vset.pattern.permute.xlu0 8
        %6438 = vperm.xlu0 %6437, %v6319
        %v6439 = vpop.permute.xlu0 %6438
        %6440 = vset.pattern.permute.xlu0 8
        %6441 = vperm.xlu0 %6440, %v6320
        %v6442 = vpop.permute.xlu0 %6441
        %6443 = vset.pattern.permute.xlu0 8
        %6444 = vperm.xlu0 %6443, %v6321
        %v6445 = vpop.permute.xlu0 %6444
        %6446 = vset.pattern.permute.xlu0 8
        %6447 = vperm.xlu0 %6446, %v6322
        %v6448 = vpop.permute.xlu0 %6447
        %6449 = vset.pattern.permute.xlu0 8
        %6450 = vperm.xlu0 %6449, %v6323
        %v6451 = vpop.permute.xlu0 %6450
        %6452 = vset.pattern.permute.xlu0 8
        %6453 = vperm.xlu0 %6452, %v6324
        %v6454 = vpop.permute.xlu0 %6453
        %6455 = vset.pattern.permute.xlu0 8
        %6456 = vperm.xlu0 %6455, %v6325
        %v6457 = vpop.permute.xlu0 %6456
        %6458 = vset.pattern.permute.xlu0 8
        %6459 = vperm.xlu0 %6458, %v6326
        %v6460 = vpop.permute.xlu0 %6459
        %6461 = vset.pattern.permute.xlu0 8
        %6462 = vperm.xlu0 %6461, %v6327
        %v6463 = vpop.permute.xlu0 %6462
        %6464 = vset.pattern.permute.xlu0 8
        %6465 = vperm.xlu0 %6464, %v6328
        %v6466 = vpop.permute.xlu0 %6465
        %6467 = vset.pattern.permute.xlu0 8
        %6468 = vperm.xlu0 %6467, %v6329
        %v6469 = vpop.permute.xlu0 %6468
        %6470 = vset.pattern.permute.xlu0 8
        %6471 = vperm.xlu0 %6470, %v6330
        %v6472 = vpop.permute.xlu0 %6471
        %6473 = vset.pattern.permute.xlu0 8
        %6474 = vperm.xlu0 %6473, %v6331
        %v6475 = vpop.permute.xlu0 %6474
        %6476 = vset.pattern.permute.xlu0 8
        %6477 = vperm.xlu0 %6476, %v6332
        %v6478 = vpop.permute.xlu0 %6477
        %6479 = vset.pattern.permute.xlu0 8
        %6480 = vperm.xlu0 %6479, %v6333
        %v6481 = vpop.permute.xlu0 %6480
        %6482 = vset.pattern.permute.xlu0 8
        %6483 = vperm.xlu0 %6482, %v6334
        %v6484 = vpop.permute.xlu0 %6483
        %6485 = vset.pattern.permute.xlu0 8
        %6486 = vperm.xlu0 %6485, %v6335
        %v6487 = vpop.permute.xlu0 %6486
        %6488 = vset.pattern.permute.xlu0 8
        %6489 = vperm.xlu0 %6488, %v6336
        %v6490 = vpop.permute.xlu0 %6489
        %6491 = vset.pattern.permute.xlu0 8
        %6492 = vperm.xlu0 %6491, %v6337
        %v6493 = vpop.permute.xlu0 %6492
        %6494 = vset.pattern.permute.xlu0 8
        %6495 = vperm.xlu0 %6494, %v6338
        %v6496 = vpop.permute.xlu0 %6495
        %6497 = vset.pattern.permute.xlu0 8
        %6498 = vperm.xlu0 %6497, %v6339
        %v6499 = vpop.permute.xlu0 %6498
        %6500 = vset.pattern.permute.xlu0 8
        %6501 = vperm.xlu0 %6500, %v6340
        %v6502 = vpop.permute.xlu0 %6501
        %6503 = vset.pattern.permute.xlu0 8
        %6504 = vperm.xlu0 %6503, %v6341
        %v6505 = vpop.permute.xlu0 %6504
        %6506 = vset.pattern.permute.xlu0 8
        %6507 = vperm.xlu0 %6506, %v6342
        %v6508 = vpop.permute.xlu0 %6507
        %6509 = vset.pattern.permute.xlu0 8
        %6510 = vperm.xlu0 %6509, %v6343
        %v6511 = vpop.permute.xlu0 %6510
        %6512 = vset.pattern.permute.xlu0 8
        %6513 = vperm.xlu0 %6512, %v6344
        %v6514 = vpop.permute.xlu0 %6513
        %6515 = vset.pattern.permute.xlu0 8
        %6516 = vperm.xlu0 %6515, %v6345
        %v6517 = vpop.permute.xlu0 %6516
        %6518 = vset.pattern.permute.xlu0 8
        %6519 = vperm.xlu0 %6518, %v6346
        %v6520 = vpop.permute.xlu0 %6519
        %6521 = vset.pattern.permute.xlu0 8
        %6522 = vperm.xlu0 %6521, %v6347
        %v6523 = vpop.permute.xlu0 %6522
        %6524 = vset.pattern.permute.xlu0 8
        %6525 = vperm.xlu0 %6524, %v6348
        %v6526 = vpop.permute.xlu0 %6525
        %6527 = vset.pattern.permute.xlu0 8
        %6528 = vperm.xlu0 %6527, %v6349
        %v6529 = vpop.permute.xlu0 %6528
        %6530 = vset.pattern.permute.xlu0 8
        %6531 = vperm.xlu0 %6530, %v6350
        %v6532 = vpop.permute.xlu0 %6531
        %6533 = vset.pattern.permute.xlu0 8
        %6534 = vperm.xlu0 %6533, %v6351
        %v6535 = vpop.permute.xlu0 %6534
        %6536 = vset.pattern.permute.xlu0 8
        %6537 = vperm.xlu0 %6536, %v6352
        %v6538 = vpop.permute.xlu0 %6537
        %6539 = vset.pattern.permute.xlu0 8
        %6540 = vperm.xlu0 %6539, %v6353
        %v6541 = vpop.permute.xlu0 %6540
        %6542 = vset.pattern.permute.xlu0 8
        %6543 = vperm.xlu0 %6542, %v6354
        %v6544 = vpop.permute.xlu0 %6543
        %6545 = vset.pattern.permute.xlu0 8
        %6546 = vperm.xlu0 %6545, %v6355
        %v6547 = vpop.permute.xlu0 %6546
        %vm6548 = vcmp.eq.s32.totalorder %v6358, %v210
        %vm6549 = vcmp.eq.s32.totalorder %v6358, %v211
        %vm6550 = vcmp.eq.s32.totalorder %v6361, %v210
        %vm6551 = vcmp.eq.s32.totalorder %v6361, %v211
        %vm6552 = vcmp.eq.s32.totalorder %v6364, %v210
        %vm6553 = vcmp.eq.s32.totalorder %v6364, %v211
        %vm6554 = vcmp.eq.s32.totalorder %v6367, %v210
        %vm6555 = vcmp.eq.s32.totalorder %v6367, %v211
        %vm6556 = vcmp.eq.s32.totalorder %v6370, %v210
        %vm6557 = vcmp.eq.s32.totalorder %v6370, %v211
        %vm6558 = vcmp.eq.s32.totalorder %v6373, %v210
        %vm6559 = vcmp.eq.s32.totalorder %v6373, %v211
        %vm6560 = vcmp.eq.s32.totalorder %v6376, %v210
        %vm6561 = vcmp.eq.s32.totalorder %v6376, %v211
        %vm6562 = vcmp.eq.s32.totalorder %v6379, %v210
        %vm6563 = vcmp.eq.s32.totalorder %v6379, %v211
        %vm6564 = vcmp.eq.s32.totalorder %v6382, %v210
        %vm6565 = vcmp.eq.s32.totalorder %v6382, %v211
        %vm6566 = vcmp.eq.s32.totalorder %v6385, %v210
        %vm6567 = vcmp.eq.s32.totalorder %v6385, %v211
        %vm6568 = vcmp.eq.s32.totalorder %v6388, %v210
        %vm6569 = vcmp.eq.s32.totalorder %v6388, %v211
        %vm6570 = vcmp.eq.s32.totalorder %v6391, %v210
        %vm6571 = vcmp.eq.s32.totalorder %v6391, %v211
        %vm6572 = vcmp.eq.s32.totalorder %v6394, %v210
        %vm6573 = vcmp.eq.s32.totalorder %v6394, %v211
        %vm6574 = vcmp.eq.s32.totalorder %v6397, %v210
        %vm6575 = vcmp.eq.s32.totalorder %v6397, %v211
        %vm6576 = vcmp.eq.s32.totalorder %v6400, %v210
        %vm6577 = vcmp.eq.s32.totalorder %v6400, %v211
        %vm6578 = vcmp.eq.s32.totalorder %v6403, %v210
        %vm6579 = vcmp.eq.s32.totalorder %v6403, %v211
        %vm6580 = vcmp.eq.s32.totalorder %v6406, %v210
        %vm6581 = vcmp.eq.s32.totalorder %v6406, %v211
        %vm6582 = vcmp.eq.s32.totalorder %v6409, %v210
        %vm6583 = vcmp.eq.s32.totalorder %v6409, %v211
        %vm6584 = vcmp.eq.s32.totalorder %v6412, %v210
        %vm6585 = vcmp.eq.s32.totalorder %v6412, %v211
        %vm6586 = vcmp.eq.s32.totalorder %v6415, %v210
        %vm6587 = vcmp.eq.s32.totalorder %v6415, %v211
        %vm6588 = vcmp.eq.s32.totalorder %v6418, %v210
        %vm6589 = vcmp.eq.s32.totalorder %v6418, %v211
        %vm6590 = vcmp.eq.s32.totalorder %v6421, %v210
        %vm6591 = vcmp.eq.s32.totalorder %v6421, %v211
        %vm6592 = vcmp.eq.s32.totalorder %v6424, %v210
        %vm6593 = vcmp.eq.s32.totalorder %v6424, %v211
        %vm6594 = vcmp.eq.s32.totalorder %v6427, %v210
        %vm6595 = vcmp.eq.s32.totalorder %v6427, %v211
        %vm6596 = vcmp.eq.s32.totalorder %v6430, %v210
        %vm6597 = vcmp.eq.s32.totalorder %v6430, %v211
        %vm6598 = vcmp.eq.s32.totalorder %v6433, %v210
        %vm6599 = vcmp.eq.s32.totalorder %v6433, %v211
        %vm6600 = vcmp.eq.s32.totalorder %v6436, %v210
        %vm6601 = vcmp.eq.s32.totalorder %v6436, %v211
        %vm6602 = vcmp.eq.s32.totalorder %v6439, %v210
        %vm6603 = vcmp.eq.s32.totalorder %v6439, %v211
        %vm6604 = vcmp.eq.s32.totalorder %v6442, %v210
        %vm6605 = vcmp.eq.s32.totalorder %v6442, %v211
        %vm6606 = vcmp.eq.s32.totalorder %v6445, %v210
        %vm6607 = vcmp.eq.s32.totalorder %v6445, %v211
        %vm6608 = vcmp.eq.s32.totalorder %v6448, %v210
        %vm6609 = vcmp.eq.s32.totalorder %v6448, %v211
        %vm6610 = vcmp.eq.s32.totalorder %v6451, %v210
        %vm6611 = vcmp.eq.s32.totalorder %v6451, %v211
        %vm6612 = vcmp.eq.s32.totalorder %v6454, %v210
        %vm6613 = vcmp.eq.s32.totalorder %v6454, %v211
        %vm6614 = vcmp.eq.s32.totalorder %v6457, %v210
        %vm6615 = vcmp.eq.s32.totalorder %v6457, %v211
        %vm6616 = vcmp.eq.s32.totalorder %v6460, %v210
        %vm6617 = vcmp.eq.s32.totalorder %v6460, %v211
        %vm6618 = vcmp.eq.s32.totalorder %v6463, %v210
        %vm6619 = vcmp.eq.s32.totalorder %v6463, %v211
        %vm6620 = vcmp.eq.s32.totalorder %v6466, %v210
        %vm6621 = vcmp.eq.s32.totalorder %v6466, %v211
        %vm6622 = vcmp.eq.s32.totalorder %v6469, %v210
        %vm6623 = vcmp.eq.s32.totalorder %v6469, %v211
        %vm6624 = vcmp.eq.s32.totalorder %v6472, %v210
        %vm6625 = vcmp.eq.s32.totalorder %v6472, %v211
        %vm6626 = vcmp.eq.s32.totalorder %v6475, %v210
        %vm6627 = vcmp.eq.s32.totalorder %v6475, %v211
        %vm6628 = vcmp.eq.s32.totalorder %v6478, %v210
        %vm6629 = vcmp.eq.s32.totalorder %v6478, %v211
        %vm6630 = vcmp.eq.s32.totalorder %v6481, %v210
        %vm6631 = vcmp.eq.s32.totalorder %v6481, %v211
        %vm6632 = vcmp.eq.s32.totalorder %v6484, %v210
        %vm6633 = vcmp.eq.s32.totalorder %v6484, %v211
        %vm6634 = vcmp.eq.s32.totalorder %v6487, %v210
        %vm6635 = vcmp.eq.s32.totalorder %v6487, %v211
        %vm6636 = vcmp.eq.s32.totalorder %v6490, %v210
        %vm6637 = vcmp.eq.s32.totalorder %v6490, %v211
        %vm6638 = vcmp.eq.s32.totalorder %v6493, %v210
        %vm6639 = vcmp.eq.s32.totalorder %v6493, %v211
        %vm6640 = vcmp.eq.s32.totalorder %v6496, %v210
        %vm6641 = vcmp.eq.s32.totalorder %v6496, %v211
        %vm6642 = vcmp.eq.s32.totalorder %v6499, %v210
        %vm6643 = vcmp.eq.s32.totalorder %v6499, %v211
        %vm6644 = vcmp.eq.s32.totalorder %v6502, %v210
        %vm6645 = vcmp.eq.s32.totalorder %v6502, %v211
        %vm6646 = vcmp.eq.s32.totalorder %v6505, %v210
        %vm6647 = vcmp.eq.s32.totalorder %v6505, %v211
        %vm6648 = vcmp.eq.s32.totalorder %v6508, %v210
        %vm6649 = vcmp.eq.s32.totalorder %v6508, %v211
        %vm6650 = vcmp.eq.s32.totalorder %v6511, %v210
        %vm6651 = vcmp.eq.s32.totalorder %v6511, %v211
        %vm6652 = vcmp.eq.s32.totalorder %v6514, %v210
        %vm6653 = vcmp.eq.s32.totalorder %v6514, %v211
        %vm6654 = vcmp.eq.s32.totalorder %v6517, %v210
        %vm6655 = vcmp.eq.s32.totalorder %v6517, %v211
        %vm6656 = vcmp.eq.s32.totalorder %v6520, %v210
        %vm6657 = vcmp.eq.s32.totalorder %v6520, %v211
        %vm6658 = vcmp.eq.s32.totalorder %v6523, %v210
        %vm6659 = vcmp.eq.s32.totalorder %v6523, %v211
        %vm6660 = vcmp.eq.s32.totalorder %v6526, %v210
        %vm6661 = vcmp.eq.s32.totalorder %v6526, %v211
        %vm6662 = vcmp.eq.s32.totalorder %v6529, %v210
        %vm6663 = vcmp.eq.s32.totalorder %v6529, %v211
        %vm6664 = vcmp.eq.s32.totalorder %v6532, %v210
        %vm6665 = vcmp.eq.s32.totalorder %v6532, %v211
        %vm6666 = vcmp.eq.s32.totalorder %v6535, %v210
        %vm6667 = vcmp.eq.s32.totalorder %v6535, %v211
        %vm6668 = vcmp.eq.s32.totalorder %v6538, %v210
        %vm6669 = vcmp.eq.s32.totalorder %v6538, %v211
        %vm6670 = vcmp.eq.s32.totalorder %v6541, %v210
        %vm6671 = vcmp.eq.s32.totalorder %v6541, %v211
        %vm6672 = vcmp.eq.s32.totalorder %v6544, %v210
        %vm6673 = vcmp.eq.s32.totalorder %v6544, %v211
        %vm6674 = vcmp.eq.s32.totalorder %v6547, %v210
        %vm6675 = vcmp.eq.s32.totalorder %v6547, %v211
        %v6676 = vsel %vm6548, 1, 0
        %v6677 = vsel %vm6549, 1, 0
        %v6678 = vsel %vm6550, 1, 0
        %v6679 = vsel %vm6551, 1, 0
        %v6680 = vsel %vm6552, 1, 0
        %v6681 = vsel %vm6553, 1, 0
        %v6682 = vsel %vm6554, 1, 0
        %v6683 = vsel %vm6555, 1, 0
        %v6684 = vsel %vm6556, 1, 0
        %v6685 = vsel %vm6557, 1, 0
        %v6686 = vsel %vm6558, 1, 0
        %v6687 = vsel %vm6559, 1, 0
        %v6688 = vsel %vm6560, 1, 0
        %v6689 = vsel %vm6561, 1, 0
        %v6690 = vsel %vm6562, 1, 0
        %v6691 = vsel %vm6563, 1, 0
        %v6692 = vsel %vm6564, 1, 0
        %v6693 = vsel %vm6565, 1, 0
        %v6694 = vsel %vm6566, 1, 0
        %v6695 = vsel %vm6567, 1, 0
        %v6696 = vsel %vm6568, 1, 0
        %v6697 = vsel %vm6569, 1, 0
        %v6698 = vsel %vm6570, 1, 0
        %v6699 = vsel %vm6571, 1, 0
        %v6700 = vsel %vm6572, 1, 0
        %v6701 = vsel %vm6573, 1, 0
        %v6702 = vsel %vm6574, 1, 0
        %v6703 = vsel %vm6575, 1, 0
        %v6704 = vsel %vm6576, 1, 0
        %v6705 = vsel %vm6577, 1, 0
        %v6706 = vsel %vm6578, 1, 0
        %v6707 = vsel %vm6579, 1, 0
        %v6708 = vsel %vm6580, 1, 0
        %v6709 = vsel %vm6581, 1, 0
        %v6710 = vsel %vm6582, 1, 0
        %v6711 = vsel %vm6583, 1, 0
        %v6712 = vsel %vm6584, 1, 0
        %v6713 = vsel %vm6585, 1, 0
        %v6714 = vsel %vm6586, 1, 0
        %v6715 = vsel %vm6587, 1, 0
        %v6716 = vsel %vm6588, 1, 0
        %v6717 = vsel %vm6589, 1, 0
        %v6718 = vsel %vm6590, 1, 0
        %v6719 = vsel %vm6591, 1, 0
        %v6720 = vsel %vm6592, 1, 0
        %v6721 = vsel %vm6593, 1, 0
        %v6722 = vsel %vm6594, 1, 0
        %v6723 = vsel %vm6595, 1, 0
        %v6724 = vsel %vm6596, 1, 0
        %v6725 = vsel %vm6597, 1, 0
        %v6726 = vsel %vm6598, 1, 0
        %v6727 = vsel %vm6599, 1, 0
        %v6728 = vsel %vm6600, 1, 0
        %v6729 = vsel %vm6601, 1, 0
        %v6730 = vsel %vm6602, 1, 0
        %v6731 = vsel %vm6603, 1, 0
        %v6732 = vsel %vm6604, 1, 0
        %v6733 = vsel %vm6605, 1, 0
        %v6734 = vsel %vm6606, 1, 0
        %v6735 = vsel %vm6607, 1, 0
        %v6736 = vsel %vm6608, 1, 0
        %v6737 = vsel %vm6609, 1, 0
        %v6738 = vsel %vm6610, 1, 0
        %v6739 = vsel %vm6611, 1, 0
        %v6740 = vsel %vm6612, 1, 0
        %v6741 = vsel %vm6613, 1, 0
        %v6742 = vsel %vm6614, 1, 0
        %v6743 = vsel %vm6615, 1, 0
        %v6744 = vsel %vm6616, 1, 0
        %v6745 = vsel %vm6617, 1, 0
        %v6746 = vsel %vm6618, 1, 0
        %v6747 = vsel %vm6619, 1, 0
        %v6748 = vsel %vm6620, 1, 0
        %v6749 = vsel %vm6621, 1, 0
        %v6750 = vsel %vm6622, 1, 0
        %v6751 = vsel %vm6623, 1, 0
        %v6752 = vsel %vm6624, 1, 0
        %v6753 = vsel %vm6625, 1, 0
        %v6754 = vsel %vm6626, 1, 0
        %v6755 = vsel %vm6627, 1, 0
        %v6756 = vsel %vm6628, 1, 0
        %v6757 = vsel %vm6629, 1, 0
        %v6758 = vsel %vm6630, 1, 0
        %v6759 = vsel %vm6631, 1, 0
        %v6760 = vsel %vm6632, 1, 0
        %v6761 = vsel %vm6633, 1, 0
        %v6762 = vsel %vm6634, 1, 0
        %v6763 = vsel %vm6635, 1, 0
        %v6764 = vsel %vm6636, 1, 0
        %v6765 = vsel %vm6637, 1, 0
        %v6766 = vsel %vm6638, 1, 0
        %v6767 = vsel %vm6639, 1, 0
        %v6768 = vsel %vm6640, 1, 0
        %v6769 = vsel %vm6641, 1, 0
        %v6770 = vsel %vm6642, 1, 0
        %v6771 = vsel %vm6643, 1, 0
        %v6772 = vsel %vm6644, 1, 0
        %v6773 = vsel %vm6645, 1, 0
        %v6774 = vsel %vm6646, 1, 0
        %v6775 = vsel %vm6647, 1, 0
        %v6776 = vsel %vm6648, 1, 0
        %v6777 = vsel %vm6649, 1, 0
        %v6778 = vsel %vm6650, 1, 0
        %v6779 = vsel %vm6651, 1, 0
        %v6780 = vsel %vm6652, 1, 0
        %v6781 = vsel %vm6653, 1, 0
        %v6782 = vsel %vm6654, 1, 0
        %v6783 = vsel %vm6655, 1, 0
        %v6784 = vsel %vm6656, 1, 0
        %v6785 = vsel %vm6657, 1, 0
        %v6786 = vsel %vm6658, 1, 0
        %v6787 = vsel %vm6659, 1, 0
        %v6788 = vsel %vm6660, 1, 0
        %v6789 = vsel %vm6661, 1, 0
        %v6790 = vsel %vm6662, 1, 0
        %v6791 = vsel %vm6663, 1, 0
        %v6792 = vsel %vm6664, 1, 0
        %v6793 = vsel %vm6665, 1, 0
        %v6794 = vsel %vm6666, 1, 0
        %v6795 = vsel %vm6667, 1, 0
        %v6796 = vsel %vm6668, 1, 0
        %v6797 = vsel %vm6669, 1, 0
        %v6798 = vsel %vm6670, 1, 0
        %v6799 = vsel %vm6671, 1, 0
        %v6800 = vsel %vm6672, 1, 0
        %v6801 = vsel %vm6673, 1, 0
        %v6802 = vsel %vm6674, 1, 0
        %v6803 = vsel %vm6675, 1, 0
        %v6804 = vcvt.s32.f32 %v6676
        %v6805 = vcvt.s32.f32 %v6677
        %v6806 = vcvt.s32.f32 %v6678
        %v6807 = vcvt.s32.f32 %v6679
        %v6808 = vcvt.s32.f32 %v6680
        %v6809 = vcvt.s32.f32 %v6681
        %v6810 = vcvt.s32.f32 %v6682
        %v6811 = vcvt.s32.f32 %v6683
        %v6812 = vcvt.s32.f32 %v6684
        %v6813 = vcvt.s32.f32 %v6685
        %v6814 = vcvt.s32.f32 %v6686
        %v6815 = vcvt.s32.f32 %v6687
        %v6816 = vcvt.s32.f32 %v6688
        %v6817 = vcvt.s32.f32 %v6689
        %v6818 = vcvt.s32.f32 %v6690
        %v6819 = vcvt.s32.f32 %v6691
        %v6820 = vcvt.s32.f32 %v6692
        %v6821 = vcvt.s32.f32 %v6693
        %v6822 = vcvt.s32.f32 %v6694
        %v6823 = vcvt.s32.f32 %v6695
        %v6824 = vcvt.s32.f32 %v6696
        %v6825 = vcvt.s32.f32 %v6697
        %v6826 = vcvt.s32.f32 %v6698
        %v6827 = vcvt.s32.f32 %v6699
        %v6828 = vcvt.s32.f32 %v6700
        %v6829 = vcvt.s32.f32 %v6701
        %v6830 = vcvt.s32.f32 %v6702
        %v6831 = vcvt.s32.f32 %v6703
        %v6832 = vcvt.s32.f32 %v6704
        %v6833 = vcvt.s32.f32 %v6705
        %v6834 = vcvt.s32.f32 %v6706
        %v6835 = vcvt.s32.f32 %v6707
        %v6836 = vcvt.s32.f32 %v6708
        %v6837 = vcvt.s32.f32 %v6709
        %v6838 = vcvt.s32.f32 %v6710
        %v6839 = vcvt.s32.f32 %v6711
        %v6840 = vcvt.s32.f32 %v6712
        %v6841 = vcvt.s32.f32 %v6713
        %v6842 = vcvt.s32.f32 %v6714
        %v6843 = vcvt.s32.f32 %v6715
        %v6844 = vcvt.s32.f32 %v6716
        %v6845 = vcvt.s32.f32 %v6717
        %v6846 = vcvt.s32.f32 %v6718
        %v6847 = vcvt.s32.f32 %v6719
        %v6848 = vcvt.s32.f32 %v6720
        %v6849 = vcvt.s32.f32 %v6721
        %v6850 = vcvt.s32.f32 %v6722
        %v6851 = vcvt.s32.f32 %v6723
        %v6852 = vcvt.s32.f32 %v6724
        %v6853 = vcvt.s32.f32 %v6725
        %v6854 = vcvt.s32.f32 %v6726
        %v6855 = vcvt.s32.f32 %v6727
        %v6856 = vcvt.s32.f32 %v6728
        %v6857 = vcvt.s32.f32 %v6729
        %v6858 = vcvt.s32.f32 %v6730
        %v6859 = vcvt.s32.f32 %v6731
        %v6860 = vcvt.s32.f32 %v6732
        %v6861 = vcvt.s32.f32 %v6733
        %v6862 = vcvt.s32.f32 %v6734
        %v6863 = vcvt.s32.f32 %v6735
        %v6864 = vcvt.s32.f32 %v6736
        %v6865 = vcvt.s32.f32 %v6737
        %v6866 = vcvt.s32.f32 %v6738
        %v6867 = vcvt.s32.f32 %v6739
        %v6868 = vcvt.s32.f32 %v6740
        %v6869 = vcvt.s32.f32 %v6741
        %v6870 = vcvt.s32.f32 %v6742
        %v6871 = vcvt.s32.f32 %v6743
        %v6872 = vcvt.s32.f32 %v6744
        %v6873 = vcvt.s32.f32 %v6745
        %v6874 = vcvt.s32.f32 %v6746
        %v6875 = vcvt.s32.f32 %v6747
        %v6876 = vcvt.s32.f32 %v6748
        %v6877 = vcvt.s32.f32 %v6749
        %v6878 = vcvt.s32.f32 %v6750
        %v6879 = vcvt.s32.f32 %v6751
        %v6880 = vcvt.s32.f32 %v6752
        %v6881 = vcvt.s32.f32 %v6753
        %v6882 = vcvt.s32.f32 %v6754
        %v6883 = vcvt.s32.f32 %v6755
        %v6884 = vcvt.s32.f32 %v6756
        %v6885 = vcvt.s32.f32 %v6757
        %v6886 = vcvt.s32.f32 %v6758
        %v6887 = vcvt.s32.f32 %v6759
        %v6888 = vcvt.s32.f32 %v6760
        %v6889 = vcvt.s32.f32 %v6761
        %v6890 = vcvt.s32.f32 %v6762
        %v6891 = vcvt.s32.f32 %v6763
        %v6892 = vcvt.s32.f32 %v6764
        %v6893 = vcvt.s32.f32 %v6765
        %v6894 = vcvt.s32.f32 %v6766
        %v6895 = vcvt.s32.f32 %v6767
        %v6896 = vcvt.s32.f32 %v6768
        %v6897 = vcvt.s32.f32 %v6769
        %v6898 = vcvt.s32.f32 %v6770
        %v6899 = vcvt.s32.f32 %v6771
        %v6900 = vcvt.s32.f32 %v6772
        %v6901 = vcvt.s32.f32 %v6773
        %v6902 = vcvt.s32.f32 %v6774
        %v6903 = vcvt.s32.f32 %v6775
        %v6904 = vcvt.s32.f32 %v6776
        %v6905 = vcvt.s32.f32 %v6777
        %v6906 = vcvt.s32.f32 %v6778
        %v6907 = vcvt.s32.f32 %v6779
        %v6908 = vcvt.s32.f32 %v6780
        %v6909 = vcvt.s32.f32 %v6781
        %v6910 = vcvt.s32.f32 %v6782
        %v6911 = vcvt.s32.f32 %v6783
        %v6912 = vcvt.s32.f32 %v6784
        %v6913 = vcvt.s32.f32 %v6785
        %v6914 = vcvt.s32.f32 %v6786
        %v6915 = vcvt.s32.f32 %v6787
        %v6916 = vcvt.s32.f32 %v6788
        %v6917 = vcvt.s32.f32 %v6789
        %v6918 = vcvt.s32.f32 %v6790
        %v6919 = vcvt.s32.f32 %v6791
        %v6920 = vcvt.s32.f32 %v6792
        %v6921 = vcvt.s32.f32 %v6793
        %v6922 = vcvt.s32.f32 %v6794
        %v6923 = vcvt.s32.f32 %v6795
        %v6924 = vcvt.s32.f32 %v6796
        %v6925 = vcvt.s32.f32 %v6797
        %v6926 = vcvt.s32.f32 %v6798
        %v6927 = vcvt.s32.f32 %v6799
        %v6928 = vcvt.s32.f32 %v6800
        %v6929 = vcvt.s32.f32 %v6801
        %v6930 = vcvt.s32.f32 %v6802
        %v6931 = vcvt.s32.f32 %v6803
        %v6932 = vadd.f32 %v6164, %v6804
        %v6933 = vadd.f32 %v6165, %v6805
        %v6934 = vadd.f32 %v6166, %v6806
        %v6935 = vadd.f32 %v6167, %v6807
        %v6936 = vadd.f32 %v6168, %v6808
        %v6937 = vadd.f32 %v6169, %v6809
        %v6938 = vadd.f32 %v6170, %v6810
        %v6939 = vadd.f32 %v6171, %v6811
        %v6940 = vadd.f32 %v6172, %v6812
        %v6941 = vadd.f32 %v6173, %v6813
        %v6942 = vadd.f32 %v6174, %v6814
        %v6943 = vadd.f32 %v6175, %v6815
        %v6944 = vadd.f32 %v6176, %v6816
        %v6945 = vadd.f32 %v6177, %v6817
        %v6946 = vadd.f32 %v6178, %v6818
        %v6947 = vadd.f32 %v6179, %v6819
        %v6948 = vadd.f32 %v6180, %v6820
        %v6949 = vadd.f32 %v6181, %v6821
        %v6950 = vadd.f32 %v6182, %v6822
        %v6951 = vadd.f32 %v6183, %v6823
        %v6952 = vadd.f32 %v6184, %v6824
        %v6953 = vadd.f32 %v6185, %v6825
        %v6954 = vadd.f32 %v6186, %v6826
        %v6955 = vadd.f32 %v6187, %v6827
        %v6956 = vadd.f32 %v6188, %v6828
        %v6957 = vadd.f32 %v6189, %v6829
        %v6958 = vadd.f32 %v6190, %v6830
        %v6959 = vadd.f32 %v6191, %v6831
        %v6960 = vadd.f32 %v6192, %v6832
        %v6961 = vadd.f32 %v6193, %v6833
        %v6962 = vadd.f32 %v6194, %v6834
        %v6963 = vadd.f32 %v6195, %v6835
        %v6964 = vadd.f32 %v6196, %v6836
        %v6965 = vadd.f32 %v6197, %v6837
        %v6966 = vadd.f32 %v6198, %v6838
        %v6967 = vadd.f32 %v6199, %v6839
        %v6968 = vadd.f32 %v6200, %v6840
        %v6969 = vadd.f32 %v6201, %v6841
        %v6970 = vadd.f32 %v6202, %v6842
        %v6971 = vadd.f32 %v6203, %v6843
        %v6972 = vadd.f32 %v6204, %v6844
        %v6973 = vadd.f32 %v6205, %v6845
        %v6974 = vadd.f32 %v6206, %v6846
        %v6975 = vadd.f32 %v6207, %v6847
        %v6976 = vadd.f32 %v6208, %v6848
        %v6977 = vadd.f32 %v6209, %v6849
        %v6978 = vadd.f32 %v6210, %v6850
        %v6979 = vadd.f32 %v6211, %v6851
        %v6980 = vadd.f32 %v6212, %v6852
        %v6981 = vadd.f32 %v6213, %v6853
        %v6982 = vadd.f32 %v6214, %v6854
        %v6983 = vadd.f32 %v6215, %v6855
        %v6984 = vadd.f32 %v6216, %v6856
        %v6985 = vadd.f32 %v6217, %v6857
        %v6986 = vadd.f32 %v6218, %v6858
        %v6987 = vadd.f32 %v6219, %v6859
        %v6988 = vadd.f32 %v6220, %v6860
        %v6989 = vadd.f32 %v6221, %v6861
        %v6990 = vadd.f32 %v6222, %v6862
        %v6991 = vadd.f32 %v6223, %v6863
        %v6992 = vadd.f32 %v6224, %v6864
        %v6993 = vadd.f32 %v6225, %v6865
        %v6994 = vadd.f32 %v6226, %v6866
        %v6995 = vadd.f32 %v6227, %v6867
        %v6996 = vadd.f32 %v6228, %v6868
        %v6997 = vadd.f32 %v6229, %v6869
        %v6998 = vadd.f32 %v6230, %v6870
        %v6999 = vadd.f32 %v6231, %v6871
        %v7000 = vadd.f32 %v6232, %v6872
        %v7001 = vadd.f32 %v6233, %v6873
        %v7002 = vadd.f32 %v6234, %v6874
        %v7003 = vadd.f32 %v6235, %v6875
        %v7004 = vadd.f32 %v6236, %v6876
        %v7005 = vadd.f32 %v6237, %v6877
        %v7006 = vadd.f32 %v6238, %v6878
        %v7007 = vadd.f32 %v6239, %v6879
        %v7008 = vadd.f32 %v6240, %v6880
        %v7009 = vadd.f32 %v6241, %v6881
        %v7010 = vadd.f32 %v6242, %v6882
        %v7011 = vadd.f32 %v6243, %v6883
        %v7012 = vadd.f32 %v6244, %v6884
        %v7013 = vadd.f32 %v6245, %v6885
        %v7014 = vadd.f32 %v6246, %v6886
        %v7015 = vadd.f32 %v6247, %v6887
        %v7016 = vadd.f32 %v6248, %v6888
        %v7017 = vadd.f32 %v6249, %v6889
        %v7018 = vadd.f32 %v6250, %v6890
        %v7019 = vadd.f32 %v6251, %v6891
        %v7020 = vadd.f32 %v6252, %v6892
        %v7021 = vadd.f32 %v6253, %v6893
        %v7022 = vadd.f32 %v6254, %v6894
        %v7023 = vadd.f32 %v6255, %v6895
        %v7024 = vadd.f32 %v6256, %v6896
        %v7025 = vadd.f32 %v6257, %v6897
        %v7026 = vadd.f32 %v6258, %v6898
        %v7027 = vadd.f32 %v6259, %v6899
        %v7028 = vadd.f32 %v6260, %v6900
        %v7029 = vadd.f32 %v6261, %v6901
        %v7030 = vadd.f32 %v6262, %v6902
        %v7031 = vadd.f32 %v6263, %v6903
        %v7032 = vadd.f32 %v6264, %v6904
        %v7033 = vadd.f32 %v6265, %v6905
        %v7034 = vadd.f32 %v6266, %v6906
        %v7035 = vadd.f32 %v6267, %v6907
        %v7036 = vadd.f32 %v6268, %v6908
        %v7037 = vadd.f32 %v6269, %v6909
        %v7038 = vadd.f32 %v6270, %v6910
        %v7039 = vadd.f32 %v6271, %v6911
        %v7040 = vadd.f32 %v6272, %v6912
        %v7041 = vadd.f32 %v6273, %v6913
        %v7042 = vadd.f32 %v6274, %v6914
        %v7043 = vadd.f32 %v6275, %v6915
        %v7044 = vadd.f32 %v6276, %v6916
        %v7045 = vadd.f32 %v6277, %v6917
        %v7046 = vadd.f32 %v6278, %v6918
        %v7047 = vadd.f32 %v6279, %v6919
        %v7048 = vadd.f32 %v6280, %v6920
        %v7049 = vadd.f32 %v6281, %v6921
        %v7050 = vadd.f32 %v6282, %v6922
        %v7051 = vadd.f32 %v6283, %v6923
        %v7052 = vadd.f32 %v6284, %v6924
        %v7053 = vadd.f32 %v6285, %v6925
        %v7054 = vadd.f32 %v6286, %v6926
        %v7055 = vadd.f32 %v6287, %v6927
        %v7056 = vadd.f32 %v6288, %v6928
        %v7057 = vadd.f32 %v6289, %v6929
        %v7058 = vadd.f32 %v6290, %v6930
        %v7059 = vadd.f32 %v6291, %v6931
        %v7060 = vld [vmem:[%s1] sm:$0xff]
        %v7061 = vld [vmem:[%s1 + $0x8] sm:$0xff]
        %v7062 = vld [vmem:[%s1 + $0x10] sm:$0xff]
        %v7063 = vld [vmem:[%s1 + $0x18] sm:$0xff]
        %v7064 = vld [vmem:[%s1 + $0x20] sm:$0xff]
        %v7065 = vld [vmem:[%s1 + $0x28] sm:$0xff]
        %v7066 = vld [vmem:[%s1 + $0x30] sm:$0xff]
        %v7067 = vld [vmem:[%s1 + $0x38] sm:$0xff]
        %v7068 = vld [vmem:[%s1 + $0x40] sm:$0xff]
        %v7069 = vld [vmem:[%s1 + $0x48] sm:$0xff]
        %v7070 = vld [vmem:[%s1 + $0x50] sm:$0xff]
        %v7071 = vld [vmem:[%s1 + $0x58] sm:$0xff]
        %v7072 = vld [vmem:[%s1 + $0x60] sm:$0xff]
        %v7073 = vld [vmem:[%s1 + $0x68] sm:$0xff]
        %v7074 = vld [vmem:[%s1 + $0x70] sm:$0xff]
        %v7075 = vld [vmem:[%s1 + $0x78] sm:$0xff]
        %v7076 = vld [vmem:[%s1 + $0x80] sm:$0xff]
        %v7077 = vld [vmem:[%s1 + $0x88] sm:$0xff]
        %v7078 = vld [vmem:[%s1 + $0x90] sm:$0xff]
        %v7079 = vld [vmem:[%s1 + $0x98] sm:$0xff]
        %v7080 = vld [vmem:[%s1 + $0xa0] sm:$0xff]
        %v7081 = vld [vmem:[%s1 + $0xa8] sm:$0xff]
        %v7082 = vld [vmem:[%s1 + $0xb0] sm:$0xff]
        %v7083 = vld [vmem:[%s1 + $0xb8] sm:$0xff]
        %v7084 = vld [vmem:[%s1 + $0xc0] sm:$0xff]
        %v7085 = vld [vmem:[%s1 + $0xc8] sm:$0xff]
        %v7086 = vld [vmem:[%s1 + $0xd0] sm:$0xff]
        %v7087 = vld [vmem:[%s1 + $0xd8] sm:$0xff]
        %v7088 = vld [vmem:[%s1 + $0xe0] sm:$0xff]
        %v7089 = vld [vmem:[%s1 + $0xe8] sm:$0xff]
        %v7090 = vld [vmem:[%s1 + $0xf0] sm:$0xff]
        %v7091 = vld [vmem:[%s1 + $0xf8] sm:$0xff]
        %7092 = vmatpush.msra.mxu0 %v7075
        %7093 = vmatpush.msra.mxu0 %v7074
        %7094 = vmatpush.msra.mxu0 %v7073
        %7095 = vmatpush.msra.mxu0 %v7072
        %7096 = vmatpush.msra.mxu0 %v7071
        %7097 = vmatpush.msra.mxu0 %v7070
        %7098 = vmatpush.msra.mxu0 %v7069
        %7099 = vmatpush.msra.mxu0 %v7068
        %7100 = vmatpush.msra.mxu0 %v7067
        %7101 = vmatpush.msra.mxu0 %v7066
        %7102 = vmatpush.msra.mxu0 %v7065
        %7103 = vmatpush.msra.mxu0 %v7064
        %7104 = vmatpush.msra.mxu0 %v7063
        %7105 = vmatpush.msra.mxu0 %v7062
        %7106 = vmatpush.msra.mxu0 %v7061
        %7107 = vmatpush.msra.mxu0 %v7060
        %7108 = vmatmul.f32.gmra.mxu0 %v6932
        %v7109 = vpop.f32.mrf.mxu0
        %v7110 = vadd.f32 0.0, %v7109
        %7111 = vmatmul.f32.gmra.mxu0 %v6934
        %v7112 = vpop.f32.mrf.mxu0
        %v7113 = vadd.f32 0.0, %v7112
        %7114 = vmatmul.f32.gmra.mxu0 %v6936
        %v7115 = vpop.f32.mrf.mxu0
        %v7116 = vadd.f32 0.0, %v7115
        %7117 = vmatmul.f32.gmra.mxu0 %v6938
        %v7118 = vpop.f32.mrf.mxu0
        %v7119 = vadd.f32 0.0, %v7118
        %7120 = vmatmul.f32.gmra.mxu0 %v6940
        %v7121 = vpop.f32.mrf.mxu0
        %v7122 = vadd.f32 0.0, %v7121
        %7123 = vmatmul.f32.gmra.mxu0 %v6942
        %v7124 = vpop.f32.mrf.mxu0
        %v7125 = vadd.f32 0.0, %v7124
        %7126 = vmatmul.f32.gmra.mxu0 %v6944
        %v7127 = vpop.f32.mrf.mxu0
        %v7128 = vadd.f32 0.0, %v7127
        %7129 = vmatmul.f32.gmra.mxu0 %v6946
        %v7130 = vpop.f32.mrf.mxu0
        %v7131 = vadd.f32 0.0, %v7130
        %7132 = vmatmul.f32.gmra.mxu0 %v6948
        %v7133 = vpop.f32.mrf.mxu0
        %v7134 = vadd.f32 0.0, %v7133
        %7135 = vmatmul.f32.gmra.mxu0 %v6950
        %v7136 = vpop.f32.mrf.mxu0
        %v7137 = vadd.f32 0.0, %v7136
        %7138 = vmatmul.f32.gmra.mxu0 %v6952
        %v7139 = vpop.f32.mrf.mxu0
        %v7140 = vadd.f32 0.0, %v7139
        %7141 = vmatmul.f32.gmra.mxu0 %v6954
        %v7142 = vpop.f32.mrf.mxu0
        %v7143 = vadd.f32 0.0, %v7142
        %7144 = vmatmul.f32.gmra.mxu0 %v6956
        %v7145 = vpop.f32.mrf.mxu0
        %v7146 = vadd.f32 0.0, %v7145
        %7147 = vmatmul.f32.gmra.mxu0 %v6958
        %v7148 = vpop.f32.mrf.mxu0
        %v7149 = vadd.f32 0.0, %v7148
        %7150 = vmatmul.f32.gmra.mxu0 %v6960
        %v7151 = vpop.f32.mrf.mxu0
        %v7152 = vadd.f32 0.0, %v7151
        %7153 = vmatmul.f32.gmra.mxu0 %v6962
        %v7154 = vpop.f32.mrf.mxu0
        %v7155 = vadd.f32 0.0, %v7154
        %7156 = vmatmul.f32.gmra.mxu0 %v6964
        %v7157 = vpop.f32.mrf.mxu0
        %v7158 = vadd.f32 0.0, %v7157
        %7159 = vmatmul.f32.gmra.mxu0 %v6966
        %v7160 = vpop.f32.mrf.mxu0
        %v7161 = vadd.f32 0.0, %v7160
        %7162 = vmatmul.f32.gmra.mxu0 %v6968
        %v7163 = vpop.f32.mrf.mxu0
        %v7164 = vadd.f32 0.0, %v7163
        %7165 = vmatmul.f32.gmra.mxu0 %v6970
        %v7166 = vpop.f32.mrf.mxu0
        %v7167 = vadd.f32 0.0, %v7166
        %7168 = vmatmul.f32.gmra.mxu0 %v6972
        %v7169 = vpop.f32.mrf.mxu0
        %v7170 = vadd.f32 0.0, %v7169
        %7171 = vmatmul.f32.gmra.mxu0 %v6974
        %v7172 = vpop.f32.mrf.mxu0
        %v7173 = vadd.f32 0.0, %v7172
        %7174 = vmatmul.f32.gmra.mxu0 %v6976
        %v7175 = vpop.f32.mrf.mxu0
        %v7176 = vadd.f32 0.0, %v7175
        %7177 = vmatmul.f32.gmra.mxu0 %v6978
        %v7178 = vpop.f32.mrf.mxu0
        %v7179 = vadd.f32 0.0, %v7178
        %7180 = vmatmul.f32.gmra.mxu0 %v6980
        %v7181 = vpop.f32.mrf.mxu0
        %v7182 = vadd.f32 0.0, %v7181
        %7183 = vmatmul.f32.gmra.mxu0 %v6982
        %v7184 = vpop.f32.mrf.mxu0
        %v7185 = vadd.f32 0.0, %v7184
        %7186 = vmatmul.f32.gmra.mxu0 %v6984
        %v7187 = vpop.f32.mrf.mxu0
        %v7188 = vadd.f32 0.0, %v7187
        %7189 = vmatmul.f32.gmra.mxu0 %v6986
        %v7190 = vpop.f32.mrf.mxu0
        %v7191 = vadd.f32 0.0, %v7190
        %7192 = vmatmul.f32.gmra.mxu0 %v6988
        %v7193 = vpop.f32.mrf.mxu0
        %v7194 = vadd.f32 0.0, %v7193
        %7195 = vmatmul.f32.gmra.mxu0 %v6990
        %v7196 = vpop.f32.mrf.mxu0
        %v7197 = vadd.f32 0.0, %v7196
        %7198 = vmatmul.f32.gmra.mxu0 %v6992
        %v7199 = vpop.f32.mrf.mxu0
        %v7200 = vadd.f32 0.0, %v7199
        %7201 = vmatmul.f32.gmra.mxu0 %v6994
        %v7202 = vpop.f32.mrf.mxu0
        %v7203 = vadd.f32 0.0, %v7202
        %7204 = vmatmul.f32.gmra.mxu0 %v6996
        %v7205 = vpop.f32.mrf.mxu0
        %v7206 = vadd.f32 0.0, %v7205
        %7207 = vmatmul.f32.gmra.mxu0 %v6998
        %v7208 = vpop.f32.mrf.mxu0
        %v7209 = vadd.f32 0.0, %v7208
        %7210 = vmatmul.f32.gmra.mxu0 %v7000
        %v7211 = vpop.f32.mrf.mxu0
        %v7212 = vadd.f32 0.0, %v7211
        %7213 = vmatmul.f32.gmra.mxu0 %v7002
        %v7214 = vpop.f32.mrf.mxu0
        %v7215 = vadd.f32 0.0, %v7214
        %7216 = vmatmul.f32.gmra.mxu0 %v7004
        %v7217 = vpop.f32.mrf.mxu0
        %v7218 = vadd.f32 0.0, %v7217
        %7219 = vmatmul.f32.gmra.mxu0 %v7006
        %v7220 = vpop.f32.mrf.mxu0
        %v7221 = vadd.f32 0.0, %v7220
        %7222 = vmatmul.f32.gmra.mxu0 %v7008
        %v7223 = vpop.f32.mrf.mxu0
        %v7224 = vadd.f32 0.0, %v7223
        %7225 = vmatmul.f32.gmra.mxu0 %v7010
        %v7226 = vpop.f32.mrf.mxu0
        %v7227 = vadd.f32 0.0, %v7226
        %7228 = vmatmul.f32.gmra.mxu0 %v7012
        %v7229 = vpop.f32.mrf.mxu0
        %v7230 = vadd.f32 0.0, %v7229
        %7231 = vmatmul.f32.gmra.mxu0 %v7014
        %v7232 = vpop.f32.mrf.mxu0
        %v7233 = vadd.f32 0.0, %v7232
        %7234 = vmatmul.f32.gmra.mxu0 %v7016
        %v7235 = vpop.f32.mrf.mxu0
        %v7236 = vadd.f32 0.0, %v7235
        %7237 = vmatmul.f32.gmra.mxu0 %v7018
        %v7238 = vpop.f32.mrf.mxu0
        %v7239 = vadd.f32 0.0, %v7238
        %7240 = vmatmul.f32.gmra.mxu0 %v7020
        %v7241 = vpop.f32.mrf.mxu0
        %v7242 = vadd.f32 0.0, %v7241
        %7243 = vmatmul.f32.gmra.mxu0 %v7022
        %v7244 = vpop.f32.mrf.mxu0
        %v7245 = vadd.f32 0.0, %v7244
        %7246 = vmatmul.f32.gmra.mxu0 %v7024
        %v7247 = vpop.f32.mrf.mxu0
        %v7248 = vadd.f32 0.0, %v7247
        %7249 = vmatmul.f32.gmra.mxu0 %v7026
        %v7250 = vpop.f32.mrf.mxu0
        %v7251 = vadd.f32 0.0, %v7250
        %7252 = vmatmul.f32.gmra.mxu0 %v7028
        %v7253 = vpop.f32.mrf.mxu0
        %v7254 = vadd.f32 0.0, %v7253
        %7255 = vmatmul.f32.gmra.mxu0 %v7030
        %v7256 = vpop.f32.mrf.mxu0
        %v7257 = vadd.f32 0.0, %v7256
        %7258 = vmatmul.f32.gmra.mxu0 %v7032
        %v7259 = vpop.f32.mrf.mxu0
        %v7260 = vadd.f32 0.0, %v7259
        %7261 = vmatmul.f32.gmra.mxu0 %v7034
        %v7262 = vpop.f32.mrf.mxu0
        %v7263 = vadd.f32 0.0, %v7262
        %7264 = vmatmul.f32.gmra.mxu0 %v7036
        %v7265 = vpop.f32.mrf.mxu0
        %v7266 = vadd.f32 0.0, %v7265
        %7267 = vmatmul.f32.gmra.mxu0 %v7038
        %v7268 = vpop.f32.mrf.mxu0
        %v7269 = vadd.f32 0.0, %v7268
        %7270 = vmatmul.f32.gmra.mxu0 %v7040
        %v7271 = vpop.f32.mrf.mxu0
        %v7272 = vadd.f32 0.0, %v7271
        %7273 = vmatmul.f32.gmra.mxu0 %v7042
        %v7274 = vpop.f32.mrf.mxu0
        %v7275 = vadd.f32 0.0, %v7274
        %7276 = vmatmul.f32.gmra.mxu0 %v7044
        %v7277 = vpop.f32.mrf.mxu0
        %v7278 = vadd.f32 0.0, %v7277
        %7279 = vmatmul.f32.gmra.mxu0 %v7046
        %v7280 = vpop.f32.mrf.mxu0
        %v7281 = vadd.f32 0.0, %v7280
        %7282 = vmatmul.f32.gmra.mxu0 %v7048
        %v7283 = vpop.f32.mrf.mxu0
        %v7284 = vadd.f32 0.0, %v7283
        %7285 = vmatmul.f32.gmra.mxu0 %v7050
        %v7286 = vpop.f32.mrf.mxu0
        %v7287 = vadd.f32 0.0, %v7286
        %7288 = vmatmul.f32.gmra.mxu0 %v7052
        %v7289 = vpop.f32.mrf.mxu0
        %v7290 = vadd.f32 0.0, %v7289
        %7291 = vmatmul.f32.gmra.mxu0 %v7054
        %v7292 = vpop.f32.mrf.mxu0
        %v7293 = vadd.f32 0.0, %v7292
        %7294 = vmatmul.f32.gmra.mxu0 %v7056
        %v7295 = vpop.f32.mrf.mxu0
        %v7296 = vadd.f32 0.0, %v7295
        %7297 = vmatmul.f32.gmra.mxu0 %v7058
        %v7298 = vpop.f32.mrf.mxu0
        %v7299 = vadd.f32 0.0, %v7298
        %7300 = vdwg.mxu0
        %7301 = vmatpush.msra.mxu0 %v7091
        %7302 = vmatpush.msra.mxu0 %v7090
        %7303 = vmatpush.msra.mxu0 %v7089
        %7304 = vmatpush.msra.mxu0 %v7088
        %7305 = vmatpush.msra.mxu0 %v7087
        %7306 = vmatpush.msra.mxu0 %v7086
        %7307 = vmatpush.msra.mxu0 %v7085
        %7308 = vmatpush.msra.mxu0 %v7084
        %7309 = vmatpush.msra.mxu0 %v7083
        %7310 = vmatpush.msra.mxu0 %v7082
        %7311 = vmatpush.msra.mxu0 %v7081
        %7312 = vmatpush.msra.mxu0 %v7080
        %7313 = vmatpush.msra.mxu0 %v7079
        %7314 = vmatpush.msra.mxu0 %v7078
        %7315 = vmatpush.msra.mxu0 %v7077
        %7316 = vmatpush.msra.mxu0 %v7076
        %7317 = vmatmul.f32.gmra.mxu0 %v6933
        %v7318 = vpop.f32.mrf.mxu0
        %v7319 = vadd.f32 %v7110, %v7318
        %7320 = vmatmul.f32.gmra.mxu0 %v6935
        %v7321 = vpop.f32.mrf.mxu0
        %v7322 = vadd.f32 %v7113, %v7321
        %7323 = vmatmul.f32.gmra.mxu0 %v6937
        %v7324 = vpop.f32.mrf.mxu0
        %v7325 = vadd.f32 %v7116, %v7324
        %7326 = vmatmul.f32.gmra.mxu0 %v6939
        %v7327 = vpop.f32.mrf.mxu0
        %v7328 = vadd.f32 %v7119, %v7327
        %7329 = vmatmul.f32.gmra.mxu0 %v6941
        %v7330 = vpop.f32.mrf.mxu0
        %v7331 = vadd.f32 %v7122, %v7330
        %7332 = vmatmul.f32.gmra.mxu0 %v6943
        %v7333 = vpop.f32.mrf.mxu0
        %v7334 = vadd.f32 %v7125, %v7333
        %7335 = vmatmul.f32.gmra.mxu0 %v6945
        %v7336 = vpop.f32.mrf.mxu0
        %v7337 = vadd.f32 %v7128, %v7336
        %7338 = vmatmul.f32.gmra.mxu0 %v6947
        %v7339 = vpop.f32.mrf.mxu0
        %v7340 = vadd.f32 %v7131, %v7339
        %7341 = vmatmul.f32.gmra.mxu0 %v6949
        %v7342 = vpop.f32.mrf.mxu0
        %v7343 = vadd.f32 %v7134, %v7342
        %7344 = vmatmul.f32.gmra.mxu0 %v6951
        %v7345 = vpop.f32.mrf.mxu0
        %v7346 = vadd.f32 %v7137, %v7345
        %7347 = vmatmul.f32.gmra.mxu0 %v6953
        %v7348 = vpop.f32.mrf.mxu0
        %v7349 = vadd.f32 %v7140, %v7348
        %7350 = vmatmul.f32.gmra.mxu0 %v6955
        %v7351 = vpop.f32.mrf.mxu0
        %v7352 = vadd.f32 %v7143, %v7351
        %7353 = vmatmul.f32.gmra.mxu0 %v6957
        %v7354 = vpop.f32.mrf.mxu0
        %v7355 = vadd.f32 %v7146, %v7354
        %7356 = vmatmul.f32.gmra.mxu0 %v6959
        %v7357 = vpop.f32.mrf.mxu0
        %v7358 = vadd.f32 %v7149, %v7357
        %7359 = vmatmul.f32.gmra.mxu0 %v6961
        %v7360 = vpop.f32.mrf.mxu0
        %v7361 = vadd.f32 %v7152, %v7360
        %7362 = vmatmul.f32.gmra.mxu0 %v6963
        %v7363 = vpop.f32.mrf.mxu0
        %v7364 = vadd.f32 %v7155, %v7363
        %7365 = vmatmul.f32.gmra.mxu0 %v6965
        %v7366 = vpop.f32.mrf.mxu0
        %v7367 = vadd.f32 %v7158, %v7366
        %7368 = vmatmul.f32.gmra.mxu0 %v6967
        %v7369 = vpop.f32.mrf.mxu0
        %v7370 = vadd.f32 %v7161, %v7369
        %7371 = vmatmul.f32.gmra.mxu0 %v6969
        %v7372 = vpop.f32.mrf.mxu0
        %v7373 = vadd.f32 %v7164, %v7372
        %7374 = vmatmul.f32.gmra.mxu0 %v6971
        %v7375 = vpop.f32.mrf.mxu0
        %v7376 = vadd.f32 %v7167, %v7375
        %7377 = vmatmul.f32.gmra.mxu0 %v6973
        %v7378 = vpop.f32.mrf.mxu0
        %v7379 = vadd.f32 %v7170, %v7378
        %7380 = vmatmul.f32.gmra.mxu0 %v6975
        %v7381 = vpop.f32.mrf.mxu0
        %v7382 = vadd.f32 %v7173, %v7381
        %7383 = vmatmul.f32.gmra.mxu0 %v6977
        %v7384 = vpop.f32.mrf.mxu0
        %v7385 = vadd.f32 %v7176, %v7384
        %7386 = vmatmul.f32.gmra.mxu0 %v6979
        %v7387 = vpop.f32.mrf.mxu0
        %v7388 = vadd.f32 %v7179, %v7387
        %7389 = vmatmul.f32.gmra.mxu0 %v6981
        %v7390 = vpop.f32.mrf.mxu0
        %v7391 = vadd.f32 %v7182, %v7390
        %7392 = vmatmul.f32.gmra.mxu0 %v6983
        %v7393 = vpop.f32.mrf.mxu0
        %v7394 = vadd.f32 %v7185, %v7393
        %7395 = vmatmul.f32.gmra.mxu0 %v6985
        %v7396 = vpop.f32.mrf.mxu0
        %v7397 = vadd.f32 %v7188, %v7396
        %7398 = vmatmul.f32.gmra.mxu0 %v6987
        %v7399 = vpop.f32.mrf.mxu0
        %v7400 = vadd.f32 %v7191, %v7399
        %7401 = vmatmul.f32.gmra.mxu0 %v6989
        %v7402 = vpop.f32.mrf.mxu0
        %v7403 = vadd.f32 %v7194, %v7402
        %7404 = vmatmul.f32.gmra.mxu0 %v6991
        %v7405 = vpop.f32.mrf.mxu0
        %v7406 = vadd.f32 %v7197, %v7405
        %7407 = vmatmul.f32.gmra.mxu0 %v6993
        %v7408 = vpop.f32.mrf.mxu0
        %v7409 = vadd.f32 %v7200, %v7408
        %7410 = vmatmul.f32.gmra.mxu0 %v6995
        %v7411 = vpop.f32.mrf.mxu0
        %v7412 = vadd.f32 %v7203, %v7411
        %7413 = vmatmul.f32.gmra.mxu0 %v6997
        %v7414 = vpop.f32.mrf.mxu0
        %v7415 = vadd.f32 %v7206, %v7414
        %7416 = vmatmul.f32.gmra.mxu0 %v6999
        %v7417 = vpop.f32.mrf.mxu0
        %v7418 = vadd.f32 %v7209, %v7417
        %7419 = vmatmul.f32.gmra.mxu0 %v7001
        %v7420 = vpop.f32.mrf.mxu0
        %v7421 = vadd.f32 %v7212, %v7420
        %7422 = vmatmul.f32.gmra.mxu0 %v7003
        %v7423 = vpop.f32.mrf.mxu0
        %v7424 = vadd.f32 %v7215, %v7423
        %7425 = vmatmul.f32.gmra.mxu0 %v7005
        %v7426 = vpop.f32.mrf.mxu0
        %v7427 = vadd.f32 %v7218, %v7426
        %7428 = vmatmul.f32.gmra.mxu0 %v7007
        %v7429 = vpop.f32.mrf.mxu0
        %v7430 = vadd.f32 %v7221, %v7429
        %7431 = vmatmul.f32.gmra.mxu0 %v7009
        %v7432 = vpop.f32.mrf.mxu0
        %v7433 = vadd.f32 %v7224, %v7432
        %7434 = vmatmul.f32.gmra.mxu0 %v7011
        %v7435 = vpop.f32.mrf.mxu0
        %v7436 = vadd.f32 %v7227, %v7435
        %7437 = vmatmul.f32.gmra.mxu0 %v7013
        %v7438 = vpop.f32.mrf.mxu0
        %v7439 = vadd.f32 %v7230, %v7438
        %7440 = vmatmul.f32.gmra.mxu0 %v7015
        %v7441 = vpop.f32.mrf.mxu0
        %v7442 = vadd.f32 %v7233, %v7441
        %7443 = vmatmul.f32.gmra.mxu0 %v7017
        %v7444 = vpop.f32.mrf.mxu0
        %v7445 = vadd.f32 %v7236, %v7444
        %7446 = vmatmul.f32.gmra.mxu0 %v7019
        %v7447 = vpop.f32.mrf.mxu0
        %v7448 = vadd.f32 %v7239, %v7447
        %7449 = vmatmul.f32.gmra.mxu0 %v7021
        %v7450 = vpop.f32.mrf.mxu0
        %v7451 = vadd.f32 %v7242, %v7450
        %7452 = vmatmul.f32.gmra.mxu0 %v7023
        %v7453 = vpop.f32.mrf.mxu0
        %v7454 = vadd.f32 %v7245, %v7453
        %7455 = vmatmul.f32.gmra.mxu0 %v7025
        %v7456 = vpop.f32.mrf.mxu0
        %v7457 = vadd.f32 %v7248, %v7456
        %7458 = vmatmul.f32.gmra.mxu0 %v7027
        %v7459 = vpop.f32.mrf.mxu0
        %v7460 = vadd.f32 %v7251, %v7459
        %7461 = vmatmul.f32.gmra.mxu0 %v7029
        %v7462 = vpop.f32.mrf.mxu0
        %v7463 = vadd.f32 %v7254, %v7462
        %7464 = vmatmul.f32.gmra.mxu0 %v7031
        %v7465 = vpop.f32.mrf.mxu0
        %v7466 = vadd.f32 %v7257, %v7465
        %7467 = vmatmul.f32.gmra.mxu0 %v7033
        %v7468 = vpop.f32.mrf.mxu0
        %v7469 = vadd.f32 %v7260, %v7468
        %7470 = vmatmul.f32.gmra.mxu0 %v7035
        %v7471 = vpop.f32.mrf.mxu0
        %v7472 = vadd.f32 %v7263, %v7471
        %7473 = vmatmul.f32.gmra.mxu0 %v7037
        %v7474 = vpop.f32.mrf.mxu0
        %v7475 = vadd.f32 %v7266, %v7474
        %7476 = vmatmul.f32.gmra.mxu0 %v7039
        %v7477 = vpop.f32.mrf.mxu0
        %v7478 = vadd.f32 %v7269, %v7477
        %7479 = vmatmul.f32.gmra.mxu0 %v7041
        %v7480 = vpop.f32.mrf.mxu0
        %v7481 = vadd.f32 %v7272, %v7480
        %7482 = vmatmul.f32.gmra.mxu0 %v7043
        %v7483 = vpop.f32.mrf.mxu0
        %v7484 = vadd.f32 %v7275, %v7483
        %7485 = vmatmul.f32.gmra.mxu0 %v7045
        %v7486 = vpop.f32.mrf.mxu0
        %v7487 = vadd.f32 %v7278, %v7486
        %7488 = vmatmul.f32.gmra.mxu0 %v7047
        %v7489 = vpop.f32.mrf.mxu0
        %v7490 = vadd.f32 %v7281, %v7489
        %7491 = vmatmul.f32.gmra.mxu0 %v7049
        %v7492 = vpop.f32.mrf.mxu0
        %v7493 = vadd.f32 %v7284, %v7492
        %7494 = vmatmul.f32.gmra.mxu0 %v7051
        %v7495 = vpop.f32.mrf.mxu0
        %v7496 = vadd.f32 %v7287, %v7495
        %7497 = vmatmul.f32.gmra.mxu0 %v7053
        %v7498 = vpop.f32.mrf.mxu0
        %v7499 = vadd.f32 %v7290, %v7498
        %7500 = vmatmul.f32.gmra.mxu0 %v7055
        %v7501 = vpop.f32.mrf.mxu0
        %v7502 = vadd.f32 %v7293, %v7501
        %7503 = vmatmul.f32.gmra.mxu0 %v7057
        %v7504 = vpop.f32.mrf.mxu0
        %v7505 = vadd.f32 %v7296, %v7504
        %7506 = vmatmul.f32.gmra.mxu0 %v7059
        %v7507 = vpop.f32.mrf.mxu0
        %v7508 = vadd.f32 %v7299, %v7507
        %7509 = vdwg.mxu0
        %7510 = vst [vmem:[%s137] sm:$0xff] %v7319
        %7511 = vst [vmem:[%s137 + $0x8] sm:$0xff] %v7322
        %7512 = vst [vmem:[%s137 + $0x10] sm:$0xff] %v7325
        %7513 = vst [vmem:[%s137 + $0x18] sm:$0xff] %v7328
        %7514 = vst [vmem:[%s137 + $0x20] sm:$0xff] %v7331
        %7515 = vst [vmem:[%s137 + $0x28] sm:$0xff] %v7334
        %7516 = vst [vmem:[%s137 + $0x30] sm:$0xff] %v7337
        %7517 = vst [vmem:[%s137 + $0x38] sm:$0xff] %v7340
        %7518 = vst [vmem:[%s137 + $0x40] sm:$0xff] %v7343
        %7519 = vst [vmem:[%s137 + $0x48] sm:$0xff] %v7346
        %7520 = vst [vmem:[%s137 + $0x50] sm:$0xff] %v7349
        %7521 = vst [vmem:[%s137 + $0x58] sm:$0xff] %v7352
        %7522 = vst [vmem:[%s137 + $0x60] sm:$0xff] %v7355
        %7523 = vst [vmem:[%s137 + $0x68] sm:$0xff] %v7358
        %7524 = vst [vmem:[%s137 + $0x70] sm:$0xff] %v7361
        %7525 = vst [vmem:[%s137 + $0x78] sm:$0xff] %v7364
        %7526 = vst [vmem:[%s137 + $0x80] sm:$0xff] %v7367
        %7527 = vst [vmem:[%s137 + $0x88] sm:$0xff] %v7370
        %7528 = vst [vmem:[%s137 + $0x90] sm:$0xff] %v7373
        %7529 = vst [vmem:[%s137 + $0x98] sm:$0xff] %v7376
        %7530 = vst [vmem:[%s137 + $0xa0] sm:$0xff] %v7379
        %7531 = vst [vmem:[%s137 + $0xa8] sm:$0xff] %v7382
        %7532 = vst [vmem:[%s137 + $0xb0] sm:$0xff] %v7385
        %7533 = vst [vmem:[%s137 + $0xb8] sm:$0xff] %v7388
        %7534 = vst [vmem:[%s137 + $0xc0] sm:$0xff] %v7391
        %7535 = vst [vmem:[%s137 + $0xc8] sm:$0xff] %v7394
        %7536 = vst [vmem:[%s137 + $0xd0] sm:$0xff] %v7397
        %7537 = vst [vmem:[%s137 + $0xd8] sm:$0xff] %v7400
        %7538 = vst [vmem:[%s137 + $0xe0] sm:$0xff] %v7403
        %7539 = vst [vmem:[%s137 + $0xe8] sm:$0xff] %v7406
        %7540 = vst [vmem:[%s137 + $0xf0] sm:$0xff] %v7409
        %7541 = vst [vmem:[%s137 + $0xf8] sm:$0xff] %v7412
        %7542 = vst [vmem:[%s137 + $0x100] sm:$0xff] %v7415
        %7543 = vst [vmem:[%s137 + $0x108] sm:$0xff] %v7418
        %7544 = vst [vmem:[%s137 + $0x110] sm:$0xff] %v7421
        %7545 = vst [vmem:[%s137 + $0x118] sm:$0xff] %v7424
        %7546 = vst [vmem:[%s137 + $0x120] sm:$0xff] %v7427
        %7547 = vst [vmem:[%s137 + $0x128] sm:$0xff] %v7430
        %7548 = vst [vmem:[%s137 + $0x130] sm:$0xff] %v7433
        %7549 = vst [vmem:[%s137 + $0x138] sm:$0xff] %v7436
        %7550 = vst [vmem:[%s137 + $0x140] sm:$0xff] %v7439
        %7551 = vst [vmem:[%s137 + $0x148] sm:$0xff] %v7442
        %7552 = vst [vmem:[%s137 + $0x150] sm:$0xff] %v7445
        %7553 = vst [vmem:[%s137 + $0x158] sm:$0xff] %v7448
        %7554 = vst [vmem:[%s137 + $0x160] sm:$0xff] %v7451
        %7555 = vst [vmem:[%s137 + $0x168] sm:$0xff] %v7454
        %7556 = vst [vmem:[%s137 + $0x170] sm:$0xff] %v7457
        %7557 = vst [vmem:[%s137 + $0x178] sm:$0xff] %v7460
        %7558 = vst [vmem:[%s137 + $0x180] sm:$0xff] %v7463
        %7559 = vst [vmem:[%s137 + $0x188] sm:$0xff] %v7466
        %7560 = vst [vmem:[%s137 + $0x190] sm:$0xff] %v7469
        %7561 = vst [vmem:[%s137 + $0x198] sm:$0xff] %v7472
        %7562 = vst [vmem:[%s137 + $0x1a0] sm:$0xff] %v7475
        %7563 = vst [vmem:[%s137 + $0x1a8] sm:$0xff] %v7478
        %7564 = vst [vmem:[%s137 + $0x1b0] sm:$0xff] %v7481
        %7565 = vst [vmem:[%s137 + $0x1b8] sm:$0xff] %v7484
        %7566 = vst [vmem:[%s137 + $0x1c0] sm:$0xff] %v7487
        %7567 = vst [vmem:[%s137 + $0x1c8] sm:$0xff] %v7490
        %7568 = vst [vmem:[%s137 + $0x1d0] sm:$0xff] %v7493
        %7569 = vst [vmem:[%s137 + $0x1d8] sm:$0xff] %v7496
        %7570 = vst [vmem:[%s137 + $0x1e0] sm:$0xff] %v7499
        %7571 = vst [vmem:[%s137 + $0x1e8] sm:$0xff] %v7502
        %7572 = vst [vmem:[%s137 + $0x1f0] sm:$0xff] %v7505
        %7573 = vst [vmem:[%s137 + $0x1f8] sm:$0xff] %v7508
        %s7574 = sand.u32 %s71, 1
        %s7575 = scalar_lea.sflag [#allocation3], %s7574
        %s7576 = sand.u32 %s71, 1
        %s7577 = smul.addr %s7576, 512
        %s7578 = scalar_lea.vmem [#allocation2], %s7577
        // Predicated region
        $region29: #{tpu_custom_call.1} parent=27 // pred_check
          %p7579 = pneg %p81
        $region30: #{tpu_custom_call.1} parent=27 // pred_check_branch
          %7581 = sbr.rel (%p7579) target = $region32
        $region31: #{tpu_custom_call.1} parent=27 // pred_region
          %s7582 = smul.u32 64, %s16
          %7584 = vsyncadd %s7575, 0
          %s7585 = smul.addr %s7582, 8
          %s7586 = scalar_lea.hbm %s2, %s7585
          %s7587 = sshll.u32 %s7578, 4
          %s7588 = int_to_ptr.vmem [resolvable:$true] %s7587
          %s7589 = sshll.u32 %s7586, 4
          %s7590 = int_to_ptr.hbm [resolvable:$true] %s7589
          %7595 = dma.vmem_to_hbm [thread:$0]  %s7588, 8192, %s7590, %s7575, 128, 128, 8
        $region32: #{tpu_custom_call.1} parent=27 // pred_fallthru
          _
      $region28: #{tpu_custom_call.1} parent=5 // pred_fallthru
        _
      %p7596 = scmp.le.s32.totalorder 2, %s11
      // Predicated region
      $region33: #{tpu_custom_call.1} parent=5 // pred_check
        %p7597 = pneg %p7596
      $region34: #{tpu_custom_call.1} parent=5 // pred_check_branch
        %7599 = sbr.rel (%p7597) target = $region36
      $region35: #{tpu_custom_call.1} parent=5 // pred_region
        %s7600 = ssub.s32 %s11, 2
        // Predicated region
        $region37: #{tpu_custom_call.1} parent=35 // pred_check
          %p7601 = pneg %p87
        $region38: #{tpu_custom_call.1} parent=35 // pred_check_branch
          %7603 = sbr.rel (%p7601) target = $region40
        $region39: #{tpu_custom_call.1} parent=35 // pred_region
          %s7604 = sand.u32 %s72, 1
          %s7605 = scalar_lea.sflag [#allocation3], %s7604
          %s7606 = sand.u32 %s72, 1
          %s7607 = smul.addr %s7606, 512
          %s7608 = scalar_lea.vmem [#allocation2], %s7607
          %7610 = dma.done %s7605, 8192
        $region40: #{tpu_custom_call.1} parent=35 // pred_fallthru
          _
      $region36: #{tpu_custom_call.1} parent=5 // pred_fallthru
        _
    $region6: #{tpu_custom_call.1} parent=1 // loop_footer
      %s15 = sadd.s32 1, %s11
    $region7: #{tpu_custom_call.1} parent=1 // loop_footer_branch
      %10 = sbr.rel target = $region3
    $region8: #{tpu_custom_call.1} parent=1 // loop_exit
      _
    %7611 = vsyncpa [#allocation3], 1
    %s7612 = scalar_lea.sflag [#allocation3], 1
    %7613 = vsyncpa %s7612, 1

</llo_original>
